<compile_context>
chip_gen: v5e
topology: v5e:2x2
jax: 0.10.0
libtpu: 0.0.40
codegen_flags: <defaults>
</compile_context>

<pallas_src>
import functools
import math

import jax
import jax.numpy as jnp
from jax.experimental import pallas as pl
from jax.experimental.pallas import tpu as pltpu


# ----------------------------------------------------------------- kernel ---

def _transformer_kernel(
    # per-batch inputs (grid axis b)
    src_ids_ref, xs_ref, xt_ref,
    # encoder weights (stacked over layers on a leading axis)
    e_wqkv, e_bqkv, e_wo, e_bo, e_g1, e_b1,
    e_fw1, e_fb1, e_fw2, e_fb2, e_g2, e_b2,
    e_gf, e_bf,
    # decoder weights (stacked over layers on a leading axis)
    d_wqkv, d_bqkv, d_wo, d_bo, d_g1, d_b1,
    d_cwq, d_cbq, d_cwkv, d_cbkv, d_cwo, d_cbo, d_g2, d_b2,
    d_fw1, d_fb1, d_fw2, d_fb2, d_g3, d_b3,
    d_gf, d_bf, out_w, out_b,
    # output
    o_ref,
    *, num_layers, num_heads, eps, scale, pad_id, neg):
    f32 = jnp.float32
    bf16 = jnp.bfloat16
    D = xs_ref.shape[-1]
    Dh = D // num_heads

    def ln(z, g, b):
        mean = jnp.mean(z, axis=-1, keepdims=True)
        var = jnp.mean((z - mean) ** 2, axis=-1, keepdims=True)
        return (z - mean) * jax.lax.rsqrt(var + eps) * g + b

    def sdpa(q, k, v, wo, bo, add_mask):
        # q:(Tq,D)  k,v:(Tk,D) f32.  Per-head static lane slices.  A batched
        # head-einsum / concat-heads-then-single-out-proj variant was
        # considered (v6e MXU-width advice) but the per-head partial
        # projections are kept for robust Mosaic lowering at these tiny
        # (8x8x8) shapes; perf delta is negligible at this size.
        y = jnp.zeros((q.shape[0], D), f32)
        for h in range(num_heads):
            sl = slice(h * Dh, (h + 1) * Dh)
            s = jax.lax.dot_general(q[:, sl], k[:, sl],
                                    (((1,), (1,)), ((), ())),
                                    preferred_element_type=f32) * scale
            if add_mask is not None:
                s = s + add_mask
            s = s - jnp.max(s, axis=-1, keepdims=True)
            p = jnp.exp(s)
            p = p / jnp.sum(p, axis=-1, keepdims=True)    # exact softmax denom
            oh = jnp.dot(p, v[:, sl], preferred_element_type=f32)
            # concat_h(oh) @ Wo^T  ==  sum_h oh @ wo[h*Dh:(h+1)*Dh, :]
            y = y + jnp.dot(oh, wo[h * Dh:(h + 1) * Dh, :],
                            preferred_element_type=f32)
        return y + bo

    # ------------------------------------------------------------ encoder ---
    # key-padding mask built in-kernel from the raw token ids (additive row)
    kpm = jnp.where(src_ids_ref[...] == pad_id, f32(neg), f32(0.0))   # (1, Ts)

    x = xs_ref[...]                                                   # (Ts, D)
    for l in range(num_layers):
        qkv = jnp.dot(x.astype(bf16), e_wqkv[l],
                      preferred_element_type=f32) + e_bqkv[l]
        a = sdpa(qkv[:, :D], qkv[:, D:2 * D], qkv[:, 2 * D:],
                 e_wo[l], e_bo[l], kpm)
        x = ln(x + a, e_g1[l], e_b1[l])
        hdn = jnp.maximum(jnp.dot(x.astype(bf16), e_fw1[l],
                                  preferred_element_type=f32) + e_fb1[l], 0.0)
        ffn = jnp.dot(hdn.astype(bf16), e_fw2[l],
                      preferred_element_type=f32) + e_fb2[l]
        x = ln(x + ffn, e_g2[l], e_b2[l])
    mem = ln(x, e_gf[...], e_bf[...])          # encoder final norm, fused here
    mem_b = mem.astype(bf16)

    # ------------------------------------------------------------ decoder ---
    Tt = xt_ref.shape[0]
    rows = jax.lax.broadcasted_iota(jnp.int32, (Tt, Tt), 0)
    cols = jax.lax.broadcasted_iota(jnp.int32, (Tt, Tt), 1)
    causal = jnp.where(cols > rows, f32(neg), f32(0.0))

    y = xt_ref[...]                                                   # (Tt, D)
    for l in range(num_layers):
        # causal self-attention
        qkv = jnp.dot(y.astype(bf16), d_wqkv[l],
                      preferred_element_type=f32) + d_bqkv[l]
        a = sdpa(qkv[:, :D], qkv[:, D:2 * D], qkv[:, 2 * D:],
                 d_wo[l], d_bo[l], causal)
        y = ln(y + a, d_g1[l], d_b1[l])
        # cross-attention (no memory mask), pre-split q / kv projections
        q = jnp.dot(y.astype(bf16), d_cwq[l],
                    preferred_element_type=f32) + d_cbq[l]
        kv = jnp.dot(mem_b, d_cwkv[l],
                     preferred_element_type=f32) + d_cbkv[l]
        a = sdpa(q, kv[:, :D], kv[:, D:], d_cwo[l], d_cbo[l], None)
        y = ln(y + a, d_g2[l], d_b2[l])
        # FFN (dff zero-padded to 128 lanes -> numerically exact, lane-dense)
        hdn = jnp.maximum(jnp.dot(y.astype(bf16), d_fw1[l],
                                  preferred_element_type=f32) + d_fb1[l], 0.0)
        ffn = jnp.dot(hdn.astype(bf16), d_fw2[l],
                      preferred_element_type=f32) + d_fb2[l]
        y = ln(y + ffn, d_g3[l], d_b3[l])

    # final decoder LayerNorm fused with the lane-padded output projection
    yn = ln(y, d_gf[...], d_bf[...]).astype(bf16)
    o_ref[...] = jnp.dot(yn, out_w[...],
                         preferred_element_type=f32) + out_b[...]


# ----------------------------------------------------------- pallas wrapper --

def _fused_forward(src_ids, src_x, tgt_x, params, *, num_heads, pad_id,
                   eps=1e-5):
    B, Ts, D = src_x.shape
    Tt = tgt_x.shape[1]
    enc, dec = params["enc"], params["dec"]
    num_layers = int(enc["sa_wqkv_t"].shape[0])
    vocab_pad = params["out_w_t"].shape[1]
    scale = 1.0 / math.sqrt(D // num_heads)

    # order here MUST match the kernel signature
    weights = [
        enc["sa_wqkv_t"], enc["sa_bqkv"], enc["sa_wo_t"], enc["sa_bo"],
        enc["ln1_g"], enc["ln1_b"],
        enc["w1_t"], enc["b1"], enc["w2_t"], enc["b2"],
        enc["ln2_g"], enc["ln2_b"],
        params["enc_norm_g"], params["enc_norm_b"],
        dec["sa_wqkv_t"], dec["sa_bqkv"], dec["sa_wo_t"], dec["sa_bo"],
        dec["ln1_g"], dec["ln1_b"],
        dec["ca_wq_t"], dec["ca_bq"], dec["ca_wkv_t"], dec["ca_bkv"],
        dec["ca_wo_t"], dec["ca_bo"],
        dec["ln2_g"], dec["ln2_b"],
        dec["w1_t"], dec["b1"], dec["w2_t"], dec["b2"],
        dec["ln3_g"], dec["ln3_b"],
        params["dec_norm_g"], params["dec_norm_b"],
        params["out_w_t"], params["out_b"],
    ]

    def _rep(a):                               # whole array, same for every b
        return pl.BlockSpec(a.shape, lambda b, nd=a.ndim: (0,) * nd)

    in_specs = ([pl.BlockSpec((None, 1, Ts), lambda b: (b, 0, 0)),
                 pl.BlockSpec((None, Ts, D), lambda b: (b, 0, 0)),
                 pl.BlockSpec((None, Tt, D), lambda b: (b, 0, 0))]
                + [_rep(w) for w in weights])

    kern = functools.partial(_transformer_kernel, num_layers=num_layers,
                             num_heads=num_heads, eps=eps, scale=scale,
                             pad_id=pad_id, neg=-1e30)
    return pl.pallas_call(
        kern,
        out_shape=jax.ShapeDtypeStruct((B, Tt, vocab_pad), jnp.float32),
        grid=(B,),
        in_specs=in_specs,
        out_specs=pl.BlockSpec((None, Tt, vocab_pad), lambda b: (b, 0, 0)),
        compiler_params=pltpu.CompilerParams(
            dimension_semantics=("parallel",),        # 2-way for v7x megacore
            vmem_limit_bytes=32 * 1024 * 1024),
    )(src_ids, src_x, tgt_x, *weights)


# ------------------------------------------------------------ model pieces --

def build_pe_table(d_model, max_seq_len=100):
    # exact formula from the PyTorch PositionalEncoding:
    #   pe[pos, i]   = sin(pos / 10000 ** (2*i/d))        (i even)
    #   pe[pos, i+1] = cos(pos / 10000 ** (2*(i+1)/d))
    pos = jnp.arange(max_seq_len, dtype=jnp.float32)[:, None]
    i_even = jnp.arange(0, d_model, 2, dtype=jnp.float32)
    pe_sin = jnp.sin(pos / 10000.0 ** (2.0 * i_even / d_model))
    pe_cos = jnp.cos(pos / 10000.0 ** (2.0 * (i_even + 1.0) / d_model))
    pe = jnp.zeros((max_seq_len, d_model), jnp.float32)
    pe = pe.at[:, 0::2].set(pe_sin)
    pe = pe.at[:, 1::2].set(pe_cos)
    return pe[None]                                   # (1, max_seq_len, d)


def init_params(key, src_vocab_size, tgt_vocab_size, d_model, num_heads,
                num_layers, dff=4, dff_pad=128, vocab_pad=128):
    D = d_model
    BF = jnp.bfloat16
    kiter = iter(jax.random.split(key, 256))

    def nrm(shape, scl=0.02):
        return scl * jax.random.normal(next(kiter), shape, dtype=jnp.float32)

    def ones(): return jnp.ones((1, D), jnp.float32)
    def zeros(): return jnp.zeros((1, D), jnp.float32)

    def enc_layer():
        return dict(
            sa_wqkv_t=nrm((D, 3 * D)).astype(BF), sa_bqkv=nrm((1, 3 * D)),
            sa_wo_t=nrm((D, D)), sa_bo=nrm((1, D)),        # out-proj kept f32
            ln1_g=ones(), ln1_b=zeros(),
            # dff zero-padded to 128 lanes: ReLU(0)*0 contributes nothing
            w1_t=jnp.zeros((D, dff_pad), jnp.float32)
                 .at[:, :dff].set(nrm((D, dff))).astype(BF),
            b1=jnp.zeros((1, dff_pad), jnp.float32).at[:, :dff].set(nrm((1, dff))),
            w2_t=jnp.zeros((dff_pad, D), jnp.float32)
                 .at[:dff, :].set(nrm((dff, D))).astype(BF),
            b2=nrm((1, D)),
            ln2_g=ones(), ln2_b=zeros(),
        )

    def dec_layer():
        d = enc_layer()
        d["ln3_g"], d["ln3_b"] = d.pop("ln2_g"), d.pop("ln2_b")  # FFN norm
        d.update(
            ca_wq_t=nrm((D, D)).astype(BF), ca_bq=nrm((1, D)),
            ca_wkv_t=nrm((D, 2 * D)).astype(BF), ca_bkv=nrm((1, 2 * D)),
            ca_wo_t=nrm((D, D)), ca_bo=nrm((1, D)),
            ln2_g=ones(), ln2_b=zeros(),                         # cross-attn norm
        )
        return d

    def stack(layers):
        return {k: jnp.stack([l[k] for l in layers]) for k in layers[0]}

    # embeddings with sqrt(d_model) folded in (removes a whole kernel launch)
    emb_scale = math.sqrt(d_model)
    src_emb = nrm((src_vocab_size, D), 1.0) * emb_scale
    tgt_emb = nrm((tgt_vocab_size, D), 1.0) * emb_scale

    out_w = jnp.zeros((D, vocab_pad), jnp.float32) \
        .at[:, :tgt_vocab_size].set(nrm((D, tgt_vocab_size)))
    out_b = jnp.zeros((1, vocab_pad), jnp.float32) \
        .at[:, :tgt_vocab_size].set(nrm((1, tgt_vocab_size)))

    return dict(
        src_emb=src_emb, tgt_emb=tgt_emb, pe=build_pe_table(d_model),
        enc=stack([enc_layer() for _ in range(num_layers)]),
        dec=stack([dec_layer() for _ in range(num_layers)]),
        enc_norm_g=ones(), enc_norm_b=zeros(),
        dec_norm_g=ones(), dec_norm_b=zeros(),
        out_w_t=out_w.astype(BF), out_b=out_b)


def transformer_forward(params, src, tgt, *, pad_id, num_heads,
                        tgt_vocab_size):
    B, Ts = src.shape
    Tt = tgt.shape[1]
    # Embedding gather stays in XLA (glue). sqrt(d_model) is folded into the
    # tables; positional-encoding add is a plain XLA add (no kernel launch).
    src_x = params["src_emb"][src] + params["pe"][:, :Ts]
    tgt_x = params["tgt_emb"][tgt] + params["pe"][:, :Tt]
    # TODO(synk): training-mode dropout not modeled (identity in eval mode)
    src_ids = src.astype(jnp.int32)[:, None, :]          # (B, 1, Ts)
    logits_pad = _fused_forward(src_ids, src_x, tgt_x, params,
                                num_heads=num_heads, pad_id=pad_id)
    return logits_pad[:, :, :tgt_vocab_size]


# -------------------------------------------------------------------- main --

if __name__ == "__main__":
    B, Ts, Tt = 2, 8, 8
    d_model, num_heads, num_layers = 32, 4, 2            # nn.Transformer(..., 4)
    src_vocab_size, tgt_vocab_size, pad_id = 16, 16, 0   # '<pad>' -> 0

    key = jax.random.PRNGKey(0)
    k_par, k_src, k_tgt = jax.random.split(key, 3)
    params = init_params(k_par, src_vocab_size, tgt_vocab_size,
                         d_model, num_heads, num_layers)

    src = jax.random.randint(k_src, (B, Ts), 1, src_vocab_size, dtype=jnp.int32)
    src = src.at[0, -2:].set(pad_id)     # exercise the key-padding mask
    tgt = jax.random.randint(k_tgt, (B, Tt), 1, tgt_vocab_size, dtype=jnp.int32)

    fwd = jax.jit(functools.partial(transformer_forward, pad_id=pad_id,
                                    num_heads=num_heads,
                                    tgt_vocab_size=tgt_vocab_size))
    out = fwd(params, src, tgt)
    out = jax.block_until_ready(out)

    assert out.shape == (B, Tt, tgt_vocab_size), out.shape
    assert bool(jnp.all(jnp.isfinite(out)))
    print("KERNEL_OK")
</pallas_src>

<mosaic_0001>
module attributes {stable_mosaic.version = 11 : i64} {
  func.func @_transformer_kernel(%arg0: i32, %arg1: memref<1x1x8xi32, #tpu.memory_space<vmem>>, %arg2: memref<1x8x32xf32, #tpu.memory_space<vmem>>, %arg3: memref<1x8x32xf32, #tpu.memory_space<vmem>>, %arg4: memref<2x32x96xbf16, #tpu.memory_space<vmem>>, %arg5: memref<2x1x96xf32, #tpu.memory_space<vmem>>, %arg6: memref<2x32x32xf32, #tpu.memory_space<vmem>>, %arg7: memref<2x1x32xf32, #tpu.memory_space<vmem>>, %arg8: memref<2x1x32xf32, #tpu.memory_space<vmem>>, %arg9: memref<2x1x32xf32, #tpu.memory_space<vmem>>, %arg10: memref<2x32x128xbf16, #tpu.memory_space<vmem>>, %arg11: memref<2x1x128xf32, #tpu.memory_space<vmem>>, %arg12: memref<2x128x32xbf16, #tpu.memory_space<vmem>>, %arg13: memref<2x1x32xf32, #tpu.memory_space<vmem>>, %arg14: memref<2x1x32xf32, #tpu.memory_space<vmem>>, %arg15: memref<2x1x32xf32, #tpu.memory_space<vmem>>, %arg16: memref<1x32xf32, #tpu.memory_space<vmem>>, %arg17: memref<1x32xf32, #tpu.memory_space<vmem>>, %arg18: memref<2x32x96xbf16, #tpu.memory_space<vmem>>, %arg19: memref<2x1x96xf32, #tpu.memory_space<vmem>>, %arg20: memref<2x32x32xf32, #tpu.memory_space<vmem>>, %arg21: memref<2x1x32xf32, #tpu.memory_space<vmem>>, %arg22: memref<2x1x32xf32, #tpu.memory_space<vmem>>, %arg23: memref<2x1x32xf32, #tpu.memory_space<vmem>>, %arg24: memref<2x32x32xbf16, #tpu.memory_space<vmem>>, %arg25: memref<2x1x32xf32, #tpu.memory_space<vmem>>, %arg26: memref<2x32x64xbf16, #tpu.memory_space<vmem>>, %arg27: memref<2x1x64xf32, #tpu.memory_space<vmem>>, %arg28: memref<2x32x32xf32, #tpu.memory_space<vmem>>, %arg29: memref<2x1x32xf32, #tpu.memory_space<vmem>>, %arg30: memref<2x1x32xf32, #tpu.memory_space<vmem>>, %arg31: memref<2x1x32xf32, #tpu.memory_space<vmem>>, %arg32: memref<2x32x128xbf16, #tpu.memory_space<vmem>>, %arg33: memref<2x1x128xf32, #tpu.memory_space<vmem>>, %arg34: memref<2x128x32xbf16, #tpu.memory_space<vmem>>, %arg35: memref<2x1x32xf32, #tpu.memory_space<vmem>>, %arg36: memref<2x1x32xf32, #tpu.memory_space<vmem>>, %arg37: memref<2x1x32xf32, #tpu.memory_space<vmem>>, %arg38: memref<1x32xf32, #tpu.memory_space<vmem>>, %arg39: memref<1x32xf32, #tpu.memory_space<vmem>>, %arg40: memref<32x128xbf16, #tpu.memory_space<vmem>>, %arg41: memref<1x128xf32, #tpu.memory_space<vmem>>, %arg42: memref<1x8x128xf32, #tpu.memory_space<vmem>>) attributes {dimension_semantics = [#tpu.dimension_semantics<parallel>], iteration_bounds = array<i64: 2>, scalar_prefetch = 0 : i64, scratch_operands = 0 : i64, tpu.core_type = #tpu.core_type<tc>, window_params = [{transform_indices = @transform_0, window_bounds = array<i64: 1, 1, 8>}, {transform_indices = @transform_1, window_bounds = array<i64: 1, 8, 32>}, {transform_indices = @transform_2, window_bounds = array<i64: 1, 8, 32>}, {pipeline_mode = #tpu.pipeline_mode<synchronous>, transform_indices = @transform_3, window_bounds = array<i64: 2, 32, 96>}, {pipeline_mode = #tpu.pipeline_mode<synchronous>, transform_indices = @transform_4, window_bounds = array<i64: 2, 1, 96>}, {pipeline_mode = #tpu.pipeline_mode<synchronous>, transform_indices = @transform_5, window_bounds = array<i64: 2, 32, 32>}, {pipeline_mode = #tpu.pipeline_mode<synchronous>, transform_indices = @transform_6, window_bounds = array<i64: 2, 1, 32>}, {pipeline_mode = #tpu.pipeline_mode<synchronous>, transform_indices = @transform_7, window_bounds = array<i64: 2, 1, 32>}, {pipeline_mode = #tpu.pipeline_mode<synchronous>, transform_indices = @transform_8, window_bounds = array<i64: 2, 1, 32>}, {pipeline_mode = #tpu.pipeline_mode<synchronous>, transform_indices = @transform_9, window_bounds = array<i64: 2, 32, 128>}, {pipeline_mode = #tpu.pipeline_mode<synchronous>, transform_indices = @transform_10, window_bounds = array<i64: 2, 1, 128>}, {pipeline_mode = #tpu.pipeline_mode<synchronous>, transform_indices = @transform_11, window_bounds = array<i64: 2, 128, 32>}, {pipeline_mode = #tpu.pipeline_mode<synchronous>, transform_indices = @transform_12, window_bounds = array<i64: 2, 1, 32>}, {pipeline_mode = #tpu.pipeline_mode<synchronous>, transform_indices = @transform_13, window_bounds = array<i64: 2, 1, 32>}, {pipeline_mode = #tpu.pipeline_mode<synchronous>, transform_indices = @transform_14, window_bounds = array<i64: 2, 1, 32>}, {pipeline_mode = #tpu.pipeline_mode<synchronous>, transform_indices = @transform_15, window_bounds = array<i64: 1, 32>}, {pipeline_mode = #tpu.pipeline_mode<synchronous>, transform_indices = @transform_16, window_bounds = array<i64: 1, 32>}, {pipeline_mode = #tpu.pipeline_mode<synchronous>, transform_indices = @transform_17, window_bounds = array<i64: 2, 32, 96>}, {pipeline_mode = #tpu.pipeline_mode<synchronous>, transform_indices = @transform_18, window_bounds = array<i64: 2, 1, 96>}, {pipeline_mode = #tpu.pipeline_mode<synchronous>, transform_indices = @transform_19, window_bounds = array<i64: 2, 32, 32>}, {pipeline_mode = #tpu.pipeline_mode<synchronous>, transform_indices = @transform_20, window_bounds = array<i64: 2, 1, 32>}, {pipeline_mode = #tpu.pipeline_mode<synchronous>, transform_indices = @transform_21, window_bounds = array<i64: 2, 1, 32>}, {pipeline_mode = #tpu.pipeline_mode<synchronous>, transform_indices = @transform_22, window_bounds = array<i64: 2, 1, 32>}, {pipeline_mode = #tpu.pipeline_mode<synchronous>, transform_indices = @transform_23, window_bounds = array<i64: 2, 32, 32>}, {pipeline_mode = #tpu.pipeline_mode<synchronous>, transform_indices = @transform_24, window_bounds = array<i64: 2, 1, 32>}, {pipeline_mode = #tpu.pipeline_mode<synchronous>, transform_indices = @transform_25, window_bounds = array<i64: 2, 32, 64>}, {pipeline_mode = #tpu.pipeline_mode<synchronous>, transform_indices = @transform_26, window_bounds = array<i64: 2, 1, 64>}, {pipeline_mode = #tpu.pipeline_mode<synchronous>, transform_indices = @transform_27, window_bounds = array<i64: 2, 32, 32>}, {pipeline_mode = #tpu.pipeline_mode<synchronous>, transform_indices = @transform_28, window_bounds = array<i64: 2, 1, 32>}, {pipeline_mode = #tpu.pipeline_mode<synchronous>, transform_indices = @transform_29, window_bounds = array<i64: 2, 1, 32>}, {pipeline_mode = #tpu.pipeline_mode<synchronous>, transform_indices = @transform_30, window_bounds = array<i64: 2, 1, 32>}, {pipeline_mode = #tpu.pipeline_mode<synchronous>, transform_indices = @transform_31, window_bounds = array<i64: 2, 32, 128>}, {pipeline_mode = #tpu.pipeline_mode<synchronous>, transform_indices = @transform_32, window_bounds = array<i64: 2, 1, 128>}, {pipeline_mode = #tpu.pipeline_mode<synchronous>, transform_indices = @transform_33, window_bounds = array<i64: 2, 128, 32>}, {pipeline_mode = #tpu.pipeline_mode<synchronous>, transform_indices = @transform_34, window_bounds = array<i64: 2, 1, 32>}, {pipeline_mode = #tpu.pipeline_mode<synchronous>, transform_indices = @transform_35, window_bounds = array<i64: 2, 1, 32>}, {pipeline_mode = #tpu.pipeline_mode<synchronous>, transform_indices = @transform_36, window_bounds = array<i64: 2, 1, 32>}, {pipeline_mode = #tpu.pipeline_mode<synchronous>, transform_indices = @transform_37, window_bounds = array<i64: 1, 32>}, {pipeline_mode = #tpu.pipeline_mode<synchronous>, transform_indices = @transform_38, window_bounds = array<i64: 1, 32>}, {pipeline_mode = #tpu.pipeline_mode<synchronous>, transform_indices = @transform_39, window_bounds = array<i64: 32, 128>}, {pipeline_mode = #tpu.pipeline_mode<synchronous>, transform_indices = @transform_40, window_bounds = array<i64: 1, 128>}, {transform_indices = @transform_41, window_bounds = array<i64: 1, 8, 128>}]} {
    %c0 = arith.constant 0 : index
    %c0_0 = arith.constant 0 : index
    %c0_1 = arith.constant 0 : index
    %0 = vector.load %arg1[%c0, %c0_0, %c0_1] : memref<1x1x8xi32, #tpu.memory_space<vmem>>, vector<1x1x8xi32>
    %1 = vector.shape_cast %0 : vector<1x1x8xi32> to vector<1x8xi32>
    %c0_i32 = arith.constant 0 : i32
    %2 = vector.broadcast %c0_i32 : i32 to vector<1x8xi32>
    %3 = arith.cmpi eq, %1, %2 : vector<1x8xi32>
    %cst = arith.constant -1.000000e+30 : f32
    %cst_2 = arith.constant 0.000000e+00 : f32
    %4 = vector.broadcast %cst : f32 to vector<1x8xf32>
    %5 = vector.broadcast %cst_2 : f32 to vector<1x8xf32>
    %6 = arith.select %3, %4, %5 : vector<1x8xi1>, vector<1x8xf32>
    %c0_3 = arith.constant 0 : index
    %c0_4 = arith.constant 0 : index
    %c0_5 = arith.constant 0 : index
    %7 = vector.load %arg2[%c0_3, %c0_4, %c0_5] : memref<1x8x32xf32, #tpu.memory_space<vmem>>, vector<1x8x32xf32>
    %8 = vector.shape_cast %7 : vector<1x8x32xf32> to vector<8x32xf32>
    %9 = arith.truncf %8 : vector<8x32xf32> to vector<8x32xbf16>
    %c0_6 = arith.constant 0 : index
    %c0_7 = arith.constant 0 : index
    %c0_8 = arith.constant 0 : index
    %10 = vector.load %arg4[%c0_6, %c0_7, %c0_8] : memref<2x32x96xbf16, #tpu.memory_space<vmem>>, vector<1x32x96xbf16>
    %11 = vector.shape_cast %10 : vector<1x32x96xbf16> to vector<32x96xbf16>
    %cst_9 = arith.constant dense<0.000000e+00> : vector<8x96xf32>
    %12 = tpu.matmul %9, %11, %cst_9 {dimension_numbers = #tpu.dot_dimension_numbers<[1], [0], [0], [1], [0, 0, 1, 1], [], []>} : vector<8x32xbf16>, vector<32x96xbf16>, vector<8x96xf32> -> vector<8x96xf32>
    %c0_10 = arith.constant 0 : index
    %c0_11 = arith.constant 0 : index
    %c0_12 = arith.constant 0 : index
    %13 = vector.load %arg5[%c0_10, %c0_11, %c0_12] : memref<2x1x96xf32, #tpu.memory_space<vmem>>, vector<1x1x96xf32>
    %14 = vector.shape_cast %13 : vector<1x1x96xf32> to vector<1x96xf32>
    %15 = vector.broadcast %14 : vector<1x96xf32> to vector<8x96xf32>
    %16 = arith.addf %12, %15 : vector<8x96xf32>
    %17 = vector.extract_strided_slice %16 {offsets = [0, 0], sizes = [8, 32], strides = [1, 1]} : vector<8x96xf32> to vector<8x32xf32>
    %18 = vector.extract_strided_slice %16 {offsets = [0, 32], sizes = [8, 32], strides = [1, 1]} : vector<8x96xf32> to vector<8x32xf32>
    %19 = vector.extract_strided_slice %16 {offsets = [0, 64], sizes = [8, 32], strides = [1, 1]} : vector<8x96xf32> to vector<8x32xf32>
    %c0_13 = arith.constant 0 : index
    %c0_14 = arith.constant 0 : index
    %c0_15 = arith.constant 0 : index
    %20 = vector.load %arg6[%c0_13, %c0_14, %c0_15] : memref<2x32x32xf32, #tpu.memory_space<vmem>>, vector<1x32x32xf32>
    %21 = vector.shape_cast %20 : vector<1x32x32xf32> to vector<32x32xf32>
    %c0_16 = arith.constant 0 : index
    %c0_17 = arith.constant 0 : index
    %c0_18 = arith.constant 0 : index
    %22 = vector.load %arg7[%c0_16, %c0_17, %c0_18] : memref<2x1x32xf32, #tpu.memory_space<vmem>>, vector<1x1x32xf32>
    %23 = vector.shape_cast %22 : vector<1x1x32xf32> to vector<1x32xf32>
    %cst_19 = arith.constant 0.000000e+00 : f32
    %24 = vector.broadcast %cst_19 : f32 to vector<8x32xf32>
    %25 = vector.extract_strided_slice %17 {offsets = [0, 0], sizes = [8, 8], strides = [1, 1]} : vector<8x32xf32> to vector<8x8xf32>
    %26 = vector.extract_strided_slice %18 {offsets = [0, 0], sizes = [8, 8], strides = [1, 1]} : vector<8x32xf32> to vector<8x8xf32>
    %cst_20 = arith.constant dense<0.000000e+00> : vector<8x8xf32>
    %27 = tpu.matmul %25, %26, %cst_20 {dimension_numbers = #tpu.dot_dimension_numbers<[1], [1], [0], [0], [0, 0, 1, 0], [], []>} : vector<8x8xf32>, vector<8x8xf32>, vector<8x8xf32> -> vector<8x8xf32>
    %cst_21 = arith.constant 0.353553385 : f32
    %28 = vector.broadcast %cst_21 : f32 to vector<8x8xf32>
    %29 = arith.mulf %27, %28 : vector<8x8xf32>
    %30 = vector.broadcast %6 : vector<1x8xf32> to vector<8x8xf32>
    %31 = arith.addf %29, %30 : vector<8x8xf32>
    %cst_22 = arith.constant dense<0xFF800000> : vector<8xf32>
    %32 = vector.multi_reduction <maximumf>, %31, %cst_22 [1] : vector<8x8xf32> to vector<8xf32>
    %33 = vector.shape_cast %32 : vector<8xf32> to vector<8x1xf32>
    %34 = vector.broadcast %33 : vector<8x1xf32> to vector<8x8xf32>
    %35 = arith.subf %31, %34 : vector<8x8xf32>
    %36 = math.exp %35 : vector<8x8xf32>
    %cst_23 = arith.constant dense<0.000000e+00> : vector<8xf32>
    %37 = vector.multi_reduction <add>, %36, %cst_23 [1] : vector<8x8xf32> to vector<8xf32>
    %38 = vector.shape_cast %37 : vector<8xf32> to vector<8x1xf32>
    %39 = vector.broadcast %38 : vector<8x1xf32> to vector<8x8xf32>
    %40 = arith.divf %36, %39 : vector<8x8xf32>
    %41 = vector.extract_strided_slice %19 {offsets = [0, 0], sizes = [8, 8], strides = [1, 1]} : vector<8x32xf32> to vector<8x8xf32>
    %cst_24 = arith.constant dense<0.000000e+00> : vector<8x8xf32>
    %42 = tpu.matmul %40, %41, %cst_24 {dimension_numbers = #tpu.dot_dimension_numbers<[1], [0], [0], [1], [0, 0, 1, 1], [], []>} : vector<8x8xf32>, vector<8x8xf32>, vector<8x8xf32> -> vector<8x8xf32>
    %43 = vector.extract_strided_slice %21 {offsets = [0, 0], sizes = [8, 32], strides = [1, 1]} : vector<32x32xf32> to vector<8x32xf32>
    %cst_25 = arith.constant dense<0.000000e+00> : vector<8x32xf32>
    %44 = tpu.matmul %42, %43, %cst_25 {dimension_numbers = #tpu.dot_dimension_numbers<[1], [0], [0], [1], [0, 0, 1, 1], [], []>} : vector<8x8xf32>, vector<8x32xf32>, vector<8x32xf32> -> vector<8x32xf32>
    %45 = arith.addf %24, %44 : vector<8x32xf32>
    %46 = vector.extract_strided_slice %17 {offsets = [0, 8], sizes = [8, 8], strides = [1, 1]} : vector<8x32xf32> to vector<8x8xf32>
    %47 = vector.extract_strided_slice %18 {offsets = [0, 8], sizes = [8, 8], strides = [1, 1]} : vector<8x32xf32> to vector<8x8xf32>
    %cst_26 = arith.constant dense<0.000000e+00> : vector<8x8xf32>
    %48 = tpu.matmul %46, %47, %cst_26 {dimension_numbers = #tpu.dot_dimension_numbers<[1], [1], [0], [0], [0, 0, 1, 0], [], []>} : vector<8x8xf32>, vector<8x8xf32>, vector<8x8xf32> -> vector<8x8xf32>
    %cst_27 = arith.constant 0.353553385 : f32
    %49 = vector.broadcast %cst_27 : f32 to vector<8x8xf32>
    %50 = arith.mulf %48, %49 : vector<8x8xf32>
    %51 = vector.broadcast %6 : vector<1x8xf32> to vector<8x8xf32>
    %52 = arith.addf %50, %51 : vector<8x8xf32>
    %cst_28 = arith.constant dense<0xFF800000> : vector<8xf32>
    %53 = vector.multi_reduction <maximumf>, %52, %cst_28 [1] : vector<8x8xf32> to vector<8xf32>
    %54 = vector.shape_cast %53 : vector<8xf32> to vector<8x1xf32>
    %55 = vector.broadcast %54 : vector<8x1xf32> to vector<8x8xf32>
    %56 = arith.subf %52, %55 : vector<8x8xf32>
    %57 = math.exp %56 : vector<8x8xf32>
    %cst_29 = arith.constant dense<0.000000e+00> : vector<8xf32>
    %58 = vector.multi_reduction <add>, %57, %cst_29 [1] : vector<8x8xf32> to vector<8xf32>
    %59 = vector.shape_cast %58 : vector<8xf32> to vector<8x1xf32>
    %60 = vector.broadcast %59 : vector<8x1xf32> to vector<8x8xf32>
    %61 = arith.divf %57, %60 : vector<8x8xf32>
    %62 = vector.extract_strided_slice %19 {offsets = [0, 8], sizes = [8, 8], strides = [1, 1]} : vector<8x32xf32> to vector<8x8xf32>
    %cst_30 = arith.constant dense<0.000000e+00> : vector<8x8xf32>
    %63 = tpu.matmul %61, %62, %cst_30 {dimension_numbers = #tpu.dot_dimension_numbers<[1], [0], [0], [1], [0, 0, 1, 1], [], []>} : vector<8x8xf32>, vector<8x8xf32>, vector<8x8xf32> -> vector<8x8xf32>
    %64 = vector.extract_strided_slice %21 {offsets = [8, 0], sizes = [8, 32], strides = [1, 1]} : vector<32x32xf32> to vector<8x32xf32>
    %cst_31 = arith.constant dense<0.000000e+00> : vector<8x32xf32>
    %65 = tpu.matmul %63, %64, %cst_31 {dimension_numbers = #tpu.dot_dimension_numbers<[1], [0], [0], [1], [0, 0, 1, 1], [], []>} : vector<8x8xf32>, vector<8x32xf32>, vector<8x32xf32> -> vector<8x32xf32>
    %66 = arith.addf %45, %65 : vector<8x32xf32>
    %67 = vector.extract_strided_slice %17 {offsets = [0, 16], sizes = [8, 8], strides = [1, 1]} : vector<8x32xf32> to vector<8x8xf32>
    %68 = vector.extract_strided_slice %18 {offsets = [0, 16], sizes = [8, 8], strides = [1, 1]} : vector<8x32xf32> to vector<8x8xf32>
    %cst_32 = arith.constant dense<0.000000e+00> : vector<8x8xf32>
    %69 = tpu.matmul %67, %68, %cst_32 {dimension_numbers = #tpu.dot_dimension_numbers<[1], [1], [0], [0], [0, 0, 1, 0], [], []>} : vector<8x8xf32>, vector<8x8xf32>, vector<8x8xf32> -> vector<8x8xf32>
    %cst_33 = arith.constant 0.353553385 : f32
    %70 = vector.broadcast %cst_33 : f32 to vector<8x8xf32>
    %71 = arith.mulf %69, %70 : vector<8x8xf32>
    %72 = vector.broadcast %6 : vector<1x8xf32> to vector<8x8xf32>
    %73 = arith.addf %71, %72 : vector<8x8xf32>
    %cst_34 = arith.constant dense<0xFF800000> : vector<8xf32>
    %74 = vector.multi_reduction <maximumf>, %73, %cst_34 [1] : vector<8x8xf32> to vector<8xf32>
    %75 = vector.shape_cast %74 : vector<8xf32> to vector<8x1xf32>
    %76 = vector.broadcast %75 : vector<8x1xf32> to vector<8x8xf32>
    %77 = arith.subf %73, %76 : vector<8x8xf32>
    %78 = math.exp %77 : vector<8x8xf32>
    %cst_35 = arith.constant dense<0.000000e+00> : vector<8xf32>
    %79 = vector.multi_reduction <add>, %78, %cst_35 [1] : vector<8x8xf32> to vector<8xf32>
    %80 = vector.shape_cast %79 : vector<8xf32> to vector<8x1xf32>
    %81 = vector.broadcast %80 : vector<8x1xf32> to vector<8x8xf32>
    %82 = arith.divf %78, %81 : vector<8x8xf32>
    %83 = vector.extract_strided_slice %19 {offsets = [0, 16], sizes = [8, 8], strides = [1, 1]} : vector<8x32xf32> to vector<8x8xf32>
    %cst_36 = arith.constant dense<0.000000e+00> : vector<8x8xf32>
    %84 = tpu.matmul %82, %83, %cst_36 {dimension_numbers = #tpu.dot_dimension_numbers<[1], [0], [0], [1], [0, 0, 1, 1], [], []>} : vector<8x8xf32>, vector<8x8xf32>, vector<8x8xf32> -> vector<8x8xf32>
    %85 = vector.extract_strided_slice %21 {offsets = [16, 0], sizes = [8, 32], strides = [1, 1]} : vector<32x32xf32> to vector<8x32xf32>
    %cst_37 = arith.constant dense<0.000000e+00> : vector<8x32xf32>
    %86 = tpu.matmul %84, %85, %cst_37 {dimension_numbers = #tpu.dot_dimension_numbers<[1], [0], [0], [1], [0, 0, 1, 1], [], []>} : vector<8x8xf32>, vector<8x32xf32>, vector<8x32xf32> -> vector<8x32xf32>
    %87 = arith.addf %66, %86 : vector<8x32xf32>
    %88 = vector.extract_strided_slice %17 {offsets = [0, 24], sizes = [8, 8], strides = [1, 1]} : vector<8x32xf32> to vector<8x8xf32>
    %89 = vector.extract_strided_slice %18 {offsets = [0, 24], sizes = [8, 8], strides = [1, 1]} : vector<8x32xf32> to vector<8x8xf32>
    %cst_38 = arith.constant dense<0.000000e+00> : vector<8x8xf32>
    %90 = tpu.matmul %88, %89, %cst_38 {dimension_numbers = #tpu.dot_dimension_numbers<[1], [1], [0], [0], [0, 0, 1, 0], [], []>} : vector<8x8xf32>, vector<8x8xf32>, vector<8x8xf32> -> vector<8x8xf32>
    %cst_39 = arith.constant 0.353553385 : f32
    %91 = vector.broadcast %cst_39 : f32 to vector<8x8xf32>
    %92 = arith.mulf %90, %91 : vector<8x8xf32>
    %93 = vector.broadcast %6 : vector<1x8xf32> to vector<8x8xf32>
    %94 = arith.addf %92, %93 : vector<8x8xf32>
    %cst_40 = arith.constant dense<0xFF800000> : vector<8xf32>
    %95 = vector.multi_reduction <maximumf>, %94, %cst_40 [1] : vector<8x8xf32> to vector<8xf32>
    %96 = vector.shape_cast %95 : vector<8xf32> to vector<8x1xf32>
    %97 = vector.broadcast %96 : vector<8x1xf32> to vector<8x8xf32>
    %98 = arith.subf %94, %97 : vector<8x8xf32>
    %99 = math.exp %98 : vector<8x8xf32>
    %cst_41 = arith.constant dense<0.000000e+00> : vector<8xf32>
    %100 = vector.multi_reduction <add>, %99, %cst_41 [1] : vector<8x8xf32> to vector<8xf32>
    %101 = vector.shape_cast %100 : vector<8xf32> to vector<8x1xf32>
    %102 = vector.broadcast %101 : vector<8x1xf32> to vector<8x8xf32>
    %103 = arith.divf %99, %102 : vector<8x8xf32>
    %104 = vector.extract_strided_slice %19 {offsets = [0, 24], sizes = [8, 8], strides = [1, 1]} : vector<8x32xf32> to vector<8x8xf32>
    %cst_42 = arith.constant dense<0.000000e+00> : vector<8x8xf32>
    %105 = tpu.matmul %103, %104, %cst_42 {dimension_numbers = #tpu.dot_dimension_numbers<[1], [0], [0], [1], [0, 0, 1, 1], [], []>} : vector<8x8xf32>, vector<8x8xf32>, vector<8x8xf32> -> vector<8x8xf32>
    %106 = vector.extract_strided_slice %21 {offsets = [24, 0], sizes = [8, 32], strides = [1, 1]} : vector<32x32xf32> to vector<8x32xf32>
    %cst_43 = arith.constant dense<0.000000e+00> : vector<8x32xf32>
    %107 = tpu.matmul %105, %106, %cst_43 {dimension_numbers = #tpu.dot_dimension_numbers<[1], [0], [0], [1], [0, 0, 1, 1], [], []>} : vector<8x8xf32>, vector<8x32xf32>, vector<8x32xf32> -> vector<8x32xf32>
    %108 = arith.addf %87, %107 : vector<8x32xf32>
    %109 = vector.broadcast %23 : vector<1x32xf32> to vector<8x32xf32>
    %110 = arith.addf %108, %109 : vector<8x32xf32>
    %111 = arith.addf %8, %110 : vector<8x32xf32>
    %c0_44 = arith.constant 0 : index
    %c0_45 = arith.constant 0 : index
    %c0_46 = arith.constant 0 : index
    %112 = vector.load %arg8[%c0_44, %c0_45, %c0_46] : memref<2x1x32xf32, #tpu.memory_space<vmem>>, vector<1x1x32xf32>
    %113 = vector.shape_cast %112 : vector<1x1x32xf32> to vector<1x32xf32>
    %c0_47 = arith.constant 0 : index
    %c0_48 = arith.constant 0 : index
    %c0_49 = arith.constant 0 : index
    %114 = vector.load %arg9[%c0_47, %c0_48, %c0_49] : memref<2x1x32xf32, #tpu.memory_space<vmem>>, vector<1x1x32xf32>
    %115 = vector.shape_cast %114 : vector<1x1x32xf32> to vector<1x32xf32>
    %cst_50 = arith.constant dense<0.000000e+00> : vector<8xf32>
    %116 = vector.multi_reduction <add>, %111, %cst_50 [1] : vector<8x32xf32> to vector<8xf32>
    %117 = vector.shape_cast %116 : vector<8xf32> to vector<8x1xf32>
    %cst_51 = arith.constant 3.200000e+01 : f32
    %118 = vector.broadcast %cst_51 : f32 to vector<8x1xf32>
    %119 = arith.divf %117, %118 : vector<8x1xf32>
    %120 = vector.broadcast %119 : vector<8x1xf32> to vector<8x32xf32>
    %121 = arith.subf %111, %120 : vector<8x32xf32>
    %122 = arith.mulf %121, %121 : vector<8x32xf32>
    %cst_52 = arith.constant dense<0.000000e+00> : vector<8xf32>
    %123 = vector.multi_reduction <add>, %122, %cst_52 [1] : vector<8x32xf32> to vector<8xf32>
    %124 = vector.shape_cast %123 : vector<8xf32> to vector<8x1xf32>
    %cst_53 = arith.constant 3.200000e+01 : f32
    %125 = vector.broadcast %cst_53 : f32 to vector<8x1xf32>
    %126 = arith.divf %124, %125 : vector<8x1xf32>
    %127 = vector.broadcast %119 : vector<8x1xf32> to vector<8x32xf32>
    %128 = arith.subf %111, %127 : vector<8x32xf32>
    %cst_54 = arith.constant 9.99999974E-6 : f32
    %129 = vector.broadcast %cst_54 : f32 to vector<8x1xf32>
    %130 = arith.addf %126, %129 : vector<8x1xf32>
    %131 = math.rsqrt %130 : vector<8x1xf32>
    %132 = vector.broadcast %131 : vector<8x1xf32> to vector<8x32xf32>
    %133 = arith.mulf %128, %132 : vector<8x32xf32>
    %134 = vector.broadcast %113 : vector<1x32xf32> to vector<8x32xf32>
    %135 = arith.mulf %133, %134 : vector<8x32xf32>
    %136 = vector.broadcast %115 : vector<1x32xf32> to vector<8x32xf32>
    %137 = arith.addf %135, %136 : vector<8x32xf32>
    %138 = arith.truncf %137 : vector<8x32xf32> to vector<8x32xbf16>
    %c0_55 = arith.constant 0 : index
    %c0_56 = arith.constant 0 : index
    %c0_57 = arith.constant 0 : index
    %139 = vector.load %arg10[%c0_55, %c0_56, %c0_57] : memref<2x32x128xbf16, #tpu.memory_space<vmem>>, vector<1x32x128xbf16>
    %140 = vector.shape_cast %139 : vector<1x32x128xbf16> to vector<32x128xbf16>
    %cst_58 = arith.constant dense<0.000000e+00> : vector<8x128xf32>
    %141 = tpu.matmul %138, %140, %cst_58 {dimension_numbers = #tpu.dot_dimension_numbers<[1], [0], [0], [1], [0, 0, 1, 1], [], []>} : vector<8x32xbf16>, vector<32x128xbf16>, vector<8x128xf32> -> vector<8x128xf32>
    %c0_59 = arith.constant 0 : index
    %c0_60 = arith.constant 0 : index
    %c0_61 = arith.constant 0 : index
    %142 = vector.load %arg11[%c0_59, %c0_60, %c0_61] : memref<2x1x128xf32, #tpu.memory_space<vmem>>, vector<1x1x128xf32>
    %143 = vector.shape_cast %142 : vector<1x1x128xf32> to vector<1x128xf32>
    %144 = vector.broadcast %143 : vector<1x128xf32> to vector<8x128xf32>
    %145 = arith.addf %141, %144 : vector<8x128xf32>
    %cst_62 = arith.constant 0.000000e+00 : f32
    %146 = vector.broadcast %cst_62 : f32 to vector<8x128xf32>
    %147 = arith.maximumf %145, %146 : vector<8x128xf32>
    %148 = arith.truncf %147 : vector<8x128xf32> to vector<8x128xbf16>
    %c0_63 = arith.constant 0 : index
    %c0_64 = arith.constant 0 : index
    %c0_65 = arith.constant 0 : index
    %149 = vector.load %arg12[%c0_63, %c0_64, %c0_65] : memref<2x128x32xbf16, #tpu.memory_space<vmem>>, vector<1x128x32xbf16>
    %150 = vector.shape_cast %149 : vector<1x128x32xbf16> to vector<128x32xbf16>
    %cst_66 = arith.constant dense<0.000000e+00> : vector<8x32xf32>
    %151 = tpu.matmul %148, %150, %cst_66 {dimension_numbers = #tpu.dot_dimension_numbers<[1], [0], [0], [1], [0, 0, 1, 1], [], []>} : vector<8x128xbf16>, vector<128x32xbf16>, vector<8x32xf32> -> vector<8x32xf32>
    %c0_67 = arith.constant 0 : index
    %c0_68 = arith.constant 0 : index
    %c0_69 = arith.constant 0 : index
    %152 = vector.load %arg13[%c0_67, %c0_68, %c0_69] : memref<2x1x32xf32, #tpu.memory_space<vmem>>, vector<1x1x32xf32>
    %153 = vector.shape_cast %152 : vector<1x1x32xf32> to vector<1x32xf32>
    %154 = vector.broadcast %153 : vector<1x32xf32> to vector<8x32xf32>
    %155 = arith.addf %151, %154 : vector<8x32xf32>
    %156 = arith.addf %137, %155 : vector<8x32xf32>
    %c0_70 = arith.constant 0 : index
    %c0_71 = arith.constant 0 : index
    %c0_72 = arith.constant 0 : index
    %157 = vector.load %arg14[%c0_70, %c0_71, %c0_72] : memref<2x1x32xf32, #tpu.memory_space<vmem>>, vector<1x1x32xf32>
    %158 = vector.shape_cast %157 : vector<1x1x32xf32> to vector<1x32xf32>
    %c0_73 = arith.constant 0 : index
    %c0_74 = arith.constant 0 : index
    %c0_75 = arith.constant 0 : index
    %159 = vector.load %arg15[%c0_73, %c0_74, %c0_75] : memref<2x1x32xf32, #tpu.memory_space<vmem>>, vector<1x1x32xf32>
    %160 = vector.shape_cast %159 : vector<1x1x32xf32> to vector<1x32xf32>
    %cst_76 = arith.constant dense<0.000000e+00> : vector<8xf32>
    %161 = vector.multi_reduction <add>, %156, %cst_76 [1] : vector<8x32xf32> to vector<8xf32>
    %162 = vector.shape_cast %161 : vector<8xf32> to vector<8x1xf32>
    %cst_77 = arith.constant 3.200000e+01 : f32
    %163 = vector.broadcast %cst_77 : f32 to vector<8x1xf32>
    %164 = arith.divf %162, %163 : vector<8x1xf32>
    %165 = vector.broadcast %164 : vector<8x1xf32> to vector<8x32xf32>
    %166 = arith.subf %156, %165 : vector<8x32xf32>
    %167 = arith.mulf %166, %166 : vector<8x32xf32>
    %cst_78 = arith.constant dense<0.000000e+00> : vector<8xf32>
    %168 = vector.multi_reduction <add>, %167, %cst_78 [1] : vector<8x32xf32> to vector<8xf32>
    %169 = vector.shape_cast %168 : vector<8xf32> to vector<8x1xf32>
    %cst_79 = arith.constant 3.200000e+01 : f32
    %170 = vector.broadcast %cst_79 : f32 to vector<8x1xf32>
    %171 = arith.divf %169, %170 : vector<8x1xf32>
    %172 = vector.broadcast %164 : vector<8x1xf32> to vector<8x32xf32>
    %173 = arith.subf %156, %172 : vector<8x32xf32>
    %cst_80 = arith.constant 9.99999974E-6 : f32
    %174 = vector.broadcast %cst_80 : f32 to vector<8x1xf32>
    %175 = arith.addf %171, %174 : vector<8x1xf32>
    %176 = math.rsqrt %175 : vector<8x1xf32>
    %177 = vector.broadcast %176 : vector<8x1xf32> to vector<8x32xf32>
    %178 = arith.mulf %173, %177 : vector<8x32xf32>
    %179 = vector.broadcast %158 : vector<1x32xf32> to vector<8x32xf32>
    %180 = arith.mulf %178, %179 : vector<8x32xf32>
    %181 = vector.broadcast %160 : vector<1x32xf32> to vector<8x32xf32>
    %182 = arith.addf %180, %181 : vector<8x32xf32>
    %183 = arith.truncf %182 : vector<8x32xf32> to vector<8x32xbf16>
    %c1 = arith.constant 1 : index
    %c0_81 = arith.constant 0 : index
    %c0_82 = arith.constant 0 : index
    %184 = vector.load %arg4[%c1, %c0_81, %c0_82] : memref<2x32x96xbf16, #tpu.memory_space<vmem>>, vector<1x32x96xbf16>
    %185 = vector.shape_cast %184 : vector<1x32x96xbf16> to vector<32x96xbf16>
    %cst_83 = arith.constant dense<0.000000e+00> : vector<8x96xf32>
    %186 = tpu.matmul %183, %185, %cst_83 {dimension_numbers = #tpu.dot_dimension_numbers<[1], [0], [0], [1], [0, 0, 1, 1], [], []>} : vector<8x32xbf16>, vector<32x96xbf16>, vector<8x96xf32> -> vector<8x96xf32>
    %c1_84 = arith.constant 1 : index
    %c0_85 = arith.constant 0 : index
    %c0_86 = arith.constant 0 : index
    %187 = vector.load %arg5[%c1_84, %c0_85, %c0_86] : memref<2x1x96xf32, #tpu.memory_space<vmem>>, vector<1x1x96xf32>
    %188 = vector.shape_cast %187 : vector<1x1x96xf32> to vector<1x96xf32>
    %189 = vector.broadcast %188 : vector<1x96xf32> to vector<8x96xf32>
    %190 = arith.addf %186, %189 : vector<8x96xf32>
    %191 = vector.extract_strided_slice %190 {offsets = [0, 0], sizes = [8, 32], strides = [1, 1]} : vector<8x96xf32> to vector<8x32xf32>
    %192 = vector.extract_strided_slice %190 {offsets = [0, 32], sizes = [8, 32], strides = [1, 1]} : vector<8x96xf32> to vector<8x32xf32>
    %193 = vector.extract_strided_slice %190 {offsets = [0, 64], sizes = [8, 32], strides = [1, 1]} : vector<8x96xf32> to vector<8x32xf32>
    %c1_87 = arith.constant 1 : index
    %c0_88 = arith.constant 0 : index
    %c0_89 = arith.constant 0 : index
    %194 = vector.load %arg6[%c1_87, %c0_88, %c0_89] : memref<2x32x32xf32, #tpu.memory_space<vmem>>, vector<1x32x32xf32>
    %195 = vector.shape_cast %194 : vector<1x32x32xf32> to vector<32x32xf32>
    %c1_90 = arith.constant 1 : index
    %c0_91 = arith.constant 0 : index
    %c0_92 = arith.constant 0 : index
    %196 = vector.load %arg7[%c1_90, %c0_91, %c0_92] : memref<2x1x32xf32, #tpu.memory_space<vmem>>, vector<1x1x32xf32>
    %197 = vector.shape_cast %196 : vector<1x1x32xf32> to vector<1x32xf32>
    %cst_93 = arith.constant 0.000000e+00 : f32
    %198 = vector.broadcast %cst_93 : f32 to vector<8x32xf32>
    %199 = vector.extract_strided_slice %191 {offsets = [0, 0], sizes = [8, 8], strides = [1, 1]} : vector<8x32xf32> to vector<8x8xf32>
    %200 = vector.extract_strided_slice %192 {offsets = [0, 0], sizes = [8, 8], strides = [1, 1]} : vector<8x32xf32> to vector<8x8xf32>
    %cst_94 = arith.constant dense<0.000000e+00> : vector<8x8xf32>
    %201 = tpu.matmul %199, %200, %cst_94 {dimension_numbers = #tpu.dot_dimension_numbers<[1], [1], [0], [0], [0, 0, 1, 0], [], []>} : vector<8x8xf32>, vector<8x8xf32>, vector<8x8xf32> -> vector<8x8xf32>
    %cst_95 = arith.constant 0.353553385 : f32
    %202 = vector.broadcast %cst_95 : f32 to vector<8x8xf32>
    %203 = arith.mulf %201, %202 : vector<8x8xf32>
    %204 = vector.broadcast %6 : vector<1x8xf32> to vector<8x8xf32>
    %205 = arith.addf %203, %204 : vector<8x8xf32>
    %cst_96 = arith.constant dense<0xFF800000> : vector<8xf32>
    %206 = vector.multi_reduction <maximumf>, %205, %cst_96 [1] : vector<8x8xf32> to vector<8xf32>
    %207 = vector.shape_cast %206 : vector<8xf32> to vector<8x1xf32>
    %208 = vector.broadcast %207 : vector<8x1xf32> to vector<8x8xf32>
    %209 = arith.subf %205, %208 : vector<8x8xf32>
    %210 = math.exp %209 : vector<8x8xf32>
    %cst_97 = arith.constant dense<0.000000e+00> : vector<8xf32>
    %211 = vector.multi_reduction <add>, %210, %cst_97 [1] : vector<8x8xf32> to vector<8xf32>
    %212 = vector.shape_cast %211 : vector<8xf32> to vector<8x1xf32>
    %213 = vector.broadcast %212 : vector<8x1xf32> to vector<8x8xf32>
    %214 = arith.divf %210, %213 : vector<8x8xf32>
    %215 = vector.extract_strided_slice %193 {offsets = [0, 0], sizes = [8, 8], strides = [1, 1]} : vector<8x32xf32> to vector<8x8xf32>
    %cst_98 = arith.constant dense<0.000000e+00> : vector<8x8xf32>
    %216 = tpu.matmul %214, %215, %cst_98 {dimension_numbers = #tpu.dot_dimension_numbers<[1], [0], [0], [1], [0, 0, 1, 1], [], []>} : vector<8x8xf32>, vector<8x8xf32>, vector<8x8xf32> -> vector<8x8xf32>
    %217 = vector.extract_strided_slice %195 {offsets = [0, 0], sizes = [8, 32], strides = [1, 1]} : vector<32x32xf32> to vector<8x32xf32>
    %cst_99 = arith.constant dense<0.000000e+00> : vector<8x32xf32>
    %218 = tpu.matmul %216, %217, %cst_99 {dimension_numbers = #tpu.dot_dimension_numbers<[1], [0], [0], [1], [0, 0, 1, 1], [], []>} : vector<8x8xf32>, vector<8x32xf32>, vector<8x32xf32> -> vector<8x32xf32>
    %219 = arith.addf %198, %218 : vector<8x32xf32>
    %220 = vector.extract_strided_slice %191 {offsets = [0, 8], sizes = [8, 8], strides = [1, 1]} : vector<8x32xf32> to vector<8x8xf32>
    %221 = vector.extract_strided_slice %192 {offsets = [0, 8], sizes = [8, 8], strides = [1, 1]} : vector<8x32xf32> to vector<8x8xf32>
    %cst_100 = arith.constant dense<0.000000e+00> : vector<8x8xf32>
    %222 = tpu.matmul %220, %221, %cst_100 {dimension_numbers = #tpu.dot_dimension_numbers<[1], [1], [0], [0], [0, 0, 1, 0], [], []>} : vector<8x8xf32>, vector<8x8xf32>, vector<8x8xf32> -> vector<8x8xf32>
    %cst_101 = arith.constant 0.353553385 : f32
    %223 = vector.broadcast %cst_101 : f32 to vector<8x8xf32>
    %224 = arith.mulf %222, %223 : vector<8x8xf32>
    %225 = vector.broadcast %6 : vector<1x8xf32> to vector<8x8xf32>
    %226 = arith.addf %224, %225 : vector<8x8xf32>
    %cst_102 = arith.constant dense<0xFF800000> : vector<8xf32>
    %227 = vector.multi_reduction <maximumf>, %226, %cst_102 [1] : vector<8x8xf32> to vector<8xf32>
    %228 = vector.shape_cast %227 : vector<8xf32> to vector<8x1xf32>
    %229 = vector.broadcast %228 : vector<8x1xf32> to vector<8x8xf32>
    %230 = arith.subf %226, %229 : vector<8x8xf32>
    %231 = math.exp %230 : vector<8x8xf32>
    %cst_103 = arith.constant dense<0.000000e+00> : vector<8xf32>
    %232 = vector.multi_reduction <add>, %231, %cst_103 [1] : vector<8x8xf32> to vector<8xf32>
    %233 = vector.shape_cast %232 : vector<8xf32> to vector<8x1xf32>
    %234 = vector.broadcast %233 : vector<8x1xf32> to vector<8x8xf32>
    %235 = arith.divf %231, %234 : vector<8x8xf32>
    %236 = vector.extract_strided_slice %193 {offsets = [0, 8], sizes = [8, 8], strides = [1, 1]} : vector<8x32xf32> to vector<8x8xf32>
    %cst_104 = arith.constant dense<0.000000e+00> : vector<8x8xf32>
    %237 = tpu.matmul %235, %236, %cst_104 {dimension_numbers = #tpu.dot_dimension_numbers<[1], [0], [0], [1], [0, 0, 1, 1], [], []>} : vector<8x8xf32>, vector<8x8xf32>, vector<8x8xf32> -> vector<8x8xf32>
    %238 = vector.extract_strided_slice %195 {offsets = [8, 0], sizes = [8, 32], strides = [1, 1]} : vector<32x32xf32> to vector<8x32xf32>
    %cst_105 = arith.constant dense<0.000000e+00> : vector<8x32xf32>
    %239 = tpu.matmul %237, %238, %cst_105 {dimension_numbers = #tpu.dot_dimension_numbers<[1], [0], [0], [1], [0, 0, 1, 1], [], []>} : vector<8x8xf32>, vector<8x32xf32>, vector<8x32xf32> -> vector<8x32xf32>
    %240 = arith.addf %219, %239 : vector<8x32xf32>
    %241 = vector.extract_strided_slice %191 {offsets = [0, 16], sizes = [8, 8], strides = [1, 1]} : vector<8x32xf32> to vector<8x8xf32>
    %242 = vector.extract_strided_slice %192 {offsets = [0, 16], sizes = [8, 8], strides = [1, 1]} : vector<8x32xf32> to vector<8x8xf32>
    %cst_106 = arith.constant dense<0.000000e+00> : vector<8x8xf32>
    %243 = tpu.matmul %241, %242, %cst_106 {dimension_numbers = #tpu.dot_dimension_numbers<[1], [1], [0], [0], [0, 0, 1, 0], [], []>} : vector<8x8xf32>, vector<8x8xf32>, vector<8x8xf32> -> vector<8x8xf32>
    %cst_107 = arith.constant 0.353553385 : f32
    %244 = vector.broadcast %cst_107 : f32 to vector<8x8xf32>
    %245 = arith.mulf %243, %244 : vector<8x8xf32>
    %246 = vector.broadcast %6 : vector<1x8xf32> to vector<8x8xf32>
    %247 = arith.addf %245, %246 : vector<8x8xf32>
    %cst_108 = arith.constant dense<0xFF800000> : vector<8xf32>
    %248 = vector.multi_reduction <maximumf>, %247, %cst_108 [1] : vector<8x8xf32> to vector<8xf32>
    %249 = vector.shape_cast %248 : vector<8xf32> to vector<8x1xf32>
    %250 = vector.broadcast %249 : vector<8x1xf32> to vector<8x8xf32>
    %251 = arith.subf %247, %250 : vector<8x8xf32>
    %252 = math.exp %251 : vector<8x8xf32>
    %cst_109 = arith.constant dense<0.000000e+00> : vector<8xf32>
    %253 = vector.multi_reduction <add>, %252, %cst_109 [1] : vector<8x8xf32> to vector<8xf32>
    %254 = vector.shape_cast %253 : vector<8xf32> to vector<8x1xf32>
    %255 = vector.broadcast %254 : vector<8x1xf32> to vector<8x8xf32>
    %256 = arith.divf %252, %255 : vector<8x8xf32>
    %257 = vector.extract_strided_slice %193 {offsets = [0, 16], sizes = [8, 8], strides = [1, 1]} : vector<8x32xf32> to vector<8x8xf32>
    %cst_110 = arith.constant dense<0.000000e+00> : vector<8x8xf32>
    %258 = tpu.matmul %256, %257, %cst_110 {dimension_numbers = #tpu.dot_dimension_numbers<[1], [0], [0], [1], [0, 0, 1, 1], [], []>} : vector<8x8xf32>, vector<8x8xf32>, vector<8x8xf32> -> vector<8x8xf32>
    %259 = vector.extract_strided_slice %195 {offsets = [16, 0], sizes = [8, 32], strides = [1, 1]} : vector<32x32xf32> to vector<8x32xf32>
    %cst_111 = arith.constant dense<0.000000e+00> : vector<8x32xf32>
    %260 = tpu.matmul %258, %259, %cst_111 {dimension_numbers = #tpu.dot_dimension_numbers<[1], [0], [0], [1], [0, 0, 1, 1], [], []>} : vector<8x8xf32>, vector<8x32xf32>, vector<8x32xf32> -> vector<8x32xf32>
    %261 = arith.addf %240, %260 : vector<8x32xf32>
    %262 = vector.extract_strided_slice %191 {offsets = [0, 24], sizes = [8, 8], strides = [1, 1]} : vector<8x32xf32> to vector<8x8xf32>
    %263 = vector.extract_strided_slice %192 {offsets = [0, 24], sizes = [8, 8], strides = [1, 1]} : vector<8x32xf32> to vector<8x8xf32>
    %cst_112 = arith.constant dense<0.000000e+00> : vector<8x8xf32>
    %264 = tpu.matmul %262, %263, %cst_112 {dimension_numbers = #tpu.dot_dimension_numbers<[1], [1], [0], [0], [0, 0, 1, 0], [], []>} : vector<8x8xf32>, vector<8x8xf32>, vector<8x8xf32> -> vector<8x8xf32>
    %cst_113 = arith.constant 0.353553385 : f32
    %265 = vector.broadcast %cst_113 : f32 to vector<8x8xf32>
    %266 = arith.mulf %264, %265 : vector<8x8xf32>
    %267 = vector.broadcast %6 : vector<1x8xf32> to vector<8x8xf32>
    %268 = arith.addf %266, %267 : vector<8x8xf32>
    %cst_114 = arith.constant dense<0xFF800000> : vector<8xf32>
    %269 = vector.multi_reduction <maximumf>, %268, %cst_114 [1] : vector<8x8xf32> to vector<8xf32>
    %270 = vector.shape_cast %269 : vector<8xf32> to vector<8x1xf32>
    %271 = vector.broadcast %270 : vector<8x1xf32> to vector<8x8xf32>
    %272 = arith.subf %268, %271 : vector<8x8xf32>
    %273 = math.exp %272 : vector<8x8xf32>
    %cst_115 = arith.constant dense<0.000000e+00> : vector<8xf32>
    %274 = vector.multi_reduction <add>, %273, %cst_115 [1] : vector<8x8xf32> to vector<8xf32>
    %275 = vector.shape_cast %274 : vector<8xf32> to vector<8x1xf32>
    %276 = vector.broadcast %275 : vector<8x1xf32> to vector<8x8xf32>
    %277 = arith.divf %273, %276 : vector<8x8xf32>
    %278 = vector.extract_strided_slice %193 {offsets = [0, 24], sizes = [8, 8], strides = [1, 1]} : vector<8x32xf32> to vector<8x8xf32>
    %cst_116 = arith.constant dense<0.000000e+00> : vector<8x8xf32>
    %279 = tpu.matmul %277, %278, %cst_116 {dimension_numbers = #tpu.dot_dimension_numbers<[1], [0], [0], [1], [0, 0, 1, 1], [], []>} : vector<8x8xf32>, vector<8x8xf32>, vector<8x8xf32> -> vector<8x8xf32>
    %280 = vector.extract_strided_slice %195 {offsets = [24, 0], sizes = [8, 32], strides = [1, 1]} : vector<32x32xf32> to vector<8x32xf32>
    %cst_117 = arith.constant dense<0.000000e+00> : vector<8x32xf32>
    %281 = tpu.matmul %279, %280, %cst_117 {dimension_numbers = #tpu.dot_dimension_numbers<[1], [0], [0], [1], [0, 0, 1, 1], [], []>} : vector<8x8xf32>, vector<8x32xf32>, vector<8x32xf32> -> vector<8x32xf32>
    %282 = arith.addf %261, %281 : vector<8x32xf32>
    %283 = vector.broadcast %197 : vector<1x32xf32> to vector<8x32xf32>
    %284 = arith.addf %282, %283 : vector<8x32xf32>
    %285 = arith.addf %182, %284 : vector<8x32xf32>
    %c1_118 = arith.constant 1 : index
    %c0_119 = arith.constant 0 : index
    %c0_120 = arith.constant 0 : index
    %286 = vector.load %arg8[%c1_118, %c0_119, %c0_120] : memref<2x1x32xf32, #tpu.memory_space<vmem>>, vector<1x1x32xf32>
    %287 = vector.shape_cast %286 : vector<1x1x32xf32> to vector<1x32xf32>
    %c1_121 = arith.constant 1 : index
    %c0_122 = arith.constant 0 : index
    %c0_123 = arith.constant 0 : index
    %288 = vector.load %arg9[%c1_121, %c0_122, %c0_123] : memref<2x1x32xf32, #tpu.memory_space<vmem>>, vector<1x1x32xf32>
    %289 = vector.shape_cast %288 : vector<1x1x32xf32> to vector<1x32xf32>
    %cst_124 = arith.constant dense<0.000000e+00> : vector<8xf32>
    %290 = vector.multi_reduction <add>, %285, %cst_124 [1] : vector<8x32xf32> to vector<8xf32>
    %291 = vector.shape_cast %290 : vector<8xf32> to vector<8x1xf32>
    %cst_125 = arith.constant 3.200000e+01 : f32
    %292 = vector.broadcast %cst_125 : f32 to vector<8x1xf32>
    %293 = arith.divf %291, %292 : vector<8x1xf32>
    %294 = vector.broadcast %293 : vector<8x1xf32> to vector<8x32xf32>
    %295 = arith.subf %285, %294 : vector<8x32xf32>
    %296 = arith.mulf %295, %295 : vector<8x32xf32>
    %cst_126 = arith.constant dense<0.000000e+00> : vector<8xf32>
    %297 = vector.multi_reduction <add>, %296, %cst_126 [1] : vector<8x32xf32> to vector<8xf32>
    %298 = vector.shape_cast %297 : vector<8xf32> to vector<8x1xf32>
    %cst_127 = arith.constant 3.200000e+01 : f32
    %299 = vector.broadcast %cst_127 : f32 to vector<8x1xf32>
    %300 = arith.divf %298, %299 : vector<8x1xf32>
    %301 = vector.broadcast %293 : vector<8x1xf32> to vector<8x32xf32>
    %302 = arith.subf %285, %301 : vector<8x32xf32>
    %cst_128 = arith.constant 9.99999974E-6 : f32
    %303 = vector.broadcast %cst_128 : f32 to vector<8x1xf32>
    %304 = arith.addf %300, %303 : vector<8x1xf32>
    %305 = math.rsqrt %304 : vector<8x1xf32>
    %306 = vector.broadcast %305 : vector<8x1xf32> to vector<8x32xf32>
    %307 = arith.mulf %302, %306 : vector<8x32xf32>
    %308 = vector.broadcast %287 : vector<1x32xf32> to vector<8x32xf32>
    %309 = arith.mulf %307, %308 : vector<8x32xf32>
    %310 = vector.broadcast %289 : vector<1x32xf32> to vector<8x32xf32>
    %311 = arith.addf %309, %310 : vector<8x32xf32>
    %312 = arith.truncf %311 : vector<8x32xf32> to vector<8x32xbf16>
    %c1_129 = arith.constant 1 : index
    %c0_130 = arith.constant 0 : index
    %c0_131 = arith.constant 0 : index
    %313 = vector.load %arg10[%c1_129, %c0_130, %c0_131] : memref<2x32x128xbf16, #tpu.memory_space<vmem>>, vector<1x32x128xbf16>
    %314 = vector.shape_cast %313 : vector<1x32x128xbf16> to vector<32x128xbf16>
    %cst_132 = arith.constant dense<0.000000e+00> : vector<8x128xf32>
    %315 = tpu.matmul %312, %314, %cst_132 {dimension_numbers = #tpu.dot_dimension_numbers<[1], [0], [0], [1], [0, 0, 1, 1], [], []>} : vector<8x32xbf16>, vector<32x128xbf16>, vector<8x128xf32> -> vector<8x128xf32>
    %c1_133 = arith.constant 1 : index
    %c0_134 = arith.constant 0 : index
    %c0_135 = arith.constant 0 : index
    %316 = vector.load %arg11[%c1_133, %c0_134, %c0_135] : memref<2x1x128xf32, #tpu.memory_space<vmem>>, vector<1x1x128xf32>
    %317 = vector.shape_cast %316 : vector<1x1x128xf32> to vector<1x128xf32>
    %318 = vector.broadcast %317 : vector<1x128xf32> to vector<8x128xf32>
    %319 = arith.addf %315, %318 : vector<8x128xf32>
    %cst_136 = arith.constant 0.000000e+00 : f32
    %320 = vector.broadcast %cst_136 : f32 to vector<8x128xf32>
    %321 = arith.maximumf %319, %320 : vector<8x128xf32>
    %322 = arith.truncf %321 : vector<8x128xf32> to vector<8x128xbf16>
    %c1_137 = arith.constant 1 : index
    %c0_138 = arith.constant 0 : index
    %c0_139 = arith.constant 0 : index
    %323 = vector.load %arg12[%c1_137, %c0_138, %c0_139] : memref<2x128x32xbf16, #tpu.memory_space<vmem>>, vector<1x128x32xbf16>
    %324 = vector.shape_cast %323 : vector<1x128x32xbf16> to vector<128x32xbf16>
    %cst_140 = arith.constant dense<0.000000e+00> : vector<8x32xf32>
    %325 = tpu.matmul %322, %324, %cst_140 {dimension_numbers = #tpu.dot_dimension_numbers<[1], [0], [0], [1], [0, 0, 1, 1], [], []>} : vector<8x128xbf16>, vector<128x32xbf16>, vector<8x32xf32> -> vector<8x32xf32>
    %c1_141 = arith.constant 1 : index
    %c0_142 = arith.constant 0 : index
    %c0_143 = arith.constant 0 : index
    %326 = vector.load %arg13[%c1_141, %c0_142, %c0_143] : memref<2x1x32xf32, #tpu.memory_space<vmem>>, vector<1x1x32xf32>
    %327 = vector.shape_cast %326 : vector<1x1x32xf32> to vector<1x32xf32>
    %328 = vector.broadcast %327 : vector<1x32xf32> to vector<8x32xf32>
    %329 = arith.addf %325, %328 : vector<8x32xf32>
    %330 = arith.addf %311, %329 : vector<8x32xf32>
    %c1_144 = arith.constant 1 : index
    %c0_145 = arith.constant 0 : index
    %c0_146 = arith.constant 0 : index
    %331 = vector.load %arg14[%c1_144, %c0_145, %c0_146] : memref<2x1x32xf32, #tpu.memory_space<vmem>>, vector<1x1x32xf32>
    %332 = vector.shape_cast %331 : vector<1x1x32xf32> to vector<1x32xf32>
    %c1_147 = arith.constant 1 : index
    %c0_148 = arith.constant 0 : index
    %c0_149 = arith.constant 0 : index
    %333 = vector.load %arg15[%c1_147, %c0_148, %c0_149] : memref<2x1x32xf32, #tpu.memory_space<vmem>>, vector<1x1x32xf32>
    %334 = vector.shape_cast %333 : vector<1x1x32xf32> to vector<1x32xf32>
    %cst_150 = arith.constant dense<0.000000e+00> : vector<8xf32>
    %335 = vector.multi_reduction <add>, %330, %cst_150 [1] : vector<8x32xf32> to vector<8xf32>
    %336 = vector.shape_cast %335 : vector<8xf32> to vector<8x1xf32>
    %cst_151 = arith.constant 3.200000e+01 : f32
    %337 = vector.broadcast %cst_151 : f32 to vector<8x1xf32>
    %338 = arith.divf %336, %337 : vector<8x1xf32>
    %339 = vector.broadcast %338 : vector<8x1xf32> to vector<8x32xf32>
    %340 = arith.subf %330, %339 : vector<8x32xf32>
    %341 = arith.mulf %340, %340 : vector<8x32xf32>
    %cst_152 = arith.constant dense<0.000000e+00> : vector<8xf32>
    %342 = vector.multi_reduction <add>, %341, %cst_152 [1] : vector<8x32xf32> to vector<8xf32>
    %343 = vector.shape_cast %342 : vector<8xf32> to vector<8x1xf32>
    %cst_153 = arith.constant 3.200000e+01 : f32
    %344 = vector.broadcast %cst_153 : f32 to vector<8x1xf32>
    %345 = arith.divf %343, %344 : vector<8x1xf32>
    %346 = vector.broadcast %338 : vector<8x1xf32> to vector<8x32xf32>
    %347 = arith.subf %330, %346 : vector<8x32xf32>
    %cst_154 = arith.constant 9.99999974E-6 : f32
    %348 = vector.broadcast %cst_154 : f32 to vector<8x1xf32>
    %349 = arith.addf %345, %348 : vector<8x1xf32>
    %350 = math.rsqrt %349 : vector<8x1xf32>
    %351 = vector.broadcast %350 : vector<8x1xf32> to vector<8x32xf32>
    %352 = arith.mulf %347, %351 : vector<8x32xf32>
    %353 = vector.broadcast %332 : vector<1x32xf32> to vector<8x32xf32>
    %354 = arith.mulf %352, %353 : vector<8x32xf32>
    %355 = vector.broadcast %334 : vector<1x32xf32> to vector<8x32xf32>
    %356 = arith.addf %354, %355 : vector<8x32xf32>
    %c0_155 = arith.constant 0 : index
    %c0_156 = arith.constant 0 : index
    %357 = vector.load %arg16[%c0_155, %c0_156] : memref<1x32xf32, #tpu.memory_space<vmem>>, vector<1x32xf32>
    %c0_157 = arith.constant 0 : index
    %c0_158 = arith.constant 0 : index
    %358 = vector.load %arg17[%c0_157, %c0_158] : memref<1x32xf32, #tpu.memory_space<vmem>>, vector<1x32xf32>
    %cst_159 = arith.constant dense<0.000000e+00> : vector<8xf32>
    %359 = vector.multi_reduction <add>, %356, %cst_159 [1] : vector<8x32xf32> to vector<8xf32>
    %360 = vector.shape_cast %359 : vector<8xf32> to vector<8x1xf32>
    %cst_160 = arith.constant 3.200000e+01 : f32
    %361 = vector.broadcast %cst_160 : f32 to vector<8x1xf32>
    %362 = arith.divf %360, %361 : vector<8x1xf32>
    %363 = vector.broadcast %362 : vector<8x1xf32> to vector<8x32xf32>
    %364 = arith.subf %356, %363 : vector<8x32xf32>
    %365 = arith.mulf %364, %364 : vector<8x32xf32>
    %cst_161 = arith.constant dense<0.000000e+00> : vector<8xf32>
    %366 = vector.multi_reduction <add>, %365, %cst_161 [1] : vector<8x32xf32> to vector<8xf32>
    %367 = vector.shape_cast %366 : vector<8xf32> to vector<8x1xf32>
    %cst_162 = arith.constant 3.200000e+01 : f32
    %368 = vector.broadcast %cst_162 : f32 to vector<8x1xf32>
    %369 = arith.divf %367, %368 : vector<8x1xf32>
    %370 = vector.broadcast %362 : vector<8x1xf32> to vector<8x32xf32>
    %371 = arith.subf %356, %370 : vector<8x32xf32>
    %cst_163 = arith.constant 9.99999974E-6 : f32
    %372 = vector.broadcast %cst_163 : f32 to vector<8x1xf32>
    %373 = arith.addf %369, %372 : vector<8x1xf32>
    %374 = math.rsqrt %373 : vector<8x1xf32>
    %375 = vector.broadcast %374 : vector<8x1xf32> to vector<8x32xf32>
    %376 = arith.mulf %371, %375 : vector<8x32xf32>
    %377 = vector.broadcast %357 : vector<1x32xf32> to vector<8x32xf32>
    %378 = arith.mulf %376, %377 : vector<8x32xf32>
    %379 = vector.broadcast %358 : vector<1x32xf32> to vector<8x32xf32>
    %380 = arith.addf %378, %379 : vector<8x32xf32>
    %381 = arith.truncf %380 : vector<8x32xf32> to vector<8x32xbf16>
    %382 = tpu.iota {dimensions = array<i32: 0>} : vector<8x8xi32>
    %383 = tpu.iota {dimensions = array<i32: 1>} : vector<8x8xi32>
    %384 = arith.cmpi sgt, %383, %382 : vector<8x8xi32>
    %cst_164 = arith.constant -1.000000e+30 : f32
    %cst_165 = arith.constant 0.000000e+00 : f32
    %385 = vector.broadcast %cst_164 : f32 to vector<8x8xf32>
    %386 = vector.broadcast %cst_165 : f32 to vector<8x8xf32>
    %387 = arith.select %384, %385, %386 : vector<8x8xi1>, vector<8x8xf32>
    %c0_166 = arith.constant 0 : index
    %c0_167 = arith.constant 0 : index
    %c0_168 = arith.constant 0 : index
    %388 = vector.load %arg3[%c0_166, %c0_167, %c0_168] : memref<1x8x32xf32, #tpu.memory_space<vmem>>, vector<1x8x32xf32>
    %389 = vector.shape_cast %388 : vector<1x8x32xf32> to vector<8x32xf32>
    %390 = arith.truncf %389 : vector<8x32xf32> to vector<8x32xbf16>
    %c0_169 = arith.constant 0 : index
    %c0_170 = arith.constant 0 : index
    %c0_171 = arith.constant 0 : index
    %391 = vector.load %arg18[%c0_169, %c0_170, %c0_171] : memref<2x32x96xbf16, #tpu.memory_space<vmem>>, vector<1x32x96xbf16>
    %392 = vector.shape_cast %391 : vector<1x32x96xbf16> to vector<32x96xbf16>
    %cst_172 = arith.constant dense<0.000000e+00> : vector<8x96xf32>
    %393 = tpu.matmul %390, %392, %cst_172 {dimension_numbers = #tpu.dot_dimension_numbers<[1], [0], [0], [1], [0, 0, 1, 1], [], []>} : vector<8x32xbf16>, vector<32x96xbf16>, vector<8x96xf32> -> vector<8x96xf32>
    %c0_173 = arith.constant 0 : index
    %c0_174 = arith.constant 0 : index
    %c0_175 = arith.constant 0 : index
    %394 = vector.load %arg19[%c0_173, %c0_174, %c0_175] : memref<2x1x96xf32, #tpu.memory_space<vmem>>, vector<1x1x96xf32>
    %395 = vector.shape_cast %394 : vector<1x1x96xf32> to vector<1x96xf32>
    %396 = vector.broadcast %395 : vector<1x96xf32> to vector<8x96xf32>
    %397 = arith.addf %393, %396 : vector<8x96xf32>
    %398 = vector.extract_strided_slice %397 {offsets = [0, 0], sizes = [8, 32], strides = [1, 1]} : vector<8x96xf32> to vector<8x32xf32>
    %399 = vector.extract_strided_slice %397 {offsets = [0, 32], sizes = [8, 32], strides = [1, 1]} : vector<8x96xf32> to vector<8x32xf32>
    %400 = vector.extract_strided_slice %397 {offsets = [0, 64], sizes = [8, 32], strides = [1, 1]} : vector<8x96xf32> to vector<8x32xf32>
    %c0_176 = arith.constant 0 : index
    %c0_177 = arith.constant 0 : index
    %c0_178 = arith.constant 0 : index
    %401 = vector.load %arg20[%c0_176, %c0_177, %c0_178] : memref<2x32x32xf32, #tpu.memory_space<vmem>>, vector<1x32x32xf32>
    %402 = vector.shape_cast %401 : vector<1x32x32xf32> to vector<32x32xf32>
    %c0_179 = arith.constant 0 : index
    %c0_180 = arith.constant 0 : index
    %c0_181 = arith.constant 0 : index
    %403 = vector.load %arg21[%c0_179, %c0_180, %c0_181] : memref<2x1x32xf32, #tpu.memory_space<vmem>>, vector<1x1x32xf32>
    %404 = vector.shape_cast %403 : vector<1x1x32xf32> to vector<1x32xf32>
    %cst_182 = arith.constant 0.000000e+00 : f32
    %405 = vector.broadcast %cst_182 : f32 to vector<8x32xf32>
    %406 = vector.extract_strided_slice %398 {offsets = [0, 0], sizes = [8, 8], strides = [1, 1]} : vector<8x32xf32> to vector<8x8xf32>
    %407 = vector.extract_strided_slice %399 {offsets = [0, 0], sizes = [8, 8], strides = [1, 1]} : vector<8x32xf32> to vector<8x8xf32>
    %cst_183 = arith.constant dense<0.000000e+00> : vector<8x8xf32>
    %408 = tpu.matmul %406, %407, %cst_183 {dimension_numbers = #tpu.dot_dimension_numbers<[1], [1], [0], [0], [0, 0, 1, 0], [], []>} : vector<8x8xf32>, vector<8x8xf32>, vector<8x8xf32> -> vector<8x8xf32>
    %cst_184 = arith.constant 0.353553385 : f32
    %409 = vector.broadcast %cst_184 : f32 to vector<8x8xf32>
    %410 = arith.mulf %408, %409 : vector<8x8xf32>
    %411 = arith.addf %410, %387 : vector<8x8xf32>
    %cst_185 = arith.constant dense<0xFF800000> : vector<8xf32>
    %412 = vector.multi_reduction <maximumf>, %411, %cst_185 [1] : vector<8x8xf32> to vector<8xf32>
    %413 = vector.shape_cast %412 : vector<8xf32> to vector<8x1xf32>
    %414 = vector.broadcast %413 : vector<8x1xf32> to vector<8x8xf32>
    %415 = arith.subf %411, %414 : vector<8x8xf32>
    %416 = math.exp %415 : vector<8x8xf32>
    %cst_186 = arith.constant dense<0.000000e+00> : vector<8xf32>
    %417 = vector.multi_reduction <add>, %416, %cst_186 [1] : vector<8x8xf32> to vector<8xf32>
    %418 = vector.shape_cast %417 : vector<8xf32> to vector<8x1xf32>
    %419 = vector.broadcast %418 : vector<8x1xf32> to vector<8x8xf32>
    %420 = arith.divf %416, %419 : vector<8x8xf32>
    %421 = vector.extract_strided_slice %400 {offsets = [0, 0], sizes = [8, 8], strides = [1, 1]} : vector<8x32xf32> to vector<8x8xf32>
    %cst_187 = arith.constant dense<0.000000e+00> : vector<8x8xf32>
    %422 = tpu.matmul %420, %421, %cst_187 {dimension_numbers = #tpu.dot_dimension_numbers<[1], [0], [0], [1], [0, 0, 1, 1], [], []>} : vector<8x8xf32>, vector<8x8xf32>, vector<8x8xf32> -> vector<8x8xf32>
    %423 = vector.extract_strided_slice %402 {offsets = [0, 0], sizes = [8, 32], strides = [1, 1]} : vector<32x32xf32> to vector<8x32xf32>
    %cst_188 = arith.constant dense<0.000000e+00> : vector<8x32xf32>
    %424 = tpu.matmul %422, %423, %cst_188 {dimension_numbers = #tpu.dot_dimension_numbers<[1], [0], [0], [1], [0, 0, 1, 1], [], []>} : vector<8x8xf32>, vector<8x32xf32>, vector<8x32xf32> -> vector<8x32xf32>
    %425 = arith.addf %405, %424 : vector<8x32xf32>
    %426 = vector.extract_strided_slice %398 {offsets = [0, 8], sizes = [8, 8], strides = [1, 1]} : vector<8x32xf32> to vector<8x8xf32>
    %427 = vector.extract_strided_slice %399 {offsets = [0, 8], sizes = [8, 8], strides = [1, 1]} : vector<8x32xf32> to vector<8x8xf32>
    %cst_189 = arith.constant dense<0.000000e+00> : vector<8x8xf32>
    %428 = tpu.matmul %426, %427, %cst_189 {dimension_numbers = #tpu.dot_dimension_numbers<[1], [1], [0], [0], [0, 0, 1, 0], [], []>} : vector<8x8xf32>, vector<8x8xf32>, vector<8x8xf32> -> vector<8x8xf32>
    %cst_190 = arith.constant 0.353553385 : f32
    %429 = vector.broadcast %cst_190 : f32 to vector<8x8xf32>
    %430 = arith.mulf %428, %429 : vector<8x8xf32>
    %431 = arith.addf %430, %387 : vector<8x8xf32>
    %cst_191 = arith.constant dense<0xFF800000> : vector<8xf32>
    %432 = vector.multi_reduction <maximumf>, %431, %cst_191 [1] : vector<8x8xf32> to vector<8xf32>
    %433 = vector.shape_cast %432 : vector<8xf32> to vector<8x1xf32>
    %434 = vector.broadcast %433 : vector<8x1xf32> to vector<8x8xf32>
    %435 = arith.subf %431, %434 : vector<8x8xf32>
    %436 = math.exp %435 : vector<8x8xf32>
    %cst_192 = arith.constant dense<0.000000e+00> : vector<8xf32>
    %437 = vector.multi_reduction <add>, %436, %cst_192 [1] : vector<8x8xf32> to vector<8xf32>
    %438 = vector.shape_cast %437 : vector<8xf32> to vector<8x1xf32>
    %439 = vector.broadcast %438 : vector<8x1xf32> to vector<8x8xf32>
    %440 = arith.divf %436, %439 : vector<8x8xf32>
    %441 = vector.extract_strided_slice %400 {offsets = [0, 8], sizes = [8, 8], strides = [1, 1]} : vector<8x32xf32> to vector<8x8xf32>
    %cst_193 = arith.constant dense<0.000000e+00> : vector<8x8xf32>
    %442 = tpu.matmul %440, %441, %cst_193 {dimension_numbers = #tpu.dot_dimension_numbers<[1], [0], [0], [1], [0, 0, 1, 1], [], []>} : vector<8x8xf32>, vector<8x8xf32>, vector<8x8xf32> -> vector<8x8xf32>
    %443 = vector.extract_strided_slice %402 {offsets = [8, 0], sizes = [8, 32], strides = [1, 1]} : vector<32x32xf32> to vector<8x32xf32>
    %cst_194 = arith.constant dense<0.000000e+00> : vector<8x32xf32>
    %444 = tpu.matmul %442, %443, %cst_194 {dimension_numbers = #tpu.dot_dimension_numbers<[1], [0], [0], [1], [0, 0, 1, 1], [], []>} : vector<8x8xf32>, vector<8x32xf32>, vector<8x32xf32> -> vector<8x32xf32>
    %445 = arith.addf %425, %444 : vector<8x32xf32>
    %446 = vector.extract_strided_slice %398 {offsets = [0, 16], sizes = [8, 8], strides = [1, 1]} : vector<8x32xf32> to vector<8x8xf32>
    %447 = vector.extract_strided_slice %399 {offsets = [0, 16], sizes = [8, 8], strides = [1, 1]} : vector<8x32xf32> to vector<8x8xf32>
    %cst_195 = arith.constant dense<0.000000e+00> : vector<8x8xf32>
    %448 = tpu.matmul %446, %447, %cst_195 {dimension_numbers = #tpu.dot_dimension_numbers<[1], [1], [0], [0], [0, 0, 1, 0], [], []>} : vector<8x8xf32>, vector<8x8xf32>, vector<8x8xf32> -> vector<8x8xf32>
    %cst_196 = arith.constant 0.353553385 : f32
    %449 = vector.broadcast %cst_196 : f32 to vector<8x8xf32>
    %450 = arith.mulf %448, %449 : vector<8x8xf32>
    %451 = arith.addf %450, %387 : vector<8x8xf32>
    %cst_197 = arith.constant dense<0xFF800000> : vector<8xf32>
    %452 = vector.multi_reduction <maximumf>, %451, %cst_197 [1] : vector<8x8xf32> to vector<8xf32>
    %453 = vector.shape_cast %452 : vector<8xf32> to vector<8x1xf32>
    %454 = vector.broadcast %453 : vector<8x1xf32> to vector<8x8xf32>
    %455 = arith.subf %451, %454 : vector<8x8xf32>
    %456 = math.exp %455 : vector<8x8xf32>
    %cst_198 = arith.constant dense<0.000000e+00> : vector<8xf32>
    %457 = vector.multi_reduction <add>, %456, %cst_198 [1] : vector<8x8xf32> to vector<8xf32>
    %458 = vector.shape_cast %457 : vector<8xf32> to vector<8x1xf32>
    %459 = vector.broadcast %458 : vector<8x1xf32> to vector<8x8xf32>
    %460 = arith.divf %456, %459 : vector<8x8xf32>
    %461 = vector.extract_strided_slice %400 {offsets = [0, 16], sizes = [8, 8], strides = [1, 1]} : vector<8x32xf32> to vector<8x8xf32>
    %cst_199 = arith.constant dense<0.000000e+00> : vector<8x8xf32>
    %462 = tpu.matmul %460, %461, %cst_199 {dimension_numbers = #tpu.dot_dimension_numbers<[1], [0], [0], [1], [0, 0, 1, 1], [], []>} : vector<8x8xf32>, vector<8x8xf32>, vector<8x8xf32> -> vector<8x8xf32>
    %463 = vector.extract_strided_slice %402 {offsets = [16, 0], sizes = [8, 32], strides = [1, 1]} : vector<32x32xf32> to vector<8x32xf32>
    %cst_200 = arith.constant dense<0.000000e+00> : vector<8x32xf32>
    %464 = tpu.matmul %462, %463, %cst_200 {dimension_numbers = #tpu.dot_dimension_numbers<[1], [0], [0], [1], [0, 0, 1, 1], [], []>} : vector<8x8xf32>, vector<8x32xf32>, vector<8x32xf32> -> vector<8x32xf32>
    %465 = arith.addf %445, %464 : vector<8x32xf32>
    %466 = vector.extract_strided_slice %398 {offsets = [0, 24], sizes = [8, 8], strides = [1, 1]} : vector<8x32xf32> to vector<8x8xf32>
    %467 = vector.extract_strided_slice %399 {offsets = [0, 24], sizes = [8, 8], strides = [1, 1]} : vector<8x32xf32> to vector<8x8xf32>
    %cst_201 = arith.constant dense<0.000000e+00> : vector<8x8xf32>
    %468 = tpu.matmul %466, %467, %cst_201 {dimension_numbers = #tpu.dot_dimension_numbers<[1], [1], [0], [0], [0, 0, 1, 0], [], []>} : vector<8x8xf32>, vector<8x8xf32>, vector<8x8xf32> -> vector<8x8xf32>
    %cst_202 = arith.constant 0.353553385 : f32
    %469 = vector.broadcast %cst_202 : f32 to vector<8x8xf32>
    %470 = arith.mulf %468, %469 : vector<8x8xf32>
    %471 = arith.addf %470, %387 : vector<8x8xf32>
    %cst_203 = arith.constant dense<0xFF800000> : vector<8xf32>
    %472 = vector.multi_reduction <maximumf>, %471, %cst_203 [1] : vector<8x8xf32> to vector<8xf32>
    %473 = vector.shape_cast %472 : vector<8xf32> to vector<8x1xf32>
    %474 = vector.broadcast %473 : vector<8x1xf32> to vector<8x8xf32>
    %475 = arith.subf %471, %474 : vector<8x8xf32>
    %476 = math.exp %475 : vector<8x8xf32>
    %cst_204 = arith.constant dense<0.000000e+00> : vector<8xf32>
    %477 = vector.multi_reduction <add>, %476, %cst_204 [1] : vector<8x8xf32> to vector<8xf32>
    %478 = vector.shape_cast %477 : vector<8xf32> to vector<8x1xf32>
    %479 = vector.broadcast %478 : vector<8x1xf32> to vector<8x8xf32>
    %480 = arith.divf %476, %479 : vector<8x8xf32>
    %481 = vector.extract_strided_slice %400 {offsets = [0, 24], sizes = [8, 8], strides = [1, 1]} : vector<8x32xf32> to vector<8x8xf32>
    %cst_205 = arith.constant dense<0.000000e+00> : vector<8x8xf32>
    %482 = tpu.matmul %480, %481, %cst_205 {dimension_numbers = #tpu.dot_dimension_numbers<[1], [0], [0], [1], [0, 0, 1, 1], [], []>} : vector<8x8xf32>, vector<8x8xf32>, vector<8x8xf32> -> vector<8x8xf32>
    %483 = vector.extract_strided_slice %402 {offsets = [24, 0], sizes = [8, 32], strides = [1, 1]} : vector<32x32xf32> to vector<8x32xf32>
    %cst_206 = arith.constant dense<0.000000e+00> : vector<8x32xf32>
    %484 = tpu.matmul %482, %483, %cst_206 {dimension_numbers = #tpu.dot_dimension_numbers<[1], [0], [0], [1], [0, 0, 1, 1], [], []>} : vector<8x8xf32>, vector<8x32xf32>, vector<8x32xf32> -> vector<8x32xf32>
    %485 = arith.addf %465, %484 : vector<8x32xf32>
    %486 = vector.broadcast %404 : vector<1x32xf32> to vector<8x32xf32>
    %487 = arith.addf %485, %486 : vector<8x32xf32>
    %488 = arith.addf %389, %487 : vector<8x32xf32>
    %c0_207 = arith.constant 0 : index
    %c0_208 = arith.constant 0 : index
    %c0_209 = arith.constant 0 : index
    %489 = vector.load %arg22[%c0_207, %c0_208, %c0_209] : memref<2x1x32xf32, #tpu.memory_space<vmem>>, vector<1x1x32xf32>
    %490 = vector.shape_cast %489 : vector<1x1x32xf32> to vector<1x32xf32>
    %c0_210 = arith.constant 0 : index
    %c0_211 = arith.constant 0 : index
    %c0_212 = arith.constant 0 : index
    %491 = vector.load %arg23[%c0_210, %c0_211, %c0_212] : memref<2x1x32xf32, #tpu.memory_space<vmem>>, vector<1x1x32xf32>
    %492 = vector.shape_cast %491 : vector<1x1x32xf32> to vector<1x32xf32>
    %cst_213 = arith.constant dense<0.000000e+00> : vector<8xf32>
    %493 = vector.multi_reduction <add>, %488, %cst_213 [1] : vector<8x32xf32> to vector<8xf32>
    %494 = vector.shape_cast %493 : vector<8xf32> to vector<8x1xf32>
    %cst_214 = arith.constant 3.200000e+01 : f32
    %495 = vector.broadcast %cst_214 : f32 to vector<8x1xf32>
    %496 = arith.divf %494, %495 : vector<8x1xf32>
    %497 = vector.broadcast %496 : vector<8x1xf32> to vector<8x32xf32>
    %498 = arith.subf %488, %497 : vector<8x32xf32>
    %499 = arith.mulf %498, %498 : vector<8x32xf32>
    %cst_215 = arith.constant dense<0.000000e+00> : vector<8xf32>
    %500 = vector.multi_reduction <add>, %499, %cst_215 [1] : vector<8x32xf32> to vector<8xf32>
    %501 = vector.shape_cast %500 : vector<8xf32> to vector<8x1xf32>
    %cst_216 = arith.constant 3.200000e+01 : f32
    %502 = vector.broadcast %cst_216 : f32 to vector<8x1xf32>
    %503 = arith.divf %501, %502 : vector<8x1xf32>
    %504 = vector.broadcast %496 : vector<8x1xf32> to vector<8x32xf32>
    %505 = arith.subf %488, %504 : vector<8x32xf32>
    %cst_217 = arith.constant 9.99999974E-6 : f32
    %506 = vector.broadcast %cst_217 : f32 to vector<8x1xf32>
    %507 = arith.addf %503, %506 : vector<8x1xf32>
    %508 = math.rsqrt %507 : vector<8x1xf32>
    %509 = vector.broadcast %508 : vector<8x1xf32> to vector<8x32xf32>
    %510 = arith.mulf %505, %509 : vector<8x32xf32>
    %511 = vector.broadcast %490 : vector<1x32xf32> to vector<8x32xf32>
    %512 = arith.mulf %510, %511 : vector<8x32xf32>
    %513 = vector.broadcast %492 : vector<1x32xf32> to vector<8x32xf32>
    %514 = arith.addf %512, %513 : vector<8x32xf32>
    %515 = arith.truncf %514 : vector<8x32xf32> to vector<8x32xbf16>
    %c0_218 = arith.constant 0 : index
    %c0_219 = arith.constant 0 : index
    %c0_220 = arith.constant 0 : index
    %516 = vector.load %arg24[%c0_218, %c0_219, %c0_220] : memref<2x32x32xbf16, #tpu.memory_space<vmem>>, vector<1x32x32xbf16>
    %517 = vector.shape_cast %516 : vector<1x32x32xbf16> to vector<32x32xbf16>
    %cst_221 = arith.constant dense<0.000000e+00> : vector<8x32xf32>
    %518 = tpu.matmul %515, %517, %cst_221 {dimension_numbers = #tpu.dot_dimension_numbers<[1], [0], [0], [1], [0, 0, 1, 1], [], []>} : vector<8x32xbf16>, vector<32x32xbf16>, vector<8x32xf32> -> vector<8x32xf32>
    %c0_222 = arith.constant 0 : index
    %c0_223 = arith.constant 0 : index
    %c0_224 = arith.constant 0 : index
    %519 = vector.load %arg25[%c0_222, %c0_223, %c0_224] : memref<2x1x32xf32, #tpu.memory_space<vmem>>, vector<1x1x32xf32>
    %520 = vector.shape_cast %519 : vector<1x1x32xf32> to vector<1x32xf32>
    %521 = vector.broadcast %520 : vector<1x32xf32> to vector<8x32xf32>
    %522 = arith.addf %518, %521 : vector<8x32xf32>
    %c0_225 = arith.constant 0 : index
    %c0_226 = arith.constant 0 : index
    %c0_227 = arith.constant 0 : index
    %523 = vector.load %arg26[%c0_225, %c0_226, %c0_227] : memref<2x32x64xbf16, #tpu.memory_space<vmem>>, vector<1x32x64xbf16>
    %524 = vector.shape_cast %523 : vector<1x32x64xbf16> to vector<32x64xbf16>
    %cst_228 = arith.constant dense<0.000000e+00> : vector<8x64xf32>
    %525 = tpu.matmul %381, %524, %cst_228 {dimension_numbers = #tpu.dot_dimension_numbers<[1], [0], [0], [1], [0, 0, 1, 1], [], []>} : vector<8x32xbf16>, vector<32x64xbf16>, vector<8x64xf32> -> vector<8x64xf32>
    %c0_229 = arith.constant 0 : index
    %c0_230 = arith.constant 0 : index
    %c0_231 = arith.constant 0 : index
    %526 = vector.load %arg27[%c0_229, %c0_230, %c0_231] : memref<2x1x64xf32, #tpu.memory_space<vmem>>, vector<1x1x64xf32>
    %527 = vector.shape_cast %526 : vector<1x1x64xf32> to vector<1x64xf32>
    %528 = vector.broadcast %527 : vector<1x64xf32> to vector<8x64xf32>
    %529 = arith.addf %525, %528 : vector<8x64xf32>
    %530 = vector.extract_strided_slice %529 {offsets = [0, 0], sizes = [8, 32], strides = [1, 1]} : vector<8x64xf32> to vector<8x32xf32>
    %531 = vector.extract_strided_slice %529 {offsets = [0, 32], sizes = [8, 32], strides = [1, 1]} : vector<8x64xf32> to vector<8x32xf32>
    %c0_232 = arith.constant 0 : index
    %c0_233 = arith.constant 0 : index
    %c0_234 = arith.constant 0 : index
    %532 = vector.load %arg28[%c0_232, %c0_233, %c0_234] : memref<2x32x32xf32, #tpu.memory_space<vmem>>, vector<1x32x32xf32>
    %533 = vector.shape_cast %532 : vector<1x32x32xf32> to vector<32x32xf32>
    %c0_235 = arith.constant 0 : index
    %c0_236 = arith.constant 0 : index
    %c0_237 = arith.constant 0 : index
    %534 = vector.load %arg29[%c0_235, %c0_236, %c0_237] : memref<2x1x32xf32, #tpu.memory_space<vmem>>, vector<1x1x32xf32>
    %535 = vector.shape_cast %534 : vector<1x1x32xf32> to vector<1x32xf32>
    %cst_238 = arith.constant 0.000000e+00 : f32
    %536 = vector.broadcast %cst_238 : f32 to vector<8x32xf32>
    %537 = vector.extract_strided_slice %522 {offsets = [0, 0], sizes = [8, 8], strides = [1, 1]} : vector<8x32xf32> to vector<8x8xf32>
    %538 = vector.extract_strided_slice %530 {offsets = [0, 0], sizes = [8, 8], strides = [1, 1]} : vector<8x32xf32> to vector<8x8xf32>
    %cst_239 = arith.constant dense<0.000000e+00> : vector<8x8xf32>
    %539 = tpu.matmul %537, %538, %cst_239 {dimension_numbers = #tpu.dot_dimension_numbers<[1], [1], [0], [0], [0, 0, 1, 0], [], []>} : vector<8x8xf32>, vector<8x8xf32>, vector<8x8xf32> -> vector<8x8xf32>
    %cst_240 = arith.constant 0.353553385 : f32
    %540 = vector.broadcast %cst_240 : f32 to vector<8x8xf32>
    %541 = arith.mulf %539, %540 : vector<8x8xf32>
    %cst_241 = arith.constant dense<0xFF800000> : vector<8xf32>
    %542 = vector.multi_reduction <maximumf>, %541, %cst_241 [1] : vector<8x8xf32> to vector<8xf32>
    %543 = vector.shape_cast %542 : vector<8xf32> to vector<8x1xf32>
    %544 = vector.broadcast %543 : vector<8x1xf32> to vector<8x8xf32>
    %545 = arith.subf %541, %544 : vector<8x8xf32>
    %546 = math.exp %545 : vector<8x8xf32>
    %cst_242 = arith.constant dense<0.000000e+00> : vector<8xf32>
    %547 = vector.multi_reduction <add>, %546, %cst_242 [1] : vector<8x8xf32> to vector<8xf32>
    %548 = vector.shape_cast %547 : vector<8xf32> to vector<8x1xf32>
    %549 = vector.broadcast %548 : vector<8x1xf32> to vector<8x8xf32>
    %550 = arith.divf %546, %549 : vector<8x8xf32>
    %551 = vector.extract_strided_slice %531 {offsets = [0, 0], sizes = [8, 8], strides = [1, 1]} : vector<8x32xf32> to vector<8x8xf32>
    %cst_243 = arith.constant dense<0.000000e+00> : vector<8x8xf32>
    %552 = tpu.matmul %550, %551, %cst_243 {dimension_numbers = #tpu.dot_dimension_numbers<[1], [0], [0], [1], [0, 0, 1, 1], [], []>} : vector<8x8xf32>, vector<8x8xf32>, vector<8x8xf32> -> vector<8x8xf32>
    %553 = vector.extract_strided_slice %533 {offsets = [0, 0], sizes = [8, 32], strides = [1, 1]} : vector<32x32xf32> to vector<8x32xf32>
    %cst_244 = arith.constant dense<0.000000e+00> : vector<8x32xf32>
    %554 = tpu.matmul %552, %553, %cst_244 {dimension_numbers = #tpu.dot_dimension_numbers<[1], [0], [0], [1], [0, 0, 1, 1], [], []>} : vector<8x8xf32>, vector<8x32xf32>, vector<8x32xf32> -> vector<8x32xf32>
    %555 = arith.addf %536, %554 : vector<8x32xf32>
    %556 = vector.extract_strided_slice %522 {offsets = [0, 8], sizes = [8, 8], strides = [1, 1]} : vector<8x32xf32> to vector<8x8xf32>
    %557 = vector.extract_strided_slice %530 {offsets = [0, 8], sizes = [8, 8], strides = [1, 1]} : vector<8x32xf32> to vector<8x8xf32>
    %cst_245 = arith.constant dense<0.000000e+00> : vector<8x8xf32>
    %558 = tpu.matmul %556, %557, %cst_245 {dimension_numbers = #tpu.dot_dimension_numbers<[1], [1], [0], [0], [0, 0, 1, 0], [], []>} : vector<8x8xf32>, vector<8x8xf32>, vector<8x8xf32> -> vector<8x8xf32>
    %cst_246 = arith.constant 0.353553385 : f32
    %559 = vector.broadcast %cst_246 : f32 to vector<8x8xf32>
    %560 = arith.mulf %558, %559 : vector<8x8xf32>
    %cst_247 = arith.constant dense<0xFF800000> : vector<8xf32>
    %561 = vector.multi_reduction <maximumf>, %560, %cst_247 [1] : vector<8x8xf32> to vector<8xf32>
    %562 = vector.shape_cast %561 : vector<8xf32> to vector<8x1xf32>
    %563 = vector.broadcast %562 : vector<8x1xf32> to vector<8x8xf32>
    %564 = arith.subf %560, %563 : vector<8x8xf32>
    %565 = math.exp %564 : vector<8x8xf32>
    %cst_248 = arith.constant dense<0.000000e+00> : vector<8xf32>
    %566 = vector.multi_reduction <add>, %565, %cst_248 [1] : vector<8x8xf32> to vector<8xf32>
    %567 = vector.shape_cast %566 : vector<8xf32> to vector<8x1xf32>
    %568 = vector.broadcast %567 : vector<8x1xf32> to vector<8x8xf32>
    %569 = arith.divf %565, %568 : vector<8x8xf32>
    %570 = vector.extract_strided_slice %531 {offsets = [0, 8], sizes = [8, 8], strides = [1, 1]} : vector<8x32xf32> to vector<8x8xf32>
    %cst_249 = arith.constant dense<0.000000e+00> : vector<8x8xf32>
    %571 = tpu.matmul %569, %570, %cst_249 {dimension_numbers = #tpu.dot_dimension_numbers<[1], [0], [0], [1], [0, 0, 1, 1], [], []>} : vector<8x8xf32>, vector<8x8xf32>, vector<8x8xf32> -> vector<8x8xf32>
    %572 = vector.extract_strided_slice %533 {offsets = [8, 0], sizes = [8, 32], strides = [1, 1]} : vector<32x32xf32> to vector<8x32xf32>
    %cst_250 = arith.constant dense<0.000000e+00> : vector<8x32xf32>
    %573 = tpu.matmul %571, %572, %cst_250 {dimension_numbers = #tpu.dot_dimension_numbers<[1], [0], [0], [1], [0, 0, 1, 1], [], []>} : vector<8x8xf32>, vector<8x32xf32>, vector<8x32xf32> -> vector<8x32xf32>
    %574 = arith.addf %555, %573 : vector<8x32xf32>
    %575 = vector.extract_strided_slice %522 {offsets = [0, 16], sizes = [8, 8], strides = [1, 1]} : vector<8x32xf32> to vector<8x8xf32>
    %576 = vector.extract_strided_slice %530 {offsets = [0, 16], sizes = [8, 8], strides = [1, 1]} : vector<8x32xf32> to vector<8x8xf32>
    %cst_251 = arith.constant dense<0.000000e+00> : vector<8x8xf32>
    %577 = tpu.matmul %575, %576, %cst_251 {dimension_numbers = #tpu.dot_dimension_numbers<[1], [1], [0], [0], [0, 0, 1, 0], [], []>} : vector<8x8xf32>, vector<8x8xf32>, vector<8x8xf32> -> vector<8x8xf32>
    %cst_252 = arith.constant 0.353553385 : f32
    %578 = vector.broadcast %cst_252 : f32 to vector<8x8xf32>
    %579 = arith.mulf %577, %578 : vector<8x8xf32>
    %cst_253 = arith.constant dense<0xFF800000> : vector<8xf32>
    %580 = vector.multi_reduction <maximumf>, %579, %cst_253 [1] : vector<8x8xf32> to vector<8xf32>
    %581 = vector.shape_cast %580 : vector<8xf32> to vector<8x1xf32>
    %582 = vector.broadcast %581 : vector<8x1xf32> to vector<8x8xf32>
    %583 = arith.subf %579, %582 : vector<8x8xf32>
    %584 = math.exp %583 : vector<8x8xf32>
    %cst_254 = arith.constant dense<0.000000e+00> : vector<8xf32>
    %585 = vector.multi_reduction <add>, %584, %cst_254 [1] : vector<8x8xf32> to vector<8xf32>
    %586 = vector.shape_cast %585 : vector<8xf32> to vector<8x1xf32>
    %587 = vector.broadcast %586 : vector<8x1xf32> to vector<8x8xf32>
    %588 = arith.divf %584, %587 : vector<8x8xf32>
    %589 = vector.extract_strided_slice %531 {offsets = [0, 16], sizes = [8, 8], strides = [1, 1]} : vector<8x32xf32> to vector<8x8xf32>
    %cst_255 = arith.constant dense<0.000000e+00> : vector<8x8xf32>
    %590 = tpu.matmul %588, %589, %cst_255 {dimension_numbers = #tpu.dot_dimension_numbers<[1], [0], [0], [1], [0, 0, 1, 1], [], []>} : vector<8x8xf32>, vector<8x8xf32>, vector<8x8xf32> -> vector<8x8xf32>
    %591 = vector.extract_strided_slice %533 {offsets = [16, 0], sizes = [8, 32], strides = [1, 1]} : vector<32x32xf32> to vector<8x32xf32>
    %cst_256 = arith.constant dense<0.000000e+00> : vector<8x32xf32>
    %592 = tpu.matmul %590, %591, %cst_256 {dimension_numbers = #tpu.dot_dimension_numbers<[1], [0], [0], [1], [0, 0, 1, 1], [], []>} : vector<8x8xf32>, vector<8x32xf32>, vector<8x32xf32> -> vector<8x32xf32>
    %593 = arith.addf %574, %592 : vector<8x32xf32>
    %594 = vector.extract_strided_slice %522 {offsets = [0, 24], sizes = [8, 8], strides = [1, 1]} : vector<8x32xf32> to vector<8x8xf32>
    %595 = vector.extract_strided_slice %530 {offsets = [0, 24], sizes = [8, 8], strides = [1, 1]} : vector<8x32xf32> to vector<8x8xf32>
    %cst_257 = arith.constant dense<0.000000e+00> : vector<8x8xf32>
    %596 = tpu.matmul %594, %595, %cst_257 {dimension_numbers = #tpu.dot_dimension_numbers<[1], [1], [0], [0], [0, 0, 1, 0], [], []>} : vector<8x8xf32>, vector<8x8xf32>, vector<8x8xf32> -> vector<8x8xf32>
    %cst_258 = arith.constant 0.353553385 : f32
    %597 = vector.broadcast %cst_258 : f32 to vector<8x8xf32>
    %598 = arith.mulf %596, %597 : vector<8x8xf32>
    %cst_259 = arith.constant dense<0xFF800000> : vector<8xf32>
    %599 = vector.multi_reduction <maximumf>, %598, %cst_259 [1] : vector<8x8xf32> to vector<8xf32>
    %600 = vector.shape_cast %599 : vector<8xf32> to vector<8x1xf32>
    %601 = vector.broadcast %600 : vector<8x1xf32> to vector<8x8xf32>
    %602 = arith.subf %598, %601 : vector<8x8xf32>
    %603 = math.exp %602 : vector<8x8xf32>
    %cst_260 = arith.constant dense<0.000000e+00> : vector<8xf32>
    %604 = vector.multi_reduction <add>, %603, %cst_260 [1] : vector<8x8xf32> to vector<8xf32>
    %605 = vector.shape_cast %604 : vector<8xf32> to vector<8x1xf32>
    %606 = vector.broadcast %605 : vector<8x1xf32> to vector<8x8xf32>
    %607 = arith.divf %603, %606 : vector<8x8xf32>
    %608 = vector.extract_strided_slice %531 {offsets = [0, 24], sizes = [8, 8], strides = [1, 1]} : vector<8x32xf32> to vector<8x8xf32>
    %cst_261 = arith.constant dense<0.000000e+00> : vector<8x8xf32>
    %609 = tpu.matmul %607, %608, %cst_261 {dimension_numbers = #tpu.dot_dimension_numbers<[1], [0], [0], [1], [0, 0, 1, 1], [], []>} : vector<8x8xf32>, vector<8x8xf32>, vector<8x8xf32> -> vector<8x8xf32>
    %610 = vector.extract_strided_slice %533 {offsets = [24, 0], sizes = [8, 32], strides = [1, 1]} : vector<32x32xf32> to vector<8x32xf32>
    %cst_262 = arith.constant dense<0.000000e+00> : vector<8x32xf32>
    %611 = tpu.matmul %609, %610, %cst_262 {dimension_numbers = #tpu.dot_dimension_numbers<[1], [0], [0], [1], [0, 0, 1, 1], [], []>} : vector<8x8xf32>, vector<8x32xf32>, vector<8x32xf32> -> vector<8x32xf32>
    %612 = arith.addf %593, %611 : vector<8x32xf32>
    %613 = vector.broadcast %535 : vector<1x32xf32> to vector<8x32xf32>
    %614 = arith.addf %612, %613 : vector<8x32xf32>
    %615 = arith.addf %514, %614 : vector<8x32xf32>
    %c0_263 = arith.constant 0 : index
    %c0_264 = arith.constant 0 : index
    %c0_265 = arith.constant 0 : index
    %616 = vector.load %arg30[%c0_263, %c0_264, %c0_265] : memref<2x1x32xf32, #tpu.memory_space<vmem>>, vector<1x1x32xf32>
    %617 = vector.shape_cast %616 : vector<1x1x32xf32> to vector<1x32xf32>
    %c0_266 = arith.constant 0 : index
    %c0_267 = arith.constant 0 : index
    %c0_268 = arith.constant 0 : index
    %618 = vector.load %arg31[%c0_266, %c0_267, %c0_268] : memref<2x1x32xf32, #tpu.memory_space<vmem>>, vector<1x1x32xf32>
    %619 = vector.shape_cast %618 : vector<1x1x32xf32> to vector<1x32xf32>
    %cst_269 = arith.constant dense<0.000000e+00> : vector<8xf32>
    %620 = vector.multi_reduction <add>, %615, %cst_269 [1] : vector<8x32xf32> to vector<8xf32>
    %621 = vector.shape_cast %620 : vector<8xf32> to vector<8x1xf32>
    %cst_270 = arith.constant 3.200000e+01 : f32
    %622 = vector.broadcast %cst_270 : f32 to vector<8x1xf32>
    %623 = arith.divf %621, %622 : vector<8x1xf32>
    %624 = vector.broadcast %623 : vector<8x1xf32> to vector<8x32xf32>
    %625 = arith.subf %615, %624 : vector<8x32xf32>
    %626 = arith.mulf %625, %625 : vector<8x32xf32>
    %cst_271 = arith.constant dense<0.000000e+00> : vector<8xf32>
    %627 = vector.multi_reduction <add>, %626, %cst_271 [1] : vector<8x32xf32> to vector<8xf32>
    %628 = vector.shape_cast %627 : vector<8xf32> to vector<8x1xf32>
    %cst_272 = arith.constant 3.200000e+01 : f32
    %629 = vector.broadcast %cst_272 : f32 to vector<8x1xf32>
    %630 = arith.divf %628, %629 : vector<8x1xf32>
    %631 = vector.broadcast %623 : vector<8x1xf32> to vector<8x32xf32>
    %632 = arith.subf %615, %631 : vector<8x32xf32>
    %cst_273 = arith.constant 9.99999974E-6 : f32
    %633 = vector.broadcast %cst_273 : f32 to vector<8x1xf32>
    %634 = arith.addf %630, %633 : vector<8x1xf32>
    %635 = math.rsqrt %634 : vector<8x1xf32>
    %636 = vector.broadcast %635 : vector<8x1xf32> to vector<8x32xf32>
    %637 = arith.mulf %632, %636 : vector<8x32xf32>
    %638 = vector.broadcast %617 : vector<1x32xf32> to vector<8x32xf32>
    %639 = arith.mulf %637, %638 : vector<8x32xf32>
    %640 = vector.broadcast %619 : vector<1x32xf32> to vector<8x32xf32>
    %641 = arith.addf %639, %640 : vector<8x32xf32>
    %642 = arith.truncf %641 : vector<8x32xf32> to vector<8x32xbf16>
    %c0_274 = arith.constant 0 : index
    %c0_275 = arith.constant 0 : index
    %c0_276 = arith.constant 0 : index
    %643 = vector.load %arg32[%c0_274, %c0_275, %c0_276] : memref<2x32x128xbf16, #tpu.memory_space<vmem>>, vector<1x32x128xbf16>
    %644 = vector.shape_cast %643 : vector<1x32x128xbf16> to vector<32x128xbf16>
    %cst_277 = arith.constant dense<0.000000e+00> : vector<8x128xf32>
    %645 = tpu.matmul %642, %644, %cst_277 {dimension_numbers = #tpu.dot_dimension_numbers<[1], [0], [0], [1], [0, 0, 1, 1], [], []>} : vector<8x32xbf16>, vector<32x128xbf16>, vector<8x128xf32> -> vector<8x128xf32>
    %c0_278 = arith.constant 0 : index
    %c0_279 = arith.constant 0 : index
    %c0_280 = arith.constant 0 : index
    %646 = vector.load %arg33[%c0_278, %c0_279, %c0_280] : memref<2x1x128xf32, #tpu.memory_space<vmem>>, vector<1x1x128xf32>
    %647 = vector.shape_cast %646 : vector<1x1x128xf32> to vector<1x128xf32>
    %648 = vector.broadcast %647 : vector<1x128xf32> to vector<8x128xf32>
    %649 = arith.addf %645, %648 : vector<8x128xf32>
    %cst_281 = arith.constant 0.000000e+00 : f32
    %650 = vector.broadcast %cst_281 : f32 to vector<8x128xf32>
    %651 = arith.maximumf %649, %650 : vector<8x128xf32>
    %652 = arith.truncf %651 : vector<8x128xf32> to vector<8x128xbf16>
    %c0_282 = arith.constant 0 : index
    %c0_283 = arith.constant 0 : index
    %c0_284 = arith.constant 0 : index
    %653 = vector.load %arg34[%c0_282, %c0_283, %c0_284] : memref<2x128x32xbf16, #tpu.memory_space<vmem>>, vector<1x128x32xbf16>
    %654 = vector.shape_cast %653 : vector<1x128x32xbf16> to vector<128x32xbf16>
    %cst_285 = arith.constant dense<0.000000e+00> : vector<8x32xf32>
    %655 = tpu.matmul %652, %654, %cst_285 {dimension_numbers = #tpu.dot_dimension_numbers<[1], [0], [0], [1], [0, 0, 1, 1], [], []>} : vector<8x128xbf16>, vector<128x32xbf16>, vector<8x32xf32> -> vector<8x32xf32>
    %c0_286 = arith.constant 0 : index
    %c0_287 = arith.constant 0 : index
    %c0_288 = arith.constant 0 : index
    %656 = vector.load %arg35[%c0_286, %c0_287, %c0_288] : memref<2x1x32xf32, #tpu.memory_space<vmem>>, vector<1x1x32xf32>
    %657 = vector.shape_cast %656 : vector<1x1x32xf32> to vector<1x32xf32>
    %658 = vector.broadcast %657 : vector<1x32xf32> to vector<8x32xf32>
    %659 = arith.addf %655, %658 : vector<8x32xf32>
    %660 = arith.addf %641, %659 : vector<8x32xf32>
    %c0_289 = arith.constant 0 : index
    %c0_290 = arith.constant 0 : index
    %c0_291 = arith.constant 0 : index
    %661 = vector.load %arg36[%c0_289, %c0_290, %c0_291] : memref<2x1x32xf32, #tpu.memory_space<vmem>>, vector<1x1x32xf32>
    %662 = vector.shape_cast %661 : vector<1x1x32xf32> to vector<1x32xf32>
    %c0_292 = arith.constant 0 : index
    %c0_293 = arith.constant 0 : index
    %c0_294 = arith.constant 0 : index
    %663 = vector.load %arg37[%c0_292, %c0_293, %c0_294] : memref<2x1x32xf32, #tpu.memory_space<vmem>>, vector<1x1x32xf32>
    %664 = vector.shape_cast %663 : vector<1x1x32xf32> to vector<1x32xf32>
    %cst_295 = arith.constant dense<0.000000e+00> : vector<8xf32>
    %665 = vector.multi_reduction <add>, %660, %cst_295 [1] : vector<8x32xf32> to vector<8xf32>
    %666 = vector.shape_cast %665 : vector<8xf32> to vector<8x1xf32>
    %cst_296 = arith.constant 3.200000e+01 : f32
    %667 = vector.broadcast %cst_296 : f32 to vector<8x1xf32>
    %668 = arith.divf %666, %667 : vector<8x1xf32>
    %669 = vector.broadcast %668 : vector<8x1xf32> to vector<8x32xf32>
    %670 = arith.subf %660, %669 : vector<8x32xf32>
    %671 = arith.mulf %670, %670 : vector<8x32xf32>
    %cst_297 = arith.constant dense<0.000000e+00> : vector<8xf32>
    %672 = vector.multi_reduction <add>, %671, %cst_297 [1] : vector<8x32xf32> to vector<8xf32>
    %673 = vector.shape_cast %672 : vector<8xf32> to vector<8x1xf32>
    %cst_298 = arith.constant 3.200000e+01 : f32
    %674 = vector.broadcast %cst_298 : f32 to vector<8x1xf32>
    %675 = arith.divf %673, %674 : vector<8x1xf32>
    %676 = vector.broadcast %668 : vector<8x1xf32> to vector<8x32xf32>
    %677 = arith.subf %660, %676 : vector<8x32xf32>
    %cst_299 = arith.constant 9.99999974E-6 : f32
    %678 = vector.broadcast %cst_299 : f32 to vector<8x1xf32>
    %679 = arith.addf %675, %678 : vector<8x1xf32>
    %680 = math.rsqrt %679 : vector<8x1xf32>
    %681 = vector.broadcast %680 : vector<8x1xf32> to vector<8x32xf32>
    %682 = arith.mulf %677, %681 : vector<8x32xf32>
    %683 = vector.broadcast %662 : vector<1x32xf32> to vector<8x32xf32>
    %684 = arith.mulf %682, %683 : vector<8x32xf32>
    %685 = vector.broadcast %664 : vector<1x32xf32> to vector<8x32xf32>
    %686 = arith.addf %684, %685 : vector<8x32xf32>
    %687 = arith.truncf %686 : vector<8x32xf32> to vector<8x32xbf16>
    %c1_300 = arith.constant 1 : index
    %c0_301 = arith.constant 0 : index
    %c0_302 = arith.constant 0 : index
    %688 = vector.load %arg18[%c1_300, %c0_301, %c0_302] : memref<2x32x96xbf16, #tpu.memory_space<vmem>>, vector<1x32x96xbf16>
    %689 = vector.shape_cast %688 : vector<1x32x96xbf16> to vector<32x96xbf16>
    %cst_303 = arith.constant dense<0.000000e+00> : vector<8x96xf32>
    %690 = tpu.matmul %687, %689, %cst_303 {dimension_numbers = #tpu.dot_dimension_numbers<[1], [0], [0], [1], [0, 0, 1, 1], [], []>} : vector<8x32xbf16>, vector<32x96xbf16>, vector<8x96xf32> -> vector<8x96xf32>
    %c1_304 = arith.constant 1 : index
    %c0_305 = arith.constant 0 : index
    %c0_306 = arith.constant 0 : index
    %691 = vector.load %arg19[%c1_304, %c0_305, %c0_306] : memref<2x1x96xf32, #tpu.memory_space<vmem>>, vector<1x1x96xf32>
    %692 = vector.shape_cast %691 : vector<1x1x96xf32> to vector<1x96xf32>
    %693 = vector.broadcast %692 : vector<1x96xf32> to vector<8x96xf32>
    %694 = arith.addf %690, %693 : vector<8x96xf32>
    %695 = vector.extract_strided_slice %694 {offsets = [0, 0], sizes = [8, 32], strides = [1, 1]} : vector<8x96xf32> to vector<8x32xf32>
    %696 = vector.extract_strided_slice %694 {offsets = [0, 32], sizes = [8, 32], strides = [1, 1]} : vector<8x96xf32> to vector<8x32xf32>
    %697 = vector.extract_strided_slice %694 {offsets = [0, 64], sizes = [8, 32], strides = [1, 1]} : vector<8x96xf32> to vector<8x32xf32>
    %c1_307 = arith.constant 1 : index
    %c0_308 = arith.constant 0 : index
    %c0_309 = arith.constant 0 : index
    %698 = vector.load %arg20[%c1_307, %c0_308, %c0_309] : memref<2x32x32xf32, #tpu.memory_space<vmem>>, vector<1x32x32xf32>
    %699 = vector.shape_cast %698 : vector<1x32x32xf32> to vector<32x32xf32>
    %c1_310 = arith.constant 1 : index
    %c0_311 = arith.constant 0 : index
    %c0_312 = arith.constant 0 : index
    %700 = vector.load %arg21[%c1_310, %c0_311, %c0_312] : memref<2x1x32xf32, #tpu.memory_space<vmem>>, vector<1x1x32xf32>
    %701 = vector.shape_cast %700 : vector<1x1x32xf32> to vector<1x32xf32>
    %cst_313 = arith.constant 0.000000e+00 : f32
    %702 = vector.broadcast %cst_313 : f32 to vector<8x32xf32>
    %703 = vector.extract_strided_slice %695 {offsets = [0, 0], sizes = [8, 8], strides = [1, 1]} : vector<8x32xf32> to vector<8x8xf32>
    %704 = vector.extract_strided_slice %696 {offsets = [0, 0], sizes = [8, 8], strides = [1, 1]} : vector<8x32xf32> to vector<8x8xf32>
    %cst_314 = arith.constant dense<0.000000e+00> : vector<8x8xf32>
    %705 = tpu.matmul %703, %704, %cst_314 {dimension_numbers = #tpu.dot_dimension_numbers<[1], [1], [0], [0], [0, 0, 1, 0], [], []>} : vector<8x8xf32>, vector<8x8xf32>, vector<8x8xf32> -> vector<8x8xf32>
    %cst_315 = arith.constant 0.353553385 : f32
    %706 = vector.broadcast %cst_315 : f32 to vector<8x8xf32>
    %707 = arith.mulf %705, %706 : vector<8x8xf32>
    %708 = arith.addf %707, %387 : vector<8x8xf32>
    %cst_316 = arith.constant dense<0xFF800000> : vector<8xf32>
    %709 = vector.multi_reduction <maximumf>, %708, %cst_316 [1] : vector<8x8xf32> to vector<8xf32>
    %710 = vector.shape_cast %709 : vector<8xf32> to vector<8x1xf32>
    %711 = vector.broadcast %710 : vector<8x1xf32> to vector<8x8xf32>
    %712 = arith.subf %708, %711 : vector<8x8xf32>
    %713 = math.exp %712 : vector<8x8xf32>
    %cst_317 = arith.constant dense<0.000000e+00> : vector<8xf32>
    %714 = vector.multi_reduction <add>, %713, %cst_317 [1] : vector<8x8xf32> to vector<8xf32>
    %715 = vector.shape_cast %714 : vector<8xf32> to vector<8x1xf32>
    %716 = vector.broadcast %715 : vector<8x1xf32> to vector<8x8xf32>
    %717 = arith.divf %713, %716 : vector<8x8xf32>
    %718 = vector.extract_strided_slice %697 {offsets = [0, 0], sizes = [8, 8], strides = [1, 1]} : vector<8x32xf32> to vector<8x8xf32>
    %cst_318 = arith.constant dense<0.000000e+00> : vector<8x8xf32>
    %719 = tpu.matmul %717, %718, %cst_318 {dimension_numbers = #tpu.dot_dimension_numbers<[1], [0], [0], [1], [0, 0, 1, 1], [], []>} : vector<8x8xf32>, vector<8x8xf32>, vector<8x8xf32> -> vector<8x8xf32>
    %720 = vector.extract_strided_slice %699 {offsets = [0, 0], sizes = [8, 32], strides = [1, 1]} : vector<32x32xf32> to vector<8x32xf32>
    %cst_319 = arith.constant dense<0.000000e+00> : vector<8x32xf32>
    %721 = tpu.matmul %719, %720, %cst_319 {dimension_numbers = #tpu.dot_dimension_numbers<[1], [0], [0], [1], [0, 0, 1, 1], [], []>} : vector<8x8xf32>, vector<8x32xf32>, vector<8x32xf32> -> vector<8x32xf32>
    %722 = arith.addf %702, %721 : vector<8x32xf32>
    %723 = vector.extract_strided_slice %695 {offsets = [0, 8], sizes = [8, 8], strides = [1, 1]} : vector<8x32xf32> to vector<8x8xf32>
    %724 = vector.extract_strided_slice %696 {offsets = [0, 8], sizes = [8, 8], strides = [1, 1]} : vector<8x32xf32> to vector<8x8xf32>
    %cst_320 = arith.constant dense<0.000000e+00> : vector<8x8xf32>
    %725 = tpu.matmul %723, %724, %cst_320 {dimension_numbers = #tpu.dot_dimension_numbers<[1], [1], [0], [0], [0, 0, 1, 0], [], []>} : vector<8x8xf32>, vector<8x8xf32>, vector<8x8xf32> -> vector<8x8xf32>
    %cst_321 = arith.constant 0.353553385 : f32
    %726 = vector.broadcast %cst_321 : f32 to vector<8x8xf32>
    %727 = arith.mulf %725, %726 : vector<8x8xf32>
    %728 = arith.addf %727, %387 : vector<8x8xf32>
    %cst_322 = arith.constant dense<0xFF800000> : vector<8xf32>
    %729 = vector.multi_reduction <maximumf>, %728, %cst_322 [1] : vector<8x8xf32> to vector<8xf32>
    %730 = vector.shape_cast %729 : vector<8xf32> to vector<8x1xf32>
    %731 = vector.broadcast %730 : vector<8x1xf32> to vector<8x8xf32>
    %732 = arith.subf %728, %731 : vector<8x8xf32>
    %733 = math.exp %732 : vector<8x8xf32>
    %cst_323 = arith.constant dense<0.000000e+00> : vector<8xf32>
    %734 = vector.multi_reduction <add>, %733, %cst_323 [1] : vector<8x8xf32> to vector<8xf32>
    %735 = vector.shape_cast %734 : vector<8xf32> to vector<8x1xf32>
    %736 = vector.broadcast %735 : vector<8x1xf32> to vector<8x8xf32>
    %737 = arith.divf %733, %736 : vector<8x8xf32>
    %738 = vector.extract_strided_slice %697 {offsets = [0, 8], sizes = [8, 8], strides = [1, 1]} : vector<8x32xf32> to vector<8x8xf32>
    %cst_324 = arith.constant dense<0.000000e+00> : vector<8x8xf32>
    %739 = tpu.matmul %737, %738, %cst_324 {dimension_numbers = #tpu.dot_dimension_numbers<[1], [0], [0], [1], [0, 0, 1, 1], [], []>} : vector<8x8xf32>, vector<8x8xf32>, vector<8x8xf32> -> vector<8x8xf32>
    %740 = vector.extract_strided_slice %699 {offsets = [8, 0], sizes = [8, 32], strides = [1, 1]} : vector<32x32xf32> to vector<8x32xf32>
    %cst_325 = arith.constant dense<0.000000e+00> : vector<8x32xf32>
    %741 = tpu.matmul %739, %740, %cst_325 {dimension_numbers = #tpu.dot_dimension_numbers<[1], [0], [0], [1], [0, 0, 1, 1], [], []>} : vector<8x8xf32>, vector<8x32xf32>, vector<8x32xf32> -> vector<8x32xf32>
    %742 = arith.addf %722, %741 : vector<8x32xf32>
    %743 = vector.extract_strided_slice %695 {offsets = [0, 16], sizes = [8, 8], strides = [1, 1]} : vector<8x32xf32> to vector<8x8xf32>
    %744 = vector.extract_strided_slice %696 {offsets = [0, 16], sizes = [8, 8], strides = [1, 1]} : vector<8x32xf32> to vector<8x8xf32>
    %cst_326 = arith.constant dense<0.000000e+00> : vector<8x8xf32>
    %745 = tpu.matmul %743, %744, %cst_326 {dimension_numbers = #tpu.dot_dimension_numbers<[1], [1], [0], [0], [0, 0, 1, 0], [], []>} : vector<8x8xf32>, vector<8x8xf32>, vector<8x8xf32> -> vector<8x8xf32>
    %cst_327 = arith.constant 0.353553385 : f32
    %746 = vector.broadcast %cst_327 : f32 to vector<8x8xf32>
    %747 = arith.mulf %745, %746 : vector<8x8xf32>
    %748 = arith.addf %747, %387 : vector<8x8xf32>
    %cst_328 = arith.constant dense<0xFF800000> : vector<8xf32>
    %749 = vector.multi_reduction <maximumf>, %748, %cst_328 [1] : vector<8x8xf32> to vector<8xf32>
    %750 = vector.shape_cast %749 : vector<8xf32> to vector<8x1xf32>
    %751 = vector.broadcast %750 : vector<8x1xf32> to vector<8x8xf32>
    %752 = arith.subf %748, %751 : vector<8x8xf32>
    %753 = math.exp %752 : vector<8x8xf32>
    %cst_329 = arith.constant dense<0.000000e+00> : vector<8xf32>
    %754 = vector.multi_reduction <add>, %753, %cst_329 [1] : vector<8x8xf32> to vector<8xf32>
    %755 = vector.shape_cast %754 : vector<8xf32> to vector<8x1xf32>
    %756 = vector.broadcast %755 : vector<8x1xf32> to vector<8x8xf32>
    %757 = arith.divf %753, %756 : vector<8x8xf32>
    %758 = vector.extract_strided_slice %697 {offsets = [0, 16], sizes = [8, 8], strides = [1, 1]} : vector<8x32xf32> to vector<8x8xf32>
    %cst_330 = arith.constant dense<0.000000e+00> : vector<8x8xf32>
    %759 = tpu.matmul %757, %758, %cst_330 {dimension_numbers = #tpu.dot_dimension_numbers<[1], [0], [0], [1], [0, 0, 1, 1], [], []>} : vector<8x8xf32>, vector<8x8xf32>, vector<8x8xf32> -> vector<8x8xf32>
    %760 = vector.extract_strided_slice %699 {offsets = [16, 0], sizes = [8, 32], strides = [1, 1]} : vector<32x32xf32> to vector<8x32xf32>
    %cst_331 = arith.constant dense<0.000000e+00> : vector<8x32xf32>
    %761 = tpu.matmul %759, %760, %cst_331 {dimension_numbers = #tpu.dot_dimension_numbers<[1], [0], [0], [1], [0, 0, 1, 1], [], []>} : vector<8x8xf32>, vector<8x32xf32>, vector<8x32xf32> -> vector<8x32xf32>
    %762 = arith.addf %742, %761 : vector<8x32xf32>
    %763 = vector.extract_strided_slice %695 {offsets = [0, 24], sizes = [8, 8], strides = [1, 1]} : vector<8x32xf32> to vector<8x8xf32>
    %764 = vector.extract_strided_slice %696 {offsets = [0, 24], sizes = [8, 8], strides = [1, 1]} : vector<8x32xf32> to vector<8x8xf32>
    %cst_332 = arith.constant dense<0.000000e+00> : vector<8x8xf32>
    %765 = tpu.matmul %763, %764, %cst_332 {dimension_numbers = #tpu.dot_dimension_numbers<[1], [1], [0], [0], [0, 0, 1, 0], [], []>} : vector<8x8xf32>, vector<8x8xf32>, vector<8x8xf32> -> vector<8x8xf32>
    %cst_333 = arith.constant 0.353553385 : f32
    %766 = vector.broadcast %cst_333 : f32 to vector<8x8xf32>
    %767 = arith.mulf %765, %766 : vector<8x8xf32>
    %768 = arith.addf %767, %387 : vector<8x8xf32>
    %cst_334 = arith.constant dense<0xFF800000> : vector<8xf32>
    %769 = vector.multi_reduction <maximumf>, %768, %cst_334 [1] : vector<8x8xf32> to vector<8xf32>
    %770 = vector.shape_cast %769 : vector<8xf32> to vector<8x1xf32>
    %771 = vector.broadcast %770 : vector<8x1xf32> to vector<8x8xf32>
    %772 = arith.subf %768, %771 : vector<8x8xf32>
    %773 = math.exp %772 : vector<8x8xf32>
    %cst_335 = arith.constant dense<0.000000e+00> : vector<8xf32>
    %774 = vector.multi_reduction <add>, %773, %cst_335 [1] : vector<8x8xf32> to vector<8xf32>
    %775 = vector.shape_cast %774 : vector<8xf32> to vector<8x1xf32>
    %776 = vector.broadcast %775 : vector<8x1xf32> to vector<8x8xf32>
    %777 = arith.divf %773, %776 : vector<8x8xf32>
    %778 = vector.extract_strided_slice %697 {offsets = [0, 24], sizes = [8, 8], strides = [1, 1]} : vector<8x32xf32> to vector<8x8xf32>
    %cst_336 = arith.constant dense<0.000000e+00> : vector<8x8xf32>
    %779 = tpu.matmul %777, %778, %cst_336 {dimension_numbers = #tpu.dot_dimension_numbers<[1], [0], [0], [1], [0, 0, 1, 1], [], []>} : vector<8x8xf32>, vector<8x8xf32>, vector<8x8xf32> -> vector<8x8xf32>
    %780 = vector.extract_strided_slice %699 {offsets = [24, 0], sizes = [8, 32], strides = [1, 1]} : vector<32x32xf32> to vector<8x32xf32>
    %cst_337 = arith.constant dense<0.000000e+00> : vector<8x32xf32>
    %781 = tpu.matmul %779, %780, %cst_337 {dimension_numbers = #tpu.dot_dimension_numbers<[1], [0], [0], [1], [0, 0, 1, 1], [], []>} : vector<8x8xf32>, vector<8x32xf32>, vector<8x32xf32> -> vector<8x32xf32>
    %782 = arith.addf %762, %781 : vector<8x32xf32>
    %783 = vector.broadcast %701 : vector<1x32xf32> to vector<8x32xf32>
    %784 = arith.addf %782, %783 : vector<8x32xf32>
    %785 = arith.addf %686, %784 : vector<8x32xf32>
    %c1_338 = arith.constant 1 : index
    %c0_339 = arith.constant 0 : index
    %c0_340 = arith.constant 0 : index
    %786 = vector.load %arg22[%c1_338, %c0_339, %c0_340] : memref<2x1x32xf32, #tpu.memory_space<vmem>>, vector<1x1x32xf32>
    %787 = vector.shape_cast %786 : vector<1x1x32xf32> to vector<1x32xf32>
    %c1_341 = arith.constant 1 : index
    %c0_342 = arith.constant 0 : index
    %c0_343 = arith.constant 0 : index
    %788 = vector.load %arg23[%c1_341, %c0_342, %c0_343] : memref<2x1x32xf32, #tpu.memory_space<vmem>>, vector<1x1x32xf32>
    %789 = vector.shape_cast %788 : vector<1x1x32xf32> to vector<1x32xf32>
    %cst_344 = arith.constant dense<0.000000e+00> : vector<8xf32>
    %790 = vector.multi_reduction <add>, %785, %cst_344 [1] : vector<8x32xf32> to vector<8xf32>
    %791 = vector.shape_cast %790 : vector<8xf32> to vector<8x1xf32>
    %cst_345 = arith.constant 3.200000e+01 : f32
    %792 = vector.broadcast %cst_345 : f32 to vector<8x1xf32>
    %793 = arith.divf %791, %792 : vector<8x1xf32>
    %794 = vector.broadcast %793 : vector<8x1xf32> to vector<8x32xf32>
    %795 = arith.subf %785, %794 : vector<8x32xf32>
    %796 = arith.mulf %795, %795 : vector<8x32xf32>
    %cst_346 = arith.constant dense<0.000000e+00> : vector<8xf32>
    %797 = vector.multi_reduction <add>, %796, %cst_346 [1] : vector<8x32xf32> to vector<8xf32>
    %798 = vector.shape_cast %797 : vector<8xf32> to vector<8x1xf32>
    %cst_347 = arith.constant 3.200000e+01 : f32
    %799 = vector.broadcast %cst_347 : f32 to vector<8x1xf32>
    %800 = arith.divf %798, %799 : vector<8x1xf32>
    %801 = vector.broadcast %793 : vector<8x1xf32> to vector<8x32xf32>
    %802 = arith.subf %785, %801 : vector<8x32xf32>
    %cst_348 = arith.constant 9.99999974E-6 : f32
    %803 = vector.broadcast %cst_348 : f32 to vector<8x1xf32>
    %804 = arith.addf %800, %803 : vector<8x1xf32>
    %805 = math.rsqrt %804 : vector<8x1xf32>
    %806 = vector.broadcast %805 : vector<8x1xf32> to vector<8x32xf32>
    %807 = arith.mulf %802, %806 : vector<8x32xf32>
    %808 = vector.broadcast %787 : vector<1x32xf32> to vector<8x32xf32>
    %809 = arith.mulf %807, %808 : vector<8x32xf32>
    %810 = vector.broadcast %789 : vector<1x32xf32> to vector<8x32xf32>
    %811 = arith.addf %809, %810 : vector<8x32xf32>
    %812 = arith.truncf %811 : vector<8x32xf32> to vector<8x32xbf16>
    %c1_349 = arith.constant 1 : index
    %c0_350 = arith.constant 0 : index
    %c0_351 = arith.constant 0 : index
    %813 = vector.load %arg24[%c1_349, %c0_350, %c0_351] : memref<2x32x32xbf16, #tpu.memory_space<vmem>>, vector<1x32x32xbf16>
    %814 = vector.shape_cast %813 : vector<1x32x32xbf16> to vector<32x32xbf16>
    %cst_352 = arith.constant dense<0.000000e+00> : vector<8x32xf32>
    %815 = tpu.matmul %812, %814, %cst_352 {dimension_numbers = #tpu.dot_dimension_numbers<[1], [0], [0], [1], [0, 0, 1, 1], [], []>} : vector<8x32xbf16>, vector<32x32xbf16>, vector<8x32xf32> -> vector<8x32xf32>
    %c1_353 = arith.constant 1 : index
    %c0_354 = arith.constant 0 : index
    %c0_355 = arith.constant 0 : index
    %816 = vector.load %arg25[%c1_353, %c0_354, %c0_355] : memref<2x1x32xf32, #tpu.memory_space<vmem>>, vector<1x1x32xf32>
    %817 = vector.shape_cast %816 : vector<1x1x32xf32> to vector<1x32xf32>
    %818 = vector.broadcast %817 : vector<1x32xf32> to vector<8x32xf32>
    %819 = arith.addf %815, %818 : vector<8x32xf32>
    %c1_356 = arith.constant 1 : index
    %c0_357 = arith.constant 0 : index
    %c0_358 = arith.constant 0 : index
    %820 = vector.load %arg26[%c1_356, %c0_357, %c0_358] : memref<2x32x64xbf16, #tpu.memory_space<vmem>>, vector<1x32x64xbf16>
    %821 = vector.shape_cast %820 : vector<1x32x64xbf16> to vector<32x64xbf16>
    %cst_359 = arith.constant dense<0.000000e+00> : vector<8x64xf32>
    %822 = tpu.matmul %381, %821, %cst_359 {dimension_numbers = #tpu.dot_dimension_numbers<[1], [0], [0], [1], [0, 0, 1, 1], [], []>} : vector<8x32xbf16>, vector<32x64xbf16>, vector<8x64xf32> -> vector<8x64xf32>
    %c1_360 = arith.constant 1 : index
    %c0_361 = arith.constant 0 : index
    %c0_362 = arith.constant 0 : index
    %823 = vector.load %arg27[%c1_360, %c0_361, %c0_362] : memref<2x1x64xf32, #tpu.memory_space<vmem>>, vector<1x1x64xf32>
    %824 = vector.shape_cast %823 : vector<1x1x64xf32> to vector<1x64xf32>
    %825 = vector.broadcast %824 : vector<1x64xf32> to vector<8x64xf32>
    %826 = arith.addf %822, %825 : vector<8x64xf32>
    %827 = vector.extract_strided_slice %826 {offsets = [0, 0], sizes = [8, 32], strides = [1, 1]} : vector<8x64xf32> to vector<8x32xf32>
    %828 = vector.extract_strided_slice %826 {offsets = [0, 32], sizes = [8, 32], strides = [1, 1]} : vector<8x64xf32> to vector<8x32xf32>
    %c1_363 = arith.constant 1 : index
    %c0_364 = arith.constant 0 : index
    %c0_365 = arith.constant 0 : index
    %829 = vector.load %arg28[%c1_363, %c0_364, %c0_365] : memref<2x32x32xf32, #tpu.memory_space<vmem>>, vector<1x32x32xf32>
    %830 = vector.shape_cast %829 : vector<1x32x32xf32> to vector<32x32xf32>
    %c1_366 = arith.constant 1 : index
    %c0_367 = arith.constant 0 : index
    %c0_368 = arith.constant 0 : index
    %831 = vector.load %arg29[%c1_366, %c0_367, %c0_368] : memref<2x1x32xf32, #tpu.memory_space<vmem>>, vector<1x1x32xf32>
    %832 = vector.shape_cast %831 : vector<1x1x32xf32> to vector<1x32xf32>
    %cst_369 = arith.constant 0.000000e+00 : f32
    %833 = vector.broadcast %cst_369 : f32 to vector<8x32xf32>
    %834 = vector.extract_strided_slice %819 {offsets = [0, 0], sizes = [8, 8], strides = [1, 1]} : vector<8x32xf32> to vector<8x8xf32>
    %835 = vector.extract_strided_slice %827 {offsets = [0, 0], sizes = [8, 8], strides = [1, 1]} : vector<8x32xf32> to vector<8x8xf32>
    %cst_370 = arith.constant dense<0.000000e+00> : vector<8x8xf32>
    %836 = tpu.matmul %834, %835, %cst_370 {dimension_numbers = #tpu.dot_dimension_numbers<[1], [1], [0], [0], [0, 0, 1, 0], [], []>} : vector<8x8xf32>, vector<8x8xf32>, vector<8x8xf32> -> vector<8x8xf32>
    %cst_371 = arith.constant 0.353553385 : f32
    %837 = vector.broadcast %cst_371 : f32 to vector<8x8xf32>
    %838 = arith.mulf %836, %837 : vector<8x8xf32>
    %cst_372 = arith.constant dense<0xFF800000> : vector<8xf32>
    %839 = vector.multi_reduction <maximumf>, %838, %cst_372 [1] : vector<8x8xf32> to vector<8xf32>
    %840 = vector.shape_cast %839 : vector<8xf32> to vector<8x1xf32>
    %841 = vector.broadcast %840 : vector<8x1xf32> to vector<8x8xf32>
    %842 = arith.subf %838, %841 : vector<8x8xf32>
    %843 = math.exp %842 : vector<8x8xf32>
    %cst_373 = arith.constant dense<0.000000e+00> : vector<8xf32>
    %844 = vector.multi_reduction <add>, %843, %cst_373 [1] : vector<8x8xf32> to vector<8xf32>
    %845 = vector.shape_cast %844 : vector<8xf32> to vector<8x1xf32>
    %846 = vector.broadcast %845 : vector<8x1xf32> to vector<8x8xf32>
    %847 = arith.divf %843, %846 : vector<8x8xf32>
    %848 = vector.extract_strided_slice %828 {offsets = [0, 0], sizes = [8, 8], strides = [1, 1]} : vector<8x32xf32> to vector<8x8xf32>
    %cst_374 = arith.constant dense<0.000000e+00> : vector<8x8xf32>
    %849 = tpu.matmul %847, %848, %cst_374 {dimension_numbers = #tpu.dot_dimension_numbers<[1], [0], [0], [1], [0, 0, 1, 1], [], []>} : vector<8x8xf32>, vector<8x8xf32>, vector<8x8xf32> -> vector<8x8xf32>
    %850 = vector.extract_strided_slice %830 {offsets = [0, 0], sizes = [8, 32], strides = [1, 1]} : vector<32x32xf32> to vector<8x32xf32>
    %cst_375 = arith.constant dense<0.000000e+00> : vector<8x32xf32>
    %851 = tpu.matmul %849, %850, %cst_375 {dimension_numbers = #tpu.dot_dimension_numbers<[1], [0], [0], [1], [0, 0, 1, 1], [], []>} : vector<8x8xf32>, vector<8x32xf32>, vector<8x32xf32> -> vector<8x32xf32>
    %852 = arith.addf %833, %851 : vector<8x32xf32>
    %853 = vector.extract_strided_slice %819 {offsets = [0, 8], sizes = [8, 8], strides = [1, 1]} : vector<8x32xf32> to vector<8x8xf32>
    %854 = vector.extract_strided_slice %827 {offsets = [0, 8], sizes = [8, 8], strides = [1, 1]} : vector<8x32xf32> to vector<8x8xf32>
    %cst_376 = arith.constant dense<0.000000e+00> : vector<8x8xf32>
    %855 = tpu.matmul %853, %854, %cst_376 {dimension_numbers = #tpu.dot_dimension_numbers<[1], [1], [0], [0], [0, 0, 1, 0], [], []>} : vector<8x8xf32>, vector<8x8xf32>, vector<8x8xf32> -> vector<8x8xf32>
    %cst_377 = arith.constant 0.353553385 : f32
    %856 = vector.broadcast %cst_377 : f32 to vector<8x8xf32>
    %857 = arith.mulf %855, %856 : vector<8x8xf32>
    %cst_378 = arith.constant dense<0xFF800000> : vector<8xf32>
    %858 = vector.multi_reduction <maximumf>, %857, %cst_378 [1] : vector<8x8xf32> to vector<8xf32>
    %859 = vector.shape_cast %858 : vector<8xf32> to vector<8x1xf32>
    %860 = vector.broadcast %859 : vector<8x1xf32> to vector<8x8xf32>
    %861 = arith.subf %857, %860 : vector<8x8xf32>
    %862 = math.exp %861 : vector<8x8xf32>
    %cst_379 = arith.constant dense<0.000000e+00> : vector<8xf32>
    %863 = vector.multi_reduction <add>, %862, %cst_379 [1] : vector<8x8xf32> to vector<8xf32>
    %864 = vector.shape_cast %863 : vector<8xf32> to vector<8x1xf32>
    %865 = vector.broadcast %864 : vector<8x1xf32> to vector<8x8xf32>
    %866 = arith.divf %862, %865 : vector<8x8xf32>
    %867 = vector.extract_strided_slice %828 {offsets = [0, 8], sizes = [8, 8], strides = [1, 1]} : vector<8x32xf32> to vector<8x8xf32>
    %cst_380 = arith.constant dense<0.000000e+00> : vector<8x8xf32>
    %868 = tpu.matmul %866, %867, %cst_380 {dimension_numbers = #tpu.dot_dimension_numbers<[1], [0], [0], [1], [0, 0, 1, 1], [], []>} : vector<8x8xf32>, vector<8x8xf32>, vector<8x8xf32> -> vector<8x8xf32>
    %869 = vector.extract_strided_slice %830 {offsets = [8, 0], sizes = [8, 32], strides = [1, 1]} : vector<32x32xf32> to vector<8x32xf32>
    %cst_381 = arith.constant dense<0.000000e+00> : vector<8x32xf32>
    %870 = tpu.matmul %868, %869, %cst_381 {dimension_numbers = #tpu.dot_dimension_numbers<[1], [0], [0], [1], [0, 0, 1, 1], [], []>} : vector<8x8xf32>, vector<8x32xf32>, vector<8x32xf32> -> vector<8x32xf32>
    %871 = arith.addf %852, %870 : vector<8x32xf32>
    %872 = vector.extract_strided_slice %819 {offsets = [0, 16], sizes = [8, 8], strides = [1, 1]} : vector<8x32xf32> to vector<8x8xf32>
    %873 = vector.extract_strided_slice %827 {offsets = [0, 16], sizes = [8, 8], strides = [1, 1]} : vector<8x32xf32> to vector<8x8xf32>
    %cst_382 = arith.constant dense<0.000000e+00> : vector<8x8xf32>
    %874 = tpu.matmul %872, %873, %cst_382 {dimension_numbers = #tpu.dot_dimension_numbers<[1], [1], [0], [0], [0, 0, 1, 0], [], []>} : vector<8x8xf32>, vector<8x8xf32>, vector<8x8xf32> -> vector<8x8xf32>
    %cst_383 = arith.constant 0.353553385 : f32
    %875 = vector.broadcast %cst_383 : f32 to vector<8x8xf32>
    %876 = arith.mulf %874, %875 : vector<8x8xf32>
    %cst_384 = arith.constant dense<0xFF800000> : vector<8xf32>
    %877 = vector.multi_reduction <maximumf>, %876, %cst_384 [1] : vector<8x8xf32> to vector<8xf32>
    %878 = vector.shape_cast %877 : vector<8xf32> to vector<8x1xf32>
    %879 = vector.broadcast %878 : vector<8x1xf32> to vector<8x8xf32>
    %880 = arith.subf %876, %879 : vector<8x8xf32>
    %881 = math.exp %880 : vector<8x8xf32>
    %cst_385 = arith.constant dense<0.000000e+00> : vector<8xf32>
    %882 = vector.multi_reduction <add>, %881, %cst_385 [1] : vector<8x8xf32> to vector<8xf32>
    %883 = vector.shape_cast %882 : vector<8xf32> to vector<8x1xf32>
    %884 = vector.broadcast %883 : vector<8x1xf32> to vector<8x8xf32>
    %885 = arith.divf %881, %884 : vector<8x8xf32>
    %886 = vector.extract_strided_slice %828 {offsets = [0, 16], sizes = [8, 8], strides = [1, 1]} : vector<8x32xf32> to vector<8x8xf32>
    %cst_386 = arith.constant dense<0.000000e+00> : vector<8x8xf32>
    %887 = tpu.matmul %885, %886, %cst_386 {dimension_numbers = #tpu.dot_dimension_numbers<[1], [0], [0], [1], [0, 0, 1, 1], [], []>} : vector<8x8xf32>, vector<8x8xf32>, vector<8x8xf32> -> vector<8x8xf32>
    %888 = vector.extract_strided_slice %830 {offsets = [16, 0], sizes = [8, 32], strides = [1, 1]} : vector<32x32xf32> to vector<8x32xf32>
    %cst_387 = arith.constant dense<0.000000e+00> : vector<8x32xf32>
    %889 = tpu.matmul %887, %888, %cst_387 {dimension_numbers = #tpu.dot_dimension_numbers<[1], [0], [0], [1], [0, 0, 1, 1], [], []>} : vector<8x8xf32>, vector<8x32xf32>, vector<8x32xf32> -> vector<8x32xf32>
    %890 = arith.addf %871, %889 : vector<8x32xf32>
    %891 = vector.extract_strided_slice %819 {offsets = [0, 24], sizes = [8, 8], strides = [1, 1]} : vector<8x32xf32> to vector<8x8xf32>
    %892 = vector.extract_strided_slice %827 {offsets = [0, 24], sizes = [8, 8], strides = [1, 1]} : vector<8x32xf32> to vector<8x8xf32>
    %cst_388 = arith.constant dense<0.000000e+00> : vector<8x8xf32>
    %893 = tpu.matmul %891, %892, %cst_388 {dimension_numbers = #tpu.dot_dimension_numbers<[1], [1], [0], [0], [0, 0, 1, 0], [], []>} : vector<8x8xf32>, vector<8x8xf32>, vector<8x8xf32> -> vector<8x8xf32>
    %cst_389 = arith.constant 0.353553385 : f32
    %894 = vector.broadcast %cst_389 : f32 to vector<8x8xf32>
    %895 = arith.mulf %893, %894 : vector<8x8xf32>
    %cst_390 = arith.constant dense<0xFF800000> : vector<8xf32>
    %896 = vector.multi_reduction <maximumf>, %895, %cst_390 [1] : vector<8x8xf32> to vector<8xf32>
    %897 = vector.shape_cast %896 : vector<8xf32> to vector<8x1xf32>
    %898 = vector.broadcast %897 : vector<8x1xf32> to vector<8x8xf32>
    %899 = arith.subf %895, %898 : vector<8x8xf32>
    %900 = math.exp %899 : vector<8x8xf32>
    %cst_391 = arith.constant dense<0.000000e+00> : vector<8xf32>
    %901 = vector.multi_reduction <add>, %900, %cst_391 [1] : vector<8x8xf32> to vector<8xf32>
    %902 = vector.shape_cast %901 : vector<8xf32> to vector<8x1xf32>
    %903 = vector.broadcast %902 : vector<8x1xf32> to vector<8x8xf32>
    %904 = arith.divf %900, %903 : vector<8x8xf32>
    %905 = vector.extract_strided_slice %828 {offsets = [0, 24], sizes = [8, 8], strides = [1, 1]} : vector<8x32xf32> to vector<8x8xf32>
    %cst_392 = arith.constant dense<0.000000e+00> : vector<8x8xf32>
    %906 = tpu.matmul %904, %905, %cst_392 {dimension_numbers = #tpu.dot_dimension_numbers<[1], [0], [0], [1], [0, 0, 1, 1], [], []>} : vector<8x8xf32>, vector<8x8xf32>, vector<8x8xf32> -> vector<8x8xf32>
    %907 = vector.extract_strided_slice %830 {offsets = [24, 0], sizes = [8, 32], strides = [1, 1]} : vector<32x32xf32> to vector<8x32xf32>
    %cst_393 = arith.constant dense<0.000000e+00> : vector<8x32xf32>
    %908 = tpu.matmul %906, %907, %cst_393 {dimension_numbers = #tpu.dot_dimension_numbers<[1], [0], [0], [1], [0, 0, 1, 1], [], []>} : vector<8x8xf32>, vector<8x32xf32>, vector<8x32xf32> -> vector<8x32xf32>
    %909 = arith.addf %890, %908 : vector<8x32xf32>
    %910 = vector.broadcast %832 : vector<1x32xf32> to vector<8x32xf32>
    %911 = arith.addf %909, %910 : vector<8x32xf32>
    %912 = arith.addf %811, %911 : vector<8x32xf32>
    %c1_394 = arith.constant 1 : index
    %c0_395 = arith.constant 0 : index
    %c0_396 = arith.constant 0 : index
    %913 = vector.load %arg30[%c1_394, %c0_395, %c0_396] : memref<2x1x32xf32, #tpu.memory_space<vmem>>, vector<1x1x32xf32>
    %914 = vector.shape_cast %913 : vector<1x1x32xf32> to vector<1x32xf32>
    %c1_397 = arith.constant 1 : index
    %c0_398 = arith.constant 0 : index
    %c0_399 = arith.constant 0 : index
    %915 = vector.load %arg31[%c1_397, %c0_398, %c0_399] : memref<2x1x32xf32, #tpu.memory_space<vmem>>, vector<1x1x32xf32>
    %916 = vector.shape_cast %915 : vector<1x1x32xf32> to vector<1x32xf32>
    %cst_400 = arith.constant dense<0.000000e+00> : vector<8xf32>
    %917 = vector.multi_reduction <add>, %912, %cst_400 [1] : vector<8x32xf32> to vector<8xf32>
    %918 = vector.shape_cast %917 : vector<8xf32> to vector<8x1xf32>
    %cst_401 = arith.constant 3.200000e+01 : f32
    %919 = vector.broadcast %cst_401 : f32 to vector<8x1xf32>
    %920 = arith.divf %918, %919 : vector<8x1xf32>
    %921 = vector.broadcast %920 : vector<8x1xf32> to vector<8x32xf32>
    %922 = arith.subf %912, %921 : vector<8x32xf32>
    %923 = arith.mulf %922, %922 : vector<8x32xf32>
    %cst_402 = arith.constant dense<0.000000e+00> : vector<8xf32>
    %924 = vector.multi_reduction <add>, %923, %cst_402 [1] : vector<8x32xf32> to vector<8xf32>
    %925 = vector.shape_cast %924 : vector<8xf32> to vector<8x1xf32>
    %cst_403 = arith.constant 3.200000e+01 : f32
    %926 = vector.broadcast %cst_403 : f32 to vector<8x1xf32>
    %927 = arith.divf %925, %926 : vector<8x1xf32>
    %928 = vector.broadcast %920 : vector<8x1xf32> to vector<8x32xf32>
    %929 = arith.subf %912, %928 : vector<8x32xf32>
    %cst_404 = arith.constant 9.99999974E-6 : f32
    %930 = vector.broadcast %cst_404 : f32 to vector<8x1xf32>
    %931 = arith.addf %927, %930 : vector<8x1xf32>
    %932 = math.rsqrt %931 : vector<8x1xf32>
    %933 = vector.broadcast %932 : vector<8x1xf32> to vector<8x32xf32>
    %934 = arith.mulf %929, %933 : vector<8x32xf32>
    %935 = vector.broadcast %914 : vector<1x32xf32> to vector<8x32xf32>
    %936 = arith.mulf %934, %935 : vector<8x32xf32>
    %937 = vector.broadcast %916 : vector<1x32xf32> to vector<8x32xf32>
    %938 = arith.addf %936, %937 : vector<8x32xf32>
    %939 = arith.truncf %938 : vector<8x32xf32> to vector<8x32xbf16>
    %c1_405 = arith.constant 1 : index
    %c0_406 = arith.constant 0 : index
    %c0_407 = arith.constant 0 : index
    %940 = vector.load %arg32[%c1_405, %c0_406, %c0_407] : memref<2x32x128xbf16, #tpu.memory_space<vmem>>, vector<1x32x128xbf16>
    %941 = vector.shape_cast %940 : vector<1x32x128xbf16> to vector<32x128xbf16>
    %cst_408 = arith.constant dense<0.000000e+00> : vector<8x128xf32>
    %942 = tpu.matmul %939, %941, %cst_408 {dimension_numbers = #tpu.dot_dimension_numbers<[1], [0], [0], [1], [0, 0, 1, 1], [], []>} : vector<8x32xbf16>, vector<32x128xbf16>, vector<8x128xf32> -> vector<8x128xf32>
    %c1_409 = arith.constant 1 : index
    %c0_410 = arith.constant 0 : index
    %c0_411 = arith.constant 0 : index
    %943 = vector.load %arg33[%c1_409, %c0_410, %c0_411] : memref<2x1x128xf32, #tpu.memory_space<vmem>>, vector<1x1x128xf32>
    %944 = vector.shape_cast %943 : vector<1x1x128xf32> to vector<1x128xf32>
    %945 = vector.broadcast %944 : vector<1x128xf32> to vector<8x128xf32>
    %946 = arith.addf %942, %945 : vector<8x128xf32>
    %cst_412 = arith.constant 0.000000e+00 : f32
    %947 = vector.broadcast %cst_412 : f32 to vector<8x128xf32>
    %948 = arith.maximumf %946, %947 : vector<8x128xf32>
    %949 = arith.truncf %948 : vector<8x128xf32> to vector<8x128xbf16>
    %c1_413 = arith.constant 1 : index
    %c0_414 = arith.constant 0 : index
    %c0_415 = arith.constant 0 : index
    %950 = vector.load %arg34[%c1_413, %c0_414, %c0_415] : memref<2x128x32xbf16, #tpu.memory_space<vmem>>, vector<1x128x32xbf16>
    %951 = vector.shape_cast %950 : vector<1x128x32xbf16> to vector<128x32xbf16>
    %cst_416 = arith.constant dense<0.000000e+00> : vector<8x32xf32>
    %952 = tpu.matmul %949, %951, %cst_416 {dimension_numbers = #tpu.dot_dimension_numbers<[1], [0], [0], [1], [0, 0, 1, 1], [], []>} : vector<8x128xbf16>, vector<128x32xbf16>, vector<8x32xf32> -> vector<8x32xf32>
    %c1_417 = arith.constant 1 : index
    %c0_418 = arith.constant 0 : index
    %c0_419 = arith.constant 0 : index
    %953 = vector.load %arg35[%c1_417, %c0_418, %c0_419] : memref<2x1x32xf32, #tpu.memory_space<vmem>>, vector<1x1x32xf32>
    %954 = vector.shape_cast %953 : vector<1x1x32xf32> to vector<1x32xf32>
    %955 = vector.broadcast %954 : vector<1x32xf32> to vector<8x32xf32>
    %956 = arith.addf %952, %955 : vector<8x32xf32>
    %957 = arith.addf %938, %956 : vector<8x32xf32>
    %c1_420 = arith.constant 1 : index
    %c0_421 = arith.constant 0 : index
    %c0_422 = arith.constant 0 : index
    %958 = vector.load %arg36[%c1_420, %c0_421, %c0_422] : memref<2x1x32xf32, #tpu.memory_space<vmem>>, vector<1x1x32xf32>
    %959 = vector.shape_cast %958 : vector<1x1x32xf32> to vector<1x32xf32>
    %c1_423 = arith.constant 1 : index
    %c0_424 = arith.constant 0 : index
    %c0_425 = arith.constant 0 : index
    %960 = vector.load %arg37[%c1_423, %c0_424, %c0_425] : memref<2x1x32xf32, #tpu.memory_space<vmem>>, vector<1x1x32xf32>
    %961 = vector.shape_cast %960 : vector<1x1x32xf32> to vector<1x32xf32>
    %cst_426 = arith.constant dense<0.000000e+00> : vector<8xf32>
    %962 = vector.multi_reduction <add>, %957, %cst_426 [1] : vector<8x32xf32> to vector<8xf32>
    %963 = vector.shape_cast %962 : vector<8xf32> to vector<8x1xf32>
    %cst_427 = arith.constant 3.200000e+01 : f32
    %964 = vector.broadcast %cst_427 : f32 to vector<8x1xf32>
    %965 = arith.divf %963, %964 : vector<8x1xf32>
    %966 = vector.broadcast %965 : vector<8x1xf32> to vector<8x32xf32>
    %967 = arith.subf %957, %966 : vector<8x32xf32>
    %968 = arith.mulf %967, %967 : vector<8x32xf32>
    %cst_428 = arith.constant dense<0.000000e+00> : vector<8xf32>
    %969 = vector.multi_reduction <add>, %968, %cst_428 [1] : vector<8x32xf32> to vector<8xf32>
    %970 = vector.shape_cast %969 : vector<8xf32> to vector<8x1xf32>
    %cst_429 = arith.constant 3.200000e+01 : f32
    %971 = vector.broadcast %cst_429 : f32 to vector<8x1xf32>
    %972 = arith.divf %970, %971 : vector<8x1xf32>
    %973 = vector.broadcast %965 : vector<8x1xf32> to vector<8x32xf32>
    %974 = arith.subf %957, %973 : vector<8x32xf32>
    %cst_430 = arith.constant 9.99999974E-6 : f32
    %975 = vector.broadcast %cst_430 : f32 to vector<8x1xf32>
    %976 = arith.addf %972, %975 : vector<8x1xf32>
    %977 = math.rsqrt %976 : vector<8x1xf32>
    %978 = vector.broadcast %977 : vector<8x1xf32> to vector<8x32xf32>
    %979 = arith.mulf %974, %978 : vector<8x32xf32>
    %980 = vector.broadcast %959 : vector<1x32xf32> to vector<8x32xf32>
    %981 = arith.mulf %979, %980 : vector<8x32xf32>
    %982 = vector.broadcast %961 : vector<1x32xf32> to vector<8x32xf32>
    %983 = arith.addf %981, %982 : vector<8x32xf32>
    %c0_431 = arith.constant 0 : index
    %c0_432 = arith.constant 0 : index
    %984 = vector.load %arg38[%c0_431, %c0_432] : memref<1x32xf32, #tpu.memory_space<vmem>>, vector<1x32xf32>
    %c0_433 = arith.constant 0 : index
    %c0_434 = arith.constant 0 : index
    %985 = vector.load %arg39[%c0_433, %c0_434] : memref<1x32xf32, #tpu.memory_space<vmem>>, vector<1x32xf32>
    %cst_435 = arith.constant dense<0.000000e+00> : vector<8xf32>
    %986 = vector.multi_reduction <add>, %983, %cst_435 [1] : vector<8x32xf32> to vector<8xf32>
    %987 = vector.shape_cast %986 : vector<8xf32> to vector<8x1xf32>
    %cst_436 = arith.constant 3.200000e+01 : f32
    %988 = vector.broadcast %cst_436 : f32 to vector<8x1xf32>
    %989 = arith.divf %987, %988 : vector<8x1xf32>
    %990 = vector.broadcast %989 : vector<8x1xf32> to vector<8x32xf32>
    %991 = arith.subf %983, %990 : vector<8x32xf32>
    %992 = arith.mulf %991, %991 : vector<8x32xf32>
    %cst_437 = arith.constant dense<0.000000e+00> : vector<8xf32>
    %993 = vector.multi_reduction <add>, %992, %cst_437 [1] : vector<8x32xf32> to vector<8xf32>
    %994 = vector.shape_cast %993 : vector<8xf32> to vector<8x1xf32>
    %cst_438 = arith.constant 3.200000e+01 : f32
    %995 = vector.broadcast %cst_438 : f32 to vector<8x1xf32>
    %996 = arith.divf %994, %995 : vector<8x1xf32>
    %997 = vector.broadcast %989 : vector<8x1xf32> to vector<8x32xf32>
    %998 = arith.subf %983, %997 : vector<8x32xf32>
    %cst_439 = arith.constant 9.99999974E-6 : f32
    %999 = vector.broadcast %cst_439 : f32 to vector<8x1xf32>
    %1000 = arith.addf %996, %999 : vector<8x1xf32>
    %1001 = math.rsqrt %1000 : vector<8x1xf32>
    %1002 = vector.broadcast %1001 : vector<8x1xf32> to vector<8x32xf32>
    %1003 = arith.mulf %998, %1002 : vector<8x32xf32>
    %1004 = vector.broadcast %984 : vector<1x32xf32> to vector<8x32xf32>
    %1005 = arith.mulf %1003, %1004 : vector<8x32xf32>
    %1006 = vector.broadcast %985 : vector<1x32xf32> to vector<8x32xf32>
    %1007 = arith.addf %1005, %1006 : vector<8x32xf32>
    %1008 = arith.truncf %1007 : vector<8x32xf32> to vector<8x32xbf16>
    %c0_440 = arith.constant 0 : index
    %c0_441 = arith.constant 0 : index
    %1009 = vector.load %arg40[%c0_440, %c0_441] : memref<32x128xbf16, #tpu.memory_space<vmem>>, vector<32x128xbf16>
    %cst_442 = arith.constant dense<0.000000e+00> : vector<8x128xf32>
    %1010 = tpu.matmul %1008, %1009, %cst_442 {dimension_numbers = #tpu.dot_dimension_numbers<[1], [0], [0], [1], [0, 0, 1, 1], [], []>} : vector<8x32xbf16>, vector<32x128xbf16>, vector<8x128xf32> -> vector<8x128xf32>
    %c0_443 = arith.constant 0 : index
    %c0_444 = arith.constant 0 : index
    %1011 = vector.load %arg41[%c0_443, %c0_444] : memref<1x128xf32, #tpu.memory_space<vmem>>, vector<1x128xf32>
    %1012 = vector.broadcast %1011 : vector<1x128xf32> to vector<8x128xf32>
    %1013 = arith.addf %1010, %1012 : vector<8x128xf32>
    %c0_445 = arith.constant 0 : index
    %c0_446 = arith.constant 0 : index
    %c0_447 = arith.constant 0 : index
    %1014 = vector.load %arg42[%c0_445, %c0_446, %c0_447] : memref<1x8x128xf32, #tpu.memory_space<vmem>>, vector<1x8x128xf32>
    %1015 = vector.shape_cast %1014 : vector<1x8x128xf32> to vector<8x128xf32>
    %1016 = vector.shape_cast %1013 : vector<8x128xf32> to vector<1x8x128xf32>
    tpu.vector_store %arg42[%c0_445, %c0_446, %c0_447], %1016 {strides = array<i32>} : memref<1x8x128xf32, #tpu.memory_space<vmem>>, vector<1x8x128xf32>,
    return
  }
  func.func @transform_0(%arg0: i32) -> (i32, i32, i32) {
    %c0_i32 = arith.constant 0 : i32
    %c0_i32_0 = arith.constant 0 : i32
    %c0_i32_1 = arith.constant 0 : i32
    return %arg0, %c0_i32, %c0_i32_0 : i32, i32, i32
  }
  func.func @transform_1(%arg0: i32) -> (i32, i32, i32) {
    %c0_i32 = arith.constant 0 : i32
    %c0_i32_0 = arith.constant 0 : i32
    %c0_i32_1 = arith.constant 0 : i32
    return %arg0, %c0_i32, %c0_i32_0 : i32, i32, i32
  }
  func.func @transform_2(%arg0: i32) -> (i32, i32, i32) {
    %c0_i32 = arith.constant 0 : i32
    %c0_i32_0 = arith.constant 0 : i32
    %c0_i32_1 = arith.constant 0 : i32
    return %arg0, %c0_i32, %c0_i32_0 : i32, i32, i32
  }
  func.func @transform_3(%arg0: i32) -> (i32, i32, i32) {
    %c0_i32 = arith.constant 0 : i32
    %c0_i32_0 = arith.constant 0 : i32
    %c0_i32_1 = arith.constant 0 : i32
    %c0_i32_2 = arith.constant 0 : i32
    return %c0_i32, %c0_i32_0, %c0_i32_1 : i32, i32, i32
  }
  func.func @transform_4(%arg0: i32) -> (i32, i32, i32) {
    %c0_i32 = arith.constant 0 : i32
    %c0_i32_0 = arith.constant 0 : i32
    %c0_i32_1 = arith.constant 0 : i32
    %c0_i32_2 = arith.constant 0 : i32
    return %c0_i32, %c0_i32_0, %c0_i32_1 : i32, i32, i32
  }
  func.func @transform_5(%arg0: i32) -> (i32, i32, i32) {
    %c0_i32 = arith.constant 0 : i32
    %c0_i32_0 = arith.constant 0 : i32
    %c0_i32_1 = arith.constant 0 : i32
    %c0_i32_2 = arith.constant 0 : i32
    return %c0_i32, %c0_i32_0, %c0_i32_1 : i32, i32, i32
  }
  func.func @transform_6(%arg0: i32) -> (i32, i32, i32) {
    %c0_i32 = arith.constant 0 : i32
    %c0_i32_0 = arith.constant 0 : i32
    %c0_i32_1 = arith.constant 0 : i32
    %c0_i32_2 = arith.constant 0 : i32
    return %c0_i32, %c0_i32_0, %c0_i32_1 : i32, i32, i32
  }
  func.func @transform_7(%arg0: i32) -> (i32, i32, i32) {
    %c0_i32 = arith.constant 0 : i32
    %c0_i32_0 = arith.constant 0 : i32
    %c0_i32_1 = arith.constant 0 : i32
    %c0_i32_2 = arith.constant 0 : i32
    return %c0_i32, %c0_i32_0, %c0_i32_1 : i32, i32, i32
  }
  func.func @transform_8(%arg0: i32) -> (i32, i32, i32) {
    %c0_i32 = arith.constant 0 : i32
    %c0_i32_0 = arith.constant 0 : i32
    %c0_i32_1 = arith.constant 0 : i32
    %c0_i32_2 = arith.constant 0 : i32
    return %c0_i32, %c0_i32_0, %c0_i32_1 : i32, i32, i32
  }
  func.func @transform_9(%arg0: i32) -> (i32, i32, i32) {
    %c0_i32 = arith.constant 0 : i32
    %c0_i32_0 = arith.constant 0 : i32
    %c0_i32_1 = arith.constant 0 : i32
    %c0_i32_2 = arith.constant 0 : i32
    return %c0_i32, %c0_i32_0, %c0_i32_1 : i32, i32, i32
  }
  func.func @transform_10(%arg0: i32) -> (i32, i32, i32) {
    %c0_i32 = arith.constant 0 : i32
    %c0_i32_0 = arith.constant 0 : i32
    %c0_i32_1 = arith.constant 0 : i32
    %c0_i32_2 = arith.constant 0 : i32
    return %c0_i32, %c0_i32_0, %c0_i32_1 : i32, i32, i32
  }
  func.func @transform_11(%arg0: i32) -> (i32, i32, i32) {
    %c0_i32 = arith.constant 0 : i32
    %c0_i32_0 = arith.constant 0 : i32
    %c0_i32_1 = arith.constant 0 : i32
    %c0_i32_2 = arith.constant 0 : i32
    return %c0_i32, %c0_i32_0, %c0_i32_1 : i32, i32, i32
  }
  func.func @transform_12(%arg0: i32) -> (i32, i32, i32) {
    %c0_i32 = arith.constant 0 : i32
    %c0_i32_0 = arith.constant 0 : i32
    %c0_i32_1 = arith.constant 0 : i32
    %c0_i32_2 = arith.constant 0 : i32
    return %c0_i32, %c0_i32_0, %c0_i32_1 : i32, i32, i32
  }
  func.func @transform_13(%arg0: i32) -> (i32, i32, i32) {
    %c0_i32 = arith.constant 0 : i32
    %c0_i32_0 = arith.constant 0 : i32
    %c0_i32_1 = arith.constant 0 : i32
    %c0_i32_2 = arith.constant 0 : i32
    return %c0_i32, %c0_i32_0, %c0_i32_1 : i32, i32, i32
  }
  func.func @transform_14(%arg0: i32) -> (i32, i32, i32) {
    %c0_i32 = arith.constant 0 : i32
    %c0_i32_0 = arith.constant 0 : i32
    %c0_i32_1 = arith.constant 0 : i32
    %c0_i32_2 = arith.constant 0 : i32
    return %c0_i32, %c0_i32_0, %c0_i32_1 : i32, i32, i32
  }
  func.func @transform_15(%arg0: i32) -> (i32, i32) {
    %c0_i32 = arith.constant 0 : i32
    %c0_i32_0 = arith.constant 0 : i32
    %c0_i32_1 = arith.constant 0 : i32
    return %c0_i32, %c0_i32_0 : i32, i32
  }
  func.func @transform_16(%arg0: i32) -> (i32, i32) {
    %c0_i32 = arith.constant 0 : i32
    %c0_i32_0 = arith.constant 0 : i32
    %c0_i32_1 = arith.constant 0 : i32
    return %c0_i32, %c0_i32_0 : i32, i32
  }
  func.func @transform_17(%arg0: i32) -> (i32, i32, i32) {
    %c0_i32 = arith.constant 0 : i32
    %c0_i32_0 = arith.constant 0 : i32
    %c0_i32_1 = arith.constant 0 : i32
    %c0_i32_2 = arith.constant 0 : i32
    return %c0_i32, %c0_i32_0, %c0_i32_1 : i32, i32, i32
  }
  func.func @transform_18(%arg0: i32) -> (i32, i32, i32) {
    %c0_i32 = arith.constant 0 : i32
    %c0_i32_0 = arith.constant 0 : i32
    %c0_i32_1 = arith.constant 0 : i32
    %c0_i32_2 = arith.constant 0 : i32
    return %c0_i32, %c0_i32_0, %c0_i32_1 : i32, i32, i32
  }
  func.func @transform_19(%arg0: i32) -> (i32, i32, i32) {
    %c0_i32 = arith.constant 0 : i32
    %c0_i32_0 = arith.constant 0 : i32
    %c0_i32_1 = arith.constant 0 : i32
    %c0_i32_2 = arith.constant 0 : i32
    return %c0_i32, %c0_i32_0, %c0_i32_1 : i32, i32, i32
  }
  func.func @transform_20(%arg0: i32) -> (i32, i32, i32) {
    %c0_i32 = arith.constant 0 : i32
    %c0_i32_0 = arith.constant 0 : i32
    %c0_i32_1 = arith.constant 0 : i32
    %c0_i32_2 = arith.constant 0 : i32
    return %c0_i32, %c0_i32_0, %c0_i32_1 : i32, i32, i32
  }
  func.func @transform_21(%arg0: i32) -> (i32, i32, i32) {
    %c0_i32 = arith.constant 0 : i32
    %c0_i32_0 = arith.constant 0 : i32
    %c0_i32_1 = arith.constant 0 : i32
    %c0_i32_2 = arith.constant 0 : i32
    return %c0_i32, %c0_i32_0, %c0_i32_1 : i32, i32, i32
  }
  func.func @transform_22(%arg0: i32) -> (i32, i32, i32) {
    %c0_i32 = arith.constant 0 : i32
    %c0_i32_0 = arith.constant 0 : i32
    %c0_i32_1 = arith.constant 0 : i32
    %c0_i32_2 = arith.constant 0 : i32
    return %c0_i32, %c0_i32_0, %c0_i32_1 : i32, i32, i32
  }
  func.func @transform_23(%arg0: i32) -> (i32, i32, i32) {
    %c0_i32 = arith.constant 0 : i32
    %c0_i32_0 = arith.constant 0 : i32
    %c0_i32_1 = arith.constant 0 : i32
    %c0_i32_2 = arith.constant 0 : i32
    return %c0_i32, %c0_i32_0, %c0_i32_1 : i32, i32, i32
  }
  func.func @transform_24(%arg0: i32) -> (i32, i32, i32) {
    %c0_i32 = arith.constant 0 : i32
    %c0_i32_0 = arith.constant 0 : i32
    %c0_i32_1 = arith.constant 0 : i32
    %c0_i32_2 = arith.constant 0 : i32
    return %c0_i32, %c0_i32_0, %c0_i32_1 : i32, i32, i32
  }
  func.func @transform_25(%arg0: i32) -> (i32, i32, i32) {
    %c0_i32 = arith.constant 0 : i32
    %c0_i32_0 = arith.constant 0 : i32
    %c0_i32_1 = arith.constant 0 : i32
    %c0_i32_2 = arith.constant 0 : i32
    return %c0_i32, %c0_i32_0, %c0_i32_1 : i32, i32, i32
  }
  func.func @transform_26(%arg0: i32) -> (i32, i32, i32) {
    %c0_i32 = arith.constant 0 : i32
    %c0_i32_0 = arith.constant 0 : i32
    %c0_i32_1 = arith.constant 0 : i32
    %c0_i32_2 = arith.constant 0 : i32
    return %c0_i32, %c0_i32_0, %c0_i32_1 : i32, i32, i32
  }
  func.func @transform_27(%arg0: i32) -> (i32, i32, i32) {
    %c0_i32 = arith.constant 0 : i32
    %c0_i32_0 = arith.constant 0 : i32
    %c0_i32_1 = arith.constant 0 : i32
    %c0_i32_2 = arith.constant 0 : i32
    return %c0_i32, %c0_i32_0, %c0_i32_1 : i32, i32, i32
  }
  func.func @transform_28(%arg0: i32) -> (i32, i32, i32) {
    %c0_i32 = arith.constant 0 : i32
    %c0_i32_0 = arith.constant 0 : i32
    %c0_i32_1 = arith.constant 0 : i32
    %c0_i32_2 = arith.constant 0 : i32
    return %c0_i32, %c0_i32_0, %c0_i32_1 : i32, i32, i32
  }
  func.func @transform_29(%arg0: i32) -> (i32, i32, i32) {
    %c0_i32 = arith.constant 0 : i32
    %c0_i32_0 = arith.constant 0 : i32
    %c0_i32_1 = arith.constant 0 : i32
    %c0_i32_2 = arith.constant 0 : i32
    return %c0_i32, %c0_i32_0, %c0_i32_1 : i32, i32, i32
  }
  func.func @transform_30(%arg0: i32) -> (i32, i32, i32) {
    %c0_i32 = arith.constant 0 : i32
    %c0_i32_0 = arith.constant 0 : i32
    %c0_i32_1 = arith.constant 0 : i32
    %c0_i32_2 = arith.constant 0 : i32
    return %c0_i32, %c0_i32_0, %c0_i32_1 : i32, i32, i32
  }
  func.func @transform_31(%arg0: i32) -> (i32, i32, i32) {
    %c0_i32 = arith.constant 0 : i32
    %c0_i32_0 = arith.constant 0 : i32
    %c0_i32_1 = arith.constant 0 : i32
    %c0_i32_2 = arith.constant 0 : i32
    return %c0_i32, %c0_i32_0, %c0_i32_1 : i32, i32, i32
  }
  func.func @transform_32(%arg0: i32) -> (i32, i32, i32) {
    %c0_i32 = arith.constant 0 : i32
    %c0_i32_0 = arith.constant 0 : i32
    %c0_i32_1 = arith.constant 0 : i32
    %c0_i32_2 = arith.constant 0 : i32
    return %c0_i32, %c0_i32_0, %c0_i32_1 : i32, i32, i32
  }
  func.func @transform_33(%arg0: i32) -> (i32, i32, i32) {
    %c0_i32 = arith.constant 0 : i32
    %c0_i32_0 = arith.constant 0 : i32
    %c0_i32_1 = arith.constant 0 : i32
    %c0_i32_2 = arith.constant 0 : i32
    return %c0_i32, %c0_i32_0, %c0_i32_1 : i32, i32, i32
  }
  func.func @transform_34(%arg0: i32) -> (i32, i32, i32) {
    %c0_i32 = arith.constant 0 : i32
    %c0_i32_0 = arith.constant 0 : i32
    %c0_i32_1 = arith.constant 0 : i32
    %c0_i32_2 = arith.constant 0 : i32
    return %c0_i32, %c0_i32_0, %c0_i32_1 : i32, i32, i32
  }
  func.func @transform_35(%arg0: i32) -> (i32, i32, i32) {
    %c0_i32 = arith.constant 0 : i32
    %c0_i32_0 = arith.constant 0 : i32
    %c0_i32_1 = arith.constant 0 : i32
    %c0_i32_2 = arith.constant 0 : i32
    return %c0_i32, %c0_i32_0, %c0_i32_1 : i32, i32, i32
  }
  func.func @transform_36(%arg0: i32) -> (i32, i32, i32) {
    %c0_i32 = arith.constant 0 : i32
    %c0_i32_0 = arith.constant 0 : i32
    %c0_i32_1 = arith.constant 0 : i32
    %c0_i32_2 = arith.constant 0 : i32
    return %c0_i32, %c0_i32_0, %c0_i32_1 : i32, i32, i32
  }
  func.func @transform_37(%arg0: i32) -> (i32, i32) {
    %c0_i32 = arith.constant 0 : i32
    %c0_i32_0 = arith.constant 0 : i32
    %c0_i32_1 = arith.constant 0 : i32
    return %c0_i32, %c0_i32_0 : i32, i32
  }
  func.func @transform_38(%arg0: i32) -> (i32, i32) {
    %c0_i32 = arith.constant 0 : i32
    %c0_i32_0 = arith.constant 0 : i32
    %c0_i32_1 = arith.constant 0 : i32
    return %c0_i32, %c0_i32_0 : i32, i32
  }
  func.func @transform_39(%arg0: i32) -> (i32, i32) {
    %c0_i32 = arith.constant 0 : i32
    %c0_i32_0 = arith.constant 0 : i32
    %c0_i32_1 = arith.constant 0 : i32
    return %c0_i32, %c0_i32_0 : i32, i32
  }
  func.func @transform_40(%arg0: i32) -> (i32, i32) {
    %c0_i32 = arith.constant 0 : i32
    %c0_i32_0 = arith.constant 0 : i32
    %c0_i32_1 = arith.constant 0 : i32
    return %c0_i32, %c0_i32_0 : i32, i32
  }
  func.func @transform_41(%arg0: i32) -> (i32, i32, i32) {
    %c0_i32 = arith.constant 0 : i32
    %c0_i32_0 = arith.constant 0 : i32
    %c0_i32_1 = arith.constant 0 : i32
    return %arg0, %c0_i32, %c0_i32_0 : i32, i32, i32
  }
}

</mosaic_0001>

<llo_original>
// kernel: transformer_forward.1
$region0: #{transformer_forward.1}
  #allocation0 [shape = 'u32[]', space=smem, size = 0x4, offset = 0x4, fixed_abs, tag = 'smem constant byte address 0x4 - core index']
  #allocation1 [shape = 'u32[72,128]{1,0:T(1,128)}', space=vmem, size = 0x9000, scoped, tag = 'internal scratch']
  %s0 = inlined_call_operand.smem [shape: u32[42], index: -1, kind: input, shape index: {}]
  %s1 = sld [smem:[%s0]]
  %s2 = scalar_lea.smem %s0, 1
  %s3 = sld [smem:[%s2]]
  %s4 = scalar_lea.smem %s0, 2
  %s5 = sld [smem:[%s4]]
  %s6 = scalar_lea.smem %s0, 3
  %s7 = sld [smem:[%s6]]
  %s8 = scalar_lea.smem %s0, 4
  %s9 = sld [smem:[%s8]]
  %s10 = scalar_lea.smem %s0, 5
  %s11 = sld [smem:[%s10]]
  %s12 = scalar_lea.smem %s0, 6
  %s13 = sld [smem:[%s12]]
  %s14 = scalar_lea.smem %s0, 7
  %s15 = sld [smem:[%s14]]
  %s16 = scalar_lea.smem %s0, 8
  %s17 = sld [smem:[%s16]]
  %s18 = scalar_lea.smem %s0, 9
  %s19 = sld [smem:[%s18]]
  %s20 = scalar_lea.smem %s0, 10
  %s21 = sld [smem:[%s20]]
  %s22 = scalar_lea.smem %s0, 11
  %s23 = sld [smem:[%s22]]
  %s24 = scalar_lea.smem %s0, 12
  %s25 = sld [smem:[%s24]]
  %s26 = scalar_lea.smem %s0, 13
  %s27 = sld [smem:[%s26]]
  %s28 = scalar_lea.smem %s0, 14
  %s29 = sld [smem:[%s28]]
  %s30 = scalar_lea.smem %s0, 15
  %s31 = sld [smem:[%s30]]
  %s32 = scalar_lea.smem %s0, 16
  %s33 = sld [smem:[%s32]]
  %s34 = scalar_lea.smem %s0, 17
  %s35 = sld [smem:[%s34]]
  %s36 = scalar_lea.smem %s0, 18
  %s37 = sld [smem:[%s36]]
  %s38 = scalar_lea.smem %s0, 19
  %s39 = sld [smem:[%s38]]
  %s40 = scalar_lea.smem %s0, 20
  %s41 = sld [smem:[%s40]]
  %s42 = scalar_lea.smem %s0, 21
  %s43 = sld [smem:[%s42]]
  %s44 = scalar_lea.smem %s0, 22
  %s45 = sld [smem:[%s44]]
  %s46 = scalar_lea.smem %s0, 23
  %s47 = sld [smem:[%s46]]
  %s48 = scalar_lea.smem %s0, 24
  %s49 = sld [smem:[%s48]]
  %s50 = scalar_lea.smem %s0, 25
  %s51 = sld [smem:[%s50]]
  %s52 = scalar_lea.smem %s0, 26
  %s53 = sld [smem:[%s52]]
  %s54 = scalar_lea.smem %s0, 27
  %s55 = sld [smem:[%s54]]
  %s56 = scalar_lea.smem %s0, 28
  %s57 = sld [smem:[%s56]]
  %s58 = scalar_lea.smem %s0, 29
  %s59 = sld [smem:[%s58]]
  %s60 = scalar_lea.smem %s0, 30
  %s61 = sld [smem:[%s60]]
  %s62 = scalar_lea.smem %s0, 31
  %s63 = sld [smem:[%s62]]
  %s64 = scalar_lea.smem %s0, 32
  %s65 = sld [smem:[%s64]]
  %s66 = scalar_lea.smem %s0, 33
  %s67 = sld [smem:[%s66]]
  %s68 = scalar_lea.smem %s0, 34
  %s69 = sld [smem:[%s68]]
  %s70 = scalar_lea.smem %s0, 35
  %s71 = sld [smem:[%s70]]
  %s72 = scalar_lea.smem %s0, 36
  %s73 = sld [smem:[%s72]]
  %s74 = scalar_lea.smem %s0, 37
  %s75 = sld [smem:[%s74]]
  %s76 = scalar_lea.smem %s0, 38
  %s77 = sld [smem:[%s76]]
  %s78 = scalar_lea.smem %s0, 39
  %s79 = sld [smem:[%s78]]
  %s80 = scalar_lea.smem %s0, 40
  %s81 = sld [smem:[%s80]]
  %s82 = scalar_lea.smem %s0, 41
  %s83 = sld [smem:[%s82]]
  %s84 = sld [smem:[#allocation0]]
  $region201: #{transformer_forward.1} parent=0
    _
  %s86 = ssub.s32 1, %s84
  %s87 = scalar_select 0, %s86, %s84
  $region1: #{transformer_forward.1} parent=0
    #allocation2 [shape = 'u8[512]{0}', space=vmem, size = 0x400, scoped, tag = 'input window, operand 40, single buffered']
    #allocation3 [shape = 's32[2]{0}', space=sflag, size = 0x8, scoped, tag = 'scoped memory for transformer_forward.1']
    #allocation4 [shape = 's32[2]{0}', space=sflag, size = 0x8, scoped, tag = 'scoped memory for transformer_forward.1']
    #allocation5 [shape = 'u8[8192]{0}', space=vmem, size = 0x2000, scoped, tag = 'output window, operand 0']
    %88 = vsyncpa [#allocation3], 0
    %89 = vsyncpa [#allocation4], 0
    %s90 = scalar_lea.sflag [#allocation4], 1
    %91 = vsyncpa %s90, 0
    loop: start=0, step=1, limit=4
    $region2: #{transformer_forward.1} parent=1 // loop_pre_header
      _
    $region3: #{transformer_forward.1} parent=1 // loop_header
      %s93 = sphi 0, %s97
      %p94 = scmp.ge.s32.totalorder %s93, 4
      %s103 = sphi 0, %s105
      %s106 = sphi 0, %s103
      %s107 = sphi 0, %s106
      %s123 = sphi 0, %s107
      %s129 = sphi 0, %s131
      %s132 = sphi 0, %s129
      %s133 = sphi 0, %s132
      %s149 = sphi 0, %s133
      %s155 = sphi 0, %s157
      %s158 = sphi 0, %s155
      %s159 = sphi 0, %s158
      %s175 = sphi 0, %s159
      %s179 = sphi 0, %s179
      %s181 = sphi 0, %s179
      %s182 = sphi 0, %s181
      %s196 = sphi 0, %s182
      %s200 = sphi 0, %s200
      %s202 = sphi 0, %s200
      %s203 = sphi 0, %s202
      %s217 = sphi 0, %s203
      %s221 = sphi 0, %s221
      %s223 = sphi 0, %s221
      %s224 = sphi 0, %s223
      %s238 = sphi 0, %s224
      %s242 = sphi 0, %s242
      %s244 = sphi 0, %s242
      %s245 = sphi 0, %s244
      %s259 = sphi 0, %s245
      %s263 = sphi 0, %s263
      %s265 = sphi 0, %s263
      %s266 = sphi 0, %s265
      %s280 = sphi 0, %s266
      %s284 = sphi 0, %s284
      %s286 = sphi 0, %s284
      %s287 = sphi 0, %s286
      %s301 = sphi 0, %s287
      %s305 = sphi 0, %s305
      %s307 = sphi 0, %s305
      %s308 = sphi 0, %s307
      %s322 = sphi 0, %s308
      %s326 = sphi 0, %s326
      %s328 = sphi 0, %s326
      %s329 = sphi 0, %s328
      %s343 = sphi 0, %s329
      %s347 = sphi 0, %s347
      %s349 = sphi 0, %s347
      %s350 = sphi 0, %s349
      %s364 = sphi 0, %s350
      %s368 = sphi 0, %s368
      %s370 = sphi 0, %s368
      %s371 = sphi 0, %s370
      %s385 = sphi 0, %s371
      %s389 = sphi 0, %s389
      %s391 = sphi 0, %s389
      %s392 = sphi 0, %s391
      %s406 = sphi 0, %s392
      %s410 = sphi 0, %s410
      %s412 = sphi 0, %s410
      %s413 = sphi 0, %s412
      %s427 = sphi 0, %s413
      %s431 = sphi 0, %s431
      %s433 = sphi 0, %s431
      %s434 = sphi 0, %s433
      %s448 = sphi 0, %s434
      %s452 = sphi 0, %s452
      %s454 = sphi 0, %s452
      %s455 = sphi 0, %s454
      %s469 = sphi 0, %s455
      %s473 = sphi 0, %s473
      %s475 = sphi 0, %s473
      %s476 = sphi 0, %s475
      %s490 = sphi 0, %s476
      %s494 = sphi 0, %s494
      %s496 = sphi 0, %s494
      %s497 = sphi 0, %s496
      %s511 = sphi 0, %s497
      %s515 = sphi 0, %s515
      %s517 = sphi 0, %s515
      %s518 = sphi 0, %s517
      %s532 = sphi 0, %s518
      %s536 = sphi 0, %s536
      %s538 = sphi 0, %s536
      %s539 = sphi 0, %s538
      %s553 = sphi 0, %s539
      %s557 = sphi 0, %s557
      %s559 = sphi 0, %s557
      %s560 = sphi 0, %s559
      %s574 = sphi 0, %s560
      %s578 = sphi 0, %s578
      %s580 = sphi 0, %s578
      %s581 = sphi 0, %s580
      %s595 = sphi 0, %s581
      %s599 = sphi 0, %s599
      %s601 = sphi 0, %s599
      %s602 = sphi 0, %s601
      %s616 = sphi 0, %s602
      %s620 = sphi 0, %s620
      %s622 = sphi 0, %s620
      %s623 = sphi 0, %s622
      %s637 = sphi 0, %s623
      %s641 = sphi 0, %s641
      %s643 = sphi 0, %s641
      %s644 = sphi 0, %s643
      %s658 = sphi 0, %s644
      %s662 = sphi 0, %s662
      %s664 = sphi 0, %s662
      %s665 = sphi 0, %s664
      %s679 = sphi 0, %s665
      %s683 = sphi 0, %s683
      %s685 = sphi 0, %s683
      %s686 = sphi 0, %s685
      %s700 = sphi 0, %s686
      %s704 = sphi 0, %s704
      %s706 = sphi 0, %s704
      %s707 = sphi 0, %s706
      %s721 = sphi 0, %s707
      %s725 = sphi 0, %s725
      %s727 = sphi 0, %s725
      %s728 = sphi 0, %s727
      %s742 = sphi 0, %s728
      %s746 = sphi 0, %s746
      %s748 = sphi 0, %s746
      %s749 = sphi 0, %s748
      %s763 = sphi 0, %s749
      %s767 = sphi 0, %s767
      %s769 = sphi 0, %s767
      %s770 = sphi 0, %s769
      %s784 = sphi 0, %s770
      %s788 = sphi 0, %s788
      %s790 = sphi 0, %s788
      %s791 = sphi 0, %s790
      %s805 = sphi 0, %s791
      %s809 = sphi 0, %s809
      %s811 = sphi 0, %s809
      %s812 = sphi 0, %s811
      %s826 = sphi 0, %s812
      %s830 = sphi 0, %s830
      %s832 = sphi 0, %s830
      %s833 = sphi 0, %s832
      %s847 = sphi 0, %s833
      %s851 = sphi 0, %s851
      %s853 = sphi 0, %s851
      %s854 = sphi 0, %s853
      %s868 = sphi 0, %s854
      %s872 = sphi 0, %s872
      %s874 = sphi 0, %s872
      %s875 = sphi 0, %s874
      %s889 = sphi 0, %s875
      %s893 = sphi 0, %s893
      %s895 = sphi 0, %s893
      %s896 = sphi 0, %s895
      %s910 = sphi 0, %s896
      %s914 = sphi 0, %s914
      %s916 = sphi 0, %s914
      %s917 = sphi 0, %s916
      %s931 = sphi 0, %s917
      %s935 = sphi 0, %s935
      %s937 = sphi 0, %s935
      %s938 = sphi 0, %s937
      %s952 = sphi 0, %s938
      %s956 = sphi 0, %s956
      %s958 = sphi 0, %s956
      %s959 = sphi 0, %s958
      %s973 = sphi 0, %s959
      %s979 = sphi 0, %s981
      %s982 = sphi 0, %s979
      %s983 = sphi 0, %s982
      %s999 = sphi 0, %s983
    $region4: #{transformer_forward.1} parent=1 // loop_header_branch
      %96 = sbr.rel (%p94) target = $region8
    $region5: #{transformer_forward.1} parent=1 // loop_body
      %s98 = ssub.s32 %s93, 1
      %s99 = ssub.s32 %s93, 2
      %s100 = sadd.s32 %s93, 1
      %s101 = ssub.s32 %s93, %s100
      %p102 = scmp.eq.s32.totalorder %s101, 0
      %s104 = sadd.s32 %s103, 1
      %s105 = scalar_select %p102, %s103, %s104
      %p108 = pneg %p102
      %p109 = scmp.eq.s32.totalorder %s93, 1
      %p110 = por %p108, %p109
      %p111 = scmp.ne.s32.totalorder %s103, %s106
      %p112 = scmp.eq.s32.totalorder %s93, 0
      %p113 = por %p111, %p112
      %p114 = scmp.ne.s32.totalorder %s103, %s106
      %p115 = scmp.eq.s32.totalorder %s98, 1
      %p116 = por %p114, %p115
      %p117 = scmp.ne.s32.totalorder %s106, %s107
      %p118 = scmp.eq.s32.totalorder %s98, 0
      %p119 = por %p117, %p118
      %p120 = scmp.ne.s32.totalorder %s106, %s107
      %p121 = scmp.eq.s32.totalorder %s99, 1
      %p122 = por %p120, %p121
      %p124 = scmp.ne.s32.totalorder %s107, %s123
      %p125 = scmp.eq.s32.totalorder %s99, 0
      %p126 = por %p124, %p125
      %s127 = ssub.s32 %s93, %s100
      %p128 = scmp.eq.s32.totalorder %s127, 0
      %s130 = sadd.s32 %s129, 1
      %s131 = scalar_select %p128, %s129, %s130
      %p134 = pneg %p128
      %p135 = scmp.eq.s32.totalorder %s93, 1
      %p136 = por %p134, %p135
      %p137 = scmp.ne.s32.totalorder %s129, %s132
      %p138 = scmp.eq.s32.totalorder %s93, 0
      %p139 = por %p137, %p138
      %p140 = scmp.ne.s32.totalorder %s129, %s132
      %p141 = scmp.eq.s32.totalorder %s98, 1
      %p142 = por %p140, %p141
      %p143 = scmp.ne.s32.totalorder %s132, %s133
      %p144 = scmp.eq.s32.totalorder %s98, 0
      %p145 = por %p143, %p144
      %p146 = scmp.ne.s32.totalorder %s132, %s133
      %p147 = scmp.eq.s32.totalorder %s99, 1
      %p148 = por %p146, %p147
      %p150 = scmp.ne.s32.totalorder %s133, %s149
      %p151 = scmp.eq.s32.totalorder %s99, 0
      %p152 = por %p150, %p151
      %s153 = ssub.s32 %s93, %s100
      %p154 = scmp.eq.s32.totalorder %s153, 0
      %s156 = sadd.s32 %s155, 1
      %s157 = scalar_select %p154, %s155, %s156
      %p160 = pneg %p154
      %p161 = scmp.eq.s32.totalorder %s93, 1
      %p162 = por %p160, %p161
      %p163 = scmp.ne.s32.totalorder %s155, %s158
      %p164 = scmp.eq.s32.totalorder %s93, 0
      %p165 = por %p163, %p164
      %p166 = scmp.ne.s32.totalorder %s155, %s158
      %p167 = scmp.eq.s32.totalorder %s98, 1
      %p168 = por %p166, %p167
      %p169 = scmp.ne.s32.totalorder %s158, %s159
      %p170 = scmp.eq.s32.totalorder %s98, 0
      %p171 = por %p169, %p170
      %p172 = scmp.ne.s32.totalorder %s158, %s159
      %p173 = scmp.eq.s32.totalorder %s99, 1
      %p174 = por %p172, %p173
      %p176 = scmp.ne.s32.totalorder %s159, %s175
      %p177 = scmp.eq.s32.totalorder %s99, 0
      %p178 = por %p176, %p177
      %s180 = sadd.s32 %s179, 1
      %p183 = scmp.eq.s32.totalorder %s93, 1
      %p184 = scmp.ne.s32.totalorder %s179, %s181
      %p185 = scmp.eq.s32.totalorder %s93, 0
      %p186 = por %p184, %p185
      %p187 = scmp.ne.s32.totalorder %s179, %s181
      %p188 = scmp.eq.s32.totalorder %s98, 1
      %p189 = por %p187, %p188
      %p190 = scmp.ne.s32.totalorder %s181, %s182
      %p191 = scmp.eq.s32.totalorder %s98, 0
      %p192 = por %p190, %p191
      %p193 = scmp.ne.s32.totalorder %s181, %s182
      %p194 = scmp.eq.s32.totalorder %s99, 1
      %p195 = por %p193, %p194
      %p197 = scmp.ne.s32.totalorder %s182, %s196
      %p198 = scmp.eq.s32.totalorder %s99, 0
      %p199 = por %p197, %p198
      %s201 = sadd.s32 %s200, 1
      %p204 = scmp.eq.s32.totalorder %s93, 1
      %p205 = scmp.ne.s32.totalorder %s200, %s202
      %p206 = scmp.eq.s32.totalorder %s93, 0
      %p207 = por %p205, %p206
      %p208 = scmp.ne.s32.totalorder %s200, %s202
      %p209 = scmp.eq.s32.totalorder %s98, 1
      %p210 = por %p208, %p209
      %p211 = scmp.ne.s32.totalorder %s202, %s203
      %p212 = scmp.eq.s32.totalorder %s98, 0
      %p213 = por %p211, %p212
      %p214 = scmp.ne.s32.totalorder %s202, %s203
      %p215 = scmp.eq.s32.totalorder %s99, 1
      %p216 = por %p214, %p215
      %p218 = scmp.ne.s32.totalorder %s203, %s217
      %p219 = scmp.eq.s32.totalorder %s99, 0
      %p220 = por %p218, %p219
      %s222 = sadd.s32 %s221, 1
      %p225 = scmp.eq.s32.totalorder %s93, 1
      %p226 = scmp.ne.s32.totalorder %s221, %s223
      %p227 = scmp.eq.s32.totalorder %s93, 0
      %p228 = por %p226, %p227
      %p229 = scmp.ne.s32.totalorder %s221, %s223
      %p230 = scmp.eq.s32.totalorder %s98, 1
      %p231 = por %p229, %p230
      %p232 = scmp.ne.s32.totalorder %s223, %s224
      %p233 = scmp.eq.s32.totalorder %s98, 0
      %p234 = por %p232, %p233
      %p235 = scmp.ne.s32.totalorder %s223, %s224
      %p236 = scmp.eq.s32.totalorder %s99, 1
      %p237 = por %p235, %p236
      %p239 = scmp.ne.s32.totalorder %s224, %s238
      %p240 = scmp.eq.s32.totalorder %s99, 0
      %p241 = por %p239, %p240
      %s243 = sadd.s32 %s242, 1
      %p246 = scmp.eq.s32.totalorder %s93, 1
      %p247 = scmp.ne.s32.totalorder %s242, %s244
      %p248 = scmp.eq.s32.totalorder %s93, 0
      %p249 = por %p247, %p248
      %p250 = scmp.ne.s32.totalorder %s242, %s244
      %p251 = scmp.eq.s32.totalorder %s98, 1
      %p252 = por %p250, %p251
      %p253 = scmp.ne.s32.totalorder %s244, %s245
      %p254 = scmp.eq.s32.totalorder %s98, 0
      %p255 = por %p253, %p254
      %p256 = scmp.ne.s32.totalorder %s244, %s245
      %p257 = scmp.eq.s32.totalorder %s99, 1
      %p258 = por %p256, %p257
      %p260 = scmp.ne.s32.totalorder %s245, %s259
      %p261 = scmp.eq.s32.totalorder %s99, 0
      %p262 = por %p260, %p261
      %s264 = sadd.s32 %s263, 1
      %p267 = scmp.eq.s32.totalorder %s93, 1
      %p268 = scmp.ne.s32.totalorder %s263, %s265
      %p269 = scmp.eq.s32.totalorder %s93, 0
      %p270 = por %p268, %p269
      %p271 = scmp.ne.s32.totalorder %s263, %s265
      %p272 = scmp.eq.s32.totalorder %s98, 1
      %p273 = por %p271, %p272
      %p274 = scmp.ne.s32.totalorder %s265, %s266
      %p275 = scmp.eq.s32.totalorder %s98, 0
      %p276 = por %p274, %p275
      %p277 = scmp.ne.s32.totalorder %s265, %s266
      %p278 = scmp.eq.s32.totalorder %s99, 1
      %p279 = por %p277, %p278
      %p281 = scmp.ne.s32.totalorder %s266, %s280
      %p282 = scmp.eq.s32.totalorder %s99, 0
      %p283 = por %p281, %p282
      %s285 = sadd.s32 %s284, 1
      %p288 = scmp.eq.s32.totalorder %s93, 1
      %p289 = scmp.ne.s32.totalorder %s284, %s286
      %p290 = scmp.eq.s32.totalorder %s93, 0
      %p291 = por %p289, %p290
      %p292 = scmp.ne.s32.totalorder %s284, %s286
      %p293 = scmp.eq.s32.totalorder %s98, 1
      %p294 = por %p292, %p293
      %p295 = scmp.ne.s32.totalorder %s286, %s287
      %p296 = scmp.eq.s32.totalorder %s98, 0
      %p297 = por %p295, %p296
      %p298 = scmp.ne.s32.totalorder %s286, %s287
      %p299 = scmp.eq.s32.totalorder %s99, 1
      %p300 = por %p298, %p299
      %p302 = scmp.ne.s32.totalorder %s287, %s301
      %p303 = scmp.eq.s32.totalorder %s99, 0
      %p304 = por %p302, %p303
      %s306 = sadd.s32 %s305, 1
      %p309 = scmp.eq.s32.totalorder %s93, 1
      %p310 = scmp.ne.s32.totalorder %s305, %s307
      %p311 = scmp.eq.s32.totalorder %s93, 0
      %p312 = por %p310, %p311
      %p313 = scmp.ne.s32.totalorder %s305, %s307
      %p314 = scmp.eq.s32.totalorder %s98, 1
      %p315 = por %p313, %p314
      %p316 = scmp.ne.s32.totalorder %s307, %s308
      %p317 = scmp.eq.s32.totalorder %s98, 0
      %p318 = por %p316, %p317
      %p319 = scmp.ne.s32.totalorder %s307, %s308
      %p320 = scmp.eq.s32.totalorder %s99, 1
      %p321 = por %p319, %p320
      %p323 = scmp.ne.s32.totalorder %s308, %s322
      %p324 = scmp.eq.s32.totalorder %s99, 0
      %p325 = por %p323, %p324
      %s327 = sadd.s32 %s326, 1
      %p330 = scmp.eq.s32.totalorder %s93, 1
      %p331 = scmp.ne.s32.totalorder %s326, %s328
      %p332 = scmp.eq.s32.totalorder %s93, 0
      %p333 = por %p331, %p332
      %p334 = scmp.ne.s32.totalorder %s326, %s328
      %p335 = scmp.eq.s32.totalorder %s98, 1
      %p336 = por %p334, %p335
      %p337 = scmp.ne.s32.totalorder %s328, %s329
      %p338 = scmp.eq.s32.totalorder %s98, 0
      %p339 = por %p337, %p338
      %p340 = scmp.ne.s32.totalorder %s328, %s329
      %p341 = scmp.eq.s32.totalorder %s99, 1
      %p342 = por %p340, %p341
      %p344 = scmp.ne.s32.totalorder %s329, %s343
      %p345 = scmp.eq.s32.totalorder %s99, 0
      %p346 = por %p344, %p345
      %s348 = sadd.s32 %s347, 1
      %p351 = scmp.eq.s32.totalorder %s93, 1
      %p352 = scmp.ne.s32.totalorder %s347, %s349
      %p353 = scmp.eq.s32.totalorder %s93, 0
      %p354 = por %p352, %p353
      %p355 = scmp.ne.s32.totalorder %s347, %s349
      %p356 = scmp.eq.s32.totalorder %s98, 1
      %p357 = por %p355, %p356
      %p358 = scmp.ne.s32.totalorder %s349, %s350
      %p359 = scmp.eq.s32.totalorder %s98, 0
      %p360 = por %p358, %p359
      %p361 = scmp.ne.s32.totalorder %s349, %s350
      %p362 = scmp.eq.s32.totalorder %s99, 1
      %p363 = por %p361, %p362
      %p365 = scmp.ne.s32.totalorder %s350, %s364
      %p366 = scmp.eq.s32.totalorder %s99, 0
      %p367 = por %p365, %p366
      %s369 = sadd.s32 %s368, 1
      %p372 = scmp.eq.s32.totalorder %s93, 1
      %p373 = scmp.ne.s32.totalorder %s368, %s370
      %p374 = scmp.eq.s32.totalorder %s93, 0
      %p375 = por %p373, %p374
      %p376 = scmp.ne.s32.totalorder %s368, %s370
      %p377 = scmp.eq.s32.totalorder %s98, 1
      %p378 = por %p376, %p377
      %p379 = scmp.ne.s32.totalorder %s370, %s371
      %p380 = scmp.eq.s32.totalorder %s98, 0
      %p381 = por %p379, %p380
      %p382 = scmp.ne.s32.totalorder %s370, %s371
      %p383 = scmp.eq.s32.totalorder %s99, 1
      %p384 = por %p382, %p383
      %p386 = scmp.ne.s32.totalorder %s371, %s385
      %p387 = scmp.eq.s32.totalorder %s99, 0
      %p388 = por %p386, %p387
      %s390 = sadd.s32 %s389, 1
      %p393 = scmp.eq.s32.totalorder %s93, 1
      %p394 = scmp.ne.s32.totalorder %s389, %s391
      %p395 = scmp.eq.s32.totalorder %s93, 0
      %p396 = por %p394, %p395
      %p397 = scmp.ne.s32.totalorder %s389, %s391
      %p398 = scmp.eq.s32.totalorder %s98, 1
      %p399 = por %p397, %p398
      %p400 = scmp.ne.s32.totalorder %s391, %s392
      %p401 = scmp.eq.s32.totalorder %s98, 0
      %p402 = por %p400, %p401
      %p403 = scmp.ne.s32.totalorder %s391, %s392
      %p404 = scmp.eq.s32.totalorder %s99, 1
      %p405 = por %p403, %p404
      %p407 = scmp.ne.s32.totalorder %s392, %s406
      %p408 = scmp.eq.s32.totalorder %s99, 0
      %p409 = por %p407, %p408
      %s411 = sadd.s32 %s410, 1
      %p414 = scmp.eq.s32.totalorder %s93, 1
      %p415 = scmp.ne.s32.totalorder %s410, %s412
      %p416 = scmp.eq.s32.totalorder %s93, 0
      %p417 = por %p415, %p416
      %p418 = scmp.ne.s32.totalorder %s410, %s412
      %p419 = scmp.eq.s32.totalorder %s98, 1
      %p420 = por %p418, %p419
      %p421 = scmp.ne.s32.totalorder %s412, %s413
      %p422 = scmp.eq.s32.totalorder %s98, 0
      %p423 = por %p421, %p422
      %p424 = scmp.ne.s32.totalorder %s412, %s413
      %p425 = scmp.eq.s32.totalorder %s99, 1
      %p426 = por %p424, %p425
      %p428 = scmp.ne.s32.totalorder %s413, %s427
      %p429 = scmp.eq.s32.totalorder %s99, 0
      %p430 = por %p428, %p429
      %s432 = sadd.s32 %s431, 1
      %p435 = scmp.eq.s32.totalorder %s93, 1
      %p436 = scmp.ne.s32.totalorder %s431, %s433
      %p437 = scmp.eq.s32.totalorder %s93, 0
      %p438 = por %p436, %p437
      %p439 = scmp.ne.s32.totalorder %s431, %s433
      %p440 = scmp.eq.s32.totalorder %s98, 1
      %p441 = por %p439, %p440
      %p442 = scmp.ne.s32.totalorder %s433, %s434
      %p443 = scmp.eq.s32.totalorder %s98, 0
      %p444 = por %p442, %p443
      %p445 = scmp.ne.s32.totalorder %s433, %s434
      %p446 = scmp.eq.s32.totalorder %s99, 1
      %p447 = por %p445, %p446
      %p449 = scmp.ne.s32.totalorder %s434, %s448
      %p450 = scmp.eq.s32.totalorder %s99, 0
      %p451 = por %p449, %p450
      %s453 = sadd.s32 %s452, 1
      %p456 = scmp.eq.s32.totalorder %s93, 1
      %p457 = scmp.ne.s32.totalorder %s452, %s454
      %p458 = scmp.eq.s32.totalorder %s93, 0
      %p459 = por %p457, %p458
      %p460 = scmp.ne.s32.totalorder %s452, %s454
      %p461 = scmp.eq.s32.totalorder %s98, 1
      %p462 = por %p460, %p461
      %p463 = scmp.ne.s32.totalorder %s454, %s455
      %p464 = scmp.eq.s32.totalorder %s98, 0
      %p465 = por %p463, %p464
      %p466 = scmp.ne.s32.totalorder %s454, %s455
      %p467 = scmp.eq.s32.totalorder %s99, 1
      %p468 = por %p466, %p467
      %p470 = scmp.ne.s32.totalorder %s455, %s469
      %p471 = scmp.eq.s32.totalorder %s99, 0
      %p472 = por %p470, %p471
      %s474 = sadd.s32 %s473, 1
      %p477 = scmp.eq.s32.totalorder %s93, 1
      %p478 = scmp.ne.s32.totalorder %s473, %s475
      %p479 = scmp.eq.s32.totalorder %s93, 0
      %p480 = por %p478, %p479
      %p481 = scmp.ne.s32.totalorder %s473, %s475
      %p482 = scmp.eq.s32.totalorder %s98, 1
      %p483 = por %p481, %p482
      %p484 = scmp.ne.s32.totalorder %s475, %s476
      %p485 = scmp.eq.s32.totalorder %s98, 0
      %p486 = por %p484, %p485
      %p487 = scmp.ne.s32.totalorder %s475, %s476
      %p488 = scmp.eq.s32.totalorder %s99, 1
      %p489 = por %p487, %p488
      %p491 = scmp.ne.s32.totalorder %s476, %s490
      %p492 = scmp.eq.s32.totalorder %s99, 0
      %p493 = por %p491, %p492
      %s495 = sadd.s32 %s494, 1
      %p498 = scmp.eq.s32.totalorder %s93, 1
      %p499 = scmp.ne.s32.totalorder %s494, %s496
      %p500 = scmp.eq.s32.totalorder %s93, 0
      %p501 = por %p499, %p500
      %p502 = scmp.ne.s32.totalorder %s494, %s496
      %p503 = scmp.eq.s32.totalorder %s98, 1
      %p504 = por %p502, %p503
      %p505 = scmp.ne.s32.totalorder %s496, %s497
      %p506 = scmp.eq.s32.totalorder %s98, 0
      %p507 = por %p505, %p506
      %p508 = scmp.ne.s32.totalorder %s496, %s497
      %p509 = scmp.eq.s32.totalorder %s99, 1
      %p510 = por %p508, %p509
      %p512 = scmp.ne.s32.totalorder %s497, %s511
      %p513 = scmp.eq.s32.totalorder %s99, 0
      %p514 = por %p512, %p513
      %s516 = sadd.s32 %s515, 1
      %p519 = scmp.eq.s32.totalorder %s93, 1
      %p520 = scmp.ne.s32.totalorder %s515, %s517
      %p521 = scmp.eq.s32.totalorder %s93, 0
      %p522 = por %p520, %p521
      %p523 = scmp.ne.s32.totalorder %s515, %s517
      %p524 = scmp.eq.s32.totalorder %s98, 1
      %p525 = por %p523, %p524
      %p526 = scmp.ne.s32.totalorder %s517, %s518
      %p527 = scmp.eq.s32.totalorder %s98, 0
      %p528 = por %p526, %p527
      %p529 = scmp.ne.s32.totalorder %s517, %s518
      %p530 = scmp.eq.s32.totalorder %s99, 1
      %p531 = por %p529, %p530
      %p533 = scmp.ne.s32.totalorder %s518, %s532
      %p534 = scmp.eq.s32.totalorder %s99, 0
      %p535 = por %p533, %p534
      %s537 = sadd.s32 %s536, 1
      %p540 = scmp.eq.s32.totalorder %s93, 1
      %p541 = scmp.ne.s32.totalorder %s536, %s538
      %p542 = scmp.eq.s32.totalorder %s93, 0
      %p543 = por %p541, %p542
      %p544 = scmp.ne.s32.totalorder %s536, %s538
      %p545 = scmp.eq.s32.totalorder %s98, 1
      %p546 = por %p544, %p545
      %p547 = scmp.ne.s32.totalorder %s538, %s539
      %p548 = scmp.eq.s32.totalorder %s98, 0
      %p549 = por %p547, %p548
      %p550 = scmp.ne.s32.totalorder %s538, %s539
      %p551 = scmp.eq.s32.totalorder %s99, 1
      %p552 = por %p550, %p551
      %p554 = scmp.ne.s32.totalorder %s539, %s553
      %p555 = scmp.eq.s32.totalorder %s99, 0
      %p556 = por %p554, %p555
      %s558 = sadd.s32 %s557, 1
      %p561 = scmp.eq.s32.totalorder %s93, 1
      %p562 = scmp.ne.s32.totalorder %s557, %s559
      %p563 = scmp.eq.s32.totalorder %s93, 0
      %p564 = por %p562, %p563
      %p565 = scmp.ne.s32.totalorder %s557, %s559
      %p566 = scmp.eq.s32.totalorder %s98, 1
      %p567 = por %p565, %p566
      %p568 = scmp.ne.s32.totalorder %s559, %s560
      %p569 = scmp.eq.s32.totalorder %s98, 0
      %p570 = por %p568, %p569
      %p571 = scmp.ne.s32.totalorder %s559, %s560
      %p572 = scmp.eq.s32.totalorder %s99, 1
      %p573 = por %p571, %p572
      %p575 = scmp.ne.s32.totalorder %s560, %s574
      %p576 = scmp.eq.s32.totalorder %s99, 0
      %p577 = por %p575, %p576
      %s579 = sadd.s32 %s578, 1
      %p582 = scmp.eq.s32.totalorder %s93, 1
      %p583 = scmp.ne.s32.totalorder %s578, %s580
      %p584 = scmp.eq.s32.totalorder %s93, 0
      %p585 = por %p583, %p584
      %p586 = scmp.ne.s32.totalorder %s578, %s580
      %p587 = scmp.eq.s32.totalorder %s98, 1
      %p588 = por %p586, %p587
      %p589 = scmp.ne.s32.totalorder %s580, %s581
      %p590 = scmp.eq.s32.totalorder %s98, 0
      %p591 = por %p589, %p590
      %p592 = scmp.ne.s32.totalorder %s580, %s581
      %p593 = scmp.eq.s32.totalorder %s99, 1
      %p594 = por %p592, %p593
      %p596 = scmp.ne.s32.totalorder %s581, %s595
      %p597 = scmp.eq.s32.totalorder %s99, 0
      %p598 = por %p596, %p597
      %s600 = sadd.s32 %s599, 1
      %p603 = scmp.eq.s32.totalorder %s93, 1
      %p604 = scmp.ne.s32.totalorder %s599, %s601
      %p605 = scmp.eq.s32.totalorder %s93, 0
      %p606 = por %p604, %p605
      %p607 = scmp.ne.s32.totalorder %s599, %s601
      %p608 = scmp.eq.s32.totalorder %s98, 1
      %p609 = por %p607, %p608
      %p610 = scmp.ne.s32.totalorder %s601, %s602
      %p611 = scmp.eq.s32.totalorder %s98, 0
      %p612 = por %p610, %p611
      %p613 = scmp.ne.s32.totalorder %s601, %s602
      %p614 = scmp.eq.s32.totalorder %s99, 1
      %p615 = por %p613, %p614
      %p617 = scmp.ne.s32.totalorder %s602, %s616
      %p618 = scmp.eq.s32.totalorder %s99, 0
      %p619 = por %p617, %p618
      %s621 = sadd.s32 %s620, 1
      %p624 = scmp.eq.s32.totalorder %s93, 1
      %p625 = scmp.ne.s32.totalorder %s620, %s622
      %p626 = scmp.eq.s32.totalorder %s93, 0
      %p627 = por %p625, %p626
      %p628 = scmp.ne.s32.totalorder %s620, %s622
      %p629 = scmp.eq.s32.totalorder %s98, 1
      %p630 = por %p628, %p629
      %p631 = scmp.ne.s32.totalorder %s622, %s623
      %p632 = scmp.eq.s32.totalorder %s98, 0
      %p633 = por %p631, %p632
      %p634 = scmp.ne.s32.totalorder %s622, %s623
      %p635 = scmp.eq.s32.totalorder %s99, 1
      %p636 = por %p634, %p635
      %p638 = scmp.ne.s32.totalorder %s623, %s637
      %p639 = scmp.eq.s32.totalorder %s99, 0
      %p640 = por %p638, %p639
      %s642 = sadd.s32 %s641, 1
      %p645 = scmp.eq.s32.totalorder %s93, 1
      %p646 = scmp.ne.s32.totalorder %s641, %s643
      %p647 = scmp.eq.s32.totalorder %s93, 0
      %p648 = por %p646, %p647
      %p649 = scmp.ne.s32.totalorder %s641, %s643
      %p650 = scmp.eq.s32.totalorder %s98, 1
      %p651 = por %p649, %p650
      %p652 = scmp.ne.s32.totalorder %s643, %s644
      %p653 = scmp.eq.s32.totalorder %s98, 0
      %p654 = por %p652, %p653
      %p655 = scmp.ne.s32.totalorder %s643, %s644
      %p656 = scmp.eq.s32.totalorder %s99, 1
      %p657 = por %p655, %p656
      %p659 = scmp.ne.s32.totalorder %s644, %s658
      %p660 = scmp.eq.s32.totalorder %s99, 0
      %p661 = por %p659, %p660
      %s663 = sadd.s32 %s662, 1
      %p666 = scmp.eq.s32.totalorder %s93, 1
      %p667 = scmp.ne.s32.totalorder %s662, %s664
      %p668 = scmp.eq.s32.totalorder %s93, 0
      %p669 = por %p667, %p668
      %p670 = scmp.ne.s32.totalorder %s662, %s664
      %p671 = scmp.eq.s32.totalorder %s98, 1
      %p672 = por %p670, %p671
      %p673 = scmp.ne.s32.totalorder %s664, %s665
      %p674 = scmp.eq.s32.totalorder %s98, 0
      %p675 = por %p673, %p674
      %p676 = scmp.ne.s32.totalorder %s664, %s665
      %p677 = scmp.eq.s32.totalorder %s99, 1
      %p678 = por %p676, %p677
      %p680 = scmp.ne.s32.totalorder %s665, %s679
      %p681 = scmp.eq.s32.totalorder %s99, 0
      %p682 = por %p680, %p681
      %s684 = sadd.s32 %s683, 1
      %p687 = scmp.eq.s32.totalorder %s93, 1
      %p688 = scmp.ne.s32.totalorder %s683, %s685
      %p689 = scmp.eq.s32.totalorder %s93, 0
      %p690 = por %p688, %p689
      %p691 = scmp.ne.s32.totalorder %s683, %s685
      %p692 = scmp.eq.s32.totalorder %s98, 1
      %p693 = por %p691, %p692
      %p694 = scmp.ne.s32.totalorder %s685, %s686
      %p695 = scmp.eq.s32.totalorder %s98, 0
      %p696 = por %p694, %p695
      %p697 = scmp.ne.s32.totalorder %s685, %s686
      %p698 = scmp.eq.s32.totalorder %s99, 1
      %p699 = por %p697, %p698
      %p701 = scmp.ne.s32.totalorder %s686, %s700
      %p702 = scmp.eq.s32.totalorder %s99, 0
      %p703 = por %p701, %p702
      %s705 = sadd.s32 %s704, 1
      %p708 = scmp.eq.s32.totalorder %s93, 1
      %p709 = scmp.ne.s32.totalorder %s704, %s706
      %p710 = scmp.eq.s32.totalorder %s93, 0
      %p711 = por %p709, %p710
      %p712 = scmp.ne.s32.totalorder %s704, %s706
      %p713 = scmp.eq.s32.totalorder %s98, 1
      %p714 = por %p712, %p713
      %p715 = scmp.ne.s32.totalorder %s706, %s707
      %p716 = scmp.eq.s32.totalorder %s98, 0
      %p717 = por %p715, %p716
      %p718 = scmp.ne.s32.totalorder %s706, %s707
      %p719 = scmp.eq.s32.totalorder %s99, 1
      %p720 = por %p718, %p719
      %p722 = scmp.ne.s32.totalorder %s707, %s721
      %p723 = scmp.eq.s32.totalorder %s99, 0
      %p724 = por %p722, %p723
      %s726 = sadd.s32 %s725, 1
      %p729 = scmp.eq.s32.totalorder %s93, 1
      %p730 = scmp.ne.s32.totalorder %s725, %s727
      %p731 = scmp.eq.s32.totalorder %s93, 0
      %p732 = por %p730, %p731
      %p733 = scmp.ne.s32.totalorder %s725, %s727
      %p734 = scmp.eq.s32.totalorder %s98, 1
      %p735 = por %p733, %p734
      %p736 = scmp.ne.s32.totalorder %s727, %s728
      %p737 = scmp.eq.s32.totalorder %s98, 0
      %p738 = por %p736, %p737
      %p739 = scmp.ne.s32.totalorder %s727, %s728
      %p740 = scmp.eq.s32.totalorder %s99, 1
      %p741 = por %p739, %p740
      %p743 = scmp.ne.s32.totalorder %s728, %s742
      %p744 = scmp.eq.s32.totalorder %s99, 0
      %p745 = por %p743, %p744
      %s747 = sadd.s32 %s746, 1
      %p750 = scmp.eq.s32.totalorder %s93, 1
      %p751 = scmp.ne.s32.totalorder %s746, %s748
      %p752 = scmp.eq.s32.totalorder %s93, 0
      %p753 = por %p751, %p752
      %p754 = scmp.ne.s32.totalorder %s746, %s748
      %p755 = scmp.eq.s32.totalorder %s98, 1
      %p756 = por %p754, %p755
      %p757 = scmp.ne.s32.totalorder %s748, %s749
      %p758 = scmp.eq.s32.totalorder %s98, 0
      %p759 = por %p757, %p758
      %p760 = scmp.ne.s32.totalorder %s748, %s749
      %p761 = scmp.eq.s32.totalorder %s99, 1
      %p762 = por %p760, %p761
      %p764 = scmp.ne.s32.totalorder %s749, %s763
      %p765 = scmp.eq.s32.totalorder %s99, 0
      %p766 = por %p764, %p765
      %s768 = sadd.s32 %s767, 1
      %p771 = scmp.eq.s32.totalorder %s93, 1
      %p772 = scmp.ne.s32.totalorder %s767, %s769
      %p773 = scmp.eq.s32.totalorder %s93, 0
      %p774 = por %p772, %p773
      %p775 = scmp.ne.s32.totalorder %s767, %s769
      %p776 = scmp.eq.s32.totalorder %s98, 1
      %p777 = por %p775, %p776
      %p778 = scmp.ne.s32.totalorder %s769, %s770
      %p779 = scmp.eq.s32.totalorder %s98, 0
      %p780 = por %p778, %p779
      %p781 = scmp.ne.s32.totalorder %s769, %s770
      %p782 = scmp.eq.s32.totalorder %s99, 1
      %p783 = por %p781, %p782
      %p785 = scmp.ne.s32.totalorder %s770, %s784
      %p786 = scmp.eq.s32.totalorder %s99, 0
      %p787 = por %p785, %p786
      %s789 = sadd.s32 %s788, 1
      %p792 = scmp.eq.s32.totalorder %s93, 1
      %p793 = scmp.ne.s32.totalorder %s788, %s790
      %p794 = scmp.eq.s32.totalorder %s93, 0
      %p795 = por %p793, %p794
      %p796 = scmp.ne.s32.totalorder %s788, %s790
      %p797 = scmp.eq.s32.totalorder %s98, 1
      %p798 = por %p796, %p797
      %p799 = scmp.ne.s32.totalorder %s790, %s791
      %p800 = scmp.eq.s32.totalorder %s98, 0
      %p801 = por %p799, %p800
      %p802 = scmp.ne.s32.totalorder %s790, %s791
      %p803 = scmp.eq.s32.totalorder %s99, 1
      %p804 = por %p802, %p803
      %p806 = scmp.ne.s32.totalorder %s791, %s805
      %p807 = scmp.eq.s32.totalorder %s99, 0
      %p808 = por %p806, %p807
      %s810 = sadd.s32 %s809, 1
      %p813 = scmp.eq.s32.totalorder %s93, 1
      %p814 = scmp.ne.s32.totalorder %s809, %s811
      %p815 = scmp.eq.s32.totalorder %s93, 0
      %p816 = por %p814, %p815
      %p817 = scmp.ne.s32.totalorder %s809, %s811
      %p818 = scmp.eq.s32.totalorder %s98, 1
      %p819 = por %p817, %p818
      %p820 = scmp.ne.s32.totalorder %s811, %s812
      %p821 = scmp.eq.s32.totalorder %s98, 0
      %p822 = por %p820, %p821
      %p823 = scmp.ne.s32.totalorder %s811, %s812
      %p824 = scmp.eq.s32.totalorder %s99, 1
      %p825 = por %p823, %p824
      %p827 = scmp.ne.s32.totalorder %s812, %s826
      %p828 = scmp.eq.s32.totalorder %s99, 0
      %p829 = por %p827, %p828
      %s831 = sadd.s32 %s830, 1
      %p834 = scmp.eq.s32.totalorder %s93, 1
      %p835 = scmp.ne.s32.totalorder %s830, %s832
      %p836 = scmp.eq.s32.totalorder %s93, 0
      %p837 = por %p835, %p836
      %p838 = scmp.ne.s32.totalorder %s830, %s832
      %p839 = scmp.eq.s32.totalorder %s98, 1
      %p840 = por %p838, %p839
      %p841 = scmp.ne.s32.totalorder %s832, %s833
      %p842 = scmp.eq.s32.totalorder %s98, 0
      %p843 = por %p841, %p842
      %p844 = scmp.ne.s32.totalorder %s832, %s833
      %p845 = scmp.eq.s32.totalorder %s99, 1
      %p846 = por %p844, %p845
      %p848 = scmp.ne.s32.totalorder %s833, %s847
      %p849 = scmp.eq.s32.totalorder %s99, 0
      %p850 = por %p848, %p849
      %s852 = sadd.s32 %s851, 1
      %p855 = scmp.eq.s32.totalorder %s93, 1
      %p856 = scmp.ne.s32.totalorder %s851, %s853
      %p857 = scmp.eq.s32.totalorder %s93, 0
      %p858 = por %p856, %p857
      %p859 = scmp.ne.s32.totalorder %s851, %s853
      %p860 = scmp.eq.s32.totalorder %s98, 1
      %p861 = por %p859, %p860
      %p862 = scmp.ne.s32.totalorder %s853, %s854
      %p863 = scmp.eq.s32.totalorder %s98, 0
      %p864 = por %p862, %p863
      %p865 = scmp.ne.s32.totalorder %s853, %s854
      %p866 = scmp.eq.s32.totalorder %s99, 1
      %p867 = por %p865, %p866
      %p869 = scmp.ne.s32.totalorder %s854, %s868
      %p870 = scmp.eq.s32.totalorder %s99, 0
      %p871 = por %p869, %p870
      %s873 = sadd.s32 %s872, 1
      %p876 = scmp.eq.s32.totalorder %s93, 1
      %p877 = scmp.ne.s32.totalorder %s872, %s874
      %p878 = scmp.eq.s32.totalorder %s93, 0
      %p879 = por %p877, %p878
      %p880 = scmp.ne.s32.totalorder %s872, %s874
      %p881 = scmp.eq.s32.totalorder %s98, 1
      %p882 = por %p880, %p881
      %p883 = scmp.ne.s32.totalorder %s874, %s875
      %p884 = scmp.eq.s32.totalorder %s98, 0
      %p885 = por %p883, %p884
      %p886 = scmp.ne.s32.totalorder %s874, %s875
      %p887 = scmp.eq.s32.totalorder %s99, 1
      %p888 = por %p886, %p887
      %p890 = scmp.ne.s32.totalorder %s875, %s889
      %p891 = scmp.eq.s32.totalorder %s99, 0
      %p892 = por %p890, %p891
      %s894 = sadd.s32 %s893, 1
      %p897 = scmp.eq.s32.totalorder %s93, 1
      %p898 = scmp.ne.s32.totalorder %s893, %s895
      %p899 = scmp.eq.s32.totalorder %s93, 0
      %p900 = por %p898, %p899
      %p901 = scmp.ne.s32.totalorder %s893, %s895
      %p902 = scmp.eq.s32.totalorder %s98, 1
      %p903 = por %p901, %p902
      %p904 = scmp.ne.s32.totalorder %s895, %s896
      %p905 = scmp.eq.s32.totalorder %s98, 0
      %p906 = por %p904, %p905
      %p907 = scmp.ne.s32.totalorder %s895, %s896
      %p908 = scmp.eq.s32.totalorder %s99, 1
      %p909 = por %p907, %p908
      %p911 = scmp.ne.s32.totalorder %s896, %s910
      %p912 = scmp.eq.s32.totalorder %s99, 0
      %p913 = por %p911, %p912
      %s915 = sadd.s32 %s914, 1
      %p918 = scmp.eq.s32.totalorder %s93, 1
      %p919 = scmp.ne.s32.totalorder %s914, %s916
      %p920 = scmp.eq.s32.totalorder %s93, 0
      %p921 = por %p919, %p920
      %p922 = scmp.ne.s32.totalorder %s914, %s916
      %p923 = scmp.eq.s32.totalorder %s98, 1
      %p924 = por %p922, %p923
      %p925 = scmp.ne.s32.totalorder %s916, %s917
      %p926 = scmp.eq.s32.totalorder %s98, 0
      %p927 = por %p925, %p926
      %p928 = scmp.ne.s32.totalorder %s916, %s917
      %p929 = scmp.eq.s32.totalorder %s99, 1
      %p930 = por %p928, %p929
      %p932 = scmp.ne.s32.totalorder %s917, %s931
      %p933 = scmp.eq.s32.totalorder %s99, 0
      %p934 = por %p932, %p933
      %s936 = sadd.s32 %s935, 1
      %p939 = scmp.eq.s32.totalorder %s93, 1
      %p940 = scmp.ne.s32.totalorder %s935, %s937
      %p941 = scmp.eq.s32.totalorder %s93, 0
      %p942 = por %p940, %p941
      %p943 = scmp.ne.s32.totalorder %s935, %s937
      %p944 = scmp.eq.s32.totalorder %s98, 1
      %p945 = por %p943, %p944
      %p946 = scmp.ne.s32.totalorder %s937, %s938
      %p947 = scmp.eq.s32.totalorder %s98, 0
      %p948 = por %p946, %p947
      %p949 = scmp.ne.s32.totalorder %s937, %s938
      %p950 = scmp.eq.s32.totalorder %s99, 1
      %p951 = por %p949, %p950
      %p953 = scmp.ne.s32.totalorder %s938, %s952
      %p954 = scmp.eq.s32.totalorder %s99, 0
      %p955 = por %p953, %p954
      %s957 = sadd.s32 %s956, 1
      %p960 = scmp.eq.s32.totalorder %s93, 1
      %p961 = scmp.ne.s32.totalorder %s956, %s958
      %p962 = scmp.eq.s32.totalorder %s93, 0
      %p963 = por %p961, %p962
      %p964 = scmp.ne.s32.totalorder %s956, %s958
      %p965 = scmp.eq.s32.totalorder %s98, 1
      %p966 = por %p964, %p965
      %p967 = scmp.ne.s32.totalorder %s958, %s959
      %p968 = scmp.eq.s32.totalorder %s98, 0
      %p969 = por %p967, %p968
      %p970 = scmp.ne.s32.totalorder %s958, %s959
      %p971 = scmp.eq.s32.totalorder %s99, 1
      %p972 = por %p970, %p971
      %p974 = scmp.ne.s32.totalorder %s959, %s973
      %p975 = scmp.eq.s32.totalorder %s99, 0
      %p976 = por %p974, %p975
      %s977 = ssub.s32 %s93, %s100
      %p978 = scmp.eq.s32.totalorder %s977, 0
      %s980 = sadd.s32 %s979, 1
      %s981 = scalar_select %p978, %s979, %s980
      %p984 = pneg %p978
      %p985 = scmp.eq.s32.totalorder %s93, 1
      %p986 = por %p984, %p985
      %p987 = scmp.ne.s32.totalorder %s979, %s982
      %p988 = scmp.eq.s32.totalorder %s93, 0
      %p989 = por %p987, %p988
      %p990 = scmp.ne.s32.totalorder %s979, %s982
      %p991 = scmp.eq.s32.totalorder %s98, 1
      %p992 = por %p990, %p991
      %p993 = scmp.ne.s32.totalorder %s982, %s983
      %p994 = scmp.eq.s32.totalorder %s98, 0
      %p995 = por %p993, %p994
      %p996 = scmp.ne.s32.totalorder %s982, %s983
      %p997 = scmp.eq.s32.totalorder %s99, 1
      %p998 = por %p996, %p997
      %p1000 = scmp.ne.s32.totalorder %s983, %s999
      %p1001 = scmp.eq.s32.totalorder %s99, 0
      %p1002 = por %p1000, %p1001
      %p1003 = scmp.le.s32.totalorder 1, %s93
      %p1004 = scmp.lt.s32.totalorder %s93, 3
      %p1005 = pnand %p1003, %p1004
      %p1006 = pneg %p1005
      // Predicated region
      $region9: #{transformer_forward.1} parent=5 // pred_check
        _
      $region10: #{transformer_forward.1} parent=5 // pred_check_branch
        %1008 = sbr.rel (%p1005) target = $region12
      $region11: #{transformer_forward.1} parent=5 // pred_region
        %s1009 = ssub.s32 %s93, 1
        // Predicated region
        $region13: #{transformer_forward.1} parent=11 // pred_check
          %p1010 = pneg %p192
        $region14: #{transformer_forward.1} parent=11 // pred_check_branch
          %1012 = sbr.rel (%p1010) target = $region16
        $region15: #{transformer_forward.1} parent=11 // pred_region
          _
        $region16: #{transformer_forward.1} parent=11 // pred_fallthru
          _
        // Predicated region
        $region17: #{transformer_forward.1} parent=11 // pred_check
          %p1013 = pneg %p213
        $region18: #{transformer_forward.1} parent=11 // pred_check_branch
          %1015 = sbr.rel (%p1013) target = $region20
        $region19: #{transformer_forward.1} parent=11 // pred_region
          _
        $region20: #{transformer_forward.1} parent=11 // pred_fallthru
          _
        // Predicated region
        $region21: #{transformer_forward.1} parent=11 // pred_check
          %p1016 = pneg %p234
        $region22: #{transformer_forward.1} parent=11 // pred_check_branch
          %1018 = sbr.rel (%p1016) target = $region24
        $region23: #{transformer_forward.1} parent=11 // pred_region
          _
        $region24: #{transformer_forward.1} parent=11 // pred_fallthru
          _
        // Predicated region
        $region25: #{transformer_forward.1} parent=11 // pred_check
          %p1019 = pneg %p255
        $region26: #{transformer_forward.1} parent=11 // pred_check_branch
          %1021 = sbr.rel (%p1019) target = $region28
        $region27: #{transformer_forward.1} parent=11 // pred_region
          _
        $region28: #{transformer_forward.1} parent=11 // pred_fallthru
          _
        // Predicated region
        $region29: #{transformer_forward.1} parent=11 // pred_check
          %p1022 = pneg %p276
        $region30: #{transformer_forward.1} parent=11 // pred_check_branch
          %1024 = sbr.rel (%p1022) target = $region32
        $region31: #{transformer_forward.1} parent=11 // pred_region
          _
        $region32: #{transformer_forward.1} parent=11 // pred_fallthru
          _
        // Predicated region
        $region33: #{transformer_forward.1} parent=11 // pred_check
          %p1025 = pneg %p297
        $region34: #{transformer_forward.1} parent=11 // pred_check_branch
          %1027 = sbr.rel (%p1025) target = $region36
        $region35: #{transformer_forward.1} parent=11 // pred_region
          _
        $region36: #{transformer_forward.1} parent=11 // pred_fallthru
          _
        // Predicated region
        $region37: #{transformer_forward.1} parent=11 // pred_check
          %p1028 = pneg %p318
        $region38: #{transformer_forward.1} parent=11 // pred_check_branch
          %1030 = sbr.rel (%p1028) target = $region40
        $region39: #{transformer_forward.1} parent=11 // pred_region
          _
        $region40: #{transformer_forward.1} parent=11 // pred_fallthru
          _
        // Predicated region
        $region41: #{transformer_forward.1} parent=11 // pred_check
          %p1031 = pneg %p339
        $region42: #{transformer_forward.1} parent=11 // pred_check_branch
          %1033 = sbr.rel (%p1031) target = $region44
        $region43: #{transformer_forward.1} parent=11 // pred_region
          _
        $region44: #{transformer_forward.1} parent=11 // pred_fallthru
          _
        // Predicated region
        $region45: #{transformer_forward.1} parent=11 // pred_check
          %p1034 = pneg %p360
        $region46: #{transformer_forward.1} parent=11 // pred_check_branch
          %1036 = sbr.rel (%p1034) target = $region48
        $region47: #{transformer_forward.1} parent=11 // pred_region
          _
        $region48: #{transformer_forward.1} parent=11 // pred_fallthru
          _
        // Predicated region
        $region49: #{transformer_forward.1} parent=11 // pred_check
          %p1037 = pneg %p381
        $region50: #{transformer_forward.1} parent=11 // pred_check_branch
          %1039 = sbr.rel (%p1037) target = $region52
        $region51: #{transformer_forward.1} parent=11 // pred_region
          _
        $region52: #{transformer_forward.1} parent=11 // pred_fallthru
          _
        // Predicated region
        $region53: #{transformer_forward.1} parent=11 // pred_check
          %p1040 = pneg %p402
        $region54: #{transformer_forward.1} parent=11 // pred_check_branch
          %1042 = sbr.rel (%p1040) target = $region56
        $region55: #{transformer_forward.1} parent=11 // pred_region
          _
        $region56: #{transformer_forward.1} parent=11 // pred_fallthru
          _
        // Predicated region
        $region57: #{transformer_forward.1} parent=11 // pred_check
          %p1043 = pneg %p423
        $region58: #{transformer_forward.1} parent=11 // pred_check_branch
          %1045 = sbr.rel (%p1043) target = $region60
        $region59: #{transformer_forward.1} parent=11 // pred_region
          _
        $region60: #{transformer_forward.1} parent=11 // pred_fallthru
          _
        // Predicated region
        $region61: #{transformer_forward.1} parent=11 // pred_check
          %p1046 = pneg %p444
        $region62: #{transformer_forward.1} parent=11 // pred_check_branch
          %1048 = sbr.rel (%p1046) target = $region64
        $region63: #{transformer_forward.1} parent=11 // pred_region
          _
        $region64: #{transformer_forward.1} parent=11 // pred_fallthru
          _
        // Predicated region
        $region65: #{transformer_forward.1} parent=11 // pred_check
          %p1049 = pneg %p465
        $region66: #{transformer_forward.1} parent=11 // pred_check_branch
          %1051 = sbr.rel (%p1049) target = $region68
        $region67: #{transformer_forward.1} parent=11 // pred_region
          _
        $region68: #{transformer_forward.1} parent=11 // pred_fallthru
          _
        // Predicated region
        $region69: #{transformer_forward.1} parent=11 // pred_check
          %p1052 = pneg %p486
        $region70: #{transformer_forward.1} parent=11 // pred_check_branch
          %1054 = sbr.rel (%p1052) target = $region72
        $region71: #{transformer_forward.1} parent=11 // pred_region
          _
        $region72: #{transformer_forward.1} parent=11 // pred_fallthru
          _
        // Predicated region
        $region73: #{transformer_forward.1} parent=11 // pred_check
          %p1055 = pneg %p507
        $region74: #{transformer_forward.1} parent=11 // pred_check_branch
          %1057 = sbr.rel (%p1055) target = $region76
        $region75: #{transformer_forward.1} parent=11 // pred_region
          _
        $region76: #{transformer_forward.1} parent=11 // pred_fallthru
          _
        // Predicated region
        $region77: #{transformer_forward.1} parent=11 // pred_check
          %p1058 = pneg %p528
        $region78: #{transformer_forward.1} parent=11 // pred_check_branch
          %1060 = sbr.rel (%p1058) target = $region80
        $region79: #{transformer_forward.1} parent=11 // pred_region
          _
        $region80: #{transformer_forward.1} parent=11 // pred_fallthru
          _
        // Predicated region
        $region81: #{transformer_forward.1} parent=11 // pred_check
          %p1061 = pneg %p549
        $region82: #{transformer_forward.1} parent=11 // pred_check_branch
          %1063 = sbr.rel (%p1061) target = $region84
        $region83: #{transformer_forward.1} parent=11 // pred_region
          _
        $region84: #{transformer_forward.1} parent=11 // pred_fallthru
          _
        // Predicated region
        $region85: #{transformer_forward.1} parent=11 // pred_check
          %p1064 = pneg %p570
        $region86: #{transformer_forward.1} parent=11 // pred_check_branch
          %1066 = sbr.rel (%p1064) target = $region88
        $region87: #{transformer_forward.1} parent=11 // pred_region
          _
        $region88: #{transformer_forward.1} parent=11 // pred_fallthru
          _
        // Predicated region
        $region89: #{transformer_forward.1} parent=11 // pred_check
          %p1067 = pneg %p591
        $region90: #{transformer_forward.1} parent=11 // pred_check_branch
          %1069 = sbr.rel (%p1067) target = $region92
        $region91: #{transformer_forward.1} parent=11 // pred_region
          _
        $region92: #{transformer_forward.1} parent=11 // pred_fallthru
          _
        // Predicated region
        $region93: #{transformer_forward.1} parent=11 // pred_check
          %p1070 = pneg %p612
        $region94: #{transformer_forward.1} parent=11 // pred_check_branch
          %1072 = sbr.rel (%p1070) target = $region96
        $region95: #{transformer_forward.1} parent=11 // pred_region
          _
        $region96: #{transformer_forward.1} parent=11 // pred_fallthru
          _
        // Predicated region
        $region97: #{transformer_forward.1} parent=11 // pred_check
          %p1073 = pneg %p633
        $region98: #{transformer_forward.1} parent=11 // pred_check_branch
          %1075 = sbr.rel (%p1073) target = $region100
        $region99: #{transformer_forward.1} parent=11 // pred_region
          _
        $region100: #{transformer_forward.1} parent=11 // pred_fallthru
          _
        // Predicated region
        $region101: #{transformer_forward.1} parent=11 // pred_check
          %p1076 = pneg %p654
        $region102: #{transformer_forward.1} parent=11 // pred_check_branch
          %1078 = sbr.rel (%p1076) target = $region104
        $region103: #{transformer_forward.1} parent=11 // pred_region
          _
        $region104: #{transformer_forward.1} parent=11 // pred_fallthru
          _
        // Predicated region
        $region105: #{transformer_forward.1} parent=11 // pred_check
          %p1079 = pneg %p675
        $region106: #{transformer_forward.1} parent=11 // pred_check_branch
          %1081 = sbr.rel (%p1079) target = $region108
        $region107: #{transformer_forward.1} parent=11 // pred_region
          _
        $region108: #{transformer_forward.1} parent=11 // pred_fallthru
          _
        // Predicated region
        $region109: #{transformer_forward.1} parent=11 // pred_check
          %p1082 = pneg %p696
        $region110: #{transformer_forward.1} parent=11 // pred_check_branch
          %1084 = sbr.rel (%p1082) target = $region112
        $region111: #{transformer_forward.1} parent=11 // pred_region
          _
        $region112: #{transformer_forward.1} parent=11 // pred_fallthru
          _
        // Predicated region
        $region113: #{transformer_forward.1} parent=11 // pred_check
          %p1085 = pneg %p717
        $region114: #{transformer_forward.1} parent=11 // pred_check_branch
          %1087 = sbr.rel (%p1085) target = $region116
        $region115: #{transformer_forward.1} parent=11 // pred_region
          _
        $region116: #{transformer_forward.1} parent=11 // pred_fallthru
          _
        // Predicated region
        $region117: #{transformer_forward.1} parent=11 // pred_check
          %p1088 = pneg %p738
        $region118: #{transformer_forward.1} parent=11 // pred_check_branch
          %1090 = sbr.rel (%p1088) target = $region120
        $region119: #{transformer_forward.1} parent=11 // pred_region
          _
        $region120: #{transformer_forward.1} parent=11 // pred_fallthru
          _
        // Predicated region
        $region121: #{transformer_forward.1} parent=11 // pred_check
          %p1091 = pneg %p759
        $region122: #{transformer_forward.1} parent=11 // pred_check_branch
          %1093 = sbr.rel (%p1091) target = $region124
        $region123: #{transformer_forward.1} parent=11 // pred_region
          _
        $region124: #{transformer_forward.1} parent=11 // pred_fallthru
          _
        // Predicated region
        $region125: #{transformer_forward.1} parent=11 // pred_check
          %p1094 = pneg %p780
        $region126: #{transformer_forward.1} parent=11 // pred_check_branch
          %1096 = sbr.rel (%p1094) target = $region128
        $region127: #{transformer_forward.1} parent=11 // pred_region
          _
        $region128: #{transformer_forward.1} parent=11 // pred_fallthru
          _
        // Predicated region
        $region129: #{transformer_forward.1} parent=11 // pred_check
          %p1097 = pneg %p801
        $region130: #{transformer_forward.1} parent=11 // pred_check_branch
          %1099 = sbr.rel (%p1097) target = $region132
        $region131: #{transformer_forward.1} parent=11 // pred_region
          _
        $region132: #{transformer_forward.1} parent=11 // pred_fallthru
          _
        // Predicated region
        $region133: #{transformer_forward.1} parent=11 // pred_check
          %p1100 = pneg %p822
        $region134: #{transformer_forward.1} parent=11 // pred_check_branch
          %1102 = sbr.rel (%p1100) target = $region136
        $region135: #{transformer_forward.1} parent=11 // pred_region
          _
        $region136: #{transformer_forward.1} parent=11 // pred_fallthru
          _
        // Predicated region
        $region137: #{transformer_forward.1} parent=11 // pred_check
          %p1103 = pneg %p843
        $region138: #{transformer_forward.1} parent=11 // pred_check_branch
          %1105 = sbr.rel (%p1103) target = $region140
        $region139: #{transformer_forward.1} parent=11 // pred_region
          _
        $region140: #{transformer_forward.1} parent=11 // pred_fallthru
          _
        // Predicated region
        $region141: #{transformer_forward.1} parent=11 // pred_check
          %p1106 = pneg %p864
        $region142: #{transformer_forward.1} parent=11 // pred_check_branch
          %1108 = sbr.rel (%p1106) target = $region144
        $region143: #{transformer_forward.1} parent=11 // pred_region
          _
        $region144: #{transformer_forward.1} parent=11 // pred_fallthru
          _
        // Predicated region
        $region145: #{transformer_forward.1} parent=11 // pred_check
          %p1109 = pneg %p885
        $region146: #{transformer_forward.1} parent=11 // pred_check_branch
          %1111 = sbr.rel (%p1109) target = $region148
        $region147: #{transformer_forward.1} parent=11 // pred_region
          _
        $region148: #{transformer_forward.1} parent=11 // pred_fallthru
          _
        // Predicated region
        $region149: #{transformer_forward.1} parent=11 // pred_check
          %p1112 = pneg %p906
        $region150: #{transformer_forward.1} parent=11 // pred_check_branch
          %1114 = sbr.rel (%p1112) target = $region152
        $region151: #{transformer_forward.1} parent=11 // pred_region
          _
        $region152: #{transformer_forward.1} parent=11 // pred_fallthru
          _
        // Predicated region
        $region153: #{transformer_forward.1} parent=11 // pred_check
          %p1115 = pneg %p927
        $region154: #{transformer_forward.1} parent=11 // pred_check_branch
          %1117 = sbr.rel (%p1115) target = $region156
        $region155: #{transformer_forward.1} parent=11 // pred_region
          _
        $region156: #{transformer_forward.1} parent=11 // pred_fallthru
          _
        // Predicated region
        $region157: #{transformer_forward.1} parent=11 // pred_check
          %p1118 = pneg %p948
        $region158: #{transformer_forward.1} parent=11 // pred_check_branch
          %1120 = sbr.rel (%p1118) target = $region160
        $region159: #{transformer_forward.1} parent=11 // pred_region
          _
        $region160: #{transformer_forward.1} parent=11 // pred_fallthru
          _
        // Predicated region
        $region161: #{transformer_forward.1} parent=11 // pred_check
          %p1121 = pneg %p969
        $region162: #{transformer_forward.1} parent=11 // pred_check_branch
          %1123 = sbr.rel (%p1121) target = $region164
        $region163: #{transformer_forward.1} parent=11 // pred_region
          %1125 = vsyncadd [#allocation3], 0
          %s1127 = sshll.u32 %s81, 4
          %s1128 = int_to_ptr.hbm [resolvable:$true] %s1127
          %s1129 = sshll.u32 [#allocation2], 4
          %s1130 = int_to_ptr.vmem [resolvable:$true] %s1129
          %1132 = dma.hbm_to_vmem [thread:$0]  %s1128, 16, %s1130, [#allocation3]
        $region164: #{transformer_forward.1} parent=11 // pred_fallthru
          _
      $region12: #{transformer_forward.1} parent=5 // pred_fallthru
        _
      %p1133 = scmp.lt.s32.totalorder %s93, 2
      // Predicated region
      $region165: #{transformer_forward.1} parent=5 // pred_check
        %p1134 = pneg %p1133
      $region166: #{transformer_forward.1} parent=5 // pred_check_branch
        %1136 = sbr.rel (%p1134) target = $region168
      $region167: #{transformer_forward.1} parent=5 // pred_region
        // Predicated region
        $region169: #{transformer_forward.1} parent=167 // pred_check
          %p1137 = pneg %p113
        $region170: #{transformer_forward.1} parent=167 // pred_check_branch
          %1139 = sbr.rel (%p1137) target = $region172
        $region171: #{transformer_forward.1} parent=167 // pred_region
          %p1140 = scmp.lt.s32.totalorder %s93, 1
          %s1141 = scalar_select %p1140, %s93, 1
          %s1142 = scalar_lea.vmem %s1, %s1141
        $region172: #{transformer_forward.1} parent=167 // pred_fallthru
          _
        // Predicated region
        $region173: #{transformer_forward.1} parent=167 // pred_check
          %p1143 = pneg %p139
        $region174: #{transformer_forward.1} parent=167 // pred_check_branch
          %1145 = sbr.rel (%p1143) target = $region176
        $region175: #{transformer_forward.1} parent=167 // pred_region
          %p1146 = scmp.lt.s32.totalorder %s93, 1
          %s1147 = scalar_select %p1146, %s93, 1
          %s1148 = smul.addr %s1147, 8
          %s1149 = scalar_lea.vmem %s3, %s1148
        $region176: #{transformer_forward.1} parent=167 // pred_fallthru
          _
        // Predicated region
        $region177: #{transformer_forward.1} parent=167 // pred_check
          %p1150 = pneg %p165
        $region178: #{transformer_forward.1} parent=167 // pred_check_branch
          %1152 = sbr.rel (%p1150) target = $region180
        $region179: #{transformer_forward.1} parent=167 // pred_region
          %p1153 = scmp.lt.s32.totalorder %s93, 1
          %s1154 = scalar_select %p1153, %s93, 1
          %s1155 = smul.addr %s1154, 8
          %s1156 = scalar_lea.vmem %s5, %s1155
        $region180: #{transformer_forward.1} parent=167 // pred_fallthru
          _
      $region168: #{transformer_forward.1} parent=5 // pred_fallthru
        _
      %p1157 = scmp.le.s32.totalorder 1, %s93
      %p1158 = scmp.lt.s32.totalorder %s93, 3
      %p1159 = pnand %p1157, %p1158
      %p1160 = pneg %p1159
      // Predicated region
      $region181: #{transformer_forward.1} parent=5 // pred_check
        _
      $region182: #{transformer_forward.1} parent=5 // pred_check_branch
        %1162 = sbr.rel (%p1159) target = $region184
      $region183: #{transformer_forward.1} parent=5 // pred_region
        %s1163 = ssub.s32 %s93, 1
        // Predicated region
        $region185: #{transformer_forward.1} parent=183 // pred_check
          %p1164 = pneg %p969
        $region186: #{transformer_forward.1} parent=183 // pred_check_branch
          %1166 = sbr.rel (%p1164) target = $region188
        $region187: #{transformer_forward.1} parent=183 // pred_region
          %1168 = dma.done [#allocation3], 16
        $region188: #{transformer_forward.1} parent=183 // pred_fallthru
          _
        %p1169 = scmp.lt.s32.totalorder %s98, 1
        %s1170 = scalar_select %p1169, %s98, 1
        %s1171 = scalar_lea.vmem %s1, %s1170
        %p1172 = pneg %p119
        %p1173 = pneg %p116
        %p1174 = scmp.lt.s32.totalorder %s98, 1
        %s1175 = scalar_select %p1174, %s98, 1
        %s1176 = smul.addr %s1175, 8
        %s1177 = scalar_lea.vmem %s3, %s1176
        %p1178 = pneg %p145
        %p1179 = pneg %p142
        %p1180 = scmp.lt.s32.totalorder %s98, 1
        %s1181 = scalar_select %p1180, %s98, 1
        %s1182 = smul.addr %s1181, 8
        %s1183 = scalar_lea.vmem %s5, %s1182
        %p1184 = pneg %p171
        %p1185 = pneg %p168
        %p1186 = pneg %p192
        %p1187 = pneg %p189
        %p1188 = pneg %p213
        %p1189 = pneg %p210
        %p1190 = pneg %p234
        %p1191 = pneg %p231
        %p1192 = pneg %p255
        %p1193 = pneg %p252
        %p1194 = pneg %p276
        %p1195 = pneg %p273
        %p1196 = pneg %p297
        %p1197 = pneg %p294
        %p1198 = pneg %p318
        %p1199 = pneg %p315
        %p1200 = pneg %p339
        %p1201 = pneg %p336
        %p1202 = pneg %p360
        %p1203 = pneg %p357
        %p1204 = pneg %p381
        %p1205 = pneg %p378
        %p1206 = pneg %p402
        %p1207 = pneg %p399
        %p1208 = pneg %p423
        %p1209 = pneg %p420
        %p1210 = pneg %p444
        %p1211 = pneg %p441
        %p1212 = pneg %p465
        %p1213 = pneg %p462
        %p1214 = pneg %p486
        %p1215 = pneg %p483
        %p1216 = pneg %p507
        %p1217 = pneg %p504
        %p1218 = pneg %p528
        %p1219 = pneg %p525
        %p1220 = pneg %p549
        %p1221 = pneg %p546
        %p1222 = pneg %p570
        %p1223 = pneg %p567
        %p1224 = pneg %p591
        %p1225 = pneg %p588
        %p1226 = pneg %p612
        %p1227 = pneg %p609
        %p1228 = pneg %p633
        %p1229 = pneg %p630
        %p1230 = pneg %p654
        %p1231 = pneg %p651
        %p1232 = pneg %p675
        %p1233 = pneg %p672
        %p1234 = pneg %p696
        %p1235 = pneg %p693
        %p1236 = pneg %p717
        %p1237 = pneg %p714
        %p1238 = pneg %p738
        %p1239 = pneg %p735
        %p1240 = pneg %p759
        %p1241 = pneg %p756
        %p1242 = pneg %p780
        %p1243 = pneg %p777
        %p1244 = pneg %p801
        %p1245 = pneg %p798
        %p1246 = pneg %p822
        %p1247 = pneg %p819
        %p1248 = pneg %p843
        %p1249 = pneg %p840
        %p1250 = pneg %p864
        %p1251 = pneg %p861
        %p1252 = pneg %p885
        %p1253 = pneg %p882
        %p1254 = pneg %p906
        %p1255 = pneg %p903
        %p1256 = pneg %p927
        %p1257 = pneg %p924
        %p1258 = pneg %p948
        %p1259 = pneg %p945
        %p1260 = pneg %p969
        %p1261 = pneg %p966
        %p1262 = pneg %p995
        %p1263 = pneg %p992
        %s1264 = sand.u32 %s982, 1
        %s1265 = scalar_lea.sflag [#allocation4], %s1264
        %s1266 = sand.u32 %s982, 1
        %s1267 = smul.addr %s1266, 8
        %s1268 = scalar_lea.vmem [#allocation5], %s1267
        %p1269 = scmp.lt.s32.totalorder %s98, 1
        %s1270 = scalar_select %p1269, %s98, 1
        %s1271 = scalar_lea.vmem %s1, %s1270
        %p1272 = scmp.lt.s32.totalorder %s98, 1
        %s1273 = scalar_select %p1272, %s98, 1
        %s1274 = smul.addr %s1273, 8
        %s1275 = scalar_lea.vmem %s3, %s1274
        %p1276 = scmp.lt.s32.totalorder %s98, 1
        %s1277 = scalar_select %p1276, %s98, 1
        %s1278 = smul.addr %s1277, 8
        %s1279 = scalar_lea.vmem %s5, %s1278
        %v1281 = vld [vmem:[%s1271] sm:$0x1]
        %vm1282 = vcmp.eq.s32.totalorder %v1281, 0
        %v1283 = vsel %vm1282, -1e+30, 0.0
        %v1284 = vld [vmem:[%s1275] sm:$0xff]
        %v1285 = vpack.c.bf16 %v1284, %v1284
        %v1286 = vld [vmem:[%s7] sm:$0xf]
        %v1287 = vld [vmem:[%s7 + $0x4] sm:$0xf]
        %v1288 = vld [vmem:[%s7 + $0x8] sm:$0xf]
        %v1289 = vld [vmem:[%s7 + $0xc] sm:$0xf]
        %v1290 = vld [vmem:[%s9] sm:$0x1]
        %v1292 = vperm.slane %v1290, 0
        %v1298 = vunpack.c.l.b16 %v1286
        %v1299 = vunpack.c.l.b16 %v1287
        %v1300 = vunpack.c.l.b16 %v1288
        %v1301 = vunpack.c.l.b16 %v1289
        %v1302 = vpack.c.b16 %v1299, %v1298
        %v1303 = vpack.c.b16 %v1301, %v1300
        %vm1306 = vcmask 261120
        %v1308 = vsel %vm1306, %v1285, 0
        %1310 = vmatpush.bf16.msra.mxu0 0
        %1311 = vmatpush.bf16.msra.mxu0 0
        %1312 = vmatpush.bf16.msra.mxu0 0
        %1313 = vmatpush.bf16.msra.mxu0 0
        %1314 = vmatpush.bf16.msra.mxu0 0
        %1315 = vmatpush.bf16.msra.mxu0 0
        %1316 = vmatpush.bf16.msra.mxu0 %v1303
        %1317 = vmatpush.bf16.msra.mxu0 %v1302
        %1318 = vmatmul.bf16.gmra.mxu0 %v1308
        %v1319 = vpop.f32.mrf.mxu0
        %v1320 = vadd.f32 %v1292, %v1319
        %v1321 = vpop.f32.mrf.mxu0
        %1322 = vdwg.mxu0
        %v1323 = vld [vmem:[%s11] sm:$0xff]
        %v1324 = vld [vmem:[%s11 + $0x8] sm:$0xff]
        %v1325 = vld [vmem:[%s11 + $0x10] sm:$0xff]
        %v1326 = vld [vmem:[%s11 + $0x18] sm:$0xff]
        %v1327 = vld [vmem:[%s13] sm:$0x1]
        %1329 = vrot.lane.b32.xlu0 %v1320, 96
        %v1330 = vpop.permute.xlu0 %1329
        %vm1331 = vcmask 64512
        %v1332 = vsel %vm1331, %v1320, 0
        %v1334 = vsel %vm1331, %v1330, 0
        %1336 = vmatpush.xpose.msra.mxu0 0.0
        %1337 = vmatpush.xpose.msra.mxu0 0.0
        %1338 = vmatpush.xpose.msra.mxu0 0.0
        %1339 = vmatpush.xpose.msra.mxu0 0.0
        %1340 = vmatpush.xpose.msra.mxu0 0.0
        %1341 = vmatpush.xpose.msra.mxu0 0.0
        %1342 = vmatpush.xpose.msra.mxu0 0.0
        %1343 = vmatpush.xpose.msra.mxu0 0.0
        %1344 = vmatpush.xpose.msra.mxu0 0.0
        %1345 = vmatpush.xpose.msra.mxu0 0.0
        %1346 = vmatpush.xpose.msra.mxu0 0.0
        %1347 = vmatpush.xpose.msra.mxu0 0.0
        %1348 = vmatpush.xpose.msra.mxu0 0.0
        %1349 = vmatpush.xpose.msra.mxu0 0.0
        %1350 = vmatpush.xpose.msra.mxu0 0.0
        %1351 = vmatpush.xpose.msra.mxu0 %v1334
        %1352 = vmatmul.f32.gmra.mxu0 %v1332
        %v1353 = vpop.f32.mrf.mxu0
        %v1354 = vadd.f32 0.0, %v1353
        %1355 = vdwg.mxu0
        %v1356 = vmul.f32 %v1354, 0.35355338
        %v1358 = vperm.slane %v1283, 0
        %v1360 = vadd.f32 %v1356, %v1358
        %v1361 = vsel %vm1331, %v1360, -inf
        %1362 = vmax.xlane.f32.xlu0 %v1361
        %v1363 = vpop.xlane.xlu0 %1362
        %v1364 = vsub.f32 %v1360, %v1363
        %v1365 = vmul.f32 %v1364, 1.442695
        %v1366 = vpow.pop %v1365
        %v1367 = vsel %vm1331, %v1366, 0.0
        %1368 = vadd.xlane.f32.xlu0 %v1367
        %v1369 = vpop.xlane.xlu0 %1368
        %v1370 = vrcp.pop %v1369
        %v1371 = vmul.f32 %v1369, %v1370
        %v1372 = vsub.f32 1.0, %v1371
        %v1373 = vmul.f32 %v1370, %v1372
        %v1374 = vadd.f32 %v1370, %v1373
        %vm1375 = vweird.f32 %v1369
        %vm1376 = vweird.f32 %v1370
        %vm1377 = vmor %vm1375, %vm1376
        %v1378 = vsel %vm1377, %v1370, %v1374
        %v1379 = vand.u32 2147483647, %v1369
        %vm1380 = vcmp.eq.f32.partialorder %v1379, 8.507059e+37
        %v1381 = vand.u32 %v1369, 2147483648
        %v1382 = vor.u32 1.1754944e-38, %v1381
        %v1383 = vsel %vm1380, %v1382, %v1378
        %v1384 = vmul.f32 %v1366, %v1383
        %1385 = vrot.lane.b32.xlu0 %v1320, 64
        %v1386 = vpop.permute.xlu0 %1385
        %v1389 = vsel %vm1331, %v1384, 0
        %1391 = vmatpush.msra.mxu0 0.0
        %1392 = vmatpush.msra.mxu0 0.0
        %1393 = vmatpush.msra.mxu0 0.0
        %1394 = vmatpush.msra.mxu0 0.0
        %1395 = vmatpush.msra.mxu0 0.0
        %1396 = vmatpush.msra.mxu0 0.0
        %1397 = vmatpush.msra.mxu0 0.0
        %1398 = vmatpush.msra.mxu0 0.0
        %1399 = vmatpush.msra.mxu0 0.0
        %1400 = vmatpush.msra.mxu0 0.0
        %1401 = vmatpush.msra.mxu0 0.0
        %1402 = vmatpush.msra.mxu0 0.0
        %1403 = vmatpush.msra.mxu0 0.0
        %1404 = vmatpush.msra.mxu0 0.0
        %1405 = vmatpush.msra.mxu0 0.0
        %1406 = vmatpush.msra.mxu0 %v1386
        %1407 = vmatmul.f32.gmra.mxu0 %v1389
        %v1408 = vpop.f32.mrf.mxu0
        %v1409 = vadd.f32 0.0, %v1408
        %1410 = vdwg.mxu0
        %1411 = vrot.lane.b32.xlu0 %v1320, 120
        %v1412 = vpop.permute.xlu0 %1411
        %1413 = vrot.lane.b32.xlu0 %v1320, 88
        %v1414 = vpop.permute.xlu0 %1413
        %v1415 = vsel %vm1331, %v1412, 0
        %v1417 = vsel %vm1331, %v1414, 0
        %1419 = vmatpush.xpose.msra.mxu0 0.0
        %1420 = vmatpush.xpose.msra.mxu0 0.0
        %1421 = vmatpush.xpose.msra.mxu0 0.0
        %1422 = vmatpush.xpose.msra.mxu0 0.0
        %1423 = vmatpush.xpose.msra.mxu0 0.0
        %1424 = vmatpush.xpose.msra.mxu0 0.0
        %1425 = vmatpush.xpose.msra.mxu0 0.0
        %1426 = vmatpush.xpose.msra.mxu0 0.0
        %1427 = vmatpush.xpose.msra.mxu0 0.0
        %1428 = vmatpush.xpose.msra.mxu0 0.0
        %1429 = vmatpush.xpose.msra.mxu0 0.0
        %1430 = vmatpush.xpose.msra.mxu0 0.0
        %1431 = vmatpush.xpose.msra.mxu0 0.0
        %1432 = vmatpush.xpose.msra.mxu0 0.0
        %1433 = vmatpush.xpose.msra.mxu0 0.0
        %1434 = vmatpush.xpose.msra.mxu0 %v1417
        %1435 = vmatmul.f32.gmra.mxu0 %v1415
        %v1436 = vpop.f32.mrf.mxu0
        %v1437 = vadd.f32 0.0, %v1436
        %1438 = vdwg.mxu0
        %v1439 = vmul.f32 %v1437, 0.35355338
        %v1440 = vadd.f32 %v1439, %v1358
        %v1441 = vsel %vm1331, %v1440, -inf
        %1442 = vmax.xlane.f32.xlu0 %v1441
        %v1443 = vpop.xlane.xlu0 %1442
        %v1444 = vsub.f32 %v1440, %v1443
        %v1445 = vmul.f32 %v1444, 1.442695
        %v1446 = vpow.pop %v1445
        %v1447 = vsel %vm1331, %v1446, 0.0
        %1448 = vadd.xlane.f32.xlu0 %v1447
        %v1449 = vpop.xlane.xlu0 %1448
        %v1450 = vrcp.pop %v1449
        %v1451 = vmul.f32 %v1449, %v1450
        %v1452 = vsub.f32 1.0, %v1451
        %v1453 = vmul.f32 %v1450, %v1452
        %v1454 = vadd.f32 %v1450, %v1453
        %vm1455 = vweird.f32 %v1449
        %vm1456 = vweird.f32 %v1450
        %vm1457 = vmor %vm1455, %vm1456
        %v1458 = vsel %vm1457, %v1450, %v1454
        %v1459 = vand.u32 2147483647, %v1449
        %vm1460 = vcmp.eq.f32.partialorder %v1459, 8.507059e+37
        %v1461 = vand.u32 %v1449, 2147483648
        %v1462 = vor.u32 1.1754944e-38, %v1461
        %v1463 = vsel %vm1460, %v1462, %v1458
        %v1464 = vmul.f32 %v1446, %v1463
        %1465 = vrot.lane.b32.xlu0 %v1320, 56
        %v1466 = vpop.permute.xlu0 %1465
        %v1469 = vsel %vm1331, %v1464, 0
        %1471 = vmatpush.msra.mxu0 0.0
        %1472 = vmatpush.msra.mxu0 0.0
        %1473 = vmatpush.msra.mxu0 0.0
        %1474 = vmatpush.msra.mxu0 0.0
        %1475 = vmatpush.msra.mxu0 0.0
        %1476 = vmatpush.msra.mxu0 0.0
        %1477 = vmatpush.msra.mxu0 0.0
        %1478 = vmatpush.msra.mxu0 0.0
        %1479 = vmatpush.msra.mxu0 0.0
        %1480 = vmatpush.msra.mxu0 0.0
        %1481 = vmatpush.msra.mxu0 0.0
        %1482 = vmatpush.msra.mxu0 0.0
        %1483 = vmatpush.msra.mxu0 0.0
        %1484 = vmatpush.msra.mxu0 0.0
        %1485 = vmatpush.msra.mxu0 0.0
        %1486 = vmatpush.msra.mxu0 %v1466
        %1487 = vmatmul.f32.gmra.mxu0 %v1469
        %v1488 = vpop.f32.mrf.mxu0
        %v1489 = vadd.f32 0.0, %v1488
        %1490 = vdwg.mxu0
        %v1492 = vsel %vm1331, %v1489, 0
        %1494 = vmatpush.msra.mxu0 0.0
        %1495 = vmatpush.msra.mxu0 0.0
        %1496 = vmatpush.msra.mxu0 0.0
        %1497 = vmatpush.msra.mxu0 0.0
        %1498 = vmatpush.msra.mxu0 0.0
        %1499 = vmatpush.msra.mxu0 0.0
        %1500 = vmatpush.msra.mxu0 0.0
        %1501 = vmatpush.msra.mxu0 0.0
        %1502 = vmatpush.msra.mxu0 0.0
        %1503 = vmatpush.msra.mxu0 0.0
        %1504 = vmatpush.msra.mxu0 0.0
        %1505 = vmatpush.msra.mxu0 0.0
        %1506 = vmatpush.msra.mxu0 0.0
        %1507 = vmatpush.msra.mxu0 0.0
        %1508 = vmatpush.msra.mxu0 0.0
        %1509 = vmatpush.msra.mxu0 %v1324
        %1510 = vmatmul.f32.gmra.mxu0 %v1492
        %v1511 = vpop.f32.mrf.mxu0
        %v1512 = vadd.f32 0.0, %v1511
        %1513 = vdwg.mxu0
        %v1515 = vsel %vm1331, %v1409, 0
        %1517 = vmatpush.msra.mxu0 0.0
        %1518 = vmatpush.msra.mxu0 0.0
        %1519 = vmatpush.msra.mxu0 0.0
        %1520 = vmatpush.msra.mxu0 0.0
        %1521 = vmatpush.msra.mxu0 0.0
        %1522 = vmatpush.msra.mxu0 0.0
        %1523 = vmatpush.msra.mxu0 0.0
        %1524 = vmatpush.msra.mxu0 0.0
        %1525 = vmatpush.msra.mxu0 0.0
        %1526 = vmatpush.msra.mxu0 0.0
        %1527 = vmatpush.msra.mxu0 0.0
        %1528 = vmatpush.msra.mxu0 0.0
        %1529 = vmatpush.msra.mxu0 0.0
        %1530 = vmatpush.msra.mxu0 0.0
        %1531 = vmatpush.msra.mxu0 0.0
        %1532 = vmatpush.msra.mxu0 %v1323
        %1533 = vmatmul.f32.gmra.mxu0 %v1515
        %v1534 = vpop.f32.mrf.mxu0
        %v1535 = vadd.f32 %v1512, %v1534
        %1536 = vdwg.mxu0
        %1537 = vrot.lane.b32.xlu0 %v1320, 112
        %v1538 = vpop.permute.xlu0 %1537
        %1539 = vrot.lane.b32.xlu0 %v1320, 80
        %v1540 = vpop.permute.xlu0 %1539
        %v1541 = vsel %vm1331, %v1538, 0
        %v1543 = vsel %vm1331, %v1540, 0
        %1545 = vmatpush.xpose.msra.mxu0 0.0
        %1546 = vmatpush.xpose.msra.mxu0 0.0
        %1547 = vmatpush.xpose.msra.mxu0 0.0
        %1548 = vmatpush.xpose.msra.mxu0 0.0
        %1549 = vmatpush.xpose.msra.mxu0 0.0
        %1550 = vmatpush.xpose.msra.mxu0 0.0
        %1551 = vmatpush.xpose.msra.mxu0 0.0
        %1552 = vmatpush.xpose.msra.mxu0 0.0
        %1553 = vmatpush.xpose.msra.mxu0 0.0
        %1554 = vmatpush.xpose.msra.mxu0 0.0
        %1555 = vmatpush.xpose.msra.mxu0 0.0
        %1556 = vmatpush.xpose.msra.mxu0 0.0
        %1557 = vmatpush.xpose.msra.mxu0 0.0
        %1558 = vmatpush.xpose.msra.mxu0 0.0
        %1559 = vmatpush.xpose.msra.mxu0 0.0
        %1560 = vmatpush.xpose.msra.mxu0 %v1543
        %1561 = vmatmul.f32.gmra.mxu0 %v1541
        %v1562 = vpop.f32.mrf.mxu0
        %v1563 = vadd.f32 0.0, %v1562
        %1564 = vdwg.mxu0
        %v1565 = vmul.f32 %v1563, 0.35355338
        %v1566 = vadd.f32 %v1565, %v1358
        %v1567 = vsel %vm1331, %v1566, -inf
        %1568 = vmax.xlane.f32.xlu0 %v1567
        %v1569 = vpop.xlane.xlu0 %1568
        %v1570 = vsub.f32 %v1566, %v1569
        %v1571 = vmul.f32 %v1570, 1.442695
        %v1572 = vpow.pop %v1571
        %v1573 = vsel %vm1331, %v1572, 0.0
        %1574 = vadd.xlane.f32.xlu0 %v1573
        %v1575 = vpop.xlane.xlu0 %1574
        %v1576 = vrcp.pop %v1575
        %v1577 = vmul.f32 %v1575, %v1576
        %v1578 = vsub.f32 1.0, %v1577
        %v1579 = vmul.f32 %v1576, %v1578
        %v1580 = vadd.f32 %v1576, %v1579
        %vm1581 = vweird.f32 %v1575
        %vm1582 = vweird.f32 %v1576
        %vm1583 = vmor %vm1581, %vm1582
        %v1584 = vsel %vm1583, %v1576, %v1580
        %v1585 = vand.u32 2147483647, %v1575
        %vm1586 = vcmp.eq.f32.partialorder %v1585, 8.507059e+37
        %v1587 = vand.u32 %v1575, 2147483648
        %v1588 = vor.u32 1.1754944e-38, %v1587
        %v1589 = vsel %vm1586, %v1588, %v1584
        %v1590 = vmul.f32 %v1572, %v1589
        %1591 = vrot.lane.b32.xlu0 %v1320, 48
        %v1592 = vpop.permute.xlu0 %1591
        %v1595 = vsel %vm1331, %v1590, 0
        %1597 = vmatpush.msra.mxu0 0.0
        %1598 = vmatpush.msra.mxu0 0.0
        %1599 = vmatpush.msra.mxu0 0.0
        %1600 = vmatpush.msra.mxu0 0.0
        %1601 = vmatpush.msra.mxu0 0.0
        %1602 = vmatpush.msra.mxu0 0.0
        %1603 = vmatpush.msra.mxu0 0.0
        %1604 = vmatpush.msra.mxu0 0.0
        %1605 = vmatpush.msra.mxu0 0.0
        %1606 = vmatpush.msra.mxu0 0.0
        %1607 = vmatpush.msra.mxu0 0.0
        %1608 = vmatpush.msra.mxu0 0.0
        %1609 = vmatpush.msra.mxu0 0.0
        %1610 = vmatpush.msra.mxu0 0.0
        %1611 = vmatpush.msra.mxu0 0.0
        %1612 = vmatpush.msra.mxu0 %v1592
        %1613 = vmatmul.f32.gmra.mxu0 %v1595
        %v1614 = vpop.f32.mrf.mxu0
        %v1615 = vadd.f32 0.0, %v1614
        %1616 = vdwg.mxu0
        %v1618 = vsel %vm1331, %v1615, 0
        %1620 = vmatpush.msra.mxu0 0.0
        %1621 = vmatpush.msra.mxu0 0.0
        %1622 = vmatpush.msra.mxu0 0.0
        %1623 = vmatpush.msra.mxu0 0.0
        %1624 = vmatpush.msra.mxu0 0.0
        %1625 = vmatpush.msra.mxu0 0.0
        %1626 = vmatpush.msra.mxu0 0.0
        %1627 = vmatpush.msra.mxu0 0.0
        %1628 = vmatpush.msra.mxu0 0.0
        %1629 = vmatpush.msra.mxu0 0.0
        %1630 = vmatpush.msra.mxu0 0.0
        %1631 = vmatpush.msra.mxu0 0.0
        %1632 = vmatpush.msra.mxu0 0.0
        %1633 = vmatpush.msra.mxu0 0.0
        %1634 = vmatpush.msra.mxu0 0.0
        %1635 = vmatpush.msra.mxu0 %v1325
        %1636 = vmatmul.f32.gmra.mxu0 %v1618
        %v1637 = vpop.f32.mrf.mxu0
        %v1638 = vadd.f32 0.0, %v1637
        %1639 = vdwg.mxu0
        %v1640 = vadd.f32 %v1535, %v1638
        %1641 = vrot.lane.b32.xlu0 %v1320, 104
        %v1642 = vpop.permute.xlu0 %1641
        %1643 = vrot.lane.b32.xlu0 %v1320, 72
        %v1644 = vpop.permute.xlu0 %1643
        %v1645 = vsel %vm1331, %v1642, 0
        %v1647 = vsel %vm1331, %v1644, 0
        %1649 = vmatpush.xpose.msra.mxu0 0.0
        %1650 = vmatpush.xpose.msra.mxu0 0.0
        %1651 = vmatpush.xpose.msra.mxu0 0.0
        %1652 = vmatpush.xpose.msra.mxu0 0.0
        %1653 = vmatpush.xpose.msra.mxu0 0.0
        %1654 = vmatpush.xpose.msra.mxu0 0.0
        %1655 = vmatpush.xpose.msra.mxu0 0.0
        %1656 = vmatpush.xpose.msra.mxu0 0.0
        %1657 = vmatpush.xpose.msra.mxu0 0.0
        %1658 = vmatpush.xpose.msra.mxu0 0.0
        %1659 = vmatpush.xpose.msra.mxu0 0.0
        %1660 = vmatpush.xpose.msra.mxu0 0.0
        %1661 = vmatpush.xpose.msra.mxu0 0.0
        %1662 = vmatpush.xpose.msra.mxu0 0.0
        %1663 = vmatpush.xpose.msra.mxu0 0.0
        %1664 = vmatpush.xpose.msra.mxu0 %v1647
        %1665 = vmatmul.f32.gmra.mxu0 %v1645
        %v1666 = vpop.f32.mrf.mxu0
        %v1667 = vadd.f32 0.0, %v1666
        %1668 = vdwg.mxu0
        %v1669 = vmul.f32 %v1667, 0.35355338
        %v1670 = vadd.f32 %v1669, %v1358
        %v1671 = vsel %vm1331, %v1670, -inf
        %1672 = vmax.xlane.f32.xlu0 %v1671
        %v1673 = vpop.xlane.xlu0 %1672
        %v1674 = vsub.f32 %v1670, %v1673
        %v1675 = vmul.f32 %v1674, 1.442695
        %v1676 = vpow.pop %v1675
        %v1677 = vsel %vm1331, %v1676, 0.0
        %1678 = vadd.xlane.f32.xlu0 %v1677
        %v1679 = vpop.xlane.xlu0 %1678
        %v1680 = vrcp.pop %v1679
        %v1681 = vmul.f32 %v1679, %v1680
        %v1682 = vsub.f32 1.0, %v1681
        %v1683 = vmul.f32 %v1680, %v1682
        %v1684 = vadd.f32 %v1680, %v1683
        %vm1685 = vweird.f32 %v1679
        %vm1686 = vweird.f32 %v1680
        %vm1687 = vmor %vm1685, %vm1686
        %v1688 = vsel %vm1687, %v1680, %v1684
        %v1689 = vand.u32 2147483647, %v1679
        %vm1690 = vcmp.eq.f32.partialorder %v1689, 8.507059e+37
        %v1691 = vand.u32 %v1679, 2147483648
        %v1692 = vor.u32 1.1754944e-38, %v1691
        %v1693 = vsel %vm1690, %v1692, %v1688
        %v1694 = vmul.f32 %v1676, %v1693
        %1695 = vrot.lane.b32.xlu0 %v1320, 40
        %v1696 = vpop.permute.xlu0 %1695
        %v1699 = vsel %vm1331, %v1694, 0
        %1701 = vmatpush.msra.mxu0 0.0
        %1702 = vmatpush.msra.mxu0 0.0
        %1703 = vmatpush.msra.mxu0 0.0
        %1704 = vmatpush.msra.mxu0 0.0
        %1705 = vmatpush.msra.mxu0 0.0
        %1706 = vmatpush.msra.mxu0 0.0
        %1707 = vmatpush.msra.mxu0 0.0
        %1708 = vmatpush.msra.mxu0 0.0
        %1709 = vmatpush.msra.mxu0 0.0
        %1710 = vmatpush.msra.mxu0 0.0
        %1711 = vmatpush.msra.mxu0 0.0
        %1712 = vmatpush.msra.mxu0 0.0
        %1713 = vmatpush.msra.mxu0 0.0
        %1714 = vmatpush.msra.mxu0 0.0
        %1715 = vmatpush.msra.mxu0 0.0
        %1716 = vmatpush.msra.mxu0 %v1696
        %1717 = vmatmul.f32.gmra.mxu0 %v1699
        %v1718 = vpop.f32.mrf.mxu0
        %v1719 = vadd.f32 0.0, %v1718
        %1720 = vdwg.mxu0
        %v1722 = vsel %vm1331, %v1719, 0
        %1724 = vmatpush.msra.mxu0 0.0
        %1725 = vmatpush.msra.mxu0 0.0
        %1726 = vmatpush.msra.mxu0 0.0
        %1727 = vmatpush.msra.mxu0 0.0
        %1728 = vmatpush.msra.mxu0 0.0
        %1729 = vmatpush.msra.mxu0 0.0
        %1730 = vmatpush.msra.mxu0 0.0
        %1731 = vmatpush.msra.mxu0 0.0
        %1732 = vmatpush.msra.mxu0 0.0
        %1733 = vmatpush.msra.mxu0 0.0
        %1734 = vmatpush.msra.mxu0 0.0
        %1735 = vmatpush.msra.mxu0 0.0
        %1736 = vmatpush.msra.mxu0 0.0
        %1737 = vmatpush.msra.mxu0 0.0
        %1738 = vmatpush.msra.mxu0 0.0
        %1739 = vmatpush.msra.mxu0 %v1326
        %1740 = vmatmul.f32.gmra.mxu0 %v1722
        %v1741 = vpop.f32.mrf.mxu0
        %v1742 = vadd.f32 0.0, %v1741
        %1743 = vdwg.mxu0
        %v1744 = vadd.f32 %v1640, %v1742
        %v1746 = vperm.slane %v1327, 0
        %v1748 = vadd.f32 %v1744, %v1746
        %v1749 = vadd.f32 %v1284, %v1748
        %v1750 = vld [vmem:[%s15] sm:$0x1]
        %v1751 = vld [vmem:[%s17] sm:$0x1]
        %v1752 = vsel %vm1306, %v1749, 0.0
        %1753 = vadd.xlane.f32.xlu0 %v1752
        %v1754 = vpop.xlane.xlu0 %1753
        %v1755 = vrcp.pop 32.0
        %v1756 = vmul.f32 32.0, %v1755
        %v1757 = vsub.f32 1.0, %v1756
        %v1758 = vmul.f32 %v1755, %v1757
        %v1759 = vadd.f32 %v1755, %v1758
        %vm1760 = vweird.f32 %v1755
        %v1761 = vsel %vm1760, %v1755, %v1759
        %v1762 = vmul.f32 %v1754, %v1761
        %v1763 = vsub.f32 %v1749, %v1762
        %v1764 = vmul.f32 %v1763, %v1763
        %v1765 = vsel %vm1306, %v1764, 0.0
        %1766 = vadd.xlane.f32.xlu0 %v1765
        %v1767 = vpop.xlane.xlu0 %1766
        %v1768 = vmul.f32 %v1767, %v1761
        %v1769 = vadd.f32 %v1768, 1e-05
        %v1770 = vrsqrt.pop %v1769
        %v1771 = vmul.f32 %v1770, %v1769
        %v1772 = vmul.f32 %v1771, %v1770
        %v1773 = vmul.f32 0.5, %v1772
        %v1774 = vsub.f32 1.5, %v1773
        %v1775 = vmul.f32 %v1770, %v1774
        %vm1776 = vweird.f32 %v1769
        %vm1777 = vweird.f32 %v1770
        %vm1778 = vmor %vm1776, %vm1777
        %v1779 = vsel %vm1778, %v1770, %v1775
        %v1780 = vmul.f32 %v1763, %v1779
        %v1782 = vperm.slane %v1750, 0
        %v1784 = vmul.f32 %v1780, %v1782
        %v1786 = vperm.slane %v1751, 0
        %v1788 = vadd.f32 %v1784, %v1786
        %v1789 = vpack.c.bf16 %v1788, %v1788
        %v1790 = vld [vmem:[%s19] sm:$0xf]
        %v1791 = vld [vmem:[%s19 + $0x4] sm:$0xf]
        %v1792 = vld [vmem:[%s19 + $0x8] sm:$0xf]
        %v1793 = vld [vmem:[%s19 + $0xc] sm:$0xf]
        %v1794 = vld [vmem:[%s21] sm:$0x1]
        %v1796 = vperm.slane %v1794, 0
        %v1802 = vunpack.c.l.b16 %v1790
        %v1803 = vunpack.c.l.b16 %v1791
        %v1804 = vunpack.c.l.b16 %v1792
        %v1805 = vunpack.c.l.b16 %v1793
        %v1806 = vpack.c.b16 %v1803, %v1802
        %v1807 = vpack.c.b16 %v1805, %v1804
        %v1811 = vsel %vm1306, %v1789, 0
        %1813 = vmatpush.bf16.msra.mxu0 0
        %1814 = vmatpush.bf16.msra.mxu0 0
        %1815 = vmatpush.bf16.msra.mxu0 0
        %1816 = vmatpush.bf16.msra.mxu0 0
        %1817 = vmatpush.bf16.msra.mxu0 0
        %1818 = vmatpush.bf16.msra.mxu0 0
        %1819 = vmatpush.bf16.msra.mxu0 %v1807
        %1820 = vmatpush.bf16.msra.mxu0 %v1806
        %1821 = vmatmul.bf16.gmra.mxu0 %v1811
        %v1822 = vpop.f32.mrf.mxu0
        %v1823 = vadd.f32 %v1796, %v1822
        %v1824 = vpop.f32.mrf.mxu0
        %1825 = vdwg.mxu0
        %v1826 = vmax.f32 %v1823, 0.0
        %v1827 = vpack.c.bf16 %v1826, %v1826
        %v1828 = vld [vmem:[%s23] sm:$0xf]
        %v1829 = vld [vmem:[%s23 + $0x4] sm:$0xf]
        %v1830 = vld [vmem:[%s23 + $0x8] sm:$0xf]
        %v1831 = vld [vmem:[%s23 + $0xc] sm:$0xf]
        %v1832 = vld [vmem:[%s23 + $0x10] sm:$0xf]
        %v1833 = vld [vmem:[%s23 + $0x14] sm:$0xf]
        %v1834 = vld [vmem:[%s23 + $0x18] sm:$0xf]
        %v1835 = vld [vmem:[%s23 + $0x1c] sm:$0xf]
        %v1836 = vld [vmem:[%s23 + $0x20] sm:$0xf]
        %v1837 = vld [vmem:[%s23 + $0x24] sm:$0xf]
        %v1838 = vld [vmem:[%s23 + $0x28] sm:$0xf]
        %v1839 = vld [vmem:[%s23 + $0x2c] sm:$0xf]
        %v1840 = vld [vmem:[%s23 + $0x30] sm:$0xf]
        %v1841 = vld [vmem:[%s23 + $0x34] sm:$0xf]
        %v1842 = vld [vmem:[%s23 + $0x38] sm:$0xf]
        %v1843 = vld [vmem:[%s23 + $0x3c] sm:$0xf]
        %v1844 = vld [vmem:[%s25] sm:$0x1]
        %v1846 = vperm.slane %v1844, 0
        %v1864 = vunpack.c.l.b16 %v1828
        %v1865 = vunpack.c.l.b16 %v1829
        %v1866 = vunpack.c.l.b16 %v1830
        %v1867 = vunpack.c.l.b16 %v1831
        %v1868 = vunpack.c.l.b16 %v1832
        %v1869 = vunpack.c.l.b16 %v1833
        %v1870 = vunpack.c.l.b16 %v1834
        %v1871 = vunpack.c.l.b16 %v1835
        %v1872 = vunpack.c.l.b16 %v1836
        %v1873 = vunpack.c.l.b16 %v1837
        %v1874 = vunpack.c.l.b16 %v1838
        %v1875 = vunpack.c.l.b16 %v1839
        %v1876 = vunpack.c.l.b16 %v1840
        %v1877 = vunpack.c.l.b16 %v1841
        %v1878 = vunpack.c.l.b16 %v1842
        %v1879 = vunpack.c.l.b16 %v1843
        %v1880 = vpack.c.b16 %v1865, %v1864
        %v1881 = vpack.c.b16 %v1867, %v1866
        %v1882 = vpack.c.b16 %v1869, %v1868
        %v1883 = vpack.c.b16 %v1871, %v1870
        %v1884 = vpack.c.b16 %v1873, %v1872
        %v1885 = vpack.c.b16 %v1875, %v1874
        %v1886 = vpack.c.b16 %v1877, %v1876
        %v1887 = vpack.c.b16 %v1879, %v1878
        %1896 = vmatpush.bf16.msra.mxu0 %v1887
        %1897 = vmatpush.bf16.msra.mxu0 %v1886
        %1898 = vmatpush.bf16.msra.mxu0 %v1885
        %1899 = vmatpush.bf16.msra.mxu0 %v1884
        %1900 = vmatpush.bf16.msra.mxu0 %v1883
        %1901 = vmatpush.bf16.msra.mxu0 %v1882
        %1902 = vmatpush.bf16.msra.mxu0 %v1881
        %1903 = vmatpush.bf16.msra.mxu0 %v1880
        %1904 = vmatmul.bf16.gmra.mxu0 %v1827
        %v1905 = vpop.f32.mrf.mxu0
        %v1906 = vadd.f32 %v1846, %v1905
        %v1907 = vpop.f32.mrf.mxu0
        %1908 = vdwg.mxu0
        %v1909 = vadd.f32 %v1788, %v1906
        %v1910 = vld [vmem:[%s27] sm:$0x1]
        %v1911 = vld [vmem:[%s29] sm:$0x1]
        %v1912 = vsel %vm1306, %v1909, 0.0
        %1913 = vadd.xlane.f32.xlu0 %v1912
        %v1914 = vpop.xlane.xlu0 %1913
        %v1915 = vmul.f32 %v1914, %v1761
        %v1916 = vsub.f32 %v1909, %v1915
        %v1917 = vmul.f32 %v1916, %v1916
        %v1918 = vsel %vm1306, %v1917, 0.0
        %1919 = vadd.xlane.f32.xlu0 %v1918
        %v1920 = vpop.xlane.xlu0 %1919
        %v1921 = vmul.f32 %v1920, %v1761
        %v1922 = vadd.f32 %v1921, 1e-05
        %v1923 = vrsqrt.pop %v1922
        %v1924 = vmul.f32 %v1923, %v1922
        %v1925 = vmul.f32 %v1924, %v1923
        %v1926 = vmul.f32 0.5, %v1925
        %v1927 = vsub.f32 1.5, %v1926
        %v1928 = vmul.f32 %v1923, %v1927
        %vm1929 = vweird.f32 %v1922
        %vm1930 = vweird.f32 %v1923
        %vm1931 = vmor %vm1929, %vm1930
        %v1932 = vsel %vm1931, %v1923, %v1928
        %v1933 = vmul.f32 %v1916, %v1932
        %v1935 = vperm.slane %v1910, 0
        %v1937 = vmul.f32 %v1933, %v1935
        %v1939 = vperm.slane %v1911, 0
        %v1941 = vadd.f32 %v1937, %v1939
        %v1942 = vpack.c.bf16 %v1941, %v1941
        %s1943 = scalar_lea.vmem %s7, 16
        %v1944 = vld [vmem:[%s1943] sm:$0xf]
        %v1945 = vld [vmem:[%s1943 + $0x4] sm:$0xf]
        %v1946 = vld [vmem:[%s1943 + $0x8] sm:$0xf]
        %v1947 = vld [vmem:[%s1943 + $0xc] sm:$0xf]
        %s1948 = scalar_lea.vmem %s9, 1
        %v1949 = vld [vmem:[%s1948] sm:$0x1]
        %v1951 = vperm.slane %v1949, 0
        %v1957 = vunpack.c.l.b16 %v1944
        %v1958 = vunpack.c.l.b16 %v1945
        %v1959 = vunpack.c.l.b16 %v1946
        %v1960 = vunpack.c.l.b16 %v1947
        %v1961 = vpack.c.b16 %v1958, %v1957
        %v1962 = vpack.c.b16 %v1960, %v1959
        %v1966 = vsel %vm1306, %v1942, 0
        %1968 = vmatpush.bf16.msra.mxu0 0
        %1969 = vmatpush.bf16.msra.mxu0 0
        %1970 = vmatpush.bf16.msra.mxu0 0
        %1971 = vmatpush.bf16.msra.mxu0 0
        %1972 = vmatpush.bf16.msra.mxu0 0
        %1973 = vmatpush.bf16.msra.mxu0 0
        %1974 = vmatpush.bf16.msra.mxu0 %v1962
        %1975 = vmatpush.bf16.msra.mxu0 %v1961
        %1976 = vmatmul.bf16.gmra.mxu0 %v1966
        %v1977 = vpop.f32.mrf.mxu0
        %v1978 = vadd.f32 %v1951, %v1977
        %v1979 = vpop.f32.mrf.mxu0
        %1980 = vdwg.mxu0
        %s1981 = scalar_lea.vmem %s11, 32
        %v1982 = vld [vmem:[%s1981] sm:$0xff]
        %v1983 = vld [vmem:[%s1981 + $0x8] sm:$0xff]
        %v1984 = vld [vmem:[%s1981 + $0x10] sm:$0xff]
        %v1985 = vld [vmem:[%s1981 + $0x18] sm:$0xff]
        %s1986 = scalar_lea.vmem %s13, 1
        %v1987 = vld [vmem:[%s1986] sm:$0x1]
        %1989 = vrot.lane.b32.xlu0 %v1978, 96
        %v1990 = vpop.permute.xlu0 %1989
        %v1991 = vsel %vm1331, %v1978, 0
        %v1993 = vsel %vm1331, %v1990, 0
        %1995 = vmatpush.xpose.msra.mxu0 0.0
        %1996 = vmatpush.xpose.msra.mxu0 0.0
        %1997 = vmatpush.xpose.msra.mxu0 0.0
        %1998 = vmatpush.xpose.msra.mxu0 0.0
        %1999 = vmatpush.xpose.msra.mxu0 0.0
        %2000 = vmatpush.xpose.msra.mxu0 0.0
        %2001 = vmatpush.xpose.msra.mxu0 0.0
        %2002 = vmatpush.xpose.msra.mxu0 0.0
        %2003 = vmatpush.xpose.msra.mxu0 0.0
        %2004 = vmatpush.xpose.msra.mxu0 0.0
        %2005 = vmatpush.xpose.msra.mxu0 0.0
        %2006 = vmatpush.xpose.msra.mxu0 0.0
        %2007 = vmatpush.xpose.msra.mxu0 0.0
        %2008 = vmatpush.xpose.msra.mxu0 0.0
        %2009 = vmatpush.xpose.msra.mxu0 0.0
        %2010 = vmatpush.xpose.msra.mxu0 %v1993
        %2011 = vmatmul.f32.gmra.mxu0 %v1991
        %v2012 = vpop.f32.mrf.mxu0
        %v2013 = vadd.f32 0.0, %v2012
        %2014 = vdwg.mxu0
        %v2015 = vmul.f32 %v2013, 0.35355338
        %v2016 = vadd.f32 %v2015, %v1358
        %v2017 = vsel %vm1331, %v2016, -inf
        %2018 = vmax.xlane.f32.xlu0 %v2017
        %v2019 = vpop.xlane.xlu0 %2018
        %v2020 = vsub.f32 %v2016, %v2019
        %v2021 = vmul.f32 %v2020, 1.442695
        %v2022 = vpow.pop %v2021
        %v2023 = vsel %vm1331, %v2022, 0.0
        %2024 = vadd.xlane.f32.xlu0 %v2023
        %v2025 = vpop.xlane.xlu0 %2024
        %v2026 = vrcp.pop %v2025
        %v2027 = vmul.f32 %v2025, %v2026
        %v2028 = vsub.f32 1.0, %v2027
        %v2029 = vmul.f32 %v2026, %v2028
        %v2030 = vadd.f32 %v2026, %v2029
        %vm2031 = vweird.f32 %v2025
        %vm2032 = vweird.f32 %v2026
        %vm2033 = vmor %vm2031, %vm2032
        %v2034 = vsel %vm2033, %v2026, %v2030
        %v2035 = vand.u32 2147483647, %v2025
        %vm2036 = vcmp.eq.f32.partialorder %v2035, 8.507059e+37
        %v2037 = vand.u32 %v2025, 2147483648
        %v2038 = vor.u32 1.1754944e-38, %v2037
        %v2039 = vsel %vm2036, %v2038, %v2034
        %v2040 = vmul.f32 %v2022, %v2039
        %2041 = vrot.lane.b32.xlu0 %v1978, 64
        %v2042 = vpop.permute.xlu0 %2041
        %v2045 = vsel %vm1331, %v2040, 0
        %2047 = vmatpush.msra.mxu0 0.0
        %2048 = vmatpush.msra.mxu0 0.0
        %2049 = vmatpush.msra.mxu0 0.0
        %2050 = vmatpush.msra.mxu0 0.0
        %2051 = vmatpush.msra.mxu0 0.0
        %2052 = vmatpush.msra.mxu0 0.0
        %2053 = vmatpush.msra.mxu0 0.0
        %2054 = vmatpush.msra.mxu0 0.0
        %2055 = vmatpush.msra.mxu0 0.0
        %2056 = vmatpush.msra.mxu0 0.0
        %2057 = vmatpush.msra.mxu0 0.0
        %2058 = vmatpush.msra.mxu0 0.0
        %2059 = vmatpush.msra.mxu0 0.0
        %2060 = vmatpush.msra.mxu0 0.0
        %2061 = vmatpush.msra.mxu0 0.0
        %2062 = vmatpush.msra.mxu0 %v2042
        %2063 = vmatmul.f32.gmra.mxu0 %v2045
        %v2064 = vpop.f32.mrf.mxu0
        %v2065 = vadd.f32 0.0, %v2064
        %2066 = vdwg.mxu0
        %2067 = vrot.lane.b32.xlu0 %v1978, 120
        %v2068 = vpop.permute.xlu0 %2067
        %2069 = vrot.lane.b32.xlu0 %v1978, 88
        %v2070 = vpop.permute.xlu0 %2069
        %v2071 = vsel %vm1331, %v2068, 0
        %v2073 = vsel %vm1331, %v2070, 0
        %2075 = vmatpush.xpose.msra.mxu0 0.0
        %2076 = vmatpush.xpose.msra.mxu0 0.0
        %2077 = vmatpush.xpose.msra.mxu0 0.0
        %2078 = vmatpush.xpose.msra.mxu0 0.0
        %2079 = vmatpush.xpose.msra.mxu0 0.0
        %2080 = vmatpush.xpose.msra.mxu0 0.0
        %2081 = vmatpush.xpose.msra.mxu0 0.0
        %2082 = vmatpush.xpose.msra.mxu0 0.0
        %2083 = vmatpush.xpose.msra.mxu0 0.0
        %2084 = vmatpush.xpose.msra.mxu0 0.0
        %2085 = vmatpush.xpose.msra.mxu0 0.0
        %2086 = vmatpush.xpose.msra.mxu0 0.0
        %2087 = vmatpush.xpose.msra.mxu0 0.0
        %2088 = vmatpush.xpose.msra.mxu0 0.0
        %2089 = vmatpush.xpose.msra.mxu0 0.0
        %2090 = vmatpush.xpose.msra.mxu0 %v2073
        %2091 = vmatmul.f32.gmra.mxu0 %v2071
        %v2092 = vpop.f32.mrf.mxu0
        %v2093 = vadd.f32 0.0, %v2092
        %2094 = vdwg.mxu0
        %v2095 = vmul.f32 %v2093, 0.35355338
        %v2096 = vadd.f32 %v2095, %v1358
        %v2097 = vsel %vm1331, %v2096, -inf
        %2098 = vmax.xlane.f32.xlu0 %v2097
        %v2099 = vpop.xlane.xlu0 %2098
        %v2100 = vsub.f32 %v2096, %v2099
        %v2101 = vmul.f32 %v2100, 1.442695
        %v2102 = vpow.pop %v2101
        %v2103 = vsel %vm1331, %v2102, 0.0
        %2104 = vadd.xlane.f32.xlu0 %v2103
        %v2105 = vpop.xlane.xlu0 %2104
        %v2106 = vrcp.pop %v2105
        %v2107 = vmul.f32 %v2105, %v2106
        %v2108 = vsub.f32 1.0, %v2107
        %v2109 = vmul.f32 %v2106, %v2108
        %v2110 = vadd.f32 %v2106, %v2109
        %vm2111 = vweird.f32 %v2105
        %vm2112 = vweird.f32 %v2106
        %vm2113 = vmor %vm2111, %vm2112
        %v2114 = vsel %vm2113, %v2106, %v2110
        %v2115 = vand.u32 2147483647, %v2105
        %vm2116 = vcmp.eq.f32.partialorder %v2115, 8.507059e+37
        %v2117 = vand.u32 %v2105, 2147483648
        %v2118 = vor.u32 1.1754944e-38, %v2117
        %v2119 = vsel %vm2116, %v2118, %v2114
        %v2120 = vmul.f32 %v2102, %v2119
        %2121 = vrot.lane.b32.xlu0 %v1978, 56
        %v2122 = vpop.permute.xlu0 %2121
        %v2125 = vsel %vm1331, %v2120, 0
        %2127 = vmatpush.msra.mxu0 0.0
        %2128 = vmatpush.msra.mxu0 0.0
        %2129 = vmatpush.msra.mxu0 0.0
        %2130 = vmatpush.msra.mxu0 0.0
        %2131 = vmatpush.msra.mxu0 0.0
        %2132 = vmatpush.msra.mxu0 0.0
        %2133 = vmatpush.msra.mxu0 0.0
        %2134 = vmatpush.msra.mxu0 0.0
        %2135 = vmatpush.msra.mxu0 0.0
        %2136 = vmatpush.msra.mxu0 0.0
        %2137 = vmatpush.msra.mxu0 0.0
        %2138 = vmatpush.msra.mxu0 0.0
        %2139 = vmatpush.msra.mxu0 0.0
        %2140 = vmatpush.msra.mxu0 0.0
        %2141 = vmatpush.msra.mxu0 0.0
        %2142 = vmatpush.msra.mxu0 %v2122
        %2143 = vmatmul.f32.gmra.mxu0 %v2125
        %v2144 = vpop.f32.mrf.mxu0
        %v2145 = vadd.f32 0.0, %v2144
        %2146 = vdwg.mxu0
        %v2148 = vsel %vm1331, %v2145, 0
        %2150 = vmatpush.msra.mxu0 0.0
        %2151 = vmatpush.msra.mxu0 0.0
        %2152 = vmatpush.msra.mxu0 0.0
        %2153 = vmatpush.msra.mxu0 0.0
        %2154 = vmatpush.msra.mxu0 0.0
        %2155 = vmatpush.msra.mxu0 0.0
        %2156 = vmatpush.msra.mxu0 0.0
        %2157 = vmatpush.msra.mxu0 0.0
        %2158 = vmatpush.msra.mxu0 0.0
        %2159 = vmatpush.msra.mxu0 0.0
        %2160 = vmatpush.msra.mxu0 0.0
        %2161 = vmatpush.msra.mxu0 0.0
        %2162 = vmatpush.msra.mxu0 0.0
        %2163 = vmatpush.msra.mxu0 0.0
        %2164 = vmatpush.msra.mxu0 0.0
        %2165 = vmatpush.msra.mxu0 %v1983
        %2166 = vmatmul.f32.gmra.mxu0 %v2148
        %v2167 = vpop.f32.mrf.mxu0
        %v2168 = vadd.f32 0.0, %v2167
        %2169 = vdwg.mxu0
        %v2171 = vsel %vm1331, %v2065, 0
        %2173 = vmatpush.msra.mxu0 0.0
        %2174 = vmatpush.msra.mxu0 0.0
        %2175 = vmatpush.msra.mxu0 0.0
        %2176 = vmatpush.msra.mxu0 0.0
        %2177 = vmatpush.msra.mxu0 0.0
        %2178 = vmatpush.msra.mxu0 0.0
        %2179 = vmatpush.msra.mxu0 0.0
        %2180 = vmatpush.msra.mxu0 0.0
        %2181 = vmatpush.msra.mxu0 0.0
        %2182 = vmatpush.msra.mxu0 0.0
        %2183 = vmatpush.msra.mxu0 0.0
        %2184 = vmatpush.msra.mxu0 0.0
        %2185 = vmatpush.msra.mxu0 0.0
        %2186 = vmatpush.msra.mxu0 0.0
        %2187 = vmatpush.msra.mxu0 0.0
        %2188 = vmatpush.msra.mxu0 %v1982
        %2189 = vmatmul.f32.gmra.mxu0 %v2171
        %v2190 = vpop.f32.mrf.mxu0
        %v2191 = vadd.f32 %v2168, %v2190
        %2192 = vdwg.mxu0
        %2193 = vrot.lane.b32.xlu0 %v1978, 112
        %v2194 = vpop.permute.xlu0 %2193
        %2195 = vrot.lane.b32.xlu0 %v1978, 80
        %v2196 = vpop.permute.xlu0 %2195
        %v2197 = vsel %vm1331, %v2194, 0
        %v2199 = vsel %vm1331, %v2196, 0
        %2201 = vmatpush.xpose.msra.mxu0 0.0
        %2202 = vmatpush.xpose.msra.mxu0 0.0
        %2203 = vmatpush.xpose.msra.mxu0 0.0
        %2204 = vmatpush.xpose.msra.mxu0 0.0
        %2205 = vmatpush.xpose.msra.mxu0 0.0
        %2206 = vmatpush.xpose.msra.mxu0 0.0
        %2207 = vmatpush.xpose.msra.mxu0 0.0
        %2208 = vmatpush.xpose.msra.mxu0 0.0
        %2209 = vmatpush.xpose.msra.mxu0 0.0
        %2210 = vmatpush.xpose.msra.mxu0 0.0
        %2211 = vmatpush.xpose.msra.mxu0 0.0
        %2212 = vmatpush.xpose.msra.mxu0 0.0
        %2213 = vmatpush.xpose.msra.mxu0 0.0
        %2214 = vmatpush.xpose.msra.mxu0 0.0
        %2215 = vmatpush.xpose.msra.mxu0 0.0
        %2216 = vmatpush.xpose.msra.mxu0 %v2199
        %2217 = vmatmul.f32.gmra.mxu0 %v2197
        %v2218 = vpop.f32.mrf.mxu0
        %v2219 = vadd.f32 0.0, %v2218
        %2220 = vdwg.mxu0
        %v2221 = vmul.f32 %v2219, 0.35355338
        %v2222 = vadd.f32 %v2221, %v1358
        %v2223 = vsel %vm1331, %v2222, -inf
        %2224 = vmax.xlane.f32.xlu0 %v2223
        %v2225 = vpop.xlane.xlu0 %2224
        %v2226 = vsub.f32 %v2222, %v2225
        %v2227 = vmul.f32 %v2226, 1.442695
        %v2228 = vpow.pop %v2227
        %v2229 = vsel %vm1331, %v2228, 0.0
        %2230 = vadd.xlane.f32.xlu0 %v2229
        %v2231 = vpop.xlane.xlu0 %2230
        %v2232 = vrcp.pop %v2231
        %v2233 = vmul.f32 %v2231, %v2232
        %v2234 = vsub.f32 1.0, %v2233
        %v2235 = vmul.f32 %v2232, %v2234
        %v2236 = vadd.f32 %v2232, %v2235
        %vm2237 = vweird.f32 %v2231
        %vm2238 = vweird.f32 %v2232
        %vm2239 = vmor %vm2237, %vm2238
        %v2240 = vsel %vm2239, %v2232, %v2236
        %v2241 = vand.u32 2147483647, %v2231
        %vm2242 = vcmp.eq.f32.partialorder %v2241, 8.507059e+37
        %v2243 = vand.u32 %v2231, 2147483648
        %v2244 = vor.u32 1.1754944e-38, %v2243
        %v2245 = vsel %vm2242, %v2244, %v2240
        %v2246 = vmul.f32 %v2228, %v2245
        %2247 = vrot.lane.b32.xlu0 %v1978, 48
        %v2248 = vpop.permute.xlu0 %2247
        %v2251 = vsel %vm1331, %v2246, 0
        %2253 = vmatpush.msra.mxu0 0.0
        %2254 = vmatpush.msra.mxu0 0.0
        %2255 = vmatpush.msra.mxu0 0.0
        %2256 = vmatpush.msra.mxu0 0.0
        %2257 = vmatpush.msra.mxu0 0.0
        %2258 = vmatpush.msra.mxu0 0.0
        %2259 = vmatpush.msra.mxu0 0.0
        %2260 = vmatpush.msra.mxu0 0.0
        %2261 = vmatpush.msra.mxu0 0.0
        %2262 = vmatpush.msra.mxu0 0.0
        %2263 = vmatpush.msra.mxu0 0.0
        %2264 = vmatpush.msra.mxu0 0.0
        %2265 = vmatpush.msra.mxu0 0.0
        %2266 = vmatpush.msra.mxu0 0.0
        %2267 = vmatpush.msra.mxu0 0.0
        %2268 = vmatpush.msra.mxu0 %v2248
        %2269 = vmatmul.f32.gmra.mxu0 %v2251
        %v2270 = vpop.f32.mrf.mxu0
        %v2271 = vadd.f32 0.0, %v2270
        %2272 = vdwg.mxu0
        %v2274 = vsel %vm1331, %v2271, 0
        %2276 = vmatpush.msra.mxu0 0.0
        %2277 = vmatpush.msra.mxu0 0.0
        %2278 = vmatpush.msra.mxu0 0.0
        %2279 = vmatpush.msra.mxu0 0.0
        %2280 = vmatpush.msra.mxu0 0.0
        %2281 = vmatpush.msra.mxu0 0.0
        %2282 = vmatpush.msra.mxu0 0.0
        %2283 = vmatpush.msra.mxu0 0.0
        %2284 = vmatpush.msra.mxu0 0.0
        %2285 = vmatpush.msra.mxu0 0.0
        %2286 = vmatpush.msra.mxu0 0.0
        %2287 = vmatpush.msra.mxu0 0.0
        %2288 = vmatpush.msra.mxu0 0.0
        %2289 = vmatpush.msra.mxu0 0.0
        %2290 = vmatpush.msra.mxu0 0.0
        %2291 = vmatpush.msra.mxu0 %v1984
        %2292 = vmatmul.f32.gmra.mxu0 %v2274
        %v2293 = vpop.f32.mrf.mxu0
        %v2294 = vadd.f32 0.0, %v2293
        %2295 = vdwg.mxu0
        %v2296 = vadd.f32 %v2191, %v2294
        %2297 = vrot.lane.b32.xlu0 %v1978, 104
        %v2298 = vpop.permute.xlu0 %2297
        %2299 = vrot.lane.b32.xlu0 %v1978, 72
        %v2300 = vpop.permute.xlu0 %2299
        %v2301 = vsel %vm1331, %v2298, 0
        %v2303 = vsel %vm1331, %v2300, 0
        %2305 = vmatpush.xpose.msra.mxu0 0.0
        %2306 = vmatpush.xpose.msra.mxu0 0.0
        %2307 = vmatpush.xpose.msra.mxu0 0.0
        %2308 = vmatpush.xpose.msra.mxu0 0.0
        %2309 = vmatpush.xpose.msra.mxu0 0.0
        %2310 = vmatpush.xpose.msra.mxu0 0.0
        %2311 = vmatpush.xpose.msra.mxu0 0.0
        %2312 = vmatpush.xpose.msra.mxu0 0.0
        %2313 = vmatpush.xpose.msra.mxu0 0.0
        %2314 = vmatpush.xpose.msra.mxu0 0.0
        %2315 = vmatpush.xpose.msra.mxu0 0.0
        %2316 = vmatpush.xpose.msra.mxu0 0.0
        %2317 = vmatpush.xpose.msra.mxu0 0.0
        %2318 = vmatpush.xpose.msra.mxu0 0.0
        %2319 = vmatpush.xpose.msra.mxu0 0.0
        %2320 = vmatpush.xpose.msra.mxu0 %v2303
        %2321 = vmatmul.f32.gmra.mxu0 %v2301
        %v2322 = vpop.f32.mrf.mxu0
        %v2323 = vadd.f32 0.0, %v2322
        %2324 = vdwg.mxu0
        %v2325 = vmul.f32 %v2323, 0.35355338
        %v2326 = vadd.f32 %v2325, %v1358
        %v2327 = vsel %vm1331, %v2326, -inf
        %2328 = vmax.xlane.f32.xlu0 %v2327
        %v2329 = vpop.xlane.xlu0 %2328
        %v2330 = vsub.f32 %v2326, %v2329
        %v2331 = vmul.f32 %v2330, 1.442695
        %v2332 = vpow.pop %v2331
        %v2333 = vsel %vm1331, %v2332, 0.0
        %2334 = vadd.xlane.f32.xlu0 %v2333
        %v2335 = vpop.xlane.xlu0 %2334
        %v2336 = vrcp.pop %v2335
        %v2337 = vmul.f32 %v2335, %v2336
        %v2338 = vsub.f32 1.0, %v2337
        %v2339 = vmul.f32 %v2336, %v2338
        %v2340 = vadd.f32 %v2336, %v2339
        %vm2341 = vweird.f32 %v2335
        %vm2342 = vweird.f32 %v2336
        %vm2343 = vmor %vm2341, %vm2342
        %v2344 = vsel %vm2343, %v2336, %v2340
        %v2345 = vand.u32 2147483647, %v2335
        %vm2346 = vcmp.eq.f32.partialorder %v2345, 8.507059e+37
        %v2347 = vand.u32 %v2335, 2147483648
        %v2348 = vor.u32 1.1754944e-38, %v2347
        %v2349 = vsel %vm2346, %v2348, %v2344
        %v2350 = vmul.f32 %v2332, %v2349
        %2351 = vrot.lane.b32.xlu0 %v1978, 40
        %v2352 = vpop.permute.xlu0 %2351
        %v2355 = vsel %vm1331, %v2350, 0
        %2357 = vmatpush.msra.mxu0 0.0
        %2358 = vmatpush.msra.mxu0 0.0
        %2359 = vmatpush.msra.mxu0 0.0
        %2360 = vmatpush.msra.mxu0 0.0
        %2361 = vmatpush.msra.mxu0 0.0
        %2362 = vmatpush.msra.mxu0 0.0
        %2363 = vmatpush.msra.mxu0 0.0
        %2364 = vmatpush.msra.mxu0 0.0
        %2365 = vmatpush.msra.mxu0 0.0
        %2366 = vmatpush.msra.mxu0 0.0
        %2367 = vmatpush.msra.mxu0 0.0
        %2368 = vmatpush.msra.mxu0 0.0
        %2369 = vmatpush.msra.mxu0 0.0
        %2370 = vmatpush.msra.mxu0 0.0
        %2371 = vmatpush.msra.mxu0 0.0
        %2372 = vmatpush.msra.mxu0 %v2352
        %2373 = vmatmul.f32.gmra.mxu0 %v2355
        %v2374 = vpop.f32.mrf.mxu0
        %v2375 = vadd.f32 0.0, %v2374
        %2376 = vdwg.mxu0
        %v2378 = vsel %vm1331, %v2375, 0
        %2380 = vmatpush.msra.mxu0 0.0
        %2381 = vmatpush.msra.mxu0 0.0
        %2382 = vmatpush.msra.mxu0 0.0
        %2383 = vmatpush.msra.mxu0 0.0
        %2384 = vmatpush.msra.mxu0 0.0
        %2385 = vmatpush.msra.mxu0 0.0
        %2386 = vmatpush.msra.mxu0 0.0
        %2387 = vmatpush.msra.mxu0 0.0
        %2388 = vmatpush.msra.mxu0 0.0
        %2389 = vmatpush.msra.mxu0 0.0
        %2390 = vmatpush.msra.mxu0 0.0
        %2391 = vmatpush.msra.mxu0 0.0
        %2392 = vmatpush.msra.mxu0 0.0
        %2393 = vmatpush.msra.mxu0 0.0
        %2394 = vmatpush.msra.mxu0 0.0
        %2395 = vmatpush.msra.mxu0 %v1985
        %2396 = vmatmul.f32.gmra.mxu0 %v2378
        %v2397 = vpop.f32.mrf.mxu0
        %v2398 = vadd.f32 0.0, %v2397
        %2399 = vdwg.mxu0
        %v2400 = vadd.f32 %v2296, %v2398
        %v2402 = vperm.slane %v1987, 0
        %v2404 = vadd.f32 %v2400, %v2402
        %v2405 = vadd.f32 %v1941, %v2404
        %s2406 = scalar_lea.vmem %s15, 1
        %v2407 = vld [vmem:[%s2406] sm:$0x1]
        %s2408 = scalar_lea.vmem %s17, 1
        %v2409 = vld [vmem:[%s2408] sm:$0x1]
        %v2410 = vsel %vm1306, %v2405, 0.0
        %2411 = vadd.xlane.f32.xlu0 %v2410
        %v2412 = vpop.xlane.xlu0 %2411
        %v2413 = vmul.f32 %v2412, %v1761
        %v2414 = vsub.f32 %v2405, %v2413
        %v2415 = vmul.f32 %v2414, %v2414
        %v2416 = vsel %vm1306, %v2415, 0.0
        %2417 = vadd.xlane.f32.xlu0 %v2416
        %v2418 = vpop.xlane.xlu0 %2417
        %v2419 = vmul.f32 %v2418, %v1761
        %v2420 = vadd.f32 %v2419, 1e-05
        %v2421 = vrsqrt.pop %v2420
        %v2422 = vmul.f32 %v2421, %v2420
        %v2423 = vmul.f32 %v2422, %v2421
        %v2424 = vmul.f32 0.5, %v2423
        %v2425 = vsub.f32 1.5, %v2424
        %v2426 = vmul.f32 %v2421, %v2425
        %vm2427 = vweird.f32 %v2420
        %vm2428 = vweird.f32 %v2421
        %vm2429 = vmor %vm2427, %vm2428
        %v2430 = vsel %vm2429, %v2421, %v2426
        %v2431 = vmul.f32 %v2414, %v2430
        %v2433 = vperm.slane %v2407, 0
        %v2435 = vmul.f32 %v2431, %v2433
        %v2437 = vperm.slane %v2409, 0
        %v2439 = vadd.f32 %v2435, %v2437
        %v2440 = vpack.c.bf16 %v2439, %v2439
        %s2441 = scalar_lea.vmem %s19, 16
        %v2442 = vld [vmem:[%s2441] sm:$0xf]
        %v2443 = vld [vmem:[%s2441 + $0x4] sm:$0xf]
        %v2444 = vld [vmem:[%s2441 + $0x8] sm:$0xf]
        %v2445 = vld [vmem:[%s2441 + $0xc] sm:$0xf]
        %s2446 = scalar_lea.vmem %s21, 1
        %v2447 = vld [vmem:[%s2446] sm:$0x1]
        %v2449 = vperm.slane %v2447, 0
        %v2455 = vunpack.c.l.b16 %v2442
        %v2456 = vunpack.c.l.b16 %v2443
        %v2457 = vunpack.c.l.b16 %v2444
        %v2458 = vunpack.c.l.b16 %v2445
        %v2459 = vpack.c.b16 %v2456, %v2455
        %v2460 = vpack.c.b16 %v2458, %v2457
        %v2464 = vsel %vm1306, %v2440, 0
        %2466 = vmatpush.bf16.msra.mxu0 0
        %2467 = vmatpush.bf16.msra.mxu0 0
        %2468 = vmatpush.bf16.msra.mxu0 0
        %2469 = vmatpush.bf16.msra.mxu0 0
        %2470 = vmatpush.bf16.msra.mxu0 0
        %2471 = vmatpush.bf16.msra.mxu0 0
        %2472 = vmatpush.bf16.msra.mxu0 %v2460
        %2473 = vmatpush.bf16.msra.mxu0 %v2459
        %2474 = vmatmul.bf16.gmra.mxu0 %v2464
        %v2475 = vpop.f32.mrf.mxu0
        %v2476 = vadd.f32 %v2449, %v2475
        %v2477 = vpop.f32.mrf.mxu0
        %2478 = vdwg.mxu0
        %v2479 = vmax.f32 %v2476, 0.0
        %v2480 = vpack.c.bf16 %v2479, %v2479
        %s2481 = scalar_lea.vmem %s23, 64
        %v2482 = vld [vmem:[%s2481] sm:$0xf]
        %v2483 = vld [vmem:[%s2481 + $0x4] sm:$0xf]
        %v2484 = vld [vmem:[%s2481 + $0x8] sm:$0xf]
        %v2485 = vld [vmem:[%s2481 + $0xc] sm:$0xf]
        %v2486 = vld [vmem:[%s2481 + $0x10] sm:$0xf]
        %v2487 = vld [vmem:[%s2481 + $0x14] sm:$0xf]
        %v2488 = vld [vmem:[%s2481 + $0x18] sm:$0xf]
        %v2489 = vld [vmem:[%s2481 + $0x1c] sm:$0xf]
        %v2490 = vld [vmem:[%s2481 + $0x20] sm:$0xf]
        %v2491 = vld [vmem:[%s2481 + $0x24] sm:$0xf]
        %v2492 = vld [vmem:[%s2481 + $0x28] sm:$0xf]
        %v2493 = vld [vmem:[%s2481 + $0x2c] sm:$0xf]
        %v2494 = vld [vmem:[%s2481 + $0x30] sm:$0xf]
        %v2495 = vld [vmem:[%s2481 + $0x34] sm:$0xf]
        %v2496 = vld [vmem:[%s2481 + $0x38] sm:$0xf]
        %v2497 = vld [vmem:[%s2481 + $0x3c] sm:$0xf]
        %s2498 = scalar_lea.vmem %s25, 1
        %v2499 = vld [vmem:[%s2498] sm:$0x1]
        %v2501 = vperm.slane %v2499, 0
        %v2519 = vunpack.c.l.b16 %v2482
        %v2520 = vunpack.c.l.b16 %v2483
        %v2521 = vunpack.c.l.b16 %v2484
        %v2522 = vunpack.c.l.b16 %v2485
        %v2523 = vunpack.c.l.b16 %v2486
        %v2524 = vunpack.c.l.b16 %v2487
        %v2525 = vunpack.c.l.b16 %v2488
        %v2526 = vunpack.c.l.b16 %v2489
        %v2527 = vunpack.c.l.b16 %v2490
        %v2528 = vunpack.c.l.b16 %v2491
        %v2529 = vunpack.c.l.b16 %v2492
        %v2530 = vunpack.c.l.b16 %v2493
        %v2531 = vunpack.c.l.b16 %v2494
        %v2532 = vunpack.c.l.b16 %v2495
        %v2533 = vunpack.c.l.b16 %v2496
        %v2534 = vunpack.c.l.b16 %v2497
        %v2535 = vpack.c.b16 %v2520, %v2519
        %v2536 = vpack.c.b16 %v2522, %v2521
        %v2537 = vpack.c.b16 %v2524, %v2523
        %v2538 = vpack.c.b16 %v2526, %v2525
        %v2539 = vpack.c.b16 %v2528, %v2527
        %v2540 = vpack.c.b16 %v2530, %v2529
        %v2541 = vpack.c.b16 %v2532, %v2531
        %v2542 = vpack.c.b16 %v2534, %v2533
        %2551 = vmatpush.bf16.msra.mxu0 %v2542
        %2552 = vmatpush.bf16.msra.mxu0 %v2541
        %2553 = vmatpush.bf16.msra.mxu0 %v2540
        %2554 = vmatpush.bf16.msra.mxu0 %v2539
        %2555 = vmatpush.bf16.msra.mxu0 %v2538
        %2556 = vmatpush.bf16.msra.mxu0 %v2537
        %2557 = vmatpush.bf16.msra.mxu0 %v2536
        %2558 = vmatpush.bf16.msra.mxu0 %v2535
        %2559 = vmatmul.bf16.gmra.mxu0 %v2480
        %v2560 = vpop.f32.mrf.mxu0
        %v2561 = vadd.f32 %v2501, %v2560
        %v2562 = vpop.f32.mrf.mxu0
        %2563 = vdwg.mxu0
        %v2564 = vadd.f32 %v2439, %v2561
        %s2565 = scalar_lea.vmem %s27, 1
        %v2566 = vld [vmem:[%s2565] sm:$0x1]
        %s2567 = scalar_lea.vmem %s29, 1
        %v2568 = vld [vmem:[%s2567] sm:$0x1]
        %v2569 = vsel %vm1306, %v2564, 0.0
        %2570 = vadd.xlane.f32.xlu0 %v2569
        %v2571 = vpop.xlane.xlu0 %2570
        %v2572 = vmul.f32 %v2571, %v1761
        %v2573 = vsub.f32 %v2564, %v2572
        %v2574 = vmul.f32 %v2573, %v2573
        %v2575 = vsel %vm1306, %v2574, 0.0
        %2576 = vadd.xlane.f32.xlu0 %v2575
        %v2577 = vpop.xlane.xlu0 %2576
        %v2578 = vmul.f32 %v2577, %v1761
        %v2579 = vadd.f32 %v2578, 1e-05
        %v2580 = vrsqrt.pop %v2579
        %v2581 = vmul.f32 %v2580, %v2579
        %v2582 = vmul.f32 %v2581, %v2580
        %v2583 = vmul.f32 0.5, %v2582
        %v2584 = vsub.f32 1.5, %v2583
        %v2585 = vmul.f32 %v2580, %v2584
        %vm2586 = vweird.f32 %v2579
        %vm2587 = vweird.f32 %v2580
        %vm2588 = vmor %vm2586, %vm2587
        %v2589 = vsel %vm2588, %v2580, %v2585
        %v2590 = vmul.f32 %v2573, %v2589
        %v2592 = vperm.slane %v2566, 0
        %v2594 = vmul.f32 %v2590, %v2592
        %v2596 = vperm.slane %v2568, 0
        %v2598 = vadd.f32 %v2594, %v2596
        %v2599 = vld [vmem:[%s31] sm:$0x1]
        %v2600 = vld [vmem:[%s33] sm:$0x1]
        %v2601 = vsel %vm1306, %v2598, 0.0
        %2602 = vadd.xlane.f32.xlu0 %v2601
        %v2603 = vpop.xlane.xlu0 %2602
        %v2604 = vmul.f32 %v2603, %v1761
        %v2605 = vsub.f32 %v2598, %v2604
        %v2606 = vmul.f32 %v2605, %v2605
        %v2607 = vsel %vm1306, %v2606, 0.0
        %2608 = vadd.xlane.f32.xlu0 %v2607
        %v2609 = vpop.xlane.xlu0 %2608
        %v2610 = vmul.f32 %v2609, %v1761
        %v2611 = vadd.f32 %v2610, 1e-05
        %v2612 = vrsqrt.pop %v2611
        %v2613 = vmul.f32 %v2612, %v2611
        %v2614 = vmul.f32 %v2613, %v2612
        %v2615 = vmul.f32 0.5, %v2614
        %v2616 = vsub.f32 1.5, %v2615
        %v2617 = vmul.f32 %v2612, %v2616
        %vm2618 = vweird.f32 %v2611
        %vm2619 = vweird.f32 %v2612
        %vm2620 = vmor %vm2618, %vm2619
        %v2621 = vsel %vm2620, %v2612, %v2617
        %v2622 = vmul.f32 %v2605, %v2621
        %v2624 = vperm.slane %v2599, 0
        %v2626 = vmul.f32 %v2622, %v2624
        %v2628 = vperm.slane %v2600, 0
        %v2630 = vadd.f32 %v2626, %v2628
        %v2631 = vpack.c.bf16 %v2630, %v2630
        %v2632 = vlaneseq
        %v2633 = vshrl.u32 %v2632, 7
        %v2634 = vlaneseq
        %v2635 = vand.u32 %v2634, 127
        %vm2636 = vcmp.gt.s32.totalorder %v2635, %v2633
        %v2637 = vsel %vm2636, -1e+30, 0.0
        %v2638 = vld [vmem:[%s1279] sm:$0xff]
        %v2639 = vpack.c.bf16 %v2638, %v2638
        %v2640 = vld [vmem:[%s35] sm:$0xf]
        %v2641 = vld [vmem:[%s35 + $0x4] sm:$0xf]
        %v2642 = vld [vmem:[%s35 + $0x8] sm:$0xf]
        %v2643 = vld [vmem:[%s35 + $0xc] sm:$0xf]
        %v2644 = vld [vmem:[%s37] sm:$0x1]
        %v2646 = vperm.slane %v2644, 0
        %v2652 = vunpack.c.l.b16 %v2640
        %v2653 = vunpack.c.l.b16 %v2641
        %v2654 = vunpack.c.l.b16 %v2642
        %v2655 = vunpack.c.l.b16 %v2643
        %v2656 = vpack.c.b16 %v2653, %v2652
        %v2657 = vpack.c.b16 %v2655, %v2654
        %v2661 = vsel %vm1306, %v2639, 0
        %2663 = vmatpush.bf16.msra.mxu0 0
        %2664 = vmatpush.bf16.msra.mxu0 0
        %2665 = vmatpush.bf16.msra.mxu0 0
        %2666 = vmatpush.bf16.msra.mxu0 0
        %2667 = vmatpush.bf16.msra.mxu0 0
        %2668 = vmatpush.bf16.msra.mxu0 0
        %2669 = vmatpush.bf16.msra.mxu0 %v2657
        %2670 = vmatpush.bf16.msra.mxu0 %v2656
        %2671 = vmatmul.bf16.gmra.mxu0 %v2661
        %v2672 = vpop.f32.mrf.mxu0
        %v2673 = vadd.f32 %v2646, %v2672
        %v2674 = vpop.f32.mrf.mxu0
        %2675 = vdwg.mxu0
        %v2676 = vld [vmem:[%s39] sm:$0xff]
        %v2677 = vld [vmem:[%s39 + $0x8] sm:$0xff]
        %v2678 = vld [vmem:[%s39 + $0x10] sm:$0xff]
        %v2679 = vld [vmem:[%s39 + $0x18] sm:$0xff]
        %v2680 = vld [vmem:[%s41] sm:$0x1]
        %2682 = vrot.lane.b32.xlu0 %v2673, 96
        %v2683 = vpop.permute.xlu0 %2682
        %v2684 = vsel %vm1331, %v2673, 0
        %v2686 = vsel %vm1331, %v2683, 0
        %2688 = vmatpush.xpose.msra.mxu0 0.0
        %2689 = vmatpush.xpose.msra.mxu0 0.0
        %2690 = vmatpush.xpose.msra.mxu0 0.0
        %2691 = vmatpush.xpose.msra.mxu0 0.0
        %2692 = vmatpush.xpose.msra.mxu0 0.0
        %2693 = vmatpush.xpose.msra.mxu0 0.0
        %2694 = vmatpush.xpose.msra.mxu0 0.0
        %2695 = vmatpush.xpose.msra.mxu0 0.0
        %2696 = vmatpush.xpose.msra.mxu0 0.0
        %2697 = vmatpush.xpose.msra.mxu0 0.0
        %2698 = vmatpush.xpose.msra.mxu0 0.0
        %2699 = vmatpush.xpose.msra.mxu0 0.0
        %2700 = vmatpush.xpose.msra.mxu0 0.0
        %2701 = vmatpush.xpose.msra.mxu0 0.0
        %2702 = vmatpush.xpose.msra.mxu0 0.0
        %2703 = vmatpush.xpose.msra.mxu0 %v2686
        %2704 = vmatmul.f32.gmra.mxu0 %v2684
        %v2705 = vpop.f32.mrf.mxu0
        %v2706 = vadd.f32 0.0, %v2705
        %2707 = vdwg.mxu0
        %v2708 = vmul.f32 %v2706, 0.35355338
        %v2709 = vadd.f32 %v2708, %v2637
        %v2710 = vsel %vm1331, %v2709, -inf
        %2711 = vmax.xlane.f32.xlu0 %v2710
        %v2712 = vpop.xlane.xlu0 %2711
        %v2713 = vsub.f32 %v2709, %v2712
        %v2714 = vmul.f32 %v2713, 1.442695
        %v2715 = vpow.pop %v2714
        %v2716 = vsel %vm1331, %v2715, 0.0
        %2717 = vadd.xlane.f32.xlu0 %v2716
        %v2718 = vpop.xlane.xlu0 %2717
        %v2719 = vrcp.pop %v2718
        %v2720 = vmul.f32 %v2718, %v2719
        %v2721 = vsub.f32 1.0, %v2720
        %v2722 = vmul.f32 %v2719, %v2721
        %v2723 = vadd.f32 %v2719, %v2722
        %vm2724 = vweird.f32 %v2718
        %vm2725 = vweird.f32 %v2719
        %vm2726 = vmor %vm2724, %vm2725
        %v2727 = vsel %vm2726, %v2719, %v2723
        %v2728 = vand.u32 2147483647, %v2718
        %vm2729 = vcmp.eq.f32.partialorder %v2728, 8.507059e+37
        %v2730 = vand.u32 %v2718, 2147483648
        %v2731 = vor.u32 1.1754944e-38, %v2730
        %v2732 = vsel %vm2729, %v2731, %v2727
        %v2733 = vmul.f32 %v2715, %v2732
        %2734 = vrot.lane.b32.xlu0 %v2673, 64
        %v2735 = vpop.permute.xlu0 %2734
        %v2738 = vsel %vm1331, %v2733, 0
        %2740 = vmatpush.msra.mxu0 0.0
        %2741 = vmatpush.msra.mxu0 0.0
        %2742 = vmatpush.msra.mxu0 0.0
        %2743 = vmatpush.msra.mxu0 0.0
        %2744 = vmatpush.msra.mxu0 0.0
        %2745 = vmatpush.msra.mxu0 0.0
        %2746 = vmatpush.msra.mxu0 0.0
        %2747 = vmatpush.msra.mxu0 0.0
        %2748 = vmatpush.msra.mxu0 0.0
        %2749 = vmatpush.msra.mxu0 0.0
        %2750 = vmatpush.msra.mxu0 0.0
        %2751 = vmatpush.msra.mxu0 0.0
        %2752 = vmatpush.msra.mxu0 0.0
        %2753 = vmatpush.msra.mxu0 0.0
        %2754 = vmatpush.msra.mxu0 0.0
        %2755 = vmatpush.msra.mxu0 %v2735
        %2756 = vmatmul.f32.gmra.mxu0 %v2738
        %v2757 = vpop.f32.mrf.mxu0
        %v2758 = vadd.f32 0.0, %v2757
        %2759 = vdwg.mxu0
        %2760 = vrot.lane.b32.xlu0 %v2673, 120
        %v2761 = vpop.permute.xlu0 %2760
        %2762 = vrot.lane.b32.xlu0 %v2673, 88
        %v2763 = vpop.permute.xlu0 %2762
        %v2764 = vsel %vm1331, %v2761, 0
        %v2766 = vsel %vm1331, %v2763, 0
        %2768 = vmatpush.xpose.msra.mxu0 0.0
        %2769 = vmatpush.xpose.msra.mxu0 0.0
        %2770 = vmatpush.xpose.msra.mxu0 0.0
        %2771 = vmatpush.xpose.msra.mxu0 0.0
        %2772 = vmatpush.xpose.msra.mxu0 0.0
        %2773 = vmatpush.xpose.msra.mxu0 0.0
        %2774 = vmatpush.xpose.msra.mxu0 0.0
        %2775 = vmatpush.xpose.msra.mxu0 0.0
        %2776 = vmatpush.xpose.msra.mxu0 0.0
        %2777 = vmatpush.xpose.msra.mxu0 0.0
        %2778 = vmatpush.xpose.msra.mxu0 0.0
        %2779 = vmatpush.xpose.msra.mxu0 0.0
        %2780 = vmatpush.xpose.msra.mxu0 0.0
        %2781 = vmatpush.xpose.msra.mxu0 0.0
        %2782 = vmatpush.xpose.msra.mxu0 0.0
        %2783 = vmatpush.xpose.msra.mxu0 %v2766
        %2784 = vmatmul.f32.gmra.mxu0 %v2764
        %v2785 = vpop.f32.mrf.mxu0
        %v2786 = vadd.f32 0.0, %v2785
        %2787 = vdwg.mxu0
        %v2788 = vmul.f32 %v2786, 0.35355338
        %v2789 = vadd.f32 %v2788, %v2637
        %v2790 = vsel %vm1331, %v2789, -inf
        %2791 = vmax.xlane.f32.xlu0 %v2790
        %v2792 = vpop.xlane.xlu0 %2791
        %v2793 = vsub.f32 %v2789, %v2792
        %v2794 = vmul.f32 %v2793, 1.442695
        %v2795 = vpow.pop %v2794
        %v2796 = vsel %vm1331, %v2795, 0.0
        %2797 = vadd.xlane.f32.xlu0 %v2796
        %v2798 = vpop.xlane.xlu0 %2797
        %v2799 = vrcp.pop %v2798
        %v2800 = vmul.f32 %v2798, %v2799
        %v2801 = vsub.f32 1.0, %v2800
        %v2802 = vmul.f32 %v2799, %v2801
        %v2803 = vadd.f32 %v2799, %v2802
        %vm2804 = vweird.f32 %v2798
        %vm2805 = vweird.f32 %v2799
        %vm2806 = vmor %vm2804, %vm2805
        %v2807 = vsel %vm2806, %v2799, %v2803
        %v2808 = vand.u32 2147483647, %v2798
        %vm2809 = vcmp.eq.f32.partialorder %v2808, 8.507059e+37
        %v2810 = vand.u32 %v2798, 2147483648
        %v2811 = vor.u32 1.1754944e-38, %v2810
        %v2812 = vsel %vm2809, %v2811, %v2807
        %v2813 = vmul.f32 %v2795, %v2812
        %2814 = vrot.lane.b32.xlu0 %v2673, 56
        %v2815 = vpop.permute.xlu0 %2814
        %v2818 = vsel %vm1331, %v2813, 0
        %2820 = vmatpush.msra.mxu0 0.0
        %2821 = vmatpush.msra.mxu0 0.0
        %2822 = vmatpush.msra.mxu0 0.0
        %2823 = vmatpush.msra.mxu0 0.0
        %2824 = vmatpush.msra.mxu0 0.0
        %2825 = vmatpush.msra.mxu0 0.0
        %2826 = vmatpush.msra.mxu0 0.0
        %2827 = vmatpush.msra.mxu0 0.0
        %2828 = vmatpush.msra.mxu0 0.0
        %2829 = vmatpush.msra.mxu0 0.0
        %2830 = vmatpush.msra.mxu0 0.0
        %2831 = vmatpush.msra.mxu0 0.0
        %2832 = vmatpush.msra.mxu0 0.0
        %2833 = vmatpush.msra.mxu0 0.0
        %2834 = vmatpush.msra.mxu0 0.0
        %2835 = vmatpush.msra.mxu0 %v2815
        %2836 = vmatmul.f32.gmra.mxu0 %v2818
        %v2837 = vpop.f32.mrf.mxu0
        %v2838 = vadd.f32 0.0, %v2837
        %2839 = vdwg.mxu0
        %v2841 = vsel %vm1331, %v2838, 0
        %2843 = vmatpush.msra.mxu0 0.0
        %2844 = vmatpush.msra.mxu0 0.0
        %2845 = vmatpush.msra.mxu0 0.0
        %2846 = vmatpush.msra.mxu0 0.0
        %2847 = vmatpush.msra.mxu0 0.0
        %2848 = vmatpush.msra.mxu0 0.0
        %2849 = vmatpush.msra.mxu0 0.0
        %2850 = vmatpush.msra.mxu0 0.0
        %2851 = vmatpush.msra.mxu0 0.0
        %2852 = vmatpush.msra.mxu0 0.0
        %2853 = vmatpush.msra.mxu0 0.0
        %2854 = vmatpush.msra.mxu0 0.0
        %2855 = vmatpush.msra.mxu0 0.0
        %2856 = vmatpush.msra.mxu0 0.0
        %2857 = vmatpush.msra.mxu0 0.0
        %2858 = vmatpush.msra.mxu0 %v2677
        %2859 = vmatmul.f32.gmra.mxu0 %v2841
        %v2860 = vpop.f32.mrf.mxu0
        %v2861 = vadd.f32 0.0, %v2860
        %2862 = vdwg.mxu0
        %v2864 = vsel %vm1331, %v2758, 0
        %2866 = vmatpush.msra.mxu0 0.0
        %2867 = vmatpush.msra.mxu0 0.0
        %2868 = vmatpush.msra.mxu0 0.0
        %2869 = vmatpush.msra.mxu0 0.0
        %2870 = vmatpush.msra.mxu0 0.0
        %2871 = vmatpush.msra.mxu0 0.0
        %2872 = vmatpush.msra.mxu0 0.0
        %2873 = vmatpush.msra.mxu0 0.0
        %2874 = vmatpush.msra.mxu0 0.0
        %2875 = vmatpush.msra.mxu0 0.0
        %2876 = vmatpush.msra.mxu0 0.0
        %2877 = vmatpush.msra.mxu0 0.0
        %2878 = vmatpush.msra.mxu0 0.0
        %2879 = vmatpush.msra.mxu0 0.0
        %2880 = vmatpush.msra.mxu0 0.0
        %2881 = vmatpush.msra.mxu0 %v2676
        %2882 = vmatmul.f32.gmra.mxu0 %v2864
        %v2883 = vpop.f32.mrf.mxu0
        %v2884 = vadd.f32 %v2861, %v2883
        %2885 = vdwg.mxu0
        %2886 = vrot.lane.b32.xlu0 %v2673, 112
        %v2887 = vpop.permute.xlu0 %2886
        %2888 = vrot.lane.b32.xlu0 %v2673, 80
        %v2889 = vpop.permute.xlu0 %2888
        %v2890 = vsel %vm1331, %v2887, 0
        %v2892 = vsel %vm1331, %v2889, 0
        %2894 = vmatpush.xpose.msra.mxu0 0.0
        %2895 = vmatpush.xpose.msra.mxu0 0.0
        %2896 = vmatpush.xpose.msra.mxu0 0.0
        %2897 = vmatpush.xpose.msra.mxu0 0.0
        %2898 = vmatpush.xpose.msra.mxu0 0.0
        %2899 = vmatpush.xpose.msra.mxu0 0.0
        %2900 = vmatpush.xpose.msra.mxu0 0.0
        %2901 = vmatpush.xpose.msra.mxu0 0.0
        %2902 = vmatpush.xpose.msra.mxu0 0.0
        %2903 = vmatpush.xpose.msra.mxu0 0.0
        %2904 = vmatpush.xpose.msra.mxu0 0.0
        %2905 = vmatpush.xpose.msra.mxu0 0.0
        %2906 = vmatpush.xpose.msra.mxu0 0.0
        %2907 = vmatpush.xpose.msra.mxu0 0.0
        %2908 = vmatpush.xpose.msra.mxu0 0.0
        %2909 = vmatpush.xpose.msra.mxu0 %v2892
        %2910 = vmatmul.f32.gmra.mxu0 %v2890
        %v2911 = vpop.f32.mrf.mxu0
        %v2912 = vadd.f32 0.0, %v2911
        %2913 = vdwg.mxu0
        %v2914 = vmul.f32 %v2912, 0.35355338
        %v2915 = vadd.f32 %v2914, %v2637
        %v2916 = vsel %vm1331, %v2915, -inf
        %2917 = vmax.xlane.f32.xlu0 %v2916
        %v2918 = vpop.xlane.xlu0 %2917
        %v2919 = vsub.f32 %v2915, %v2918
        %v2920 = vmul.f32 %v2919, 1.442695
        %v2921 = vpow.pop %v2920
        %v2922 = vsel %vm1331, %v2921, 0.0
        %2923 = vadd.xlane.f32.xlu0 %v2922
        %v2924 = vpop.xlane.xlu0 %2923
        %v2925 = vrcp.pop %v2924
        %v2926 = vmul.f32 %v2924, %v2925
        %v2927 = vsub.f32 1.0, %v2926
        %v2928 = vmul.f32 %v2925, %v2927
        %v2929 = vadd.f32 %v2925, %v2928
        %vm2930 = vweird.f32 %v2924
        %vm2931 = vweird.f32 %v2925
        %vm2932 = vmor %vm2930, %vm2931
        %v2933 = vsel %vm2932, %v2925, %v2929
        %v2934 = vand.u32 2147483647, %v2924
        %vm2935 = vcmp.eq.f32.partialorder %v2934, 8.507059e+37
        %v2936 = vand.u32 %v2924, 2147483648
        %v2937 = vor.u32 1.1754944e-38, %v2936
        %v2938 = vsel %vm2935, %v2937, %v2933
        %v2939 = vmul.f32 %v2921, %v2938
        %2940 = vrot.lane.b32.xlu0 %v2673, 48
        %v2941 = vpop.permute.xlu0 %2940
        %v2944 = vsel %vm1331, %v2939, 0
        %2946 = vmatpush.msra.mxu0 0.0
        %2947 = vmatpush.msra.mxu0 0.0
        %2948 = vmatpush.msra.mxu0 0.0
        %2949 = vmatpush.msra.mxu0 0.0
        %2950 = vmatpush.msra.mxu0 0.0
        %2951 = vmatpush.msra.mxu0 0.0
        %2952 = vmatpush.msra.mxu0 0.0
        %2953 = vmatpush.msra.mxu0 0.0
        %2954 = vmatpush.msra.mxu0 0.0
        %2955 = vmatpush.msra.mxu0 0.0
        %2956 = vmatpush.msra.mxu0 0.0
        %2957 = vmatpush.msra.mxu0 0.0
        %2958 = vmatpush.msra.mxu0 0.0
        %2959 = vmatpush.msra.mxu0 0.0
        %2960 = vmatpush.msra.mxu0 0.0
        %2961 = vmatpush.msra.mxu0 %v2941
        %2962 = vmatmul.f32.gmra.mxu0 %v2944
        %v2963 = vpop.f32.mrf.mxu0
        %v2964 = vadd.f32 0.0, %v2963
        %2965 = vdwg.mxu0
        %v2967 = vsel %vm1331, %v2964, 0
        %2969 = vmatpush.msra.mxu0 0.0
        %2970 = vmatpush.msra.mxu0 0.0
        %2971 = vmatpush.msra.mxu0 0.0
        %2972 = vmatpush.msra.mxu0 0.0
        %2973 = vmatpush.msra.mxu0 0.0
        %2974 = vmatpush.msra.mxu0 0.0
        %2975 = vmatpush.msra.mxu0 0.0
        %2976 = vmatpush.msra.mxu0 0.0
        %2977 = vmatpush.msra.mxu0 0.0
        %2978 = vmatpush.msra.mxu0 0.0
        %2979 = vmatpush.msra.mxu0 0.0
        %2980 = vmatpush.msra.mxu0 0.0
        %2981 = vmatpush.msra.mxu0 0.0
        %2982 = vmatpush.msra.mxu0 0.0
        %2983 = vmatpush.msra.mxu0 0.0
        %2984 = vmatpush.msra.mxu0 %v2678
        %2985 = vmatmul.f32.gmra.mxu0 %v2967
        %v2986 = vpop.f32.mrf.mxu0
        %v2987 = vadd.f32 0.0, %v2986
        %2988 = vdwg.mxu0
        %v2989 = vadd.f32 %v2884, %v2987
        %2990 = vrot.lane.b32.xlu0 %v2673, 104
        %v2991 = vpop.permute.xlu0 %2990
        %2992 = vrot.lane.b32.xlu0 %v2673, 72
        %v2993 = vpop.permute.xlu0 %2992
        %v2994 = vsel %vm1331, %v2991, 0
        %v2996 = vsel %vm1331, %v2993, 0
        %2998 = vmatpush.xpose.msra.mxu0 0.0
        %2999 = vmatpush.xpose.msra.mxu0 0.0
        %3000 = vmatpush.xpose.msra.mxu0 0.0
        %3001 = vmatpush.xpose.msra.mxu0 0.0
        %3002 = vmatpush.xpose.msra.mxu0 0.0
        %3003 = vmatpush.xpose.msra.mxu0 0.0
        %3004 = vmatpush.xpose.msra.mxu0 0.0
        %3005 = vmatpush.xpose.msra.mxu0 0.0
        %3006 = vmatpush.xpose.msra.mxu0 0.0
        %3007 = vmatpush.xpose.msra.mxu0 0.0
        %3008 = vmatpush.xpose.msra.mxu0 0.0
        %3009 = vmatpush.xpose.msra.mxu0 0.0
        %3010 = vmatpush.xpose.msra.mxu0 0.0
        %3011 = vmatpush.xpose.msra.mxu0 0.0
        %3012 = vmatpush.xpose.msra.mxu0 0.0
        %3013 = vmatpush.xpose.msra.mxu0 %v2996
        %3014 = vmatmul.f32.gmra.mxu0 %v2994
        %v3015 = vpop.f32.mrf.mxu0
        %v3016 = vadd.f32 0.0, %v3015
        %3017 = vdwg.mxu0
        %v3018 = vmul.f32 %v3016, 0.35355338
        %v3019 = vadd.f32 %v3018, %v2637
        %v3020 = vsel %vm1331, %v3019, -inf
        %3021 = vmax.xlane.f32.xlu0 %v3020
        %v3022 = vpop.xlane.xlu0 %3021
        %v3023 = vsub.f32 %v3019, %v3022
        %v3024 = vmul.f32 %v3023, 1.442695
        %v3025 = vpow.pop %v3024
        %v3026 = vsel %vm1331, %v3025, 0.0
        %3027 = vadd.xlane.f32.xlu0 %v3026
        %v3028 = vpop.xlane.xlu0 %3027
        %v3029 = vrcp.pop %v3028
        %v3030 = vmul.f32 %v3028, %v3029
        %v3031 = vsub.f32 1.0, %v3030
        %v3032 = vmul.f32 %v3029, %v3031
        %v3033 = vadd.f32 %v3029, %v3032
        %vm3034 = vweird.f32 %v3028
        %vm3035 = vweird.f32 %v3029
        %vm3036 = vmor %vm3034, %vm3035
        %v3037 = vsel %vm3036, %v3029, %v3033
        %v3038 = vand.u32 2147483647, %v3028
        %vm3039 = vcmp.eq.f32.partialorder %v3038, 8.507059e+37
        %v3040 = vand.u32 %v3028, 2147483648
        %v3041 = vor.u32 1.1754944e-38, %v3040
        %v3042 = vsel %vm3039, %v3041, %v3037
        %v3043 = vmul.f32 %v3025, %v3042
        %3044 = vrot.lane.b32.xlu0 %v2673, 40
        %v3045 = vpop.permute.xlu0 %3044
        %v3048 = vsel %vm1331, %v3043, 0
        %3050 = vmatpush.msra.mxu0 0.0
        %3051 = vmatpush.msra.mxu0 0.0
        %3052 = vmatpush.msra.mxu0 0.0
        %3053 = vmatpush.msra.mxu0 0.0
        %3054 = vmatpush.msra.mxu0 0.0
        %3055 = vmatpush.msra.mxu0 0.0
        %3056 = vmatpush.msra.mxu0 0.0
        %3057 = vmatpush.msra.mxu0 0.0
        %3058 = vmatpush.msra.mxu0 0.0
        %3059 = vmatpush.msra.mxu0 0.0
        %3060 = vmatpush.msra.mxu0 0.0
        %3061 = vmatpush.msra.mxu0 0.0
        %3062 = vmatpush.msra.mxu0 0.0
        %3063 = vmatpush.msra.mxu0 0.0
        %3064 = vmatpush.msra.mxu0 0.0
        %3065 = vmatpush.msra.mxu0 %v3045
        %3066 = vmatmul.f32.gmra.mxu0 %v3048
        %v3067 = vpop.f32.mrf.mxu0
        %v3068 = vadd.f32 0.0, %v3067
        %3069 = vdwg.mxu0
        %v3071 = vsel %vm1331, %v3068, 0
        %3073 = vmatpush.msra.mxu0 0.0
        %3074 = vmatpush.msra.mxu0 0.0
        %3075 = vmatpush.msra.mxu0 0.0
        %3076 = vmatpush.msra.mxu0 0.0
        %3077 = vmatpush.msra.mxu0 0.0
        %3078 = vmatpush.msra.mxu0 0.0
        %3079 = vmatpush.msra.mxu0 0.0
        %3080 = vmatpush.msra.mxu0 0.0
        %3081 = vmatpush.msra.mxu0 0.0
        %3082 = vmatpush.msra.mxu0 0.0
        %3083 = vmatpush.msra.mxu0 0.0
        %3084 = vmatpush.msra.mxu0 0.0
        %3085 = vmatpush.msra.mxu0 0.0
        %3086 = vmatpush.msra.mxu0 0.0
        %3087 = vmatpush.msra.mxu0 0.0
        %3088 = vmatpush.msra.mxu0 %v2679
        %3089 = vmatmul.f32.gmra.mxu0 %v3071
        %v3090 = vpop.f32.mrf.mxu0
        %v3091 = vadd.f32 0.0, %v3090
        %3092 = vdwg.mxu0
        %v3093 = vadd.f32 %v2989, %v3091
        %v3095 = vperm.slane %v2680, 0
        %v3097 = vadd.f32 %v3093, %v3095
        %v3098 = vadd.f32 %v2638, %v3097
        %v3099 = vld [vmem:[%s43] sm:$0x1]
        %v3100 = vld [vmem:[%s45] sm:$0x1]
        %v3101 = vsel %vm1306, %v3098, 0.0
        %3102 = vadd.xlane.f32.xlu0 %v3101
        %v3103 = vpop.xlane.xlu0 %3102
        %v3104 = vmul.f32 %v3103, %v1761
        %v3105 = vsub.f32 %v3098, %v3104
        %v3106 = vmul.f32 %v3105, %v3105
        %v3107 = vsel %vm1306, %v3106, 0.0
        %3108 = vadd.xlane.f32.xlu0 %v3107
        %v3109 = vpop.xlane.xlu0 %3108
        %v3110 = vmul.f32 %v3109, %v1761
        %v3111 = vadd.f32 %v3110, 1e-05
        %v3112 = vrsqrt.pop %v3111
        %v3113 = vmul.f32 %v3112, %v3111
        %v3114 = vmul.f32 %v3113, %v3112
        %v3115 = vmul.f32 0.5, %v3114
        %v3116 = vsub.f32 1.5, %v3115
        %v3117 = vmul.f32 %v3112, %v3116
        %vm3118 = vweird.f32 %v3111
        %vm3119 = vweird.f32 %v3112
        %vm3120 = vmor %vm3118, %vm3119
        %v3121 = vsel %vm3120, %v3112, %v3117
        %v3122 = vmul.f32 %v3105, %v3121
        %v3124 = vperm.slane %v3099, 0
        %v3126 = vmul.f32 %v3122, %v3124
        %v3128 = vperm.slane %v3100, 0
        %v3130 = vadd.f32 %v3126, %v3128
        %v3131 = vpack.c.bf16 %v3130, %v3130
        %v3132 = vld [vmem:[%s47] sm:$0xf]
        %v3133 = vld [vmem:[%s47 + $0x4] sm:$0xf]
        %v3134 = vld [vmem:[%s47 + $0x8] sm:$0xf]
        %v3135 = vld [vmem:[%s47 + $0xc] sm:$0xf]
        %v3136 = vld [vmem:[%s49] sm:$0x1]
        %v3138 = vperm.slane %v3136, 0
        %v3144 = vunpack.c.l.b16 %v3132
        %v3145 = vunpack.c.l.b16 %v3133
        %v3146 = vunpack.c.l.b16 %v3134
        %v3147 = vunpack.c.l.b16 %v3135
        %v3148 = vpack.c.b16 %v3145, %v3144
        %v3149 = vpack.c.b16 %v3147, %v3146
        %v3153 = vsel %vm1306, %v3131, 0
        %3155 = vmatpush.bf16.msra.mxu0 0
        %3156 = vmatpush.bf16.msra.mxu0 0
        %3157 = vmatpush.bf16.msra.mxu0 0
        %3158 = vmatpush.bf16.msra.mxu0 0
        %3159 = vmatpush.bf16.msra.mxu0 0
        %3160 = vmatpush.bf16.msra.mxu0 0
        %3161 = vmatpush.bf16.msra.mxu0 %v3149
        %3162 = vmatpush.bf16.msra.mxu0 %v3148
        %3163 = vmatmul.bf16.gmra.mxu0 %v3153
        %v3164 = vpop.f32.mrf.mxu0
        %v3165 = vadd.f32 %v3138, %v3164
        %v3166 = vpop.f32.mrf.mxu0
        %3167 = vdwg.mxu0
        %v3168 = vld [vmem:[%s51] sm:$0xf]
        %v3169 = vld [vmem:[%s51 + $0x4] sm:$0xf]
        %v3170 = vld [vmem:[%s51 + $0x8] sm:$0xf]
        %v3171 = vld [vmem:[%s51 + $0xc] sm:$0xf]
        %v3172 = vld [vmem:[%s53] sm:$0x1]
        %v3174 = vperm.slane %v3172, 0
        %v3180 = vunpack.c.l.b16 %v3168
        %v3181 = vunpack.c.l.b16 %v3169
        %v3182 = vunpack.c.l.b16 %v3170
        %v3183 = vunpack.c.l.b16 %v3171
        %v3184 = vpack.c.b16 %v3181, %v3180
        %v3185 = vpack.c.b16 %v3183, %v3182
        %v3189 = vsel %vm1306, %v2631, 0
        %3191 = vmatpush.bf16.msra.mxu0 0
        %3192 = vmatpush.bf16.msra.mxu0 0
        %3193 = vmatpush.bf16.msra.mxu0 0
        %3194 = vmatpush.bf16.msra.mxu0 0
        %3195 = vmatpush.bf16.msra.mxu0 0
        %3196 = vmatpush.bf16.msra.mxu0 0
        %3197 = vmatpush.bf16.msra.mxu0 %v3185
        %3198 = vmatpush.bf16.msra.mxu0 %v3184
        %3199 = vmatmul.bf16.gmra.mxu0 %v3189
        %v3200 = vpop.f32.mrf.mxu0
        %v3201 = vadd.f32 %v3174, %v3200
        %v3202 = vpop.f32.mrf.mxu0
        %3203 = vdwg.mxu0
        %v3204 = vld [vmem:[%s55] sm:$0xff]
        %v3205 = vld [vmem:[%s55 + $0x8] sm:$0xff]
        %v3206 = vld [vmem:[%s55 + $0x10] sm:$0xff]
        %v3207 = vld [vmem:[%s55 + $0x18] sm:$0xff]
        %v3208 = vld [vmem:[%s57] sm:$0x1]
        %v3210 = vsel %vm1331, %v3165, 0
        %v3213 = vsel %vm1331, %v3201, 0
        %3215 = vmatpush.xpose.msra.mxu0 0.0
        %3216 = vmatpush.xpose.msra.mxu0 0.0
        %3217 = vmatpush.xpose.msra.mxu0 0.0
        %3218 = vmatpush.xpose.msra.mxu0 0.0
        %3219 = vmatpush.xpose.msra.mxu0 0.0
        %3220 = vmatpush.xpose.msra.mxu0 0.0
        %3221 = vmatpush.xpose.msra.mxu0 0.0
        %3222 = vmatpush.xpose.msra.mxu0 0.0
        %3223 = vmatpush.xpose.msra.mxu0 0.0
        %3224 = vmatpush.xpose.msra.mxu0 0.0
        %3225 = vmatpush.xpose.msra.mxu0 0.0
        %3226 = vmatpush.xpose.msra.mxu0 0.0
        %3227 = vmatpush.xpose.msra.mxu0 0.0
        %3228 = vmatpush.xpose.msra.mxu0 0.0
        %3229 = vmatpush.xpose.msra.mxu0 0.0
        %3230 = vmatpush.xpose.msra.mxu0 %v3213
        %3231 = vmatmul.f32.gmra.mxu0 %v3210
        %v3232 = vpop.f32.mrf.mxu0
        %v3233 = vadd.f32 0.0, %v3232
        %3234 = vdwg.mxu0
        %v3235 = vmul.f32 %v3233, 0.35355338
        %v3236 = vsel %vm1331, %v3235, -inf
        %3237 = vmax.xlane.f32.xlu0 %v3236
        %v3238 = vpop.xlane.xlu0 %3237
        %v3239 = vsub.f32 %v3235, %v3238
        %v3240 = vmul.f32 %v3239, 1.442695
        %v3241 = vpow.pop %v3240
        %v3242 = vsel %vm1331, %v3241, 0.0
        %3243 = vadd.xlane.f32.xlu0 %v3242
        %v3244 = vpop.xlane.xlu0 %3243
        %v3245 = vrcp.pop %v3244
        %v3246 = vmul.f32 %v3244, %v3245
        %v3247 = vsub.f32 1.0, %v3246
        %v3248 = vmul.f32 %v3245, %v3247
        %v3249 = vadd.f32 %v3245, %v3248
        %vm3250 = vweird.f32 %v3244
        %vm3251 = vweird.f32 %v3245
        %vm3252 = vmor %vm3250, %vm3251
        %v3253 = vsel %vm3252, %v3245, %v3249
        %v3254 = vand.u32 2147483647, %v3244
        %vm3255 = vcmp.eq.f32.partialorder %v3254, 8.507059e+37
        %v3256 = vand.u32 %v3244, 2147483648
        %v3257 = vor.u32 1.1754944e-38, %v3256
        %v3258 = vsel %vm3255, %v3257, %v3253
        %v3259 = vmul.f32 %v3241, %v3258
        %3260 = vrot.lane.b32.xlu0 %v3201, 96
        %v3261 = vpop.permute.xlu0 %3260
        %v3264 = vsel %vm1331, %v3259, 0
        %3266 = vmatpush.msra.mxu0 0.0
        %3267 = vmatpush.msra.mxu0 0.0
        %3268 = vmatpush.msra.mxu0 0.0
        %3269 = vmatpush.msra.mxu0 0.0
        %3270 = vmatpush.msra.mxu0 0.0
        %3271 = vmatpush.msra.mxu0 0.0
        %3272 = vmatpush.msra.mxu0 0.0
        %3273 = vmatpush.msra.mxu0 0.0
        %3274 = vmatpush.msra.mxu0 0.0
        %3275 = vmatpush.msra.mxu0 0.0
        %3276 = vmatpush.msra.mxu0 0.0
        %3277 = vmatpush.msra.mxu0 0.0
        %3278 = vmatpush.msra.mxu0 0.0
        %3279 = vmatpush.msra.mxu0 0.0
        %3280 = vmatpush.msra.mxu0 0.0
        %3281 = vmatpush.msra.mxu0 %v3261
        %3282 = vmatmul.f32.gmra.mxu0 %v3264
        %v3283 = vpop.f32.mrf.mxu0
        %v3284 = vadd.f32 0.0, %v3283
        %3285 = vdwg.mxu0
        %3286 = vrot.lane.b32.xlu0 %v3165, 120
        %v3287 = vpop.permute.xlu0 %3286
        %3288 = vrot.lane.b32.xlu0 %v3201, 120
        %v3289 = vpop.permute.xlu0 %3288
        %v3290 = vsel %vm1331, %v3287, 0
        %v3292 = vsel %vm1331, %v3289, 0
        %3294 = vmatpush.xpose.msra.mxu0 0.0
        %3295 = vmatpush.xpose.msra.mxu0 0.0
        %3296 = vmatpush.xpose.msra.mxu0 0.0
        %3297 = vmatpush.xpose.msra.mxu0 0.0
        %3298 = vmatpush.xpose.msra.mxu0 0.0
        %3299 = vmatpush.xpose.msra.mxu0 0.0
        %3300 = vmatpush.xpose.msra.mxu0 0.0
        %3301 = vmatpush.xpose.msra.mxu0 0.0
        %3302 = vmatpush.xpose.msra.mxu0 0.0
        %3303 = vmatpush.xpose.msra.mxu0 0.0
        %3304 = vmatpush.xpose.msra.mxu0 0.0
        %3305 = vmatpush.xpose.msra.mxu0 0.0
        %3306 = vmatpush.xpose.msra.mxu0 0.0
        %3307 = vmatpush.xpose.msra.mxu0 0.0
        %3308 = vmatpush.xpose.msra.mxu0 0.0
        %3309 = vmatpush.xpose.msra.mxu0 %v3292
        %3310 = vmatmul.f32.gmra.mxu0 %v3290
        %v3311 = vpop.f32.mrf.mxu0
        %v3312 = vadd.f32 0.0, %v3311
        %3313 = vdwg.mxu0
        %v3314 = vmul.f32 %v3312, 0.35355338
        %v3315 = vsel %vm1331, %v3314, -inf
        %3316 = vmax.xlane.f32.xlu0 %v3315
        %v3317 = vpop.xlane.xlu0 %3316
        %v3318 = vsub.f32 %v3314, %v3317
        %v3319 = vmul.f32 %v3318, 1.442695
        %v3320 = vpow.pop %v3319
        %v3321 = vsel %vm1331, %v3320, 0.0
        %3322 = vadd.xlane.f32.xlu0 %v3321
        %v3323 = vpop.xlane.xlu0 %3322
        %v3324 = vrcp.pop %v3323
        %v3325 = vmul.f32 %v3323, %v3324
        %v3326 = vsub.f32 1.0, %v3325
        %v3327 = vmul.f32 %v3324, %v3326
        %v3328 = vadd.f32 %v3324, %v3327
        %vm3329 = vweird.f32 %v3323
        %vm3330 = vweird.f32 %v3324
        %vm3331 = vmor %vm3329, %vm3330
        %v3332 = vsel %vm3331, %v3324, %v3328
        %v3333 = vand.u32 2147483647, %v3323
        %vm3334 = vcmp.eq.f32.partialorder %v3333, 8.507059e+37
        %v3335 = vand.u32 %v3323, 2147483648
        %v3336 = vor.u32 1.1754944e-38, %v3335
        %v3337 = vsel %vm3334, %v3336, %v3332
        %v3338 = vmul.f32 %v3320, %v3337
        %3339 = vrot.lane.b32.xlu0 %v3201, 88
        %v3340 = vpop.permute.xlu0 %3339
        %v3343 = vsel %vm1331, %v3338, 0
        %3345 = vmatpush.msra.mxu0 0.0
        %3346 = vmatpush.msra.mxu0 0.0
        %3347 = vmatpush.msra.mxu0 0.0
        %3348 = vmatpush.msra.mxu0 0.0
        %3349 = vmatpush.msra.mxu0 0.0
        %3350 = vmatpush.msra.mxu0 0.0
        %3351 = vmatpush.msra.mxu0 0.0
        %3352 = vmatpush.msra.mxu0 0.0
        %3353 = vmatpush.msra.mxu0 0.0
        %3354 = vmatpush.msra.mxu0 0.0
        %3355 = vmatpush.msra.mxu0 0.0
        %3356 = vmatpush.msra.mxu0 0.0
        %3357 = vmatpush.msra.mxu0 0.0
        %3358 = vmatpush.msra.mxu0 0.0
        %3359 = vmatpush.msra.mxu0 0.0
        %3360 = vmatpush.msra.mxu0 %v3340
        %3361 = vmatmul.f32.gmra.mxu0 %v3343
        %v3362 = vpop.f32.mrf.mxu0
        %v3363 = vadd.f32 0.0, %v3362
        %3364 = vdwg.mxu0
        %v3366 = vsel %vm1331, %v3363, 0
        %3368 = vmatpush.msra.mxu0 0.0
        %3369 = vmatpush.msra.mxu0 0.0
        %3370 = vmatpush.msra.mxu0 0.0
        %3371 = vmatpush.msra.mxu0 0.0
        %3372 = vmatpush.msra.mxu0 0.0
        %3373 = vmatpush.msra.mxu0 0.0
        %3374 = vmatpush.msra.mxu0 0.0
        %3375 = vmatpush.msra.mxu0 0.0
        %3376 = vmatpush.msra.mxu0 0.0
        %3377 = vmatpush.msra.mxu0 0.0
        %3378 = vmatpush.msra.mxu0 0.0
        %3379 = vmatpush.msra.mxu0 0.0
        %3380 = vmatpush.msra.mxu0 0.0
        %3381 = vmatpush.msra.mxu0 0.0
        %3382 = vmatpush.msra.mxu0 0.0
        %3383 = vmatpush.msra.mxu0 %v3205
        %3384 = vmatmul.f32.gmra.mxu0 %v3366
        %v3385 = vpop.f32.mrf.mxu0
        %v3386 = vadd.f32 0.0, %v3385
        %3387 = vdwg.mxu0
        %v3389 = vsel %vm1331, %v3284, 0
        %3391 = vmatpush.msra.mxu0 0.0
        %3392 = vmatpush.msra.mxu0 0.0
        %3393 = vmatpush.msra.mxu0 0.0
        %3394 = vmatpush.msra.mxu0 0.0
        %3395 = vmatpush.msra.mxu0 0.0
        %3396 = vmatpush.msra.mxu0 0.0
        %3397 = vmatpush.msra.mxu0 0.0
        %3398 = vmatpush.msra.mxu0 0.0
        %3399 = vmatpush.msra.mxu0 0.0
        %3400 = vmatpush.msra.mxu0 0.0
        %3401 = vmatpush.msra.mxu0 0.0
        %3402 = vmatpush.msra.mxu0 0.0
        %3403 = vmatpush.msra.mxu0 0.0
        %3404 = vmatpush.msra.mxu0 0.0
        %3405 = vmatpush.msra.mxu0 0.0
        %3406 = vmatpush.msra.mxu0 %v3204
        %3407 = vmatmul.f32.gmra.mxu0 %v3389
        %v3408 = vpop.f32.mrf.mxu0
        %v3409 = vadd.f32 %v3386, %v3408
        %3410 = vdwg.mxu0
        %3411 = vrot.lane.b32.xlu0 %v3165, 112
        %v3412 = vpop.permute.xlu0 %3411
        %3413 = vrot.lane.b32.xlu0 %v3201, 112
        %v3414 = vpop.permute.xlu0 %3413
        %v3415 = vsel %vm1331, %v3412, 0
        %v3417 = vsel %vm1331, %v3414, 0
        %3419 = vmatpush.xpose.msra.mxu0 0.0
        %3420 = vmatpush.xpose.msra.mxu0 0.0
        %3421 = vmatpush.xpose.msra.mxu0 0.0
        %3422 = vmatpush.xpose.msra.mxu0 0.0
        %3423 = vmatpush.xpose.msra.mxu0 0.0
        %3424 = vmatpush.xpose.msra.mxu0 0.0
        %3425 = vmatpush.xpose.msra.mxu0 0.0
        %3426 = vmatpush.xpose.msra.mxu0 0.0
        %3427 = vmatpush.xpose.msra.mxu0 0.0
        %3428 = vmatpush.xpose.msra.mxu0 0.0
        %3429 = vmatpush.xpose.msra.mxu0 0.0
        %3430 = vmatpush.xpose.msra.mxu0 0.0
        %3431 = vmatpush.xpose.msra.mxu0 0.0
        %3432 = vmatpush.xpose.msra.mxu0 0.0
        %3433 = vmatpush.xpose.msra.mxu0 0.0
        %3434 = vmatpush.xpose.msra.mxu0 %v3417
        %3435 = vmatmul.f32.gmra.mxu0 %v3415
        %v3436 = vpop.f32.mrf.mxu0
        %v3437 = vadd.f32 0.0, %v3436
        %3438 = vdwg.mxu0
        %v3439 = vmul.f32 %v3437, 0.35355338
        %v3440 = vsel %vm1331, %v3439, -inf
        %3441 = vmax.xlane.f32.xlu0 %v3440
        %v3442 = vpop.xlane.xlu0 %3441
        %v3443 = vsub.f32 %v3439, %v3442
        %v3444 = vmul.f32 %v3443, 1.442695
        %v3445 = vpow.pop %v3444
        %v3446 = vsel %vm1331, %v3445, 0.0
        %3447 = vadd.xlane.f32.xlu0 %v3446
        %v3448 = vpop.xlane.xlu0 %3447
        %v3449 = vrcp.pop %v3448
        %v3450 = vmul.f32 %v3448, %v3449
        %v3451 = vsub.f32 1.0, %v3450
        %v3452 = vmul.f32 %v3449, %v3451
        %v3453 = vadd.f32 %v3449, %v3452
        %vm3454 = vweird.f32 %v3448
        %vm3455 = vweird.f32 %v3449
        %vm3456 = vmor %vm3454, %vm3455
        %v3457 = vsel %vm3456, %v3449, %v3453
        %v3458 = vand.u32 2147483647, %v3448
        %vm3459 = vcmp.eq.f32.partialorder %v3458, 8.507059e+37
        %v3460 = vand.u32 %v3448, 2147483648
        %v3461 = vor.u32 1.1754944e-38, %v3460
        %v3462 = vsel %vm3459, %v3461, %v3457
        %v3463 = vmul.f32 %v3445, %v3462
        %3464 = vrot.lane.b32.xlu0 %v3201, 80
        %v3465 = vpop.permute.xlu0 %3464
        %v3468 = vsel %vm1331, %v3463, 0
        %3470 = vmatpush.msra.mxu0 0.0
        %3471 = vmatpush.msra.mxu0 0.0
        %3472 = vmatpush.msra.mxu0 0.0
        %3473 = vmatpush.msra.mxu0 0.0
        %3474 = vmatpush.msra.mxu0 0.0
        %3475 = vmatpush.msra.mxu0 0.0
        %3476 = vmatpush.msra.mxu0 0.0
        %3477 = vmatpush.msra.mxu0 0.0
        %3478 = vmatpush.msra.mxu0 0.0
        %3479 = vmatpush.msra.mxu0 0.0
        %3480 = vmatpush.msra.mxu0 0.0
        %3481 = vmatpush.msra.mxu0 0.0
        %3482 = vmatpush.msra.mxu0 0.0
        %3483 = vmatpush.msra.mxu0 0.0
        %3484 = vmatpush.msra.mxu0 0.0
        %3485 = vmatpush.msra.mxu0 %v3465
        %3486 = vmatmul.f32.gmra.mxu0 %v3468
        %v3487 = vpop.f32.mrf.mxu0
        %v3488 = vadd.f32 0.0, %v3487
        %3489 = vdwg.mxu0
        %v3491 = vsel %vm1331, %v3488, 0
        %3493 = vmatpush.msra.mxu0 0.0
        %3494 = vmatpush.msra.mxu0 0.0
        %3495 = vmatpush.msra.mxu0 0.0
        %3496 = vmatpush.msra.mxu0 0.0
        %3497 = vmatpush.msra.mxu0 0.0
        %3498 = vmatpush.msra.mxu0 0.0
        %3499 = vmatpush.msra.mxu0 0.0
        %3500 = vmatpush.msra.mxu0 0.0
        %3501 = vmatpush.msra.mxu0 0.0
        %3502 = vmatpush.msra.mxu0 0.0
        %3503 = vmatpush.msra.mxu0 0.0
        %3504 = vmatpush.msra.mxu0 0.0
        %3505 = vmatpush.msra.mxu0 0.0
        %3506 = vmatpush.msra.mxu0 0.0
        %3507 = vmatpush.msra.mxu0 0.0
        %3508 = vmatpush.msra.mxu0 %v3206
        %3509 = vmatmul.f32.gmra.mxu0 %v3491
        %v3510 = vpop.f32.mrf.mxu0
        %v3511 = vadd.f32 0.0, %v3510
        %3512 = vdwg.mxu0
        %v3513 = vadd.f32 %v3409, %v3511
        %3514 = vrot.lane.b32.xlu0 %v3165, 104
        %v3515 = vpop.permute.xlu0 %3514
        %3516 = vrot.lane.b32.xlu0 %v3201, 104
        %v3517 = vpop.permute.xlu0 %3516
        %v3518 = vsel %vm1331, %v3515, 0
        %v3520 = vsel %vm1331, %v3517, 0
        %3522 = vmatpush.xpose.msra.mxu0 0.0
        %3523 = vmatpush.xpose.msra.mxu0 0.0
        %3524 = vmatpush.xpose.msra.mxu0 0.0
        %3525 = vmatpush.xpose.msra.mxu0 0.0
        %3526 = vmatpush.xpose.msra.mxu0 0.0
        %3527 = vmatpush.xpose.msra.mxu0 0.0
        %3528 = vmatpush.xpose.msra.mxu0 0.0
        %3529 = vmatpush.xpose.msra.mxu0 0.0
        %3530 = vmatpush.xpose.msra.mxu0 0.0
        %3531 = vmatpush.xpose.msra.mxu0 0.0
        %3532 = vmatpush.xpose.msra.mxu0 0.0
        %3533 = vmatpush.xpose.msra.mxu0 0.0
        %3534 = vmatpush.xpose.msra.mxu0 0.0
        %3535 = vmatpush.xpose.msra.mxu0 0.0
        %3536 = vmatpush.xpose.msra.mxu0 0.0
        %3537 = vmatpush.xpose.msra.mxu0 %v3520
        %3538 = vmatmul.f32.gmra.mxu0 %v3518
        %v3539 = vpop.f32.mrf.mxu0
        %v3540 = vadd.f32 0.0, %v3539
        %3541 = vdwg.mxu0
        %v3542 = vmul.f32 %v3540, 0.35355338
        %v3543 = vsel %vm1331, %v3542, -inf
        %3544 = vmax.xlane.f32.xlu0 %v3543
        %v3545 = vpop.xlane.xlu0 %3544
        %v3546 = vsub.f32 %v3542, %v3545
        %v3547 = vmul.f32 %v3546, 1.442695
        %v3548 = vpow.pop %v3547
        %v3549 = vsel %vm1331, %v3548, 0.0
        %3550 = vadd.xlane.f32.xlu0 %v3549
        %v3551 = vpop.xlane.xlu0 %3550
        %v3552 = vrcp.pop %v3551
        %v3553 = vmul.f32 %v3551, %v3552
        %v3554 = vsub.f32 1.0, %v3553
        %v3555 = vmul.f32 %v3552, %v3554
        %v3556 = vadd.f32 %v3552, %v3555
        %vm3557 = vweird.f32 %v3551
        %vm3558 = vweird.f32 %v3552
        %vm3559 = vmor %vm3557, %vm3558
        %v3560 = vsel %vm3559, %v3552, %v3556
        %v3561 = vand.u32 2147483647, %v3551
        %vm3562 = vcmp.eq.f32.partialorder %v3561, 8.507059e+37
        %v3563 = vand.u32 %v3551, 2147483648
        %v3564 = vor.u32 1.1754944e-38, %v3563
        %v3565 = vsel %vm3562, %v3564, %v3560
        %v3566 = vmul.f32 %v3548, %v3565
        %3567 = vrot.lane.b32.xlu0 %v3201, 72
        %v3568 = vpop.permute.xlu0 %3567
        %v3571 = vsel %vm1331, %v3566, 0
        %3573 = vmatpush.msra.mxu0 0.0
        %3574 = vmatpush.msra.mxu0 0.0
        %3575 = vmatpush.msra.mxu0 0.0
        %3576 = vmatpush.msra.mxu0 0.0
        %3577 = vmatpush.msra.mxu0 0.0
        %3578 = vmatpush.msra.mxu0 0.0
        %3579 = vmatpush.msra.mxu0 0.0
        %3580 = vmatpush.msra.mxu0 0.0
        %3581 = vmatpush.msra.mxu0 0.0
        %3582 = vmatpush.msra.mxu0 0.0
        %3583 = vmatpush.msra.mxu0 0.0
        %3584 = vmatpush.msra.mxu0 0.0
        %3585 = vmatpush.msra.mxu0 0.0
        %3586 = vmatpush.msra.mxu0 0.0
        %3587 = vmatpush.msra.mxu0 0.0
        %3588 = vmatpush.msra.mxu0 %v3568
        %3589 = vmatmul.f32.gmra.mxu0 %v3571
        %v3590 = vpop.f32.mrf.mxu0
        %v3591 = vadd.f32 0.0, %v3590
        %3592 = vdwg.mxu0
        %v3594 = vsel %vm1331, %v3591, 0
        %3596 = vmatpush.msra.mxu0 0.0
        %3597 = vmatpush.msra.mxu0 0.0
        %3598 = vmatpush.msra.mxu0 0.0
        %3599 = vmatpush.msra.mxu0 0.0
        %3600 = vmatpush.msra.mxu0 0.0
        %3601 = vmatpush.msra.mxu0 0.0
        %3602 = vmatpush.msra.mxu0 0.0
        %3603 = vmatpush.msra.mxu0 0.0
        %3604 = vmatpush.msra.mxu0 0.0
        %3605 = vmatpush.msra.mxu0 0.0
        %3606 = vmatpush.msra.mxu0 0.0
        %3607 = vmatpush.msra.mxu0 0.0
        %3608 = vmatpush.msra.mxu0 0.0
        %3609 = vmatpush.msra.mxu0 0.0
        %3610 = vmatpush.msra.mxu0 0.0
        %3611 = vmatpush.msra.mxu0 %v3207
        %3612 = vmatmul.f32.gmra.mxu0 %v3594
        %v3613 = vpop.f32.mrf.mxu0
        %v3614 = vadd.f32 0.0, %v3613
        %3615 = vdwg.mxu0
        %v3616 = vadd.f32 %v3513, %v3614
        %v3618 = vperm.slane %v3208, 0
        %v3620 = vadd.f32 %v3616, %v3618
        %v3621 = vadd.f32 %v3130, %v3620
        %v3622 = vld [vmem:[%s59] sm:$0x1]
        %v3623 = vld [vmem:[%s61] sm:$0x1]
        %v3624 = vsel %vm1306, %v3621, 0.0
        %3625 = vadd.xlane.f32.xlu0 %v3624
        %v3626 = vpop.xlane.xlu0 %3625
        %v3627 = vmul.f32 %v3626, %v1761
        %v3628 = vsub.f32 %v3621, %v3627
        %v3629 = vmul.f32 %v3628, %v3628
        %v3630 = vsel %vm1306, %v3629, 0.0
        %3631 = vadd.xlane.f32.xlu0 %v3630
        %v3632 = vpop.xlane.xlu0 %3631
        %v3633 = vmul.f32 %v3632, %v1761
        %v3634 = vadd.f32 %v3633, 1e-05
        %v3635 = vrsqrt.pop %v3634
        %v3636 = vmul.f32 %v3635, %v3634
        %v3637 = vmul.f32 %v3636, %v3635
        %v3638 = vmul.f32 0.5, %v3637
        %v3639 = vsub.f32 1.5, %v3638
        %v3640 = vmul.f32 %v3635, %v3639
        %vm3641 = vweird.f32 %v3634
        %vm3642 = vweird.f32 %v3635
        %vm3643 = vmor %vm3641, %vm3642
        %v3644 = vsel %vm3643, %v3635, %v3640
        %v3645 = vmul.f32 %v3628, %v3644
        %v3647 = vperm.slane %v3622, 0
        %v3649 = vmul.f32 %v3645, %v3647
        %v3651 = vperm.slane %v3623, 0
        %v3653 = vadd.f32 %v3649, %v3651
        %v3654 = vpack.c.bf16 %v3653, %v3653
        %v3655 = vld [vmem:[%s63] sm:$0xf]
        %v3656 = vld [vmem:[%s63 + $0x4] sm:$0xf]
        %v3657 = vld [vmem:[%s63 + $0x8] sm:$0xf]
        %v3658 = vld [vmem:[%s63 + $0xc] sm:$0xf]
        %v3659 = vld [vmem:[%s65] sm:$0x1]
        %v3661 = vperm.slane %v3659, 0
        %v3667 = vunpack.c.l.b16 %v3655
        %v3668 = vunpack.c.l.b16 %v3656
        %v3669 = vunpack.c.l.b16 %v3657
        %v3670 = vunpack.c.l.b16 %v3658
        %v3671 = vpack.c.b16 %v3668, %v3667
        %v3672 = vpack.c.b16 %v3670, %v3669
        %v3676 = vsel %vm1306, %v3654, 0
        %3678 = vmatpush.bf16.msra.mxu0 0
        %3679 = vmatpush.bf16.msra.mxu0 0
        %3680 = vmatpush.bf16.msra.mxu0 0
        %3681 = vmatpush.bf16.msra.mxu0 0
        %3682 = vmatpush.bf16.msra.mxu0 0
        %3683 = vmatpush.bf16.msra.mxu0 0
        %3684 = vmatpush.bf16.msra.mxu0 %v3672
        %3685 = vmatpush.bf16.msra.mxu0 %v3671
        %3686 = vmatmul.bf16.gmra.mxu0 %v3676
        %v3687 = vpop.f32.mrf.mxu0
        %v3688 = vadd.f32 %v3661, %v3687
        %v3689 = vpop.f32.mrf.mxu0
        %3690 = vdwg.mxu0
        %v3691 = vmax.f32 %v3688, 0.0
        %v3692 = vpack.c.bf16 %v3691, %v3691
        %v3693 = vld [vmem:[%s67] sm:$0xf]
        %v3694 = vld [vmem:[%s67 + $0x4] sm:$0xf]
        %v3695 = vld [vmem:[%s67 + $0x8] sm:$0xf]
        %v3696 = vld [vmem:[%s67 + $0xc] sm:$0xf]
        %v3697 = vld [vmem:[%s67 + $0x10] sm:$0xf]
        %v3698 = vld [vmem:[%s67 + $0x14] sm:$0xf]
        %v3699 = vld [vmem:[%s67 + $0x18] sm:$0xf]
        %v3700 = vld [vmem:[%s67 + $0x1c] sm:$0xf]
        %v3701 = vld [vmem:[%s67 + $0x20] sm:$0xf]
        %v3702 = vld [vmem:[%s67 + $0x24] sm:$0xf]
        %v3703 = vld [vmem:[%s67 + $0x28] sm:$0xf]
        %v3704 = vld [vmem:[%s67 + $0x2c] sm:$0xf]
        %v3705 = vld [vmem:[%s67 + $0x30] sm:$0xf]
        %v3706 = vld [vmem:[%s67 + $0x34] sm:$0xf]
        %v3707 = vld [vmem:[%s67 + $0x38] sm:$0xf]
        %v3708 = vld [vmem:[%s67 + $0x3c] sm:$0xf]
        %v3709 = vld [vmem:[%s69] sm:$0x1]
        %v3711 = vperm.slane %v3709, 0
        %v3729 = vunpack.c.l.b16 %v3693
        %v3730 = vunpack.c.l.b16 %v3694
        %v3731 = vunpack.c.l.b16 %v3695
        %v3732 = vunpack.c.l.b16 %v3696
        %v3733 = vunpack.c.l.b16 %v3697
        %v3734 = vunpack.c.l.b16 %v3698
        %v3735 = vunpack.c.l.b16 %v3699
        %v3736 = vunpack.c.l.b16 %v3700
        %v3737 = vunpack.c.l.b16 %v3701
        %v3738 = vunpack.c.l.b16 %v3702
        %v3739 = vunpack.c.l.b16 %v3703
        %v3740 = vunpack.c.l.b16 %v3704
        %v3741 = vunpack.c.l.b16 %v3705
        %v3742 = vunpack.c.l.b16 %v3706
        %v3743 = vunpack.c.l.b16 %v3707
        %v3744 = vunpack.c.l.b16 %v3708
        %v3745 = vpack.c.b16 %v3730, %v3729
        %v3746 = vpack.c.b16 %v3732, %v3731
        %v3747 = vpack.c.b16 %v3734, %v3733
        %v3748 = vpack.c.b16 %v3736, %v3735
        %v3749 = vpack.c.b16 %v3738, %v3737
        %v3750 = vpack.c.b16 %v3740, %v3739
        %v3751 = vpack.c.b16 %v3742, %v3741
        %v3752 = vpack.c.b16 %v3744, %v3743
        %3761 = vmatpush.bf16.msra.mxu0 %v3752
        %3762 = vmatpush.bf16.msra.mxu0 %v3751
        %3763 = vmatpush.bf16.msra.mxu0 %v3750
        %3764 = vmatpush.bf16.msra.mxu0 %v3749
        %3765 = vmatpush.bf16.msra.mxu0 %v3748
        %3766 = vmatpush.bf16.msra.mxu0 %v3747
        %3767 = vmatpush.bf16.msra.mxu0 %v3746
        %3768 = vmatpush.bf16.msra.mxu0 %v3745
        %3769 = vmatmul.bf16.gmra.mxu0 %v3692
        %v3770 = vpop.f32.mrf.mxu0
        %v3771 = vadd.f32 %v3711, %v3770
        %v3772 = vpop.f32.mrf.mxu0
        %3773 = vdwg.mxu0
        %v3774 = vadd.f32 %v3653, %v3771
        %v3775 = vld [vmem:[%s71] sm:$0x1]
        %v3776 = vld [vmem:[%s73] sm:$0x1]
        %v3777 = vsel %vm1306, %v3774, 0.0
        %3778 = vadd.xlane.f32.xlu0 %v3777
        %v3779 = vpop.xlane.xlu0 %3778
        %v3780 = vmul.f32 %v3779, %v1761
        %v3781 = vsub.f32 %v3774, %v3780
        %v3782 = vmul.f32 %v3781, %v3781
        %v3783 = vsel %vm1306, %v3782, 0.0
        %3784 = vadd.xlane.f32.xlu0 %v3783
        %v3785 = vpop.xlane.xlu0 %3784
        %v3786 = vmul.f32 %v3785, %v1761
        %v3787 = vadd.f32 %v3786, 1e-05
        %v3788 = vrsqrt.pop %v3787
        %v3789 = vmul.f32 %v3788, %v3787
        %v3790 = vmul.f32 %v3789, %v3788
        %v3791 = vmul.f32 0.5, %v3790
        %v3792 = vsub.f32 1.5, %v3791
        %v3793 = vmul.f32 %v3788, %v3792
        %vm3794 = vweird.f32 %v3787
        %vm3795 = vweird.f32 %v3788
        %vm3796 = vmor %vm3794, %vm3795
        %v3797 = vsel %vm3796, %v3788, %v3793
        %v3798 = vmul.f32 %v3781, %v3797
        %v3800 = vperm.slane %v3775, 0
        %v3802 = vmul.f32 %v3798, %v3800
        %v3804 = vperm.slane %v3776, 0
        %v3806 = vadd.f32 %v3802, %v3804
        %v3807 = vpack.c.bf16 %v3806, %v3806
        %s3808 = scalar_lea.vmem %s35, 16
        %v3809 = vld [vmem:[%s3808] sm:$0xf]
        %v3810 = vld [vmem:[%s3808 + $0x4] sm:$0xf]
        %v3811 = vld [vmem:[%s3808 + $0x8] sm:$0xf]
        %v3812 = vld [vmem:[%s3808 + $0xc] sm:$0xf]
        %s3813 = scalar_lea.vmem %s37, 1
        %v3814 = vld [vmem:[%s3813] sm:$0x1]
        %v3816 = vperm.slane %v3814, 0
        %v3822 = vunpack.c.l.b16 %v3809
        %v3823 = vunpack.c.l.b16 %v3810
        %v3824 = vunpack.c.l.b16 %v3811
        %v3825 = vunpack.c.l.b16 %v3812
        %v3826 = vpack.c.b16 %v3823, %v3822
        %v3827 = vpack.c.b16 %v3825, %v3824
        %v3831 = vsel %vm1306, %v3807, 0
        %3833 = vmatpush.bf16.msra.mxu0 0
        %3834 = vmatpush.bf16.msra.mxu0 0
        %3835 = vmatpush.bf16.msra.mxu0 0
        %3836 = vmatpush.bf16.msra.mxu0 0
        %3837 = vmatpush.bf16.msra.mxu0 0
        %3838 = vmatpush.bf16.msra.mxu0 0
        %3839 = vmatpush.bf16.msra.mxu0 %v3827
        %3840 = vmatpush.bf16.msra.mxu0 %v3826
        %3841 = vmatmul.bf16.gmra.mxu0 %v3831
        %v3842 = vpop.f32.mrf.mxu0
        %v3843 = vadd.f32 %v3816, %v3842
        %v3844 = vpop.f32.mrf.mxu0
        %3845 = vdwg.mxu0
        %s3846 = scalar_lea.vmem %s39, 32
        %v3847 = vld [vmem:[%s3846] sm:$0xff]
        %v3848 = vld [vmem:[%s3846 + $0x8] sm:$0xff]
        %v3849 = vld [vmem:[%s3846 + $0x10] sm:$0xff]
        %v3850 = vld [vmem:[%s3846 + $0x18] sm:$0xff]
        %s3851 = scalar_lea.vmem %s41, 1
        %v3852 = vld [vmem:[%s3851] sm:$0x1]
        %3854 = vrot.lane.b32.xlu0 %v3843, 96
        %v3855 = vpop.permute.xlu0 %3854
        %v3856 = vsel %vm1331, %v3843, 0
        %v3858 = vsel %vm1331, %v3855, 0
        %3860 = vmatpush.xpose.msra.mxu0 0.0
        %3861 = vmatpush.xpose.msra.mxu0 0.0
        %3862 = vmatpush.xpose.msra.mxu0 0.0
        %3863 = vmatpush.xpose.msra.mxu0 0.0
        %3864 = vmatpush.xpose.msra.mxu0 0.0
        %3865 = vmatpush.xpose.msra.mxu0 0.0
        %3866 = vmatpush.xpose.msra.mxu0 0.0
        %3867 = vmatpush.xpose.msra.mxu0 0.0
        %3868 = vmatpush.xpose.msra.mxu0 0.0
        %3869 = vmatpush.xpose.msra.mxu0 0.0
        %3870 = vmatpush.xpose.msra.mxu0 0.0
        %3871 = vmatpush.xpose.msra.mxu0 0.0
        %3872 = vmatpush.xpose.msra.mxu0 0.0
        %3873 = vmatpush.xpose.msra.mxu0 0.0
        %3874 = vmatpush.xpose.msra.mxu0 0.0
        %3875 = vmatpush.xpose.msra.mxu0 %v3858
        %3876 = vmatmul.f32.gmra.mxu0 %v3856
        %v3877 = vpop.f32.mrf.mxu0
        %v3878 = vadd.f32 0.0, %v3877
        %3879 = vdwg.mxu0
        %v3880 = vmul.f32 %v3878, 0.35355338
        %v3881 = vadd.f32 %v3880, %v2637
        %v3882 = vsel %vm1331, %v3881, -inf
        %3883 = vmax.xlane.f32.xlu0 %v3882
        %v3884 = vpop.xlane.xlu0 %3883
        %v3885 = vsub.f32 %v3881, %v3884
        %v3886 = vmul.f32 %v3885, 1.442695
        %v3887 = vpow.pop %v3886
        %v3888 = vsel %vm1331, %v3887, 0.0
        %3889 = vadd.xlane.f32.xlu0 %v3888
        %v3890 = vpop.xlane.xlu0 %3889
        %v3891 = vrcp.pop %v3890
        %v3892 = vmul.f32 %v3890, %v3891
        %v3893 = vsub.f32 1.0, %v3892
        %v3894 = vmul.f32 %v3891, %v3893
        %v3895 = vadd.f32 %v3891, %v3894
        %vm3896 = vweird.f32 %v3890
        %vm3897 = vweird.f32 %v3891
        %vm3898 = vmor %vm3896, %vm3897
        %v3899 = vsel %vm3898, %v3891, %v3895
        %v3900 = vand.u32 2147483647, %v3890
        %vm3901 = vcmp.eq.f32.partialorder %v3900, 8.507059e+37
        %v3902 = vand.u32 %v3890, 2147483648
        %v3903 = vor.u32 1.1754944e-38, %v3902
        %v3904 = vsel %vm3901, %v3903, %v3899
        %v3905 = vmul.f32 %v3887, %v3904
        %3906 = vrot.lane.b32.xlu0 %v3843, 64
        %v3907 = vpop.permute.xlu0 %3906
        %v3910 = vsel %vm1331, %v3905, 0
        %3912 = vmatpush.msra.mxu0 0.0
        %3913 = vmatpush.msra.mxu0 0.0
        %3914 = vmatpush.msra.mxu0 0.0
        %3915 = vmatpush.msra.mxu0 0.0
        %3916 = vmatpush.msra.mxu0 0.0
        %3917 = vmatpush.msra.mxu0 0.0
        %3918 = vmatpush.msra.mxu0 0.0
        %3919 = vmatpush.msra.mxu0 0.0
        %3920 = vmatpush.msra.mxu0 0.0
        %3921 = vmatpush.msra.mxu0 0.0
        %3922 = vmatpush.msra.mxu0 0.0
        %3923 = vmatpush.msra.mxu0 0.0
        %3924 = vmatpush.msra.mxu0 0.0
        %3925 = vmatpush.msra.mxu0 0.0
        %3926 = vmatpush.msra.mxu0 0.0
        %3927 = vmatpush.msra.mxu0 %v3907
        %3928 = vmatmul.f32.gmra.mxu0 %v3910
        %v3929 = vpop.f32.mrf.mxu0
        %v3930 = vadd.f32 0.0, %v3929
        %3931 = vdwg.mxu0
        %3932 = vrot.lane.b32.xlu0 %v3843, 120
        %v3933 = vpop.permute.xlu0 %3932
        %3934 = vrot.lane.b32.xlu0 %v3843, 88
        %v3935 = vpop.permute.xlu0 %3934
        %v3936 = vsel %vm1331, %v3933, 0
        %v3938 = vsel %vm1331, %v3935, 0
        %3940 = vmatpush.xpose.msra.mxu0 0.0
        %3941 = vmatpush.xpose.msra.mxu0 0.0
        %3942 = vmatpush.xpose.msra.mxu0 0.0
        %3943 = vmatpush.xpose.msra.mxu0 0.0
        %3944 = vmatpush.xpose.msra.mxu0 0.0
        %3945 = vmatpush.xpose.msra.mxu0 0.0
        %3946 = vmatpush.xpose.msra.mxu0 0.0
        %3947 = vmatpush.xpose.msra.mxu0 0.0
        %3948 = vmatpush.xpose.msra.mxu0 0.0
        %3949 = vmatpush.xpose.msra.mxu0 0.0
        %3950 = vmatpush.xpose.msra.mxu0 0.0
        %3951 = vmatpush.xpose.msra.mxu0 0.0
        %3952 = vmatpush.xpose.msra.mxu0 0.0
        %3953 = vmatpush.xpose.msra.mxu0 0.0
        %3954 = vmatpush.xpose.msra.mxu0 0.0
        %3955 = vmatpush.xpose.msra.mxu0 %v3938
        %3956 = vmatmul.f32.gmra.mxu0 %v3936
        %v3957 = vpop.f32.mrf.mxu0
        %v3958 = vadd.f32 0.0, %v3957
        %3959 = vdwg.mxu0
        %v3960 = vmul.f32 %v3958, 0.35355338
        %v3961 = vadd.f32 %v3960, %v2637
        %v3962 = vsel %vm1331, %v3961, -inf
        %3963 = vmax.xlane.f32.xlu0 %v3962
        %v3964 = vpop.xlane.xlu0 %3963
        %v3965 = vsub.f32 %v3961, %v3964
        %v3966 = vmul.f32 %v3965, 1.442695
        %v3967 = vpow.pop %v3966
        %v3968 = vsel %vm1331, %v3967, 0.0
        %3969 = vadd.xlane.f32.xlu0 %v3968
        %v3970 = vpop.xlane.xlu0 %3969
        %v3971 = vrcp.pop %v3970
        %v3972 = vmul.f32 %v3970, %v3971
        %v3973 = vsub.f32 1.0, %v3972
        %v3974 = vmul.f32 %v3971, %v3973
        %v3975 = vadd.f32 %v3971, %v3974
        %vm3976 = vweird.f32 %v3970
        %vm3977 = vweird.f32 %v3971
        %vm3978 = vmor %vm3976, %vm3977
        %v3979 = vsel %vm3978, %v3971, %v3975
        %v3980 = vand.u32 2147483647, %v3970
        %vm3981 = vcmp.eq.f32.partialorder %v3980, 8.507059e+37
        %v3982 = vand.u32 %v3970, 2147483648
        %v3983 = vor.u32 1.1754944e-38, %v3982
        %v3984 = vsel %vm3981, %v3983, %v3979
        %v3985 = vmul.f32 %v3967, %v3984
        %3986 = vrot.lane.b32.xlu0 %v3843, 56
        %v3987 = vpop.permute.xlu0 %3986
        %v3990 = vsel %vm1331, %v3985, 0
        %3992 = vmatpush.msra.mxu0 0.0
        %3993 = vmatpush.msra.mxu0 0.0
        %3994 = vmatpush.msra.mxu0 0.0
        %3995 = vmatpush.msra.mxu0 0.0
        %3996 = vmatpush.msra.mxu0 0.0
        %3997 = vmatpush.msra.mxu0 0.0
        %3998 = vmatpush.msra.mxu0 0.0
        %3999 = vmatpush.msra.mxu0 0.0
        %4000 = vmatpush.msra.mxu0 0.0
        %4001 = vmatpush.msra.mxu0 0.0
        %4002 = vmatpush.msra.mxu0 0.0
        %4003 = vmatpush.msra.mxu0 0.0
        %4004 = vmatpush.msra.mxu0 0.0
        %4005 = vmatpush.msra.mxu0 0.0
        %4006 = vmatpush.msra.mxu0 0.0
        %4007 = vmatpush.msra.mxu0 %v3987
        %4008 = vmatmul.f32.gmra.mxu0 %v3990
        %v4009 = vpop.f32.mrf.mxu0
        %v4010 = vadd.f32 0.0, %v4009
        %4011 = vdwg.mxu0
        %v4013 = vsel %vm1331, %v4010, 0
        %4015 = vmatpush.msra.mxu0 0.0
        %4016 = vmatpush.msra.mxu0 0.0
        %4017 = vmatpush.msra.mxu0 0.0
        %4018 = vmatpush.msra.mxu0 0.0
        %4019 = vmatpush.msra.mxu0 0.0
        %4020 = vmatpush.msra.mxu0 0.0
        %4021 = vmatpush.msra.mxu0 0.0
        %4022 = vmatpush.msra.mxu0 0.0
        %4023 = vmatpush.msra.mxu0 0.0
        %4024 = vmatpush.msra.mxu0 0.0
        %4025 = vmatpush.msra.mxu0 0.0
        %4026 = vmatpush.msra.mxu0 0.0
        %4027 = vmatpush.msra.mxu0 0.0
        %4028 = vmatpush.msra.mxu0 0.0
        %4029 = vmatpush.msra.mxu0 0.0
        %4030 = vmatpush.msra.mxu0 %v3848
        %4031 = vmatmul.f32.gmra.mxu0 %v4013
        %v4032 = vpop.f32.mrf.mxu0
        %v4033 = vadd.f32 0.0, %v4032
        %4034 = vdwg.mxu0
        %v4036 = vsel %vm1331, %v3930, 0
        %4038 = vmatpush.msra.mxu0 0.0
        %4039 = vmatpush.msra.mxu0 0.0
        %4040 = vmatpush.msra.mxu0 0.0
        %4041 = vmatpush.msra.mxu0 0.0
        %4042 = vmatpush.msra.mxu0 0.0
        %4043 = vmatpush.msra.mxu0 0.0
        %4044 = vmatpush.msra.mxu0 0.0
        %4045 = vmatpush.msra.mxu0 0.0
        %4046 = vmatpush.msra.mxu0 0.0
        %4047 = vmatpush.msra.mxu0 0.0
        %4048 = vmatpush.msra.mxu0 0.0
        %4049 = vmatpush.msra.mxu0 0.0
        %4050 = vmatpush.msra.mxu0 0.0
        %4051 = vmatpush.msra.mxu0 0.0
        %4052 = vmatpush.msra.mxu0 0.0
        %4053 = vmatpush.msra.mxu0 %v3847
        %4054 = vmatmul.f32.gmra.mxu0 %v4036
        %v4055 = vpop.f32.mrf.mxu0
        %v4056 = vadd.f32 %v4033, %v4055
        %4057 = vdwg.mxu0
        %4058 = vrot.lane.b32.xlu0 %v3843, 112
        %v4059 = vpop.permute.xlu0 %4058
        %4060 = vrot.lane.b32.xlu0 %v3843, 80
        %v4061 = vpop.permute.xlu0 %4060
        %v4062 = vsel %vm1331, %v4059, 0
        %v4064 = vsel %vm1331, %v4061, 0
        %4066 = vmatpush.xpose.msra.mxu0 0.0
        %4067 = vmatpush.xpose.msra.mxu0 0.0
        %4068 = vmatpush.xpose.msra.mxu0 0.0
        %4069 = vmatpush.xpose.msra.mxu0 0.0
        %4070 = vmatpush.xpose.msra.mxu0 0.0
        %4071 = vmatpush.xpose.msra.mxu0 0.0
        %4072 = vmatpush.xpose.msra.mxu0 0.0
        %4073 = vmatpush.xpose.msra.mxu0 0.0
        %4074 = vmatpush.xpose.msra.mxu0 0.0
        %4075 = vmatpush.xpose.msra.mxu0 0.0
        %4076 = vmatpush.xpose.msra.mxu0 0.0
        %4077 = vmatpush.xpose.msra.mxu0 0.0
        %4078 = vmatpush.xpose.msra.mxu0 0.0
        %4079 = vmatpush.xpose.msra.mxu0 0.0
        %4080 = vmatpush.xpose.msra.mxu0 0.0
        %4081 = vmatpush.xpose.msra.mxu0 %v4064
        %4082 = vmatmul.f32.gmra.mxu0 %v4062
        %v4083 = vpop.f32.mrf.mxu0
        %v4084 = vadd.f32 0.0, %v4083
        %4085 = vdwg.mxu0
        %v4086 = vmul.f32 %v4084, 0.35355338
        %v4087 = vadd.f32 %v4086, %v2637
        %v4088 = vsel %vm1331, %v4087, -inf
        %4089 = vmax.xlane.f32.xlu0 %v4088
        %v4090 = vpop.xlane.xlu0 %4089
        %v4091 = vsub.f32 %v4087, %v4090
        %v4092 = vmul.f32 %v4091, 1.442695
        %v4093 = vpow.pop %v4092
        %v4094 = vsel %vm1331, %v4093, 0.0
        %4095 = vadd.xlane.f32.xlu0 %v4094
        %v4096 = vpop.xlane.xlu0 %4095
        %v4097 = vrcp.pop %v4096
        %v4098 = vmul.f32 %v4096, %v4097
        %v4099 = vsub.f32 1.0, %v4098
        %v4100 = vmul.f32 %v4097, %v4099
        %v4101 = vadd.f32 %v4097, %v4100
        %vm4102 = vweird.f32 %v4096
        %vm4103 = vweird.f32 %v4097
        %vm4104 = vmor %vm4102, %vm4103
        %v4105 = vsel %vm4104, %v4097, %v4101
        %v4106 = vand.u32 2147483647, %v4096
        %vm4107 = vcmp.eq.f32.partialorder %v4106, 8.507059e+37
        %v4108 = vand.u32 %v4096, 2147483648
        %v4109 = vor.u32 1.1754944e-38, %v4108
        %v4110 = vsel %vm4107, %v4109, %v4105
        %v4111 = vmul.f32 %v4093, %v4110
        %4112 = vrot.lane.b32.xlu0 %v3843, 48
        %v4113 = vpop.permute.xlu0 %4112
        %v4116 = vsel %vm1331, %v4111, 0
        %4118 = vmatpush.msra.mxu0 0.0
        %4119 = vmatpush.msra.mxu0 0.0
        %4120 = vmatpush.msra.mxu0 0.0
        %4121 = vmatpush.msra.mxu0 0.0
        %4122 = vmatpush.msra.mxu0 0.0
        %4123 = vmatpush.msra.mxu0 0.0
        %4124 = vmatpush.msra.mxu0 0.0
        %4125 = vmatpush.msra.mxu0 0.0
        %4126 = vmatpush.msra.mxu0 0.0
        %4127 = vmatpush.msra.mxu0 0.0
        %4128 = vmatpush.msra.mxu0 0.0
        %4129 = vmatpush.msra.mxu0 0.0
        %4130 = vmatpush.msra.mxu0 0.0
        %4131 = vmatpush.msra.mxu0 0.0
        %4132 = vmatpush.msra.mxu0 0.0
        %4133 = vmatpush.msra.mxu0 %v4113
        %4134 = vmatmul.f32.gmra.mxu0 %v4116
        %v4135 = vpop.f32.mrf.mxu0
        %v4136 = vadd.f32 0.0, %v4135
        %4137 = vdwg.mxu0
        %v4139 = vsel %vm1331, %v4136, 0
        %4141 = vmatpush.msra.mxu0 0.0
        %4142 = vmatpush.msra.mxu0 0.0
        %4143 = vmatpush.msra.mxu0 0.0
        %4144 = vmatpush.msra.mxu0 0.0
        %4145 = vmatpush.msra.mxu0 0.0
        %4146 = vmatpush.msra.mxu0 0.0
        %4147 = vmatpush.msra.mxu0 0.0
        %4148 = vmatpush.msra.mxu0 0.0
        %4149 = vmatpush.msra.mxu0 0.0
        %4150 = vmatpush.msra.mxu0 0.0
        %4151 = vmatpush.msra.mxu0 0.0
        %4152 = vmatpush.msra.mxu0 0.0
        %4153 = vmatpush.msra.mxu0 0.0
        %4154 = vmatpush.msra.mxu0 0.0
        %4155 = vmatpush.msra.mxu0 0.0
        %4156 = vmatpush.msra.mxu0 %v3849
        %4157 = vmatmul.f32.gmra.mxu0 %v4139
        %v4158 = vpop.f32.mrf.mxu0
        %v4159 = vadd.f32 0.0, %v4158
        %4160 = vdwg.mxu0
        %v4161 = vadd.f32 %v4056, %v4159
        %4162 = vrot.lane.b32.xlu0 %v3843, 104
        %v4163 = vpop.permute.xlu0 %4162
        %4164 = vrot.lane.b32.xlu0 %v3843, 72
        %v4165 = vpop.permute.xlu0 %4164
        %v4166 = vsel %vm1331, %v4163, 0
        %v4168 = vsel %vm1331, %v4165, 0
        %4170 = vmatpush.xpose.msra.mxu0 0.0
        %4171 = vmatpush.xpose.msra.mxu0 0.0
        %4172 = vmatpush.xpose.msra.mxu0 0.0
        %4173 = vmatpush.xpose.msra.mxu0 0.0
        %4174 = vmatpush.xpose.msra.mxu0 0.0
        %4175 = vmatpush.xpose.msra.mxu0 0.0
        %4176 = vmatpush.xpose.msra.mxu0 0.0
        %4177 = vmatpush.xpose.msra.mxu0 0.0
        %4178 = vmatpush.xpose.msra.mxu0 0.0
        %4179 = vmatpush.xpose.msra.mxu0 0.0
        %4180 = vmatpush.xpose.msra.mxu0 0.0
        %4181 = vmatpush.xpose.msra.mxu0 0.0
        %4182 = vmatpush.xpose.msra.mxu0 0.0
        %4183 = vmatpush.xpose.msra.mxu0 0.0
        %4184 = vmatpush.xpose.msra.mxu0 0.0
        %4185 = vmatpush.xpose.msra.mxu0 %v4168
        %4186 = vmatmul.f32.gmra.mxu0 %v4166
        %v4187 = vpop.f32.mrf.mxu0
        %v4188 = vadd.f32 0.0, %v4187
        %4189 = vdwg.mxu0
        %v4190 = vmul.f32 %v4188, 0.35355338
        %v4191 = vadd.f32 %v4190, %v2637
        %v4192 = vsel %vm1331, %v4191, -inf
        %4193 = vmax.xlane.f32.xlu0 %v4192
        %v4194 = vpop.xlane.xlu0 %4193
        %v4195 = vsub.f32 %v4191, %v4194
        %v4196 = vmul.f32 %v4195, 1.442695
        %v4197 = vpow.pop %v4196
        %v4198 = vsel %vm1331, %v4197, 0.0
        %4199 = vadd.xlane.f32.xlu0 %v4198
        %v4200 = vpop.xlane.xlu0 %4199
        %v4201 = vrcp.pop %v4200
        %v4202 = vmul.f32 %v4200, %v4201
        %v4203 = vsub.f32 1.0, %v4202
        %v4204 = vmul.f32 %v4201, %v4203
        %v4205 = vadd.f32 %v4201, %v4204
        %vm4206 = vweird.f32 %v4200
        %vm4207 = vweird.f32 %v4201
        %vm4208 = vmor %vm4206, %vm4207
        %v4209 = vsel %vm4208, %v4201, %v4205
        %v4210 = vand.u32 2147483647, %v4200
        %vm4211 = vcmp.eq.f32.partialorder %v4210, 8.507059e+37
        %v4212 = vand.u32 %v4200, 2147483648
        %v4213 = vor.u32 1.1754944e-38, %v4212
        %v4214 = vsel %vm4211, %v4213, %v4209
        %v4215 = vmul.f32 %v4197, %v4214
        %4216 = vrot.lane.b32.xlu0 %v3843, 40
        %v4217 = vpop.permute.xlu0 %4216
        %v4220 = vsel %vm1331, %v4215, 0
        %4222 = vmatpush.msra.mxu0 0.0
        %4223 = vmatpush.msra.mxu0 0.0
        %4224 = vmatpush.msra.mxu0 0.0
        %4225 = vmatpush.msra.mxu0 0.0
        %4226 = vmatpush.msra.mxu0 0.0
        %4227 = vmatpush.msra.mxu0 0.0
        %4228 = vmatpush.msra.mxu0 0.0
        %4229 = vmatpush.msra.mxu0 0.0
        %4230 = vmatpush.msra.mxu0 0.0
        %4231 = vmatpush.msra.mxu0 0.0
        %4232 = vmatpush.msra.mxu0 0.0
        %4233 = vmatpush.msra.mxu0 0.0
        %4234 = vmatpush.msra.mxu0 0.0
        %4235 = vmatpush.msra.mxu0 0.0
        %4236 = vmatpush.msra.mxu0 0.0
        %4237 = vmatpush.msra.mxu0 %v4217
        %4238 = vmatmul.f32.gmra.mxu0 %v4220
        %v4239 = vpop.f32.mrf.mxu0
        %v4240 = vadd.f32 0.0, %v4239
        %4241 = vdwg.mxu0
        %v4243 = vsel %vm1331, %v4240, 0
        %4245 = vmatpush.msra.mxu0 0.0
        %4246 = vmatpush.msra.mxu0 0.0
        %4247 = vmatpush.msra.mxu0 0.0
        %4248 = vmatpush.msra.mxu0 0.0
        %4249 = vmatpush.msra.mxu0 0.0
        %4250 = vmatpush.msra.mxu0 0.0
        %4251 = vmatpush.msra.mxu0 0.0
        %4252 = vmatpush.msra.mxu0 0.0
        %4253 = vmatpush.msra.mxu0 0.0
        %4254 = vmatpush.msra.mxu0 0.0
        %4255 = vmatpush.msra.mxu0 0.0
        %4256 = vmatpush.msra.mxu0 0.0
        %4257 = vmatpush.msra.mxu0 0.0
        %4258 = vmatpush.msra.mxu0 0.0
        %4259 = vmatpush.msra.mxu0 0.0
        %4260 = vmatpush.msra.mxu0 %v3850
        %4261 = vmatmul.f32.gmra.mxu0 %v4243
        %v4262 = vpop.f32.mrf.mxu0
        %v4263 = vadd.f32 0.0, %v4262
        %4264 = vdwg.mxu0
        %v4265 = vadd.f32 %v4161, %v4263
        %v4267 = vperm.slane %v3852, 0
        %v4269 = vadd.f32 %v4265, %v4267
        %v4270 = vadd.f32 %v3806, %v4269
        %s4271 = scalar_lea.vmem %s43, 1
        %v4272 = vld [vmem:[%s4271] sm:$0x1]
        %s4273 = scalar_lea.vmem %s45, 1
        %v4274 = vld [vmem:[%s4273] sm:$0x1]
        %v4275 = vsel %vm1306, %v4270, 0.0
        %4276 = vadd.xlane.f32.xlu0 %v4275
        %v4277 = vpop.xlane.xlu0 %4276
        %v4278 = vmul.f32 %v4277, %v1761
        %v4279 = vsub.f32 %v4270, %v4278
        %v4280 = vmul.f32 %v4279, %v4279
        %v4281 = vsel %vm1306, %v4280, 0.0
        %4282 = vadd.xlane.f32.xlu0 %v4281
        %v4283 = vpop.xlane.xlu0 %4282
        %v4284 = vmul.f32 %v4283, %v1761
        %v4285 = vadd.f32 %v4284, 1e-05
        %v4286 = vrsqrt.pop %v4285
        %v4287 = vmul.f32 %v4286, %v4285
        %v4288 = vmul.f32 %v4287, %v4286
        %v4289 = vmul.f32 0.5, %v4288
        %v4290 = vsub.f32 1.5, %v4289
        %v4291 = vmul.f32 %v4286, %v4290
        %vm4292 = vweird.f32 %v4285
        %vm4293 = vweird.f32 %v4286
        %vm4294 = vmor %vm4292, %vm4293
        %v4295 = vsel %vm4294, %v4286, %v4291
        %v4296 = vmul.f32 %v4279, %v4295
        %v4298 = vperm.slane %v4272, 0
        %v4300 = vmul.f32 %v4296, %v4298
        %v4302 = vperm.slane %v4274, 0
        %v4304 = vadd.f32 %v4300, %v4302
        %v4305 = vpack.c.bf16 %v4304, %v4304
        %s4306 = scalar_lea.vmem %s47, 16
        %v4307 = vld [vmem:[%s4306] sm:$0xf]
        %v4308 = vld [vmem:[%s4306 + $0x4] sm:$0xf]
        %v4309 = vld [vmem:[%s4306 + $0x8] sm:$0xf]
        %v4310 = vld [vmem:[%s4306 + $0xc] sm:$0xf]
        %s4311 = scalar_lea.vmem %s49, 1
        %v4312 = vld [vmem:[%s4311] sm:$0x1]
        %v4314 = vperm.slane %v4312, 0
        %v4320 = vunpack.c.l.b16 %v4307
        %v4321 = vunpack.c.l.b16 %v4308
        %v4322 = vunpack.c.l.b16 %v4309
        %v4323 = vunpack.c.l.b16 %v4310
        %v4324 = vpack.c.b16 %v4321, %v4320
        %v4325 = vpack.c.b16 %v4323, %v4322
        %v4329 = vsel %vm1306, %v4305, 0
        %4331 = vmatpush.bf16.msra.mxu0 0
        %4332 = vmatpush.bf16.msra.mxu0 0
        %4333 = vmatpush.bf16.msra.mxu0 0
        %4334 = vmatpush.bf16.msra.mxu0 0
        %4335 = vmatpush.bf16.msra.mxu0 0
        %4336 = vmatpush.bf16.msra.mxu0 0
        %4337 = vmatpush.bf16.msra.mxu0 %v4325
        %4338 = vmatpush.bf16.msra.mxu0 %v4324
        %4339 = vmatmul.bf16.gmra.mxu0 %v4329
        %v4340 = vpop.f32.mrf.mxu0
        %v4341 = vadd.f32 %v4314, %v4340
        %v4342 = vpop.f32.mrf.mxu0
        %4343 = vdwg.mxu0
        %s4344 = scalar_lea.vmem %s51, 16
        %v4345 = vld [vmem:[%s4344] sm:$0xf]
        %v4346 = vld [vmem:[%s4344 + $0x4] sm:$0xf]
        %v4347 = vld [vmem:[%s4344 + $0x8] sm:$0xf]
        %v4348 = vld [vmem:[%s4344 + $0xc] sm:$0xf]
        %s4349 = scalar_lea.vmem %s53, 1
        %v4350 = vld [vmem:[%s4349] sm:$0x1]
        %v4352 = vperm.slane %v4350, 0
        %v4358 = vunpack.c.l.b16 %v4345
        %v4359 = vunpack.c.l.b16 %v4346
        %v4360 = vunpack.c.l.b16 %v4347
        %v4361 = vunpack.c.l.b16 %v4348
        %v4362 = vpack.c.b16 %v4359, %v4358
        %v4363 = vpack.c.b16 %v4361, %v4360
        %4366 = vmatpush.bf16.msra.mxu0 0
        %4367 = vmatpush.bf16.msra.mxu0 0
        %4368 = vmatpush.bf16.msra.mxu0 0
        %4369 = vmatpush.bf16.msra.mxu0 0
        %4370 = vmatpush.bf16.msra.mxu0 0
        %4371 = vmatpush.bf16.msra.mxu0 0
        %4372 = vmatpush.bf16.msra.mxu0 %v4363
        %4373 = vmatpush.bf16.msra.mxu0 %v4362
        %4374 = vmatmul.bf16.gmra.mxu0 %v3189
        %v4375 = vpop.f32.mrf.mxu0
        %v4376 = vadd.f32 %v4352, %v4375
        %v4377 = vpop.f32.mrf.mxu0
        %4378 = vdwg.mxu0
        %s4379 = scalar_lea.vmem %s55, 32
        %v4380 = vld [vmem:[%s4379] sm:$0xff]
        %v4381 = vld [vmem:[%s4379 + $0x8] sm:$0xff]
        %v4382 = vld [vmem:[%s4379 + $0x10] sm:$0xff]
        %v4383 = vld [vmem:[%s4379 + $0x18] sm:$0xff]
        %s4384 = scalar_lea.vmem %s57, 1
        %v4385 = vld [vmem:[%s4384] sm:$0x1]
        %v4387 = vsel %vm1331, %v4341, 0
        %v4390 = vsel %vm1331, %v4376, 0
        %4392 = vmatpush.xpose.msra.mxu0 0.0
        %4393 = vmatpush.xpose.msra.mxu0 0.0
        %4394 = vmatpush.xpose.msra.mxu0 0.0
        %4395 = vmatpush.xpose.msra.mxu0 0.0
        %4396 = vmatpush.xpose.msra.mxu0 0.0
        %4397 = vmatpush.xpose.msra.mxu0 0.0
        %4398 = vmatpush.xpose.msra.mxu0 0.0
        %4399 = vmatpush.xpose.msra.mxu0 0.0
        %4400 = vmatpush.xpose.msra.mxu0 0.0
        %4401 = vmatpush.xpose.msra.mxu0 0.0
        %4402 = vmatpush.xpose.msra.mxu0 0.0
        %4403 = vmatpush.xpose.msra.mxu0 0.0
        %4404 = vmatpush.xpose.msra.mxu0 0.0
        %4405 = vmatpush.xpose.msra.mxu0 0.0
        %4406 = vmatpush.xpose.msra.mxu0 0.0
        %4407 = vmatpush.xpose.msra.mxu0 %v4390
        %4408 = vmatmul.f32.gmra.mxu0 %v4387
        %v4409 = vpop.f32.mrf.mxu0
        %v4410 = vadd.f32 0.0, %v4409
        %4411 = vdwg.mxu0
        %v4412 = vmul.f32 %v4410, 0.35355338
        %v4413 = vsel %vm1331, %v4412, -inf
        %4414 = vmax.xlane.f32.xlu0 %v4413
        %v4415 = vpop.xlane.xlu0 %4414
        %v4416 = vsub.f32 %v4412, %v4415
        %v4417 = vmul.f32 %v4416, 1.442695
        %v4418 = vpow.pop %v4417
        %v4419 = vsel %vm1331, %v4418, 0.0
        %4420 = vadd.xlane.f32.xlu0 %v4419
        %v4421 = vpop.xlane.xlu0 %4420
        %v4422 = vrcp.pop %v4421
        %v4423 = vmul.f32 %v4421, %v4422
        %v4424 = vsub.f32 1.0, %v4423
        %v4425 = vmul.f32 %v4422, %v4424
        %v4426 = vadd.f32 %v4422, %v4425
        %vm4427 = vweird.f32 %v4421
        %vm4428 = vweird.f32 %v4422
        %vm4429 = vmor %vm4427, %vm4428
        %v4430 = vsel %vm4429, %v4422, %v4426
        %v4431 = vand.u32 2147483647, %v4421
        %vm4432 = vcmp.eq.f32.partialorder %v4431, 8.507059e+37
        %v4433 = vand.u32 %v4421, 2147483648
        %v4434 = vor.u32 1.1754944e-38, %v4433
        %v4435 = vsel %vm4432, %v4434, %v4430
        %v4436 = vmul.f32 %v4418, %v4435
        %4437 = vrot.lane.b32.xlu0 %v4376, 96
        %v4438 = vpop.permute.xlu0 %4437
        %v4441 = vsel %vm1331, %v4436, 0
        %4443 = vmatpush.msra.mxu0 0.0
        %4444 = vmatpush.msra.mxu0 0.0
        %4445 = vmatpush.msra.mxu0 0.0
        %4446 = vmatpush.msra.mxu0 0.0
        %4447 = vmatpush.msra.mxu0 0.0
        %4448 = vmatpush.msra.mxu0 0.0
        %4449 = vmatpush.msra.mxu0 0.0
        %4450 = vmatpush.msra.mxu0 0.0
        %4451 = vmatpush.msra.mxu0 0.0
        %4452 = vmatpush.msra.mxu0 0.0
        %4453 = vmatpush.msra.mxu0 0.0
        %4454 = vmatpush.msra.mxu0 0.0
        %4455 = vmatpush.msra.mxu0 0.0
        %4456 = vmatpush.msra.mxu0 0.0
        %4457 = vmatpush.msra.mxu0 0.0
        %4458 = vmatpush.msra.mxu0 %v4438
        %4459 = vmatmul.f32.gmra.mxu0 %v4441
        %v4460 = vpop.f32.mrf.mxu0
        %v4461 = vadd.f32 0.0, %v4460
        %4462 = vdwg.mxu0
        %4463 = vrot.lane.b32.xlu0 %v4341, 120
        %v4464 = vpop.permute.xlu0 %4463
        %4465 = vrot.lane.b32.xlu0 %v4376, 120
        %v4466 = vpop.permute.xlu0 %4465
        %v4467 = vsel %vm1331, %v4464, 0
        %v4469 = vsel %vm1331, %v4466, 0
        %4471 = vmatpush.xpose.msra.mxu0 0.0
        %4472 = vmatpush.xpose.msra.mxu0 0.0
        %4473 = vmatpush.xpose.msra.mxu0 0.0
        %4474 = vmatpush.xpose.msra.mxu0 0.0
        %4475 = vmatpush.xpose.msra.mxu0 0.0
        %4476 = vmatpush.xpose.msra.mxu0 0.0
        %4477 = vmatpush.xpose.msra.mxu0 0.0
        %4478 = vmatpush.xpose.msra.mxu0 0.0
        %4479 = vmatpush.xpose.msra.mxu0 0.0
        %4480 = vmatpush.xpose.msra.mxu0 0.0
        %4481 = vmatpush.xpose.msra.mxu0 0.0
        %4482 = vmatpush.xpose.msra.mxu0 0.0
        %4483 = vmatpush.xpose.msra.mxu0 0.0
        %4484 = vmatpush.xpose.msra.mxu0 0.0
        %4485 = vmatpush.xpose.msra.mxu0 0.0
        %4486 = vmatpush.xpose.msra.mxu0 %v4469
        %4487 = vmatmul.f32.gmra.mxu0 %v4467
        %v4488 = vpop.f32.mrf.mxu0
        %v4489 = vadd.f32 0.0, %v4488
        %4490 = vdwg.mxu0
        %v4491 = vmul.f32 %v4489, 0.35355338
        %v4492 = vsel %vm1331, %v4491, -inf
        %4493 = vmax.xlane.f32.xlu0 %v4492
        %v4494 = vpop.xlane.xlu0 %4493
        %v4495 = vsub.f32 %v4491, %v4494
        %v4496 = vmul.f32 %v4495, 1.442695
        %v4497 = vpow.pop %v4496
        %v4498 = vsel %vm1331, %v4497, 0.0
        %4499 = vadd.xlane.f32.xlu0 %v4498
        %v4500 = vpop.xlane.xlu0 %4499
        %v4501 = vrcp.pop %v4500
        %v4502 = vmul.f32 %v4500, %v4501
        %v4503 = vsub.f32 1.0, %v4502
        %v4504 = vmul.f32 %v4501, %v4503
        %v4505 = vadd.f32 %v4501, %v4504
        %vm4506 = vweird.f32 %v4500
        %vm4507 = vweird.f32 %v4501
        %vm4508 = vmor %vm4506, %vm4507
        %v4509 = vsel %vm4508, %v4501, %v4505
        %v4510 = vand.u32 2147483647, %v4500
        %vm4511 = vcmp.eq.f32.partialorder %v4510, 8.507059e+37
        %v4512 = vand.u32 %v4500, 2147483648
        %v4513 = vor.u32 1.1754944e-38, %v4512
        %v4514 = vsel %vm4511, %v4513, %v4509
        %v4515 = vmul.f32 %v4497, %v4514
        %4516 = vrot.lane.b32.xlu0 %v4376, 88
        %v4517 = vpop.permute.xlu0 %4516
        %v4520 = vsel %vm1331, %v4515, 0
        %4522 = vmatpush.msra.mxu0 0.0
        %4523 = vmatpush.msra.mxu0 0.0
        %4524 = vmatpush.msra.mxu0 0.0
        %4525 = vmatpush.msra.mxu0 0.0
        %4526 = vmatpush.msra.mxu0 0.0
        %4527 = vmatpush.msra.mxu0 0.0
        %4528 = vmatpush.msra.mxu0 0.0
        %4529 = vmatpush.msra.mxu0 0.0
        %4530 = vmatpush.msra.mxu0 0.0
        %4531 = vmatpush.msra.mxu0 0.0
        %4532 = vmatpush.msra.mxu0 0.0
        %4533 = vmatpush.msra.mxu0 0.0
        %4534 = vmatpush.msra.mxu0 0.0
        %4535 = vmatpush.msra.mxu0 0.0
        %4536 = vmatpush.msra.mxu0 0.0
        %4537 = vmatpush.msra.mxu0 %v4517
        %4538 = vmatmul.f32.gmra.mxu0 %v4520
        %v4539 = vpop.f32.mrf.mxu0
        %v4540 = vadd.f32 0.0, %v4539
        %4541 = vdwg.mxu0
        %v4543 = vsel %vm1331, %v4540, 0
        %4545 = vmatpush.msra.mxu0 0.0
        %4546 = vmatpush.msra.mxu0 0.0
        %4547 = vmatpush.msra.mxu0 0.0
        %4548 = vmatpush.msra.mxu0 0.0
        %4549 = vmatpush.msra.mxu0 0.0
        %4550 = vmatpush.msra.mxu0 0.0
        %4551 = vmatpush.msra.mxu0 0.0
        %4552 = vmatpush.msra.mxu0 0.0
        %4553 = vmatpush.msra.mxu0 0.0
        %4554 = vmatpush.msra.mxu0 0.0
        %4555 = vmatpush.msra.mxu0 0.0
        %4556 = vmatpush.msra.mxu0 0.0
        %4557 = vmatpush.msra.mxu0 0.0
        %4558 = vmatpush.msra.mxu0 0.0
        %4559 = vmatpush.msra.mxu0 0.0
        %4560 = vmatpush.msra.mxu0 %v4381
        %4561 = vmatmul.f32.gmra.mxu0 %v4543
        %v4562 = vpop.f32.mrf.mxu0
        %v4563 = vadd.f32 0.0, %v4562
        %4564 = vdwg.mxu0
        %v4566 = vsel %vm1331, %v4461, 0
        %4568 = vmatpush.msra.mxu0 0.0
        %4569 = vmatpush.msra.mxu0 0.0
        %4570 = vmatpush.msra.mxu0 0.0
        %4571 = vmatpush.msra.mxu0 0.0
        %4572 = vmatpush.msra.mxu0 0.0
        %4573 = vmatpush.msra.mxu0 0.0
        %4574 = vmatpush.msra.mxu0 0.0
        %4575 = vmatpush.msra.mxu0 0.0
        %4576 = vmatpush.msra.mxu0 0.0
        %4577 = vmatpush.msra.mxu0 0.0
        %4578 = vmatpush.msra.mxu0 0.0
        %4579 = vmatpush.msra.mxu0 0.0
        %4580 = vmatpush.msra.mxu0 0.0
        %4581 = vmatpush.msra.mxu0 0.0
        %4582 = vmatpush.msra.mxu0 0.0
        %4583 = vmatpush.msra.mxu0 %v4380
        %4584 = vmatmul.f32.gmra.mxu0 %v4566
        %v4585 = vpop.f32.mrf.mxu0
        %v4586 = vadd.f32 %v4563, %v4585
        %4587 = vdwg.mxu0
        %4588 = vrot.lane.b32.xlu0 %v4341, 112
        %v4589 = vpop.permute.xlu0 %4588
        %4590 = vrot.lane.b32.xlu0 %v4376, 112
        %v4591 = vpop.permute.xlu0 %4590
        %v4592 = vsel %vm1331, %v4589, 0
        %v4594 = vsel %vm1331, %v4591, 0
        %4596 = vmatpush.xpose.msra.mxu0 0.0
        %4597 = vmatpush.xpose.msra.mxu0 0.0
        %4598 = vmatpush.xpose.msra.mxu0 0.0
        %4599 = vmatpush.xpose.msra.mxu0 0.0
        %4600 = vmatpush.xpose.msra.mxu0 0.0
        %4601 = vmatpush.xpose.msra.mxu0 0.0
        %4602 = vmatpush.xpose.msra.mxu0 0.0
        %4603 = vmatpush.xpose.msra.mxu0 0.0
        %4604 = vmatpush.xpose.msra.mxu0 0.0
        %4605 = vmatpush.xpose.msra.mxu0 0.0
        %4606 = vmatpush.xpose.msra.mxu0 0.0
        %4607 = vmatpush.xpose.msra.mxu0 0.0
        %4608 = vmatpush.xpose.msra.mxu0 0.0
        %4609 = vmatpush.xpose.msra.mxu0 0.0
        %4610 = vmatpush.xpose.msra.mxu0 0.0
        %4611 = vmatpush.xpose.msra.mxu0 %v4594
        %4612 = vmatmul.f32.gmra.mxu0 %v4592
        %v4613 = vpop.f32.mrf.mxu0
        %v4614 = vadd.f32 0.0, %v4613
        %4615 = vdwg.mxu0
        %v4616 = vmul.f32 %v4614, 0.35355338
        %v4617 = vsel %vm1331, %v4616, -inf
        %4618 = vmax.xlane.f32.xlu0 %v4617
        %v4619 = vpop.xlane.xlu0 %4618
        %v4620 = vsub.f32 %v4616, %v4619
        %v4621 = vmul.f32 %v4620, 1.442695
        %v4622 = vpow.pop %v4621
        %v4623 = vsel %vm1331, %v4622, 0.0
        %4624 = vadd.xlane.f32.xlu0 %v4623
        %v4625 = vpop.xlane.xlu0 %4624
        %v4626 = vrcp.pop %v4625
        %v4627 = vmul.f32 %v4625, %v4626
        %v4628 = vsub.f32 1.0, %v4627
        %v4629 = vmul.f32 %v4626, %v4628
        %v4630 = vadd.f32 %v4626, %v4629
        %vm4631 = vweird.f32 %v4625
        %vm4632 = vweird.f32 %v4626
        %vm4633 = vmor %vm4631, %vm4632
        %v4634 = vsel %vm4633, %v4626, %v4630
        %v4635 = vand.u32 2147483647, %v4625
        %vm4636 = vcmp.eq.f32.partialorder %v4635, 8.507059e+37
        %v4637 = vand.u32 %v4625, 2147483648
        %v4638 = vor.u32 1.1754944e-38, %v4637
        %v4639 = vsel %vm4636, %v4638, %v4634
        %v4640 = vmul.f32 %v4622, %v4639
        %4641 = vrot.lane.b32.xlu0 %v4376, 80
        %v4642 = vpop.permute.xlu0 %4641
        %v4645 = vsel %vm1331, %v4640, 0
        %4647 = vmatpush.msra.mxu0 0.0
        %4648 = vmatpush.msra.mxu0 0.0
        %4649 = vmatpush.msra.mxu0 0.0
        %4650 = vmatpush.msra.mxu0 0.0
        %4651 = vmatpush.msra.mxu0 0.0
        %4652 = vmatpush.msra.mxu0 0.0
        %4653 = vmatpush.msra.mxu0 0.0
        %4654 = vmatpush.msra.mxu0 0.0
        %4655 = vmatpush.msra.mxu0 0.0
        %4656 = vmatpush.msra.mxu0 0.0
        %4657 = vmatpush.msra.mxu0 0.0
        %4658 = vmatpush.msra.mxu0 0.0
        %4659 = vmatpush.msra.mxu0 0.0
        %4660 = vmatpush.msra.mxu0 0.0
        %4661 = vmatpush.msra.mxu0 0.0
        %4662 = vmatpush.msra.mxu0 %v4642
        %4663 = vmatmul.f32.gmra.mxu0 %v4645
        %v4664 = vpop.f32.mrf.mxu0
        %v4665 = vadd.f32 0.0, %v4664
        %4666 = vdwg.mxu0
        %v4668 = vsel %vm1331, %v4665, 0
        %4670 = vmatpush.msra.mxu0 0.0
        %4671 = vmatpush.msra.mxu0 0.0
        %4672 = vmatpush.msra.mxu0 0.0
        %4673 = vmatpush.msra.mxu0 0.0
        %4674 = vmatpush.msra.mxu0 0.0
        %4675 = vmatpush.msra.mxu0 0.0
        %4676 = vmatpush.msra.mxu0 0.0
        %4677 = vmatpush.msra.mxu0 0.0
        %4678 = vmatpush.msra.mxu0 0.0
        %4679 = vmatpush.msra.mxu0 0.0
        %4680 = vmatpush.msra.mxu0 0.0
        %4681 = vmatpush.msra.mxu0 0.0
        %4682 = vmatpush.msra.mxu0 0.0
        %4683 = vmatpush.msra.mxu0 0.0
        %4684 = vmatpush.msra.mxu0 0.0
        %4685 = vmatpush.msra.mxu0 %v4382
        %4686 = vmatmul.f32.gmra.mxu0 %v4668
        %v4687 = vpop.f32.mrf.mxu0
        %v4688 = vadd.f32 0.0, %v4687
        %4689 = vdwg.mxu0
        %v4690 = vadd.f32 %v4586, %v4688
        %4691 = vrot.lane.b32.xlu0 %v4341, 104
        %v4692 = vpop.permute.xlu0 %4691
        %4693 = vrot.lane.b32.xlu0 %v4376, 104
        %v4694 = vpop.permute.xlu0 %4693
        %v4695 = vsel %vm1331, %v4692, 0
        %v4697 = vsel %vm1331, %v4694, 0
        %4699 = vmatpush.xpose.msra.mxu0 0.0
        %4700 = vmatpush.xpose.msra.mxu0 0.0
        %4701 = vmatpush.xpose.msra.mxu0 0.0
        %4702 = vmatpush.xpose.msra.mxu0 0.0
        %4703 = vmatpush.xpose.msra.mxu0 0.0
        %4704 = vmatpush.xpose.msra.mxu0 0.0
        %4705 = vmatpush.xpose.msra.mxu0 0.0
        %4706 = vmatpush.xpose.msra.mxu0 0.0
        %4707 = vmatpush.xpose.msra.mxu0 0.0
        %4708 = vmatpush.xpose.msra.mxu0 0.0
        %4709 = vmatpush.xpose.msra.mxu0 0.0
        %4710 = vmatpush.xpose.msra.mxu0 0.0
        %4711 = vmatpush.xpose.msra.mxu0 0.0
        %4712 = vmatpush.xpose.msra.mxu0 0.0
        %4713 = vmatpush.xpose.msra.mxu0 0.0
        %4714 = vmatpush.xpose.msra.mxu0 %v4697
        %4715 = vmatmul.f32.gmra.mxu0 %v4695
        %v4716 = vpop.f32.mrf.mxu0
        %v4717 = vadd.f32 0.0, %v4716
        %4718 = vdwg.mxu0
        %v4719 = vmul.f32 %v4717, 0.35355338
        %v4720 = vsel %vm1331, %v4719, -inf
        %4721 = vmax.xlane.f32.xlu0 %v4720
        %v4722 = vpop.xlane.xlu0 %4721
        %v4723 = vsub.f32 %v4719, %v4722
        %v4724 = vmul.f32 %v4723, 1.442695
        %v4725 = vpow.pop %v4724
        %v4726 = vsel %vm1331, %v4725, 0.0
        %4727 = vadd.xlane.f32.xlu0 %v4726
        %v4728 = vpop.xlane.xlu0 %4727
        %v4729 = vrcp.pop %v4728
        %v4730 = vmul.f32 %v4728, %v4729
        %v4731 = vsub.f32 1.0, %v4730
        %v4732 = vmul.f32 %v4729, %v4731
        %v4733 = vadd.f32 %v4729, %v4732
        %vm4734 = vweird.f32 %v4728
        %vm4735 = vweird.f32 %v4729
        %vm4736 = vmor %vm4734, %vm4735
        %v4737 = vsel %vm4736, %v4729, %v4733
        %v4738 = vand.u32 2147483647, %v4728
        %vm4739 = vcmp.eq.f32.partialorder %v4738, 8.507059e+37
        %v4740 = vand.u32 %v4728, 2147483648
        %v4741 = vor.u32 1.1754944e-38, %v4740
        %v4742 = vsel %vm4739, %v4741, %v4737
        %v4743 = vmul.f32 %v4725, %v4742
        %4744 = vrot.lane.b32.xlu0 %v4376, 72
        %v4745 = vpop.permute.xlu0 %4744
        %v4748 = vsel %vm1331, %v4743, 0
        %4750 = vmatpush.msra.mxu0 0.0
        %4751 = vmatpush.msra.mxu0 0.0
        %4752 = vmatpush.msra.mxu0 0.0
        %4753 = vmatpush.msra.mxu0 0.0
        %4754 = vmatpush.msra.mxu0 0.0
        %4755 = vmatpush.msra.mxu0 0.0
        %4756 = vmatpush.msra.mxu0 0.0
        %4757 = vmatpush.msra.mxu0 0.0
        %4758 = vmatpush.msra.mxu0 0.0
        %4759 = vmatpush.msra.mxu0 0.0
        %4760 = vmatpush.msra.mxu0 0.0
        %4761 = vmatpush.msra.mxu0 0.0
        %4762 = vmatpush.msra.mxu0 0.0
        %4763 = vmatpush.msra.mxu0 0.0
        %4764 = vmatpush.msra.mxu0 0.0
        %4765 = vmatpush.msra.mxu0 %v4745
        %4766 = vmatmul.f32.gmra.mxu0 %v4748
        %v4767 = vpop.f32.mrf.mxu0
        %v4768 = vadd.f32 0.0, %v4767
        %4769 = vdwg.mxu0
        %v4771 = vsel %vm1331, %v4768, 0
        %4773 = vmatpush.msra.mxu0 0.0
        %4774 = vmatpush.msra.mxu0 0.0
        %4775 = vmatpush.msra.mxu0 0.0
        %4776 = vmatpush.msra.mxu0 0.0
        %4777 = vmatpush.msra.mxu0 0.0
        %4778 = vmatpush.msra.mxu0 0.0
        %4779 = vmatpush.msra.mxu0 0.0
        %4780 = vmatpush.msra.mxu0 0.0
        %4781 = vmatpush.msra.mxu0 0.0
        %4782 = vmatpush.msra.mxu0 0.0
        %4783 = vmatpush.msra.mxu0 0.0
        %4784 = vmatpush.msra.mxu0 0.0
        %4785 = vmatpush.msra.mxu0 0.0
        %4786 = vmatpush.msra.mxu0 0.0
        %4787 = vmatpush.msra.mxu0 0.0
        %4788 = vmatpush.msra.mxu0 %v4383
        %4789 = vmatmul.f32.gmra.mxu0 %v4771
        %v4790 = vpop.f32.mrf.mxu0
        %v4791 = vadd.f32 0.0, %v4790
        %4792 = vdwg.mxu0
        %v4793 = vadd.f32 %v4690, %v4791
        %v4795 = vperm.slane %v4385, 0
        %v4797 = vadd.f32 %v4793, %v4795
        %v4798 = vadd.f32 %v4304, %v4797
        %s4799 = scalar_lea.vmem %s59, 1
        %v4800 = vld [vmem:[%s4799] sm:$0x1]
        %s4801 = scalar_lea.vmem %s61, 1
        %v4802 = vld [vmem:[%s4801] sm:$0x1]
        %v4803 = vsel %vm1306, %v4798, 0.0
        %4804 = vadd.xlane.f32.xlu0 %v4803
        %v4805 = vpop.xlane.xlu0 %4804
        %v4806 = vmul.f32 %v4805, %v1761
        %v4807 = vsub.f32 %v4798, %v4806
        %v4808 = vmul.f32 %v4807, %v4807
        %v4809 = vsel %vm1306, %v4808, 0.0
        %4810 = vadd.xlane.f32.xlu0 %v4809
        %v4811 = vpop.xlane.xlu0 %4810
        %v4812 = vmul.f32 %v4811, %v1761
        %v4813 = vadd.f32 %v4812, 1e-05
        %v4814 = vrsqrt.pop %v4813
        %v4815 = vmul.f32 %v4814, %v4813
        %v4816 = vmul.f32 %v4815, %v4814
        %v4817 = vmul.f32 0.5, %v4816
        %v4818 = vsub.f32 1.5, %v4817
        %v4819 = vmul.f32 %v4814, %v4818
        %vm4820 = vweird.f32 %v4813
        %vm4821 = vweird.f32 %v4814
        %vm4822 = vmor %vm4820, %vm4821
        %v4823 = vsel %vm4822, %v4814, %v4819
        %v4824 = vmul.f32 %v4807, %v4823
        %v4826 = vperm.slane %v4800, 0
        %v4828 = vmul.f32 %v4824, %v4826
        %v4830 = vperm.slane %v4802, 0
        %v4832 = vadd.f32 %v4828, %v4830
        %v4833 = vpack.c.bf16 %v4832, %v4832
        %s4834 = scalar_lea.vmem %s63, 16
        %v4835 = vld [vmem:[%s4834] sm:$0xf]
        %v4836 = vld [vmem:[%s4834 + $0x4] sm:$0xf]
        %v4837 = vld [vmem:[%s4834 + $0x8] sm:$0xf]
        %v4838 = vld [vmem:[%s4834 + $0xc] sm:$0xf]
        %s4839 = scalar_lea.vmem %s65, 1
        %v4840 = vld [vmem:[%s4839] sm:$0x1]
        %v4842 = vperm.slane %v4840, 0
        %v4848 = vunpack.c.l.b16 %v4835
        %v4849 = vunpack.c.l.b16 %v4836
        %v4850 = vunpack.c.l.b16 %v4837
        %v4851 = vunpack.c.l.b16 %v4838
        %v4852 = vpack.c.b16 %v4849, %v4848
        %v4853 = vpack.c.b16 %v4851, %v4850
        %v4857 = vsel %vm1306, %v4833, 0
        %4859 = vmatpush.bf16.msra.mxu0 0
        %4860 = vmatpush.bf16.msra.mxu0 0
        %4861 = vmatpush.bf16.msra.mxu0 0
        %4862 = vmatpush.bf16.msra.mxu0 0
        %4863 = vmatpush.bf16.msra.mxu0 0
        %4864 = vmatpush.bf16.msra.mxu0 0
        %4865 = vmatpush.bf16.msra.mxu0 %v4853
        %4866 = vmatpush.bf16.msra.mxu0 %v4852
        %4867 = vmatmul.bf16.gmra.mxu0 %v4857
        %v4868 = vpop.f32.mrf.mxu0
        %v4869 = vadd.f32 %v4842, %v4868
        %v4870 = vpop.f32.mrf.mxu0
        %4871 = vdwg.mxu0
        %v4872 = vmax.f32 %v4869, 0.0
        %v4873 = vpack.c.bf16 %v4872, %v4872
        %s4874 = scalar_lea.vmem %s67, 64
        %v4875 = vld [vmem:[%s4874] sm:$0xf]
        %v4876 = vld [vmem:[%s4874 + $0x4] sm:$0xf]
        %v4877 = vld [vmem:[%s4874 + $0x8] sm:$0xf]
        %v4878 = vld [vmem:[%s4874 + $0xc] sm:$0xf]
        %v4879 = vld [vmem:[%s4874 + $0x10] sm:$0xf]
        %v4880 = vld [vmem:[%s4874 + $0x14] sm:$0xf]
        %v4881 = vld [vmem:[%s4874 + $0x18] sm:$0xf]
        %v4882 = vld [vmem:[%s4874 + $0x1c] sm:$0xf]
        %v4883 = vld [vmem:[%s4874 + $0x20] sm:$0xf]
        %v4884 = vld [vmem:[%s4874 + $0x24] sm:$0xf]
        %v4885 = vld [vmem:[%s4874 + $0x28] sm:$0xf]
        %v4886 = vld [vmem:[%s4874 + $0x2c] sm:$0xf]
        %v4887 = vld [vmem:[%s4874 + $0x30] sm:$0xf]
        %v4888 = vld [vmem:[%s4874 + $0x34] sm:$0xf]
        %v4889 = vld [vmem:[%s4874 + $0x38] sm:$0xf]
        %v4890 = vld [vmem:[%s4874 + $0x3c] sm:$0xf]
        %s4891 = scalar_lea.vmem %s69, 1
        %v4892 = vld [vmem:[%s4891] sm:$0x1]
        %v4894 = vperm.slane %v4892, 0
        %v4912 = vunpack.c.l.b16 %v4875
        %v4913 = vunpack.c.l.b16 %v4876
        %v4914 = vunpack.c.l.b16 %v4877
        %v4915 = vunpack.c.l.b16 %v4878
        %v4916 = vunpack.c.l.b16 %v4879
        %v4917 = vunpack.c.l.b16 %v4880
        %v4918 = vunpack.c.l.b16 %v4881
        %v4919 = vunpack.c.l.b16 %v4882
        %v4920 = vunpack.c.l.b16 %v4883
        %v4921 = vunpack.c.l.b16 %v4884
        %v4922 = vunpack.c.l.b16 %v4885
        %v4923 = vunpack.c.l.b16 %v4886
        %v4924 = vunpack.c.l.b16 %v4887
        %v4925 = vunpack.c.l.b16 %v4888
        %v4926 = vunpack.c.l.b16 %v4889
        %v4927 = vunpack.c.l.b16 %v4890
        %v4928 = vpack.c.b16 %v4913, %v4912
        %v4929 = vpack.c.b16 %v4915, %v4914
        %v4930 = vpack.c.b16 %v4917, %v4916
        %v4931 = vpack.c.b16 %v4919, %v4918
        %v4932 = vpack.c.b16 %v4921, %v4920
        %v4933 = vpack.c.b16 %v4923, %v4922
        %v4934 = vpack.c.b16 %v4925, %v4924
        %v4935 = vpack.c.b16 %v4927, %v4926
        %4944 = vmatpush.bf16.msra.mxu0 %v4935
        %4945 = vmatpush.bf16.msra.mxu0 %v4934
        %4946 = vmatpush.bf16.msra.mxu0 %v4933
        %4947 = vmatpush.bf16.msra.mxu0 %v4932
        %4948 = vmatpush.bf16.msra.mxu0 %v4931
        %4949 = vmatpush.bf16.msra.mxu0 %v4930
        %4950 = vmatpush.bf16.msra.mxu0 %v4929
        %4951 = vmatpush.bf16.msra.mxu0 %v4928
        %4952 = vmatmul.bf16.gmra.mxu0 %v4873
        %v4953 = vpop.f32.mrf.mxu0
        %v4954 = vadd.f32 %v4894, %v4953
        %v4955 = vpop.f32.mrf.mxu0
        %4956 = vdwg.mxu0
        %v4957 = vadd.f32 %v4832, %v4954
        %s4958 = scalar_lea.vmem %s71, 1
        %v4959 = vld [vmem:[%s4958] sm:$0x1]
        %s4960 = scalar_lea.vmem %s73, 1
        %v4961 = vld [vmem:[%s4960] sm:$0x1]
        %v4962 = vsel %vm1306, %v4957, 0.0
        %4963 = vadd.xlane.f32.xlu0 %v4962
        %v4964 = vpop.xlane.xlu0 %4963
        %v4965 = vmul.f32 %v4964, %v1761
        %v4966 = vsub.f32 %v4957, %v4965
        %v4967 = vmul.f32 %v4966, %v4966
        %v4968 = vsel %vm1306, %v4967, 0.0
        %4969 = vadd.xlane.f32.xlu0 %v4968
        %v4970 = vpop.xlane.xlu0 %4969
        %v4971 = vmul.f32 %v4970, %v1761
        %v4972 = vadd.f32 %v4971, 1e-05
        %v4973 = vrsqrt.pop %v4972
        %v4974 = vmul.f32 %v4973, %v4972
        %v4975 = vmul.f32 %v4974, %v4973
        %v4976 = vmul.f32 0.5, %v4975
        %v4977 = vsub.f32 1.5, %v4976
        %v4978 = vmul.f32 %v4973, %v4977
        %vm4979 = vweird.f32 %v4972
        %vm4980 = vweird.f32 %v4973
        %vm4981 = vmor %vm4979, %vm4980
        %v4982 = vsel %vm4981, %v4973, %v4978
        %v4983 = vmul.f32 %v4966, %v4982
        %v4985 = vperm.slane %v4959, 0
        %v4987 = vmul.f32 %v4983, %v4985
        %v4989 = vperm.slane %v4961, 0
        %v4991 = vadd.f32 %v4987, %v4989
        %v4992 = vld [vmem:[%s75] sm:$0x1]
        %v4993 = vld [vmem:[%s77] sm:$0x1]
        %v4994 = vsel %vm1306, %v4991, 0.0
        %4995 = vadd.xlane.f32.xlu0 %v4994
        %v4996 = vpop.xlane.xlu0 %4995
        %v4997 = vmul.f32 %v4996, %v1761
        %v4998 = vsub.f32 %v4991, %v4997
        %v4999 = vmul.f32 %v4998, %v4998
        %v5000 = vsel %vm1306, %v4999, 0.0
        %5001 = vadd.xlane.f32.xlu0 %v5000
        %v5002 = vpop.xlane.xlu0 %5001
        %v5003 = vmul.f32 %v5002, %v1761
        %v5004 = vadd.f32 %v5003, 1e-05
        %v5005 = vrsqrt.pop %v5004
        %v5006 = vmul.f32 %v5005, %v5004
        %v5007 = vmul.f32 %v5006, %v5005
        %v5008 = vmul.f32 0.5, %v5007
        %v5009 = vsub.f32 1.5, %v5008
        %v5010 = vmul.f32 %v5005, %v5009
        %vm5011 = vweird.f32 %v5004
        %vm5012 = vweird.f32 %v5005
        %vm5013 = vmor %vm5011, %vm5012
        %v5014 = vsel %vm5013, %v5005, %v5010
        %v5015 = vmul.f32 %v4998, %v5014
        %v5017 = vperm.slane %v4992, 0
        %v5019 = vmul.f32 %v5015, %v5017
        %v5021 = vperm.slane %v4993, 0
        %v5023 = vadd.f32 %v5019, %v5021
        %v5024 = vpack.c.bf16 %v5023, %v5023
        %v5025 = vld [vmem:[%s79] sm:$0xf]
        %v5026 = vld [vmem:[%s79 + $0x4] sm:$0xf]
        %v5027 = vld [vmem:[%s79 + $0x8] sm:$0xf]
        %v5028 = vld [vmem:[%s79 + $0xc] sm:$0xf]
        %v5029 = vld [vmem:[#allocation2] sm:$0x1]
        %v5031 = vperm.slane %v5029, 0
        %v5037 = vunpack.c.l.b16 %v5025
        %v5038 = vunpack.c.l.b16 %v5026
        %v5039 = vunpack.c.l.b16 %v5027
        %v5040 = vunpack.c.l.b16 %v5028
        %v5041 = vpack.c.b16 %v5038, %v5037
        %v5042 = vpack.c.b16 %v5040, %v5039
        %v5046 = vsel %vm1306, %v5024, 0
        %5048 = vmatpush.bf16.msra.mxu0 0
        %5049 = vmatpush.bf16.msra.mxu0 0
        %5050 = vmatpush.bf16.msra.mxu0 0
        %5051 = vmatpush.bf16.msra.mxu0 0
        %5052 = vmatpush.bf16.msra.mxu0 0
        %5053 = vmatpush.bf16.msra.mxu0 0
        %5054 = vmatpush.bf16.msra.mxu0 %v5042
        %5055 = vmatpush.bf16.msra.mxu0 %v5041
        %5056 = vmatmul.bf16.gmra.mxu0 %v5046
        %v5057 = vpop.f32.mrf.mxu0
        %v5058 = vadd.f32 %v5031, %v5057
        %v5059 = vpop.f32.mrf.mxu0
        %5060 = vdwg.mxu0
        %5061 = vst [vmem:[%s1268] sm:$0xff] %v5058
        %s5062 = sand.u32 %s982, 1
        %s5063 = scalar_lea.sflag [#allocation4], %s5062
        %s5064 = sand.u32 %s982, 1
        %s5065 = smul.addr %s5064, 8
        %s5066 = scalar_lea.vmem [#allocation5], %s5065
        // Predicated region
        $region189: #{transformer_forward.1} parent=183 // pred_check
          %p5067 = pneg %p992
        $region190: #{transformer_forward.1} parent=183 // pred_check_branch
          %5069 = sbr.rel (%p5067) target = $region192
        $region191: #{transformer_forward.1} parent=183 // pred_region
          %5071 = vsyncadd %s5063, 0
          %s5072 = smul.addr %s98, 8
          %s5073 = scalar_lea.hbm %s83, %s5072
          %s5075 = sshll.u32 %s5066, 4
          %s5076 = int_to_ptr.vmem [resolvable:$true] %s5075
          %s5077 = sshll.u32 %s5073, 4
          %s5078 = int_to_ptr.hbm [resolvable:$true] %s5077
          %5080 = dma.vmem_to_hbm [thread:$0]  %s5076, 128, %s5078, %s5063
        $region192: #{transformer_forward.1} parent=183 // pred_fallthru
          _
      $region184: #{transformer_forward.1} parent=5 // pred_fallthru
        _
      %p5081 = scmp.le.s32.totalorder 2, %s93
      // Predicated region
      $region193: #{transformer_forward.1} parent=5 // pred_check
        %p5082 = pneg %p5081
      $region194: #{transformer_forward.1} parent=5 // pred_check_branch
        %5084 = sbr.rel (%p5082) target = $region196
      $region195: #{transformer_forward.1} parent=5 // pred_region
        %s5085 = ssub.s32 %s93, 2
        // Predicated region
        $region197: #{transformer_forward.1} parent=195 // pred_check
          %p5086 = pneg %p998
        $region198: #{transformer_forward.1} parent=195 // pred_check_branch
          %5088 = sbr.rel (%p5086) target = $region200
        $region199: #{transformer_forward.1} parent=195 // pred_region
          %s5089 = sand.u32 %s983, 1
          %s5090 = scalar_lea.sflag [#allocation4], %s5089
          %s5091 = sand.u32 %s983, 1
          %s5092 = smul.addr %s5091, 8
          %s5093 = scalar_lea.vmem [#allocation5], %s5092
          %5095 = dma.done %s5090, 128
        $region200: #{transformer_forward.1} parent=195 // pred_fallthru
          _
      $region196: #{transformer_forward.1} parent=5 // pred_fallthru
        _
    $region6: #{transformer_forward.1} parent=1 // loop_footer
      %s97 = sadd.s32 1, %s93
    $region7: #{transformer_forward.1} parent=1 // loop_footer_branch
      %92 = sbr.rel target = $region3
    $region8: #{transformer_forward.1} parent=1 // loop_exit
      _
    %5096 = vsyncpa [#allocation3], 1
    %s5097 = scalar_lea.sflag [#allocation3], 1
    %5098 = vsyncpa %s5097, 1
    %5099 = vsyncpa [#allocation4], 1
    %s5100 = scalar_lea.sflag [#allocation4], 1
    %5101 = vsyncpa %s5100, 1

</llo_original>
